<compile_context>
chip_gen: v6e
topology: v6e:2x2x1
jax: 0.10.0
libtpu: 0.0.40
codegen_flags: <defaults>
</compile_context>

<pallas_src>
import functools

import jax
import jax.numpy as jnp
from jax.experimental import pallas as pl
from jax.experimental.pallas import tpu as pltpu

C1, C2, C3 = 64, 128, 256


# ----------------------------------------------------------------------------
# Fused kernel
# ----------------------------------------------------------------------------
def _inhand_conv_kernel(x_ref, w1_ref, b1_ref, w2_ref, b2_ref, w3_ref, b3_ref,
                        o_ref, f1_ref, slab2_ref, f2_ref, slab3_ref,
                        *, H, W, Cin, B):
    # Flat-row ("shifted window") layout: activations are stored as (H*W, C)
    # with image width W; a 3x3 tap (dy, dx) is a row offset of dy*W + dx.
    M0 = H * W
    Mc1 = M0 - 2 * W - 2          # conv1 rows computed (taps stay inside x)
    Mc2 = (H - 4) * W             # conv2 rows materialized; covers every pooled
                                  # cell conv3 reads (h2 <= H-5). Garbage columns
                                  # (w2 >= W-4) land in pooled cells conv3 never
                                  # touches (it reads pooled[0:Hp, 0:Wp] only).
    Wh = W // 2
    Hp = (H - 4) // 2
    Ho, Wo = Hp - 2, (W - 4) // 2 - 2
    Mo = Ho * Wo
    taps = [(dy, dx) for dy in range(3) for dx in range(3)]

    # The conv2 im2col build reads f1 rows up to Mc2-1 + 2W+2 <= (H-2)*W + 1;
    # rows >= Mc1 are never *consumed* but must not be uninitialized VMEM.
    # Zeroing the 2W+2 tail rows every step costs ~nothing.
    f1_ref[Mc1:M0, :] = jnp.zeros((M0 - Mc1, C1), jnp.bfloat16)

    # -------------- conv1 + ReLU and conv2 im2col slab (per image) ----------
    for b in range(B):
        x = x_ref[b]                                         # (M0, Cin) f32
        acc = jnp.broadcast_to(b1_ref[...], (Mc1, C1))       # start from bias
        if Cin == 1:
            # Hoist the lane-broadcast: one (M0,1)->(M0,C1) expansion, then the
            # 9 taps are lane-dense VPU mul-adds (w1[t] sublane-broadcast only).
            xb = jnp.broadcast_to(x, (M0, C1))
            for t, (dy, dx) in enumerate(taps):
                off = dy * W + dx
                acc = acc + xb[off:off + Mc1, :] * w1_ref[t]
        else:
            for t, (dy, dx) in enumerate(taps):
                off = dy * W + dx
                acc = acc + jnp.dot(x[off:off + Mc1, :].astype(jnp.bfloat16),
                                    w1_ref[t].astype(jnp.bfloat16),
                                    preferred_element_type=jnp.float32)
        f1_ref[0:Mc1, :] = jnp.maximum(acc, 0.0).astype(jnp.bfloat16)

        # im2col: 9 shifted copies of f1 -> slab rows [b*Mc2, (b+1)*Mc2).
        r0 = b * Mc2
        for t, (dy, dx) in enumerate(taps):
            off = dy * W + dx
            slab2_ref[r0:r0 + Mc2, t * C1:(t + 1) * C1] = f1_ref[off:off + Mc2, :]

    # -------------- conv2: ONE MXU matmul, K = 9*C1 = 576 --------------------
    # Pre-activation stored; bias+ReLU are folded in after the max-pool.
    f2_ref[...] = jnp.dot(slab2_ref[...], w2_ref[...],
                          preferred_element_type=jnp.float32)

    # -------------- 2x2 max-pool + conv2 bias/ReLU + conv3 im2col ------------
    for b in range(B):
        r0 = b * Mc2
        # w-parity max via documented strided ref loads on the flat rows.
        ew = f2_ref[pl.ds(r0, Mc2 // 2, 2), :]               # (Mc2/2, C2), w even
        ow = f2_ref[pl.ds(r0 + 1, Mc2 // 2, 2), :]           # w odd
        pw = jnp.maximum(ew, ow)                             # rows = (h2, w2//2)
        # h-parity: row a of t3 holds [h2=2a | h2=2a+1] side by side.
        t3 = pw.reshape(Hp, W, C2)
        pooled = jnp.maximum(t3[:, 0:Wh, :], t3[:, Wh:W, :])  # (Hp, Wh, C2)
        # ReLU(x + b) is monotone and per-channel, so it commutes with the max:
        # applying it post-pool is exact and touches 4x fewer elements.
        pooled = jnp.maximum(pooled + b2_ref[...], 0.0).astype(jnp.bfloat16)

        q0 = b * Mo
        for t, (dy, dx) in enumerate(taps):
            patch = pooled[dy:dy + Ho, dx:dx + Wo, :].reshape(Mo, C2)
            slab3_ref[q0:q0 + Mo, t * C2:(t + 1) * C2] = patch

    # -------------- conv3 + ReLU: ONE MXU matmul, K = 9*C2 = 1152 ------------
    h3 = jnp.dot(slab3_ref[...], w3_ref[...], preferred_element_type=jnp.float32)
    o_ref[...] = jnp.maximum(h3 + b3_ref[...], 0.0)          # lane-dense (..,256)


# ----------------------------------------------------------------------------
# Wrapper (PyTorch NCHW in / NCHW out)
# ----------------------------------------------------------------------------
def _pick_batch_block(n):
    # Largest B in {4,3,2} dividing n while keeping >= 2 grid steps (megacore);
    # otherwise one image per step.
    for b in (4, 3, 2):
        if n % b == 0 and n // b >= 2:
            return b
    return 1


@jax.jit
def inhand_conv_forward(params, in_hand_nchw):
    N, Cin, H, W = in_hand_nchw.shape
    Hp, Wp = (H - 4) // 2, (W - 4) // 2
    Ho, Wo = Hp - 2, Wp - 2
    assert H % 2 == 0 and W % 2 == 0 and Ho >= 1 and Wo >= 1, (H, W)
    Mo = Ho * Wo
    B = _pick_batch_block(N)
    G = N // B

    x = jnp.transpose(in_hand_nchw, (0, 2, 3, 1)).reshape(N, H * W, Cin)
    x = x.astype(jnp.float32)
    # HWIO weights -> tap-major layouts matching the in-kernel im2col slabs
    # (slab column t*C + c multiplies weight row t*C + c).
    w1 = params["w1"].reshape(9, Cin, C1).astype(jnp.float32)
    b1 = params["b1"].reshape(1, C1).astype(jnp.float32)
    w2 = params["w2"].reshape(9 * C1, C2).astype(jnp.bfloat16)
    b2 = params["b2"].reshape(1, C2).astype(jnp.float32)
    w3 = params["w3"].reshape(9 * C2, C3).astype(jnp.bfloat16)
    b3 = params["b3"].reshape(1, C3).astype(jnp.float32)

    Mc1 = H * W - 2 * W - 2
    Mc2 = (H - 4) * W
    flops = 2 * N * 9 * (Mc1 * Cin * C1 + Mc2 * C1 * C2 + Mo * C2 * C3)
    bytes_accessed = (x.size * 4 + w1.size * 4 + w2.size * 2 + w3.size * 2
                      + (C1 + C2 + C3) * 4 + N * Mo * C3 * 4)

    kernel = functools.partial(_inhand_conv_kernel, H=H, W=W, Cin=Cin, B=B)
    out = pl.pallas_call(
        kernel,
        out_shape=jax.ShapeDtypeStruct((N * Mo, C3), jnp.float32),
        grid=(G,),
        in_specs=[
            pl.BlockSpec((B, H * W, Cin), lambda n: (n, 0, 0)),
            pl.BlockSpec((9, Cin, C1), lambda n: (0, 0, 0)),
            pl.BlockSpec((1, C1), lambda n: (0, 0)),
            pl.BlockSpec((9 * C1, C2), lambda n: (0, 0)),
            pl.BlockSpec((1, C2), lambda n: (0, 0)),
            pl.BlockSpec((9 * C2, C3), lambda n: (0, 0)),
            pl.BlockSpec((1, C3), lambda n: (0, 0)),
        ],
        out_specs=pl.BlockSpec((B * Mo, C3), lambda n: (n, 0)),
        scratch_shapes=[
            pltpu.VMEM((H * W, C1), jnp.bfloat16),         # f1 (one image, reused)
            pltpu.VMEM((B * Mc2, 9 * C1), jnp.bfloat16),   # conv2 im2col slab
            pltpu.VMEM((B * Mc2, C2), jnp.float32),        # conv2 pre-activation
            pltpu.VMEM((B * Mo, 9 * C2), jnp.bfloat16),    # conv3 im2col slab
        ],
        compiler_params=pltpu.CompilerParams(
            dimension_semantics=("parallel",)),
        cost_estimate=pl.CostEstimate(flops=flops, transcendentals=0,
                                      bytes_accessed=bytes_accessed),
    )(x, w1, b1, w2, b2, w3, b3)

    out = out.reshape(N, Ho, Wo, C3)
    return jnp.transpose(out, (0, 3, 1, 2))                 # NCHW, like PyTorch


# ----------------------------------------------------------------------------
# Pure-JAX reference (f32) and deterministic params
# ----------------------------------------------------------------------------
def inhand_conv_reference(params, in_hand_nchw):
    x = jnp.transpose(in_hand_nchw, (0, 2, 3, 1)).astype(jnp.float32)
    dn = ("NHWC", "HWIO", "NHWC")

    def conv(h, w, b):
        y = jax.lax.conv_general_dilated(h, w, (1, 1), "VALID",
                                         dimension_numbers=dn)
        return jax.nn.relu(y + b[None, None, None, :])

    h = conv(x, params["w1"], params["b1"])
    h = conv(h, params["w2"], params["b2"])
    h = jax.lax.reduce_window(h, -jnp.inf, jax.lax.max,
                              (1, 2, 2, 1), (1, 2, 2, 1), "VALID")
    h = conv(h, params["w3"], params["b3"])
    return jnp.transpose(h, (0, 3, 1, 2))


def make_params(key, c_in=1):
    ks = jax.random.split(key, 6)

    def conv_init(kw, kb, cin, cout):
        std = (2.0 / (cin * 9)) ** 0.5
        w = jax.random.normal(kw, (3, 3, cin, cout), jnp.float32) * std
        b = jax.random.normal(kb, (cout,), jnp.float32) * 0.05
        return w, b

    w1, b1 = conv_init(ks[0], ks[1], c_in, C1)
    w2, b2 = conv_init(ks[2], ks[3], C1, C2)
    w3, b3 = conv_init(ks[4], ks[5], C2, C3)
    return {"w1": w1, "b1": b1, "w2": w2, "b2": b2, "w3": w3, "b3": b3}


# ----------------------------------------------------------------------------
if __name__ == "__main__":
    key = jax.random.PRNGKey(0)
    kp, kx = jax.random.split(key)

    # 24x24 single-channel in-hand patch (typical for this module).
    params = make_params(kp, c_in=1)
    in_hand = jax.random.normal(kx, (2, 1, 24, 24), jnp.float32)

    out = jax.block_until_ready(inhand_conv_forward(params, in_hand))
    assert out.shape == (2, 256, 8, 8), out.shape
    assert bool(jnp.all(jnp.isfinite(out)))

    ref = inhand_conv_reference(params, in_hand)
    err = float(jnp.max(jnp.abs(out - ref)) / (jnp.max(jnp.abs(ref)) + 1e-6))
    assert err < 5e-2, f"mismatch vs reference (N=2): {err}"

    # Also exercise the multi-image-per-step path (B_blk=4, 2 grid steps).
    in_hand8 = jax.random.normal(jax.random.PRNGKey(1), (8, 1, 24, 24),
                                 jnp.float32)
    out8 = jax.block_until_ready(inhand_conv_forward(params, in_hand8))
    assert out8.shape == (8, 256, 8, 8), out8.shape
    ref8 = inhand_conv_reference(params, in_hand8)
    err8 = float(jnp.max(jnp.abs(out8 - ref8)) / (jnp.max(jnp.abs(ref8)) + 1e-6))
    assert err8 < 5e-2, f"mismatch vs reference (N=8): {err8}"

    print("KERNEL_OK")
</pallas_src>

<mosaic_0001>
module attributes {stable_mosaic.version = 11 : i64} {
  func.func @_inhand_conv_kernel(%arg0: i32, %arg1: memref<1x576x1xf32, #tpu.memory_space<vmem>>, %arg2: memref<9x1x64xf32, #tpu.memory_space<vmem>>, %arg3: memref<1x64xf32, #tpu.memory_space<vmem>>, %arg4: memref<576x128xbf16, #tpu.memory_space<vmem>>, %arg5: memref<1x128xf32, #tpu.memory_space<vmem>>, %arg6: memref<1152x256xbf16, #tpu.memory_space<vmem>>, %arg7: memref<1x256xf32, #tpu.memory_space<vmem>>, %arg8: memref<64x256xf32, #tpu.memory_space<vmem>>, %arg9: memref<576x64xbf16, #tpu.memory_space<vmem>>, %arg10: memref<480x576xbf16, #tpu.memory_space<vmem>>, %arg11: memref<480x128xf32, #tpu.memory_space<vmem>>, %arg12: memref<64x1152xbf16, #tpu.memory_space<vmem>>) attributes {dimension_semantics = [#tpu.dimension_semantics<parallel>], iteration_bounds = array<i64: 2>, scalar_prefetch = 0 : i64, scratch_operands = 4 : i64, tpu.core_type = #tpu.core_type<tc>, window_params = [{transform_indices = @transform_0, window_bounds = array<i64: 1, 576, 1>}, {pipeline_mode = #tpu.pipeline_mode<synchronous>, transform_indices = @transform_1, window_bounds = array<i64: 9, 1, 64>}, {pipeline_mode = #tpu.pipeline_mode<synchronous>, transform_indices = @transform_2, window_bounds = array<i64: 1, 64>}, {pipeline_mode = #tpu.pipeline_mode<synchronous>, transform_indices = @transform_3, window_bounds = array<i64: 576, 128>}, {pipeline_mode = #tpu.pipeline_mode<synchronous>, transform_indices = @transform_4, window_bounds = array<i64: 1, 128>}, {pipeline_mode = #tpu.pipeline_mode<synchronous>, transform_indices = @transform_5, window_bounds = array<i64: 1152, 256>}, {pipeline_mode = #tpu.pipeline_mode<synchronous>, transform_indices = @transform_6, window_bounds = array<i64: 1, 256>}, {transform_indices = @transform_7, window_bounds = array<i64: 64, 256>}]} {
    %cst = arith.constant 0.000000e+00 : bf16
    %0 = vector.broadcast %cst : bf16 to vector<50x64xbf16>
    %c526 = arith.constant 526 : index
    %c0 = arith.constant 0 : index
    %1 = vector.load %arg9[%c526, %c0] : memref<576x64xbf16, #tpu.memory_space<vmem>>, vector<50x64xbf16>
    tpu.vector_store %arg9[%c526, %c0], %0 {strides = array<i32>} : memref<576x64xbf16, #tpu.memory_space<vmem>>, vector<50x64xbf16>,
    %c0_0 = arith.constant 0 : index
    %c0_1 = arith.constant 0 : index
    %c0_2 = arith.constant 0 : index
    %2 = vector.load %arg1[%c0_0, %c0_1, %c0_2] : memref<1x576x1xf32, #tpu.memory_space<vmem>>, vector<1x576x1xf32>
    %3 = vector.shape_cast %2 : vector<1x576x1xf32> to vector<576x1xf32>
    %c0_3 = arith.constant 0 : index
    %c0_4 = arith.constant 0 : index
    %4 = vector.load %arg3[%c0_3, %c0_4] : memref<1x64xf32, #tpu.memory_space<vmem>>, vector<1x64xf32>
    %5 = vector.shape_cast %4 : vector<1x64xf32> to vector<1x64xf32>
    %6 = vector.broadcast %5 : vector<1x64xf32> to vector<526x64xf32>
    %7 = vector.shape_cast %3 : vector<576x1xf32> to vector<576x1xf32>
    %8 = vector.broadcast %7 : vector<576x1xf32> to vector<576x64xf32>
    %9 = vector.extract_strided_slice %8 {offsets = [0, 0], sizes = [526, 64], strides = [1, 1]} : vector<576x64xf32> to vector<526x64xf32>
    %c0_5 = arith.constant 0 : index
    %c0_6 = arith.constant 0 : index
    %c0_7 = arith.constant 0 : index
    %10 = vector.load %arg2[%c0_5, %c0_6, %c0_7] : memref<9x1x64xf32, #tpu.memory_space<vmem>>, vector<1x1x64xf32>
    %11 = vector.shape_cast %10 : vector<1x1x64xf32> to vector<1x64xf32>
    %12 = vector.broadcast %11 : vector<1x64xf32> to vector<526x64xf32>
    %13 = arith.mulf %9, %12 : vector<526x64xf32>
    %14 = arith.addf %6, %13 : vector<526x64xf32>
    %15 = vector.extract_strided_slice %8 {offsets = [1, 0], sizes = [526, 64], strides = [1, 1]} : vector<576x64xf32> to vector<526x64xf32>
    %c1 = arith.constant 1 : index
    %c0_8 = arith.constant 0 : index
    %c0_9 = arith.constant 0 : index
    %16 = vector.load %arg2[%c1, %c0_8, %c0_9] : memref<9x1x64xf32, #tpu.memory_space<vmem>>, vector<1x1x64xf32>
    %17 = vector.shape_cast %16 : vector<1x1x64xf32> to vector<1x64xf32>
    %18 = vector.broadcast %17 : vector<1x64xf32> to vector<526x64xf32>
    %19 = arith.mulf %15, %18 : vector<526x64xf32>
    %20 = arith.addf %14, %19 : vector<526x64xf32>
    %21 = vector.extract_strided_slice %8 {offsets = [2, 0], sizes = [526, 64], strides = [1, 1]} : vector<576x64xf32> to vector<526x64xf32>
    %c2 = arith.constant 2 : index
    %c0_10 = arith.constant 0 : index
    %c0_11 = arith.constant 0 : index
    %22 = vector.load %arg2[%c2, %c0_10, %c0_11] : memref<9x1x64xf32, #tpu.memory_space<vmem>>, vector<1x1x64xf32>
    %23 = vector.shape_cast %22 : vector<1x1x64xf32> to vector<1x64xf32>
    %24 = vector.broadcast %23 : vector<1x64xf32> to vector<526x64xf32>
    %25 = arith.mulf %21, %24 : vector<526x64xf32>
    %26 = arith.addf %20, %25 : vector<526x64xf32>
    %27 = vector.extract_strided_slice %8 {offsets = [24, 0], sizes = [526, 64], strides = [1, 1]} : vector<576x64xf32> to vector<526x64xf32>
    %c3 = arith.constant 3 : index
    %c0_12 = arith.constant 0 : index
    %c0_13 = arith.constant 0 : index
    %28 = vector.load %arg2[%c3, %c0_12, %c0_13] : memref<9x1x64xf32, #tpu.memory_space<vmem>>, vector<1x1x64xf32>
    %29 = vector.shape_cast %28 : vector<1x1x64xf32> to vector<1x64xf32>
    %30 = vector.broadcast %29 : vector<1x64xf32> to vector<526x64xf32>
    %31 = arith.mulf %27, %30 : vector<526x64xf32>
    %32 = arith.addf %26, %31 : vector<526x64xf32>
    %33 = vector.extract_strided_slice %8 {offsets = [25, 0], sizes = [526, 64], strides = [1, 1]} : vector<576x64xf32> to vector<526x64xf32>
    %c4 = arith.constant 4 : index
    %c0_14 = arith.constant 0 : index
    %c0_15 = arith.constant 0 : index
    %34 = vector.load %arg2[%c4, %c0_14, %c0_15] : memref<9x1x64xf32, #tpu.memory_space<vmem>>, vector<1x1x64xf32>
    %35 = vector.shape_cast %34 : vector<1x1x64xf32> to vector<1x64xf32>
    %36 = vector.broadcast %35 : vector<1x64xf32> to vector<526x64xf32>
    %37 = arith.mulf %33, %36 : vector<526x64xf32>
    %38 = arith.addf %32, %37 : vector<526x64xf32>
    %39 = vector.extract_strided_slice %8 {offsets = [26, 0], sizes = [526, 64], strides = [1, 1]} : vector<576x64xf32> to vector<526x64xf32>
    %c5 = arith.constant 5 : index
    %c0_16 = arith.constant 0 : index
    %c0_17 = arith.constant 0 : index
    %40 = vector.load %arg2[%c5, %c0_16, %c0_17] : memref<9x1x64xf32, #tpu.memory_space<vmem>>, vector<1x1x64xf32>
    %41 = vector.shape_cast %40 : vector<1x1x64xf32> to vector<1x64xf32>
    %42 = vector.broadcast %41 : vector<1x64xf32> to vector<526x64xf32>
    %43 = arith.mulf %39, %42 : vector<526x64xf32>
    %44 = arith.addf %38, %43 : vector<526x64xf32>
    %45 = vector.extract_strided_slice %8 {offsets = [48, 0], sizes = [526, 64], strides = [1, 1]} : vector<576x64xf32> to vector<526x64xf32>
    %c6 = arith.constant 6 : index
    %c0_18 = arith.constant 0 : index
    %c0_19 = arith.constant 0 : index
    %46 = vector.load %arg2[%c6, %c0_18, %c0_19] : memref<9x1x64xf32, #tpu.memory_space<vmem>>, vector<1x1x64xf32>
    %47 = vector.shape_cast %46 : vector<1x1x64xf32> to vector<1x64xf32>
    %48 = vector.broadcast %47 : vector<1x64xf32> to vector<526x64xf32>
    %49 = arith.mulf %45, %48 : vector<526x64xf32>
    %50 = arith.addf %44, %49 : vector<526x64xf32>
    %51 = vector.extract_strided_slice %8 {offsets = [49, 0], sizes = [526, 64], strides = [1, 1]} : vector<576x64xf32> to vector<526x64xf32>
    %c7 = arith.constant 7 : index
    %c0_20 = arith.constant 0 : index
    %c0_21 = arith.constant 0 : index
    %52 = vector.load %arg2[%c7, %c0_20, %c0_21] : memref<9x1x64xf32, #tpu.memory_space<vmem>>, vector<1x1x64xf32>
    %53 = vector.shape_cast %52 : vector<1x1x64xf32> to vector<1x64xf32>
    %54 = vector.broadcast %53 : vector<1x64xf32> to vector<526x64xf32>
    %55 = arith.mulf %51, %54 : vector<526x64xf32>
    %56 = arith.addf %50, %55 : vector<526x64xf32>
    %57 = vector.extract_strided_slice %8 {offsets = [50, 0], sizes = [526, 64], strides = [1, 1]} : vector<576x64xf32> to vector<526x64xf32>
    %c8 = arith.constant 8 : index
    %c0_22 = arith.constant 0 : index
    %c0_23 = arith.constant 0 : index
    %58 = vector.load %arg2[%c8, %c0_22, %c0_23] : memref<9x1x64xf32, #tpu.memory_space<vmem>>, vector<1x1x64xf32>
    %59 = vector.shape_cast %58 : vector<1x1x64xf32> to vector<1x64xf32>
    %60 = vector.broadcast %59 : vector<1x64xf32> to vector<526x64xf32>
    %61 = arith.mulf %57, %60 : vector<526x64xf32>
    %62 = arith.addf %56, %61 : vector<526x64xf32>
    %cst_24 = arith.constant 0.000000e+00 : f32
    %63 = vector.broadcast %cst_24 : f32 to vector<526x64xf32>
    %64 = arith.maximumf %62, %63 : vector<526x64xf32>
    %65 = arith.truncf %64 : vector<526x64xf32> to vector<526x64xbf16>
    %c0_25 = arith.constant 0 : index
    %c0_26 = arith.constant 0 : index
    %66 = vector.load %arg9[%c0_25, %c0_26] : memref<576x64xbf16, #tpu.memory_space<vmem>>, vector<526x64xbf16>
    tpu.vector_store %arg9[%c0_25, %c0_26], %65 {strides = array<i32>} : memref<576x64xbf16, #tpu.memory_space<vmem>>, vector<526x64xbf16>,
    %c0_27 = arith.constant 0 : index
    %c0_28 = arith.constant 0 : index
    %67 = vector.load %arg9[%c0_27, %c0_28] : memref<576x64xbf16, #tpu.memory_space<vmem>>, vector<480x64xbf16>
    %c0_29 = arith.constant 0 : index
    %c0_30 = arith.constant 0 : index
    %68 = vector.load %arg10[%c0_29, %c0_30] : memref<480x576xbf16, #tpu.memory_space<vmem>>, vector<480x64xbf16>
    tpu.vector_store %arg10[%c0_29, %c0_30], %67 {strides = array<i32>} : memref<480x576xbf16, #tpu.memory_space<vmem>>, vector<480x64xbf16>,
    %c1_31 = arith.constant 1 : index
    %c0_32 = arith.constant 0 : index
    %69 = vector.load %arg9[%c1_31, %c0_32] : memref<576x64xbf16, #tpu.memory_space<vmem>>, vector<480x64xbf16>
    %c0_33 = arith.constant 0 : index
    %c64 = arith.constant 64 : index
    %70 = vector.load %arg10[%c0_33, %c64] : memref<480x576xbf16, #tpu.memory_space<vmem>>, vector<480x64xbf16>
    tpu.vector_store %arg10[%c0_33, %c64], %69 {strides = array<i32>} : memref<480x576xbf16, #tpu.memory_space<vmem>>, vector<480x64xbf16>,
    %c2_34 = arith.constant 2 : index
    %c0_35 = arith.constant 0 : index
    %71 = vector.load %arg9[%c2_34, %c0_35] : memref<576x64xbf16, #tpu.memory_space<vmem>>, vector<480x64xbf16>
    %c0_36 = arith.constant 0 : index
    %c128 = arith.constant 128 : index
    %72 = vector.load %arg10[%c0_36, %c128] : memref<480x576xbf16, #tpu.memory_space<vmem>>, vector<480x64xbf16>
    tpu.vector_store %arg10[%c0_36, %c128], %71 {strides = array<i32>} : memref<480x576xbf16, #tpu.memory_space<vmem>>, vector<480x64xbf16>,
    %c24 = arith.constant 24 : index
    %c0_37 = arith.constant 0 : index
    %73 = vector.load %arg9[%c24, %c0_37] : memref<576x64xbf16, #tpu.memory_space<vmem>>, vector<480x64xbf16>
    %c0_38 = arith.constant 0 : index
    %c192 = arith.constant 192 : index
    %74 = vector.load %arg10[%c0_38, %c192] : memref<480x576xbf16, #tpu.memory_space<vmem>>, vector<480x64xbf16>
    tpu.vector_store %arg10[%c0_38, %c192], %73 {strides = array<i32>} : memref<480x576xbf16, #tpu.memory_space<vmem>>, vector<480x64xbf16>,
    %c25 = arith.constant 25 : index
    %c0_39 = arith.constant 0 : index
    %75 = vector.load %arg9[%c25, %c0_39] : memref<576x64xbf16, #tpu.memory_space<vmem>>, vector<480x64xbf16>
    %c0_40 = arith.constant 0 : index
    %c256 = arith.constant 256 : index
    %76 = vector.load %arg10[%c0_40, %c256] : memref<480x576xbf16, #tpu.memory_space<vmem>>, vector<480x64xbf16>
    tpu.vector_store %arg10[%c0_40, %c256], %75 {strides = array<i32>} : memref<480x576xbf16, #tpu.memory_space<vmem>>, vector<480x64xbf16>,
    %c26 = arith.constant 26 : index
    %c0_41 = arith.constant 0 : index
    %77 = vector.load %arg9[%c26, %c0_41] : memref<576x64xbf16, #tpu.memory_space<vmem>>, vector<480x64xbf16>
    %c0_42 = arith.constant 0 : index
    %c320 = arith.constant 320 : index
    %78 = vector.load %arg10[%c0_42, %c320] : memref<480x576xbf16, #tpu.memory_space<vmem>>, vector<480x64xbf16>
    tpu.vector_store %arg10[%c0_42, %c320], %77 {strides = array<i32>} : memref<480x576xbf16, #tpu.memory_space<vmem>>, vector<480x64xbf16>,
    %c48 = arith.constant 48 : index
    %c0_43 = arith.constant 0 : index
    %79 = vector.load %arg9[%c48, %c0_43] : memref<576x64xbf16, #tpu.memory_space<vmem>>, vector<480x64xbf16>
    %c0_44 = arith.constant 0 : index
    %c384 = arith.constant 384 : index
    %80 = vector.load %arg10[%c0_44, %c384] : memref<480x576xbf16, #tpu.memory_space<vmem>>, vector<480x64xbf16>
    tpu.vector_store %arg10[%c0_44, %c384], %79 {strides = array<i32>} : memref<480x576xbf16, #tpu.memory_space<vmem>>, vector<480x64xbf16>,
    %c49 = arith.constant 49 : index
    %c0_45 = arith.constant 0 : index
    %81 = vector.load %arg9[%c49, %c0_45] : memref<576x64xbf16, #tpu.memory_space<vmem>>, vector<480x64xbf16>
    %c0_46 = arith.constant 0 : index
    %c448 = arith.constant 448 : index
    %82 = vector.load %arg10[%c0_46, %c448] : memref<480x576xbf16, #tpu.memory_space<vmem>>, vector<480x64xbf16>
    tpu.vector_store %arg10[%c0_46, %c448], %81 {strides = array<i32>} : memref<480x576xbf16, #tpu.memory_space<vmem>>, vector<480x64xbf16>,
    %c50 = arith.constant 50 : index
    %c0_47 = arith.constant 0 : index
    %83 = vector.load %arg9[%c50, %c0_47] : memref<576x64xbf16, #tpu.memory_space<vmem>>, vector<480x64xbf16>
    %c0_48 = arith.constant 0 : index
    %c512 = arith.constant 512 : index
    %84 = vector.load %arg10[%c0_48, %c512] : memref<480x576xbf16, #tpu.memory_space<vmem>>, vector<480x64xbf16>
    tpu.vector_store %arg10[%c0_48, %c512], %83 {strides = array<i32>} : memref<480x576xbf16, #tpu.memory_space<vmem>>, vector<480x64xbf16>,
    %c0_49 = arith.constant 0 : index
    %c0_50 = arith.constant 0 : index
    %85 = vector.load %arg10[%c0_49, %c0_50] : memref<480x576xbf16, #tpu.memory_space<vmem>>, vector<480x576xbf16>
    %c0_51 = arith.constant 0 : index
    %c0_52 = arith.constant 0 : index
    %86 = vector.load %arg4[%c0_51, %c0_52] : memref<576x128xbf16, #tpu.memory_space<vmem>>, vector<576x128xbf16>
    %cst_53 = arith.constant dense<0.000000e+00> : vector<480x128xf32>
    %87 = tpu.matmul %85, %86, %cst_53 {dimension_numbers = #tpu.dot_dimension_numbers<[1], [0], [0], [1], [0, 0, 1, 1], [], []>} : vector<480x576xbf16>, vector<576x128xbf16>, vector<480x128xf32> -> vector<480x128xf32>
    %c0_54 = arith.constant 0 : index
    %c0_55 = arith.constant 0 : index
    %88 = vector.load %arg11[%c0_54, %c0_55] : memref<480x128xf32, #tpu.memory_space<vmem>>, vector<480x128xf32>
    tpu.vector_store %arg11[%c0_54, %c0_55], %87 {strides = array<i32>} : memref<480x128xf32, #tpu.memory_space<vmem>>, vector<480x128xf32>,
    %c0_56 = arith.constant 0 : index
    %c0_57 = arith.constant 0 : index
    %89 = tpu.strided_load %arg11[%c0_56, %c0_57] {strides = array<i32: 2, 1>} : memref<480x128xf32, #tpu.memory_space<vmem>>, vector<240x128xf32>
    %c1_58 = arith.constant 1 : index
    %c0_59 = arith.constant 0 : index
    %90 = tpu.strided_load %arg11[%c1_58, %c0_59] {strides = array<i32: 2, 1>} : memref<480x128xf32, #tpu.memory_space<vmem>>, vector<240x128xf32>
    %91 = arith.maximumf %89, %90 : vector<240x128xf32>
    %92 = vector.shape_cast %91 : vector<240x128xf32> to vector<10x24x128xf32>
    %93 = vector.extract_strided_slice %92 {offsets = [0, 0, 0], sizes = [10, 12, 128], strides = [1, 1, 1]} : vector<10x24x128xf32> to vector<10x12x128xf32>
    %94 = vector.extract_strided_slice %92 {offsets = [0, 12, 0], sizes = [10, 12, 128], strides = [1, 1, 1]} : vector<10x24x128xf32> to vector<10x12x128xf32>
    %95 = arith.maximumf %93, %94 : vector<10x12x128xf32>
    %c0_60 = arith.constant 0 : index
    %c0_61 = arith.constant 0 : index
    %96 = vector.load %arg5[%c0_60, %c0_61] : memref<1x128xf32, #tpu.memory_space<vmem>>, vector<1x128xf32>
    %97 = vector.shape_cast %96 : vector<1x128xf32> to vector<1x1x128xf32>
    %98 = vector.broadcast %97 : vector<1x1x128xf32> to vector<10x12x128xf32>
    %99 = arith.addf %95, %98 : vector<10x12x128xf32>
    %cst_62 = arith.constant 0.000000e+00 : f32
    %100 = vector.broadcast %cst_62 : f32 to vector<10x12x128xf32>
    %101 = arith.maximumf %99, %100 : vector<10x12x128xf32>
    %102 = arith.truncf %101 : vector<10x12x128xf32> to vector<10x12x128xbf16>
    %103 = vector.extract_strided_slice %102 {offsets = [0, 0, 0], sizes = [8, 8, 128], strides = [1, 1, 1]} : vector<10x12x128xbf16> to vector<8x8x128xbf16>
    %104 = vector.shape_cast %103 : vector<8x8x128xbf16> to vector<64x128xbf16>
    %c0_63 = arith.constant 0 : index
    %c0_64 = arith.constant 0 : index
    %105 = vector.load %arg12[%c0_63, %c0_64] : memref<64x1152xbf16, #tpu.memory_space<vmem>>, vector<64x128xbf16>
    tpu.vector_store %arg12[%c0_63, %c0_64], %104 {strides = array<i32>} : memref<64x1152xbf16, #tpu.memory_space<vmem>>, vector<64x128xbf16>,
    %106 = vector.extract_strided_slice %102 {offsets = [0, 1, 0], sizes = [8, 8, 128], strides = [1, 1, 1]} : vector<10x12x128xbf16> to vector<8x8x128xbf16>
    %107 = vector.shape_cast %106 : vector<8x8x128xbf16> to vector<64x128xbf16>
    %c0_65 = arith.constant 0 : index
    %c128_66 = arith.constant 128 : index
    %108 = vector.load %arg12[%c0_65, %c128_66] : memref<64x1152xbf16, #tpu.memory_space<vmem>>, vector<64x128xbf16>
    tpu.vector_store %arg12[%c0_65, %c128_66], %107 {strides = array<i32>} : memref<64x1152xbf16, #tpu.memory_space<vmem>>, vector<64x128xbf16>,
    %109 = vector.extract_strided_slice %102 {offsets = [0, 2, 0], sizes = [8, 8, 128], strides = [1, 1, 1]} : vector<10x12x128xbf16> to vector<8x8x128xbf16>
    %110 = vector.shape_cast %109 : vector<8x8x128xbf16> to vector<64x128xbf16>
    %c0_67 = arith.constant 0 : index
    %c256_68 = arith.constant 256 : index
    %111 = vector.load %arg12[%c0_67, %c256_68] : memref<64x1152xbf16, #tpu.memory_space<vmem>>, vector<64x128xbf16>
    tpu.vector_store %arg12[%c0_67, %c256_68], %110 {strides = array<i32>} : memref<64x1152xbf16, #tpu.memory_space<vmem>>, vector<64x128xbf16>,
    %112 = vector.extract_strided_slice %102 {offsets = [1, 0, 0], sizes = [8, 8, 128], strides = [1, 1, 1]} : vector<10x12x128xbf16> to vector<8x8x128xbf16>
    %113 = vector.shape_cast %112 : vector<8x8x128xbf16> to vector<64x128xbf16>
    %c0_69 = arith.constant 0 : index
    %c384_70 = arith.constant 384 : index
    %114 = vector.load %arg12[%c0_69, %c384_70] : memref<64x1152xbf16, #tpu.memory_space<vmem>>, vector<64x128xbf16>
    tpu.vector_store %arg12[%c0_69, %c384_70], %113 {strides = array<i32>} : memref<64x1152xbf16, #tpu.memory_space<vmem>>, vector<64x128xbf16>,
    %115 = vector.extract_strided_slice %102 {offsets = [1, 1, 0], sizes = [8, 8, 128], strides = [1, 1, 1]} : vector<10x12x128xbf16> to vector<8x8x128xbf16>
    %116 = vector.shape_cast %115 : vector<8x8x128xbf16> to vector<64x128xbf16>
    %c0_71 = arith.constant 0 : index
    %c512_72 = arith.constant 512 : index
    %117 = vector.load %arg12[%c0_71, %c512_72] : memref<64x1152xbf16, #tpu.memory_space<vmem>>, vector<64x128xbf16>
    tpu.vector_store %arg12[%c0_71, %c512_72], %116 {strides = array<i32>} : memref<64x1152xbf16, #tpu.memory_space<vmem>>, vector<64x128xbf16>,
    %118 = vector.extract_strided_slice %102 {offsets = [1, 2, 0], sizes = [8, 8, 128], strides = [1, 1, 1]} : vector<10x12x128xbf16> to vector<8x8x128xbf16>
    %119 = vector.shape_cast %118 : vector<8x8x128xbf16> to vector<64x128xbf16>
    %c0_73 = arith.constant 0 : index
    %c640 = arith.constant 640 : index
    %120 = vector.load %arg12[%c0_73, %c640] : memref<64x1152xbf16, #tpu.memory_space<vmem>>, vector<64x128xbf16>
    tpu.vector_store %arg12[%c0_73, %c640], %119 {strides = array<i32>} : memref<64x1152xbf16, #tpu.memory_space<vmem>>, vector<64x128xbf16>,
    %121 = vector.extract_strided_slice %102 {offsets = [2, 0, 0], sizes = [8, 8, 128], strides = [1, 1, 1]} : vector<10x12x128xbf16> to vector<8x8x128xbf16>
    %122 = vector.shape_cast %121 : vector<8x8x128xbf16> to vector<64x128xbf16>
    %c0_74 = arith.constant 0 : index
    %c768 = arith.constant 768 : index
    %123 = vector.load %arg12[%c0_74, %c768] : memref<64x1152xbf16, #tpu.memory_space<vmem>>, vector<64x128xbf16>
    tpu.vector_store %arg12[%c0_74, %c768], %122 {strides = array<i32>} : memref<64x1152xbf16, #tpu.memory_space<vmem>>, vector<64x128xbf16>,
    %124 = vector.extract_strided_slice %102 {offsets = [2, 1, 0], sizes = [8, 8, 128], strides = [1, 1, 1]} : vector<10x12x128xbf16> to vector<8x8x128xbf16>
    %125 = vector.shape_cast %124 : vector<8x8x128xbf16> to vector<64x128xbf16>
    %c0_75 = arith.constant 0 : index
    %c896 = arith.constant 896 : index
    %126 = vector.load %arg12[%c0_75, %c896] : memref<64x1152xbf16, #tpu.memory_space<vmem>>, vector<64x128xbf16>
    tpu.vector_store %arg12[%c0_75, %c896], %125 {strides = array<i32>} : memref<64x1152xbf16, #tpu.memory_space<vmem>>, vector<64x128xbf16>,
    %127 = vector.extract_strided_slice %102 {offsets = [2, 2, 0], sizes = [8, 8, 128], strides = [1, 1, 1]} : vector<10x12x128xbf16> to vector<8x8x128xbf16>
    %128 = vector.shape_cast %127 : vector<8x8x128xbf16> to vector<64x128xbf16>
    %c0_76 = arith.constant 0 : index
    %c1024 = arith.constant 1024 : index
    %129 = vector.load %arg12[%c0_76, %c1024] : memref<64x1152xbf16, #tpu.memory_space<vmem>>, vector<64x128xbf16>
    tpu.vector_store %arg12[%c0_76, %c1024], %128 {strides = array<i32>} : memref<64x1152xbf16, #tpu.memory_space<vmem>>, vector<64x128xbf16>,
    %c0_77 = arith.constant 0 : index
    %c0_78 = arith.constant 0 : index
    %130 = vector.load %arg12[%c0_77, %c0_78] : memref<64x1152xbf16, #tpu.memory_space<vmem>>, vector<64x1152xbf16>
    %c0_79 = arith.constant 0 : index
    %c0_80 = arith.constant 0 : index
    %131 = vector.load %arg6[%c0_79, %c0_80] : memref<1152x256xbf16, #tpu.memory_space<vmem>>, vector<1152x256xbf16>
    %cst_81 = arith.constant dense<0.000000e+00> : vector<64x256xf32>
    %132 = tpu.matmul %130, %131, %cst_81 {dimension_numbers = #tpu.dot_dimension_numbers<[1], [0], [0], [1], [0, 0, 1, 1], [], []>} : vector<64x1152xbf16>, vector<1152x256xbf16>, vector<64x256xf32> -> vector<64x256xf32>
    %c0_82 = arith.constant 0 : index
    %c0_83 = arith.constant 0 : index
    %133 = vector.load %arg7[%c0_82, %c0_83] : memref<1x256xf32, #tpu.memory_space<vmem>>, vector<1x256xf32>
    %134 = vector.broadcast %133 : vector<1x256xf32> to vector<64x256xf32>
    %135 = arith.addf %132, %134 : vector<64x256xf32>
    %cst_84 = arith.constant 0.000000e+00 : f32
    %136 = vector.broadcast %cst_84 : f32 to vector<64x256xf32>
    %137 = arith.maximumf %135, %136 : vector<64x256xf32>
    %c0_85 = arith.constant 0 : index
    %c0_86 = arith.constant 0 : index
    %138 = vector.load %arg8[%c0_85, %c0_86] : memref<64x256xf32, #tpu.memory_space<vmem>>, vector<64x256xf32>
    tpu.vector_store %arg8[%c0_85, %c0_86], %137 {strides = array<i32>} : memref<64x256xf32, #tpu.memory_space<vmem>>, vector<64x256xf32>,
    return
  }
  func.func @transform_0(%arg0: i32) -> (i32, i32, i32) {
    %c0_i32 = arith.constant 0 : i32
    %c0_i32_0 = arith.constant 0 : i32
    %c0_i32_1 = arith.constant 0 : i32
    return %arg0, %c0_i32, %c0_i32_0 : i32, i32, i32
  }
  func.func @transform_1(%arg0: i32) -> (i32, i32, i32) {
    %c0_i32 = arith.constant 0 : i32
    %c0_i32_0 = arith.constant 0 : i32
    %c0_i32_1 = arith.constant 0 : i32
    %c0_i32_2 = arith.constant 0 : i32
    return %c0_i32, %c0_i32_0, %c0_i32_1 : i32, i32, i32
  }
  func.func @transform_2(%arg0: i32) -> (i32, i32) {
    %c0_i32 = arith.constant 0 : i32
    %c0_i32_0 = arith.constant 0 : i32
    %c0_i32_1 = arith.constant 0 : i32
    return %c0_i32, %c0_i32_0 : i32, i32
  }
  func.func @transform_3(%arg0: i32) -> (i32, i32) {
    %c0_i32 = arith.constant 0 : i32
    %c0_i32_0 = arith.constant 0 : i32
    %c0_i32_1 = arith.constant 0 : i32
    return %c0_i32, %c0_i32_0 : i32, i32
  }
  func.func @transform_4(%arg0: i32) -> (i32, i32) {
    %c0_i32 = arith.constant 0 : i32
    %c0_i32_0 = arith.constant 0 : i32
    %c0_i32_1 = arith.constant 0 : i32
    return %c0_i32, %c0_i32_0 : i32, i32
  }
  func.func @transform_5(%arg0: i32) -> (i32, i32) {
    %c0_i32 = arith.constant 0 : i32
    %c0_i32_0 = arith.constant 0 : i32
    %c0_i32_1 = arith.constant 0 : i32
    return %c0_i32, %c0_i32_0 : i32, i32
  }
  func.func @transform_6(%arg0: i32) -> (i32, i32) {
    %c0_i32 = arith.constant 0 : i32
    %c0_i32_0 = arith.constant 0 : i32
    %c0_i32_1 = arith.constant 0 : i32
    return %c0_i32, %c0_i32_0 : i32, i32
  }
  func.func @transform_7(%arg0: i32) -> (i32, i32) {
    %c0_i32 = arith.constant 0 : i32
    %c0_i32_0 = arith.constant 0 : i32
    return %arg0, %c0_i32 : i32, i32
  }
}

</mosaic_0001>

<llo_original>
// kernel: inhand_conv_forward.1
$region0: #{inhand_conv_forward.1}
  #allocation0 [shape = 'u32[]', space=smem, size = 0x4, offset = 0x4, fixed_abs, tag = 'smem constant byte address 0x4 - core index']
  #allocation1 [shape = 'u32[144,128]{1,0:T(1,128)}', space=vmem, size = 0x12000, scoped, tag = 'internal scratch']
  #allocation2 [shape = 'bf16[576,64]{1,0:T(8,128)(2,1)}', space=vmem, size = 0x24000, scoped, tag = 'scratch operand']
  #allocation3 [shape = 'bf16[480,576]{1,0:T(8,128)(2,1)}', space=vmem, size = 0x96000, scoped, tag = 'scratch operand']
  #allocation4 [shape = 'f32[480,128]{1,0:T(8,128)}', space=vmem, size = 0x3c000, scoped, tag = 'scratch operand']
  #allocation5 [shape = 'bf16[64,1152]{1,0:T(8,128)(2,1)}', space=vmem, size = 0x24000, scoped, tag = 'scratch operand']
  %s0 = inlined_call_operand.vmem [shape: f32[2,576,1], index: 0, kind: input, shape index: {}]
  %s1 = inlined_call_operand.vmem [shape: f32[9,1,64], index: 1, kind: input, shape index: {}]
  %s2 = inlined_call_operand.vmem [shape: f32[1,64], index: 2, kind: input, shape index: {}]
  %s3 = inlined_call_operand.vmem [shape: bf16[576,128], index: 3, kind: input, shape index: {}]
  %s4 = inlined_call_operand.vmem [shape: f32[1,128], index: 4, kind: input, shape index: {}]
  %s5 = inlined_call_operand.vmem [shape: bf16[1152,256], index: 5, kind: input, shape index: {}]
  %s6 = inlined_call_operand.vmem [shape: f32[1,256], index: 6, kind: input, shape index: {}]
  %s7 = inlined_call_operand.hbm [shape: f32[128,256], index: 7, kind: output, shape index: {}]
  %s8 = sld [smem:[#allocation0]]
  $region61: #{inhand_conv_forward.1} parent=0
    _
  %s10 = ssub.s32 1, %s8
  %s11 = scalar_select 0, %s10, %s8
  $region1: #{inhand_conv_forward.1} parent=0
    #allocation6 [shape = 'u8[131072]{0}', space=vmem, size = 0x20000, scoped, tag = 'output window, operand 0']
    #allocation7 [shape = 's32[2]{0}', space=sflag, size = 0x8, scoped, tag = 'scoped memory for inhand_conv_forward.1']
    %12 = vsyncpa [#allocation7], 0
    %s13 = scalar_lea.sflag [#allocation7], 1
    %14 = vsyncpa %s13, 0
    loop: start=0, step=1, limit=4
    $region2: #{inhand_conv_forward.1} parent=1 // loop_pre_header
      _
    $region3: #{inhand_conv_forward.1} parent=1 // loop_header
      %s16 = sphi 0, %s20
      %p17 = scmp.ge.s32.totalorder %s16, 4
      %s26 = sphi 0, %s28
      %s29 = sphi 0, %s26
      %s30 = sphi 0, %s29
      %s46 = sphi 0, %s30
      %s50 = sphi 0, %s50
      %s52 = sphi 0, %s50
      %s53 = sphi 0, %s52
      %s67 = sphi 0, %s53
      %s71 = sphi 0, %s71
      %s73 = sphi 0, %s71
      %s74 = sphi 0, %s73
      %s88 = sphi 0, %s74
      %s92 = sphi 0, %s92
      %s94 = sphi 0, %s92
      %s95 = sphi 0, %s94
      %s109 = sphi 0, %s95
      %s113 = sphi 0, %s113
      %s115 = sphi 0, %s113
      %s116 = sphi 0, %s115
      %s130 = sphi 0, %s116
      %s134 = sphi 0, %s134
      %s136 = sphi 0, %s134
      %s137 = sphi 0, %s136
      %s151 = sphi 0, %s137
      %s155 = sphi 0, %s155
      %s157 = sphi 0, %s155
      %s158 = sphi 0, %s157
      %s172 = sphi 0, %s158
      %s178 = sphi 0, %s180
      %s181 = sphi 0, %s178
      %s182 = sphi 0, %s181
      %s198 = sphi 0, %s182
    $region4: #{inhand_conv_forward.1} parent=1 // loop_header_branch
      %19 = sbr.rel (%p17) target = $region8
    $region5: #{inhand_conv_forward.1} parent=1 // loop_body
      %s21 = ssub.s32 %s16, 1
      %s22 = ssub.s32 %s16, 2
      %s23 = sadd.s32 %s16, 1
      %s24 = ssub.s32 %s16, %s23
      %p25 = scmp.eq.s32.totalorder %s24, 0
      %s27 = sadd.s32 %s26, 1
      %s28 = scalar_select %p25, %s26, %s27
      %p31 = pneg %p25
      %p32 = scmp.eq.s32.totalorder %s16, 1
      %p33 = por %p31, %p32
      %p34 = scmp.ne.s32.totalorder %s26, %s29
      %p35 = scmp.eq.s32.totalorder %s16, 0
      %p36 = por %p34, %p35
      %p37 = scmp.ne.s32.totalorder %s26, %s29
      %p38 = scmp.eq.s32.totalorder %s21, 1
      %p39 = por %p37, %p38
      %p40 = scmp.ne.s32.totalorder %s29, %s30
      %p41 = scmp.eq.s32.totalorder %s21, 0
      %p42 = por %p40, %p41
      %p43 = scmp.ne.s32.totalorder %s29, %s30
      %p44 = scmp.eq.s32.totalorder %s22, 1
      %p45 = por %p43, %p44
      %p47 = scmp.ne.s32.totalorder %s30, %s46
      %p48 = scmp.eq.s32.totalorder %s22, 0
      %p49 = por %p47, %p48
      %s51 = sadd.s32 %s50, 1
      %p54 = scmp.eq.s32.totalorder %s16, 1
      %p55 = scmp.ne.s32.totalorder %s50, %s52
      %p56 = scmp.eq.s32.totalorder %s16, 0
      %p57 = por %p55, %p56
      %p58 = scmp.ne.s32.totalorder %s50, %s52
      %p59 = scmp.eq.s32.totalorder %s21, 1
      %p60 = por %p58, %p59
      %p61 = scmp.ne.s32.totalorder %s52, %s53
      %p62 = scmp.eq.s32.totalorder %s21, 0
      %p63 = por %p61, %p62
      %p64 = scmp.ne.s32.totalorder %s52, %s53
      %p65 = scmp.eq.s32.totalorder %s22, 1
      %p66 = por %p64, %p65
      %p68 = scmp.ne.s32.totalorder %s53, %s67
      %p69 = scmp.eq.s32.totalorder %s22, 0
      %p70 = por %p68, %p69
      %s72 = sadd.s32 %s71, 1
      %p75 = scmp.eq.s32.totalorder %s16, 1
      %p76 = scmp.ne.s32.totalorder %s71, %s73
      %p77 = scmp.eq.s32.totalorder %s16, 0
      %p78 = por %p76, %p77
      %p79 = scmp.ne.s32.totalorder %s71, %s73
      %p80 = scmp.eq.s32.totalorder %s21, 1
      %p81 = por %p79, %p80
      %p82 = scmp.ne.s32.totalorder %s73, %s74
      %p83 = scmp.eq.s32.totalorder %s21, 0
      %p84 = por %p82, %p83
      %p85 = scmp.ne.s32.totalorder %s73, %s74
      %p86 = scmp.eq.s32.totalorder %s22, 1
      %p87 = por %p85, %p86
      %p89 = scmp.ne.s32.totalorder %s74, %s88
      %p90 = scmp.eq.s32.totalorder %s22, 0
      %p91 = por %p89, %p90
      %s93 = sadd.s32 %s92, 1
      %p96 = scmp.eq.s32.totalorder %s16, 1
      %p97 = scmp.ne.s32.totalorder %s92, %s94
      %p98 = scmp.eq.s32.totalorder %s16, 0
      %p99 = por %p97, %p98
      %p100 = scmp.ne.s32.totalorder %s92, %s94
      %p101 = scmp.eq.s32.totalorder %s21, 1
      %p102 = por %p100, %p101
      %p103 = scmp.ne.s32.totalorder %s94, %s95
      %p104 = scmp.eq.s32.totalorder %s21, 0
      %p105 = por %p103, %p104
      %p106 = scmp.ne.s32.totalorder %s94, %s95
      %p107 = scmp.eq.s32.totalorder %s22, 1
      %p108 = por %p106, %p107
      %p110 = scmp.ne.s32.totalorder %s95, %s109
      %p111 = scmp.eq.s32.totalorder %s22, 0
      %p112 = por %p110, %p111
      %s114 = sadd.s32 %s113, 1
      %p117 = scmp.eq.s32.totalorder %s16, 1
      %p118 = scmp.ne.s32.totalorder %s113, %s115
      %p119 = scmp.eq.s32.totalorder %s16, 0
      %p120 = por %p118, %p119
      %p121 = scmp.ne.s32.totalorder %s113, %s115
      %p122 = scmp.eq.s32.totalorder %s21, 1
      %p123 = por %p121, %p122
      %p124 = scmp.ne.s32.totalorder %s115, %s116
      %p125 = scmp.eq.s32.totalorder %s21, 0
      %p126 = por %p124, %p125
      %p127 = scmp.ne.s32.totalorder %s115, %s116
      %p128 = scmp.eq.s32.totalorder %s22, 1
      %p129 = por %p127, %p128
      %p131 = scmp.ne.s32.totalorder %s116, %s130
      %p132 = scmp.eq.s32.totalorder %s22, 0
      %p133 = por %p131, %p132
      %s135 = sadd.s32 %s134, 1
      %p138 = scmp.eq.s32.totalorder %s16, 1
      %p139 = scmp.ne.s32.totalorder %s134, %s136
      %p140 = scmp.eq.s32.totalorder %s16, 0
      %p141 = por %p139, %p140
      %p142 = scmp.ne.s32.totalorder %s134, %s136
      %p143 = scmp.eq.s32.totalorder %s21, 1
      %p144 = por %p142, %p143
      %p145 = scmp.ne.s32.totalorder %s136, %s137
      %p146 = scmp.eq.s32.totalorder %s21, 0
      %p147 = por %p145, %p146
      %p148 = scmp.ne.s32.totalorder %s136, %s137
      %p149 = scmp.eq.s32.totalorder %s22, 1
      %p150 = por %p148, %p149
      %p152 = scmp.ne.s32.totalorder %s137, %s151
      %p153 = scmp.eq.s32.totalorder %s22, 0
      %p154 = por %p152, %p153
      %s156 = sadd.s32 %s155, 1
      %p159 = scmp.eq.s32.totalorder %s16, 1
      %p160 = scmp.ne.s32.totalorder %s155, %s157
      %p161 = scmp.eq.s32.totalorder %s16, 0
      %p162 = por %p160, %p161
      %p163 = scmp.ne.s32.totalorder %s155, %s157
      %p164 = scmp.eq.s32.totalorder %s21, 1
      %p165 = por %p163, %p164
      %p166 = scmp.ne.s32.totalorder %s157, %s158
      %p167 = scmp.eq.s32.totalorder %s21, 0
      %p168 = por %p166, %p167
      %p169 = scmp.ne.s32.totalorder %s157, %s158
      %p170 = scmp.eq.s32.totalorder %s22, 1
      %p171 = por %p169, %p170
      %p173 = scmp.ne.s32.totalorder %s158, %s172
      %p174 = scmp.eq.s32.totalorder %s22, 0
      %p175 = por %p173, %p174
      %s176 = ssub.s32 %s16, %s23
      %p177 = scmp.eq.s32.totalorder %s176, 0
      %s179 = sadd.s32 %s178, 1
      %s180 = scalar_select %p177, %s178, %s179
      %p183 = pneg %p177
      %p184 = scmp.eq.s32.totalorder %s16, 1
      %p185 = por %p183, %p184
      %p186 = scmp.ne.s32.totalorder %s178, %s181
      %p187 = scmp.eq.s32.totalorder %s16, 0
      %p188 = por %p186, %p187
      %p189 = scmp.ne.s32.totalorder %s178, %s181
      %p190 = scmp.eq.s32.totalorder %s21, 1
      %p191 = por %p189, %p190
      %p192 = scmp.ne.s32.totalorder %s181, %s182
      %p193 = scmp.eq.s32.totalorder %s21, 0
      %p194 = por %p192, %p193
      %p195 = scmp.ne.s32.totalorder %s181, %s182
      %p196 = scmp.eq.s32.totalorder %s22, 1
      %p197 = por %p195, %p196
      %p199 = scmp.ne.s32.totalorder %s182, %s198
      %p200 = scmp.eq.s32.totalorder %s22, 0
      %p201 = por %p199, %p200
      %p202 = scmp.le.s32.totalorder 1, %s16
      %p203 = scmp.lt.s32.totalorder %s16, 3
      %p204 = pnand %p202, %p203
      %p205 = pneg %p204
      // Predicated region
      $region9: #{inhand_conv_forward.1} parent=5 // pred_check
        _
      $region10: #{inhand_conv_forward.1} parent=5 // pred_check_branch
        %207 = sbr.rel (%p204) target = $region12
      $region11: #{inhand_conv_forward.1} parent=5 // pred_region
        %s208 = ssub.s32 %s16, 1
        // Predicated region
        $region13: #{inhand_conv_forward.1} parent=11 // pred_check
          %p209 = pneg %p63
        $region14: #{inhand_conv_forward.1} parent=11 // pred_check_branch
          %211 = sbr.rel (%p209) target = $region16
        $region15: #{inhand_conv_forward.1} parent=11 // pred_region
          _
        $region16: #{inhand_conv_forward.1} parent=11 // pred_fallthru
          _
        // Predicated region
        $region17: #{inhand_conv_forward.1} parent=11 // pred_check
          %p212 = pneg %p84
        $region18: #{inhand_conv_forward.1} parent=11 // pred_check_branch
          %214 = sbr.rel (%p212) target = $region20
        $region19: #{inhand_conv_forward.1} parent=11 // pred_region
          _
        $region20: #{inhand_conv_forward.1} parent=11 // pred_fallthru
          _
        // Predicated region
        $region21: #{inhand_conv_forward.1} parent=11 // pred_check
          %p215 = pneg %p105
        $region22: #{inhand_conv_forward.1} parent=11 // pred_check_branch
          %217 = sbr.rel (%p215) target = $region24
        $region23: #{inhand_conv_forward.1} parent=11 // pred_region
          _
        $region24: #{inhand_conv_forward.1} parent=11 // pred_fallthru
          _
        // Predicated region
        $region25: #{inhand_conv_forward.1} parent=11 // pred_check
          %p218 = pneg %p126
        $region26: #{inhand_conv_forward.1} parent=11 // pred_check_branch
          %220 = sbr.rel (%p218) target = $region28
        $region27: #{inhand_conv_forward.1} parent=11 // pred_region
          _
        $region28: #{inhand_conv_forward.1} parent=11 // pred_fallthru
          _
        // Predicated region
        $region29: #{inhand_conv_forward.1} parent=11 // pred_check
          %p221 = pneg %p147
        $region30: #{inhand_conv_forward.1} parent=11 // pred_check_branch
          %223 = sbr.rel (%p221) target = $region32
        $region31: #{inhand_conv_forward.1} parent=11 // pred_region
          _
        $region32: #{inhand_conv_forward.1} parent=11 // pred_fallthru
          _
        // Predicated region
        $region33: #{inhand_conv_forward.1} parent=11 // pred_check
          %p224 = pneg %p168
        $region34: #{inhand_conv_forward.1} parent=11 // pred_check_branch
          %226 = sbr.rel (%p224) target = $region36
        $region35: #{inhand_conv_forward.1} parent=11 // pred_region
          _
        $region36: #{inhand_conv_forward.1} parent=11 // pred_fallthru
          _
      $region12: #{inhand_conv_forward.1} parent=5 // pred_fallthru
        _
      %p227 = scmp.lt.s32.totalorder %s16, 2
      // Predicated region
      $region37: #{inhand_conv_forward.1} parent=5 // pred_check
        %p228 = pneg %p227
      $region38: #{inhand_conv_forward.1} parent=5 // pred_check_branch
        %230 = sbr.rel (%p228) target = $region40
      $region39: #{inhand_conv_forward.1} parent=5 // pred_region
        // Predicated region
        $region41: #{inhand_conv_forward.1} parent=39 // pred_check
          %p231 = pneg %p36
        $region42: #{inhand_conv_forward.1} parent=39 // pred_check_branch
          %233 = sbr.rel (%p231) target = $region44
        $region43: #{inhand_conv_forward.1} parent=39 // pred_region
          %p234 = scmp.lt.s32.totalorder %s16, 1
          %s235 = scalar_select %p234, %s16, 1
          %s236 = smul.addr %s235, 72
          %s237 = smul.addr %s236, 8
          %s238 = scalar_lea.vmem %s0, %s237
        $region44: #{inhand_conv_forward.1} parent=39 // pred_fallthru
          _
      $region40: #{inhand_conv_forward.1} parent=5 // pred_fallthru
        _
      %p239 = scmp.le.s32.totalorder 1, %s16
      %p240 = scmp.lt.s32.totalorder %s16, 3
      %p241 = pnand %p239, %p240
      %p242 = pneg %p241
      // Predicated region
      $region45: #{inhand_conv_forward.1} parent=5 // pred_check
        _
      $region46: #{inhand_conv_forward.1} parent=5 // pred_check_branch
        %244 = sbr.rel (%p241) target = $region48
      $region47: #{inhand_conv_forward.1} parent=5 // pred_region
        %s245 = ssub.s32 %s16, 1
        %p246 = scmp.lt.s32.totalorder %s21, 1
        %s247 = scalar_select %p246, %s21, 1
        %s248 = smul.addr %s247, 72
        %s249 = smul.addr %s248, 8
        %s250 = scalar_lea.vmem %s0, %s249
        %p251 = pneg %p42
        %p252 = pneg %p39
        %p253 = pneg %p63
        %p254 = pneg %p60
        %p255 = pneg %p84
        %p256 = pneg %p81
        %p257 = pneg %p105
        %p258 = pneg %p102
        %p259 = pneg %p126
        %p260 = pneg %p123
        %p261 = pneg %p147
        %p262 = pneg %p144
        %p263 = pneg %p168
        %p264 = pneg %p165
        %p265 = pneg %p194
        %p266 = pneg %p191
        %s267 = sand.u32 %s181, 1
        %s268 = scalar_lea.sflag [#allocation7], %s267
        %s269 = sand.u32 %s181, 1
        %s270 = smul.addr %s269, 128
        %s271 = scalar_lea.vmem [#allocation6], %s270
        %p272 = scmp.lt.s32.totalorder %s21, 1
        %s273 = scalar_select %p272, %s21, 1
        %s274 = smul.addr %s273, 72
        %s275 = smul.addr %s274, 8
        %s276 = scalar_lea.vmem %s0, %s275
        %s277 = smul.u32 8, %s21
        %vm279 = vcmask 519171
        %280 = vst.msk [vmem:[#allocation2 + $0x104] sm:$0x8] %vm279, 0
        %vm281 = vcmask 519168
        %282 = vst.msk [vmem:[#allocation2 + $0x108] sm:$0xf] %vm281, 0
        %283 = vst.msk [vmem:[#allocation2 + $0x10c] sm:$0xf] %vm281, 0
        %284 = vst.msk [vmem:[#allocation2 + $0x110] sm:$0xf] %vm281, 0
        %285 = vst.msk [vmem:[#allocation2 + $0x114] sm:$0xf] %vm281, 0
        %286 = vst.msk [vmem:[#allocation2 + $0x118] sm:$0xf] %vm281, 0
        %287 = vst.msk [vmem:[#allocation2 + $0x11c] sm:$0xf] %vm281, 0
        %v288 = vld [vmem:[%s276] sm:$0xff]
        %v289 = vld [vmem:[%s276 + $0x8] sm:$0xff]
        %v290 = vld [vmem:[%s276 + $0x10] sm:$0xff]
        %v291 = vld [vmem:[%s276 + $0x18] sm:$0xff]
        %v292 = vld [vmem:[%s276 + $0x20] sm:$0xff]
        %v293 = vld [vmem:[%s276 + $0x28] sm:$0xff]
        %v294 = vld [vmem:[%s276 + $0x30] sm:$0xff]
        %v295 = vld [vmem:[%s276 + $0x38] sm:$0xff]
        %v296 = vld [vmem:[%s276 + $0x40] sm:$0xff]
        %v297 = vld [vmem:[%s276 + $0x48] sm:$0xff]
        %v298 = vld [vmem:[%s276 + $0x50] sm:$0xff]
        %v299 = vld [vmem:[%s276 + $0x58] sm:$0xff]
        %v300 = vld [vmem:[%s276 + $0x60] sm:$0xff]
        %v301 = vld [vmem:[%s276 + $0x68] sm:$0xff]
        %v302 = vld [vmem:[%s276 + $0x70] sm:$0xff]
        %v303 = vld [vmem:[%s276 + $0x78] sm:$0xff]
        %v304 = vld [vmem:[%s276 + $0x80] sm:$0xff]
        %v305 = vld [vmem:[%s276 + $0x88] sm:$0xff]
        %v306 = vld [vmem:[%s276 + $0x90] sm:$0xff]
        %v307 = vld [vmem:[%s276 + $0x98] sm:$0xff]
        %v308 = vld [vmem:[%s276 + $0xa0] sm:$0xff]
        %v309 = vld [vmem:[%s276 + $0xa8] sm:$0xff]
        %v310 = vld [vmem:[%s276 + $0xb0] sm:$0xff]
        %v311 = vld [vmem:[%s276 + $0xb8] sm:$0xff]
        %v312 = vld [vmem:[%s276 + $0xc0] sm:$0xff]
        %v313 = vld [vmem:[%s276 + $0xc8] sm:$0xff]
        %v314 = vld [vmem:[%s276 + $0xd0] sm:$0xff]
        %v315 = vld [vmem:[%s276 + $0xd8] sm:$0xff]
        %v316 = vld [vmem:[%s276 + $0xe0] sm:$0xff]
        %v317 = vld [vmem:[%s276 + $0xe8] sm:$0xff]
        %v318 = vld [vmem:[%s276 + $0xf0] sm:$0xff]
        %v319 = vld [vmem:[%s276 + $0xf8] sm:$0xff]
        %v320 = vld [vmem:[%s276 + $0x100] sm:$0xff]
        %v321 = vld [vmem:[%s276 + $0x108] sm:$0xff]
        %v322 = vld [vmem:[%s276 + $0x110] sm:$0xff]
        %v323 = vld [vmem:[%s276 + $0x118] sm:$0xff]
        %v324 = vld [vmem:[%s276 + $0x120] sm:$0xff]
        %v325 = vld [vmem:[%s276 + $0x128] sm:$0xff]
        %v326 = vld [vmem:[%s276 + $0x130] sm:$0xff]
        %v327 = vld [vmem:[%s276 + $0x138] sm:$0xff]
        %v328 = vld [vmem:[%s276 + $0x140] sm:$0xff]
        %v329 = vld [vmem:[%s276 + $0x148] sm:$0xff]
        %v330 = vld [vmem:[%s276 + $0x150] sm:$0xff]
        %v331 = vld [vmem:[%s276 + $0x158] sm:$0xff]
        %v332 = vld [vmem:[%s276 + $0x160] sm:$0xff]
        %v333 = vld [vmem:[%s276 + $0x168] sm:$0xff]
        %v334 = vld [vmem:[%s276 + $0x170] sm:$0xff]
        %v335 = vld [vmem:[%s276 + $0x178] sm:$0xff]
        %v336 = vld [vmem:[%s276 + $0x180] sm:$0xff]
        %v337 = vld [vmem:[%s276 + $0x188] sm:$0xff]
        %v338 = vld [vmem:[%s276 + $0x190] sm:$0xff]
        %v339 = vld [vmem:[%s276 + $0x198] sm:$0xff]
        %v340 = vld [vmem:[%s276 + $0x1a0] sm:$0xff]
        %v341 = vld [vmem:[%s276 + $0x1a8] sm:$0xff]
        %v342 = vld [vmem:[%s276 + $0x1b0] sm:$0xff]
        %v343 = vld [vmem:[%s276 + $0x1b8] sm:$0xff]
        %v344 = vld [vmem:[%s276 + $0x1c0] sm:$0xff]
        %v345 = vld [vmem:[%s276 + $0x1c8] sm:$0xff]
        %v346 = vld [vmem:[%s276 + $0x1d0] sm:$0xff]
        %v347 = vld [vmem:[%s276 + $0x1d8] sm:$0xff]
        %v348 = vld [vmem:[%s276 + $0x1e0] sm:$0xff]
        %v349 = vld [vmem:[%s276 + $0x1e8] sm:$0xff]
        %v350 = vld [vmem:[%s276 + $0x1f0] sm:$0xff]
        %v351 = vld [vmem:[%s276 + $0x1f8] sm:$0xff]
        %v352 = vld [vmem:[%s276 + $0x200] sm:$0xff]
        %v353 = vld [vmem:[%s276 + $0x208] sm:$0xff]
        %v354 = vld [vmem:[%s276 + $0x210] sm:$0xff]
        %v355 = vld [vmem:[%s276 + $0x218] sm:$0xff]
        %v356 = vld [vmem:[%s276 + $0x220] sm:$0xff]
        %v357 = vld [vmem:[%s276 + $0x228] sm:$0xff]
        %v358 = vld [vmem:[%s276 + $0x230] sm:$0xff]
        %v359 = vld [vmem:[%s276 + $0x238] sm:$0xff]
        %v360 = vld [vmem:[%s2] sm:$0x1]
        %v362 = vlaneseq
        %v363 = vshrl.u32 %v362, 7
        %v364 = vsub.s32 0, %v363
        %v365 = vrot.slane %v360, %v364
        %368 = vset.pattern.permute.xlu0 0
        %369 = vperm.xlu0 %368, %v288
        %v370 = vpop.permute.xlu0 %369
        %373 = vset.pattern.permute.xlu0 0
        %374 = vperm.xlu0 %373, %v289
        %v375 = vpop.permute.xlu0 %374
        %378 = vset.pattern.permute.xlu0 0
        %379 = vperm.xlu0 %378, %v290
        %v380 = vpop.permute.xlu0 %379
        %383 = vset.pattern.permute.xlu0 0
        %384 = vperm.xlu0 %383, %v291
        %v385 = vpop.permute.xlu0 %384
        %388 = vset.pattern.permute.xlu0 0
        %389 = vperm.xlu0 %388, %v292
        %v390 = vpop.permute.xlu0 %389
        %393 = vset.pattern.permute.xlu0 0
        %394 = vperm.xlu0 %393, %v293
        %v395 = vpop.permute.xlu0 %394
        %398 = vset.pattern.permute.xlu0 0
        %399 = vperm.xlu0 %398, %v294
        %v400 = vpop.permute.xlu0 %399
        %403 = vset.pattern.permute.xlu0 0
        %404 = vperm.xlu0 %403, %v295
        %v405 = vpop.permute.xlu0 %404
        %408 = vset.pattern.permute.xlu0 0
        %409 = vperm.xlu0 %408, %v296
        %v410 = vpop.permute.xlu0 %409
        %413 = vset.pattern.permute.xlu0 0
        %414 = vperm.xlu0 %413, %v297
        %v415 = vpop.permute.xlu0 %414
        %418 = vset.pattern.permute.xlu0 0
        %419 = vperm.xlu0 %418, %v298
        %v420 = vpop.permute.xlu0 %419
        %423 = vset.pattern.permute.xlu0 0
        %424 = vperm.xlu0 %423, %v299
        %v425 = vpop.permute.xlu0 %424
        %428 = vset.pattern.permute.xlu0 0
        %429 = vperm.xlu0 %428, %v300
        %v430 = vpop.permute.xlu0 %429
        %433 = vset.pattern.permute.xlu0 0
        %434 = vperm.xlu0 %433, %v301
        %v435 = vpop.permute.xlu0 %434
        %438 = vset.pattern.permute.xlu0 0
        %439 = vperm.xlu0 %438, %v302
        %v440 = vpop.permute.xlu0 %439
        %443 = vset.pattern.permute.xlu0 0
        %444 = vperm.xlu0 %443, %v303
        %v445 = vpop.permute.xlu0 %444
        %448 = vset.pattern.permute.xlu0 0
        %449 = vperm.xlu0 %448, %v304
        %v450 = vpop.permute.xlu0 %449
        %453 = vset.pattern.permute.xlu0 0
        %454 = vperm.xlu0 %453, %v305
        %v455 = vpop.permute.xlu0 %454
        %458 = vset.pattern.permute.xlu0 0
        %459 = vperm.xlu0 %458, %v306
        %v460 = vpop.permute.xlu0 %459
        %463 = vset.pattern.permute.xlu0 0
        %464 = vperm.xlu0 %463, %v307
        %v465 = vpop.permute.xlu0 %464
        %468 = vset.pattern.permute.xlu0 0
        %469 = vperm.xlu0 %468, %v308
        %v470 = vpop.permute.xlu0 %469
        %473 = vset.pattern.permute.xlu0 0
        %474 = vperm.xlu0 %473, %v309
        %v475 = vpop.permute.xlu0 %474
        %478 = vset.pattern.permute.xlu0 0
        %479 = vperm.xlu0 %478, %v310
        %v480 = vpop.permute.xlu0 %479
        %483 = vset.pattern.permute.xlu0 0
        %484 = vperm.xlu0 %483, %v311
        %v485 = vpop.permute.xlu0 %484
        %488 = vset.pattern.permute.xlu0 0
        %489 = vperm.xlu0 %488, %v312
        %v490 = vpop.permute.xlu0 %489
        %493 = vset.pattern.permute.xlu0 0
        %494 = vperm.xlu0 %493, %v313
        %v495 = vpop.permute.xlu0 %494
        %498 = vset.pattern.permute.xlu0 0
        %499 = vperm.xlu0 %498, %v314
        %v500 = vpop.permute.xlu0 %499
        %503 = vset.pattern.permute.xlu0 0
        %504 = vperm.xlu0 %503, %v315
        %v505 = vpop.permute.xlu0 %504
        %508 = vset.pattern.permute.xlu0 0
        %509 = vperm.xlu0 %508, %v316
        %v510 = vpop.permute.xlu0 %509
        %513 = vset.pattern.permute.xlu0 0
        %514 = vperm.xlu0 %513, %v317
        %v515 = vpop.permute.xlu0 %514
        %518 = vset.pattern.permute.xlu0 0
        %519 = vperm.xlu0 %518, %v318
        %v520 = vpop.permute.xlu0 %519
        %523 = vset.pattern.permute.xlu0 0
        %524 = vperm.xlu0 %523, %v319
        %v525 = vpop.permute.xlu0 %524
        %528 = vset.pattern.permute.xlu0 0
        %529 = vperm.xlu0 %528, %v320
        %v530 = vpop.permute.xlu0 %529
        %533 = vset.pattern.permute.xlu0 0
        %534 = vperm.xlu0 %533, %v321
        %v535 = vpop.permute.xlu0 %534
        %538 = vset.pattern.permute.xlu0 0
        %539 = vperm.xlu0 %538, %v322
        %v540 = vpop.permute.xlu0 %539
        %543 = vset.pattern.permute.xlu0 0
        %544 = vperm.xlu0 %543, %v323
        %v545 = vpop.permute.xlu0 %544
        %548 = vset.pattern.permute.xlu0 0
        %549 = vperm.xlu0 %548, %v324
        %v550 = vpop.permute.xlu0 %549
        %553 = vset.pattern.permute.xlu0 0
        %554 = vperm.xlu0 %553, %v325
        %v555 = vpop.permute.xlu0 %554
        %558 = vset.pattern.permute.xlu0 0
        %559 = vperm.xlu0 %558, %v326
        %v560 = vpop.permute.xlu0 %559
        %563 = vset.pattern.permute.xlu0 0
        %564 = vperm.xlu0 %563, %v327
        %v565 = vpop.permute.xlu0 %564
        %568 = vset.pattern.permute.xlu0 0
        %569 = vperm.xlu0 %568, %v328
        %v570 = vpop.permute.xlu0 %569
        %573 = vset.pattern.permute.xlu0 0
        %574 = vperm.xlu0 %573, %v329
        %v575 = vpop.permute.xlu0 %574
        %578 = vset.pattern.permute.xlu0 0
        %579 = vperm.xlu0 %578, %v330
        %v580 = vpop.permute.xlu0 %579
        %583 = vset.pattern.permute.xlu0 0
        %584 = vperm.xlu0 %583, %v331
        %v585 = vpop.permute.xlu0 %584
        %588 = vset.pattern.permute.xlu0 0
        %589 = vperm.xlu0 %588, %v332
        %v590 = vpop.permute.xlu0 %589
        %593 = vset.pattern.permute.xlu0 0
        %594 = vperm.xlu0 %593, %v333
        %v595 = vpop.permute.xlu0 %594
        %598 = vset.pattern.permute.xlu0 0
        %599 = vperm.xlu0 %598, %v334
        %v600 = vpop.permute.xlu0 %599
        %603 = vset.pattern.permute.xlu0 0
        %604 = vperm.xlu0 %603, %v335
        %v605 = vpop.permute.xlu0 %604
        %608 = vset.pattern.permute.xlu0 0
        %609 = vperm.xlu0 %608, %v336
        %v610 = vpop.permute.xlu0 %609
        %613 = vset.pattern.permute.xlu0 0
        %614 = vperm.xlu0 %613, %v337
        %v615 = vpop.permute.xlu0 %614
        %618 = vset.pattern.permute.xlu0 0
        %619 = vperm.xlu0 %618, %v338
        %v620 = vpop.permute.xlu0 %619
        %623 = vset.pattern.permute.xlu0 0
        %624 = vperm.xlu0 %623, %v339
        %v625 = vpop.permute.xlu0 %624
        %628 = vset.pattern.permute.xlu0 0
        %629 = vperm.xlu0 %628, %v340
        %v630 = vpop.permute.xlu0 %629
        %633 = vset.pattern.permute.xlu0 0
        %634 = vperm.xlu0 %633, %v341
        %v635 = vpop.permute.xlu0 %634
        %638 = vset.pattern.permute.xlu0 0
        %639 = vperm.xlu0 %638, %v342
        %v640 = vpop.permute.xlu0 %639
        %643 = vset.pattern.permute.xlu0 0
        %644 = vperm.xlu0 %643, %v343
        %v645 = vpop.permute.xlu0 %644
        %648 = vset.pattern.permute.xlu0 0
        %649 = vperm.xlu0 %648, %v344
        %v650 = vpop.permute.xlu0 %649
        %653 = vset.pattern.permute.xlu0 0
        %654 = vperm.xlu0 %653, %v345
        %v655 = vpop.permute.xlu0 %654
        %658 = vset.pattern.permute.xlu0 0
        %659 = vperm.xlu0 %658, %v346
        %v660 = vpop.permute.xlu0 %659
        %663 = vset.pattern.permute.xlu0 0
        %664 = vperm.xlu0 %663, %v347
        %v665 = vpop.permute.xlu0 %664
        %668 = vset.pattern.permute.xlu0 0
        %669 = vperm.xlu0 %668, %v348
        %v670 = vpop.permute.xlu0 %669
        %673 = vset.pattern.permute.xlu0 0
        %674 = vperm.xlu0 %673, %v349
        %v675 = vpop.permute.xlu0 %674
        %678 = vset.pattern.permute.xlu0 0
        %679 = vperm.xlu0 %678, %v350
        %v680 = vpop.permute.xlu0 %679
        %683 = vset.pattern.permute.xlu0 0
        %684 = vperm.xlu0 %683, %v351
        %v685 = vpop.permute.xlu0 %684
        %688 = vset.pattern.permute.xlu0 0
        %689 = vperm.xlu0 %688, %v352
        %v690 = vpop.permute.xlu0 %689
        %693 = vset.pattern.permute.xlu0 0
        %694 = vperm.xlu0 %693, %v353
        %v695 = vpop.permute.xlu0 %694
        %v697 = vld [vmem:[%s1] sm:$0x1]
        %v699 = vlaneseq
        %v700 = vshrl.u32 %v699, 7
        %v701 = vsub.s32 0, %v700
        %v702 = vrot.slane %v697, %v701
        %v704 = vmul.f32 %v370, %v702
        %v705 = vmul.f32 %v375, %v702
        %v706 = vmul.f32 %v380, %v702
        %v707 = vmul.f32 %v385, %v702
        %v708 = vmul.f32 %v390, %v702
        %v709 = vmul.f32 %v395, %v702
        %v710 = vmul.f32 %v400, %v702
        %v711 = vmul.f32 %v405, %v702
        %v712 = vmul.f32 %v410, %v702
        %v713 = vmul.f32 %v415, %v702
        %v714 = vmul.f32 %v420, %v702
        %v715 = vmul.f32 %v425, %v702
        %v716 = vmul.f32 %v430, %v702
        %v717 = vmul.f32 %v435, %v702
        %v718 = vmul.f32 %v440, %v702
        %v719 = vmul.f32 %v445, %v702
        %v720 = vmul.f32 %v450, %v702
        %v721 = vmul.f32 %v455, %v702
        %v722 = vmul.f32 %v460, %v702
        %v723 = vmul.f32 %v465, %v702
        %v724 = vmul.f32 %v470, %v702
        %v725 = vmul.f32 %v475, %v702
        %v726 = vmul.f32 %v480, %v702
        %v727 = vmul.f32 %v485, %v702
        %v728 = vmul.f32 %v490, %v702
        %v729 = vmul.f32 %v495, %v702
        %v730 = vmul.f32 %v500, %v702
        %v731 = vmul.f32 %v505, %v702
        %v732 = vmul.f32 %v510, %v702
        %v733 = vmul.f32 %v515, %v702
        %v734 = vmul.f32 %v520, %v702
        %v735 = vmul.f32 %v525, %v702
        %v736 = vmul.f32 %v530, %v702
        %v737 = vmul.f32 %v535, %v702
        %v738 = vmul.f32 %v540, %v702
        %v739 = vmul.f32 %v545, %v702
        %v740 = vmul.f32 %v550, %v702
        %v741 = vmul.f32 %v555, %v702
        %v742 = vmul.f32 %v560, %v702
        %v743 = vmul.f32 %v565, %v702
        %v744 = vmul.f32 %v570, %v702
        %v745 = vmul.f32 %v575, %v702
        %v746 = vmul.f32 %v580, %v702
        %v747 = vmul.f32 %v585, %v702
        %v748 = vmul.f32 %v590, %v702
        %v749 = vmul.f32 %v595, %v702
        %v750 = vmul.f32 %v600, %v702
        %v751 = vmul.f32 %v605, %v702
        %v752 = vmul.f32 %v610, %v702
        %v753 = vmul.f32 %v615, %v702
        %v754 = vmul.f32 %v620, %v702
        %v755 = vmul.f32 %v625, %v702
        %v756 = vmul.f32 %v630, %v702
        %v757 = vmul.f32 %v635, %v702
        %v758 = vmul.f32 %v640, %v702
        %v759 = vmul.f32 %v645, %v702
        %v760 = vmul.f32 %v650, %v702
        %v761 = vmul.f32 %v655, %v702
        %v762 = vmul.f32 %v660, %v702
        %v763 = vmul.f32 %v665, %v702
        %v764 = vmul.f32 %v670, %v702
        %v765 = vmul.f32 %v675, %v702
        %v766 = vmul.f32 %v680, %v702
        %v767 = vmul.f32 %v685, %v702
        %v768 = vmul.f32 %v690, %v702
        %v769 = vmul.f32 %v695, %v702
        %v770 = vadd.f32 %v365, %v704
        %v771 = vadd.f32 %v365, %v705
        %v772 = vadd.f32 %v365, %v706
        %v773 = vadd.f32 %v365, %v707
        %v774 = vadd.f32 %v365, %v708
        %v775 = vadd.f32 %v365, %v709
        %v776 = vadd.f32 %v365, %v710
        %v777 = vadd.f32 %v365, %v711
        %v778 = vadd.f32 %v365, %v712
        %v779 = vadd.f32 %v365, %v713
        %v780 = vadd.f32 %v365, %v714
        %v781 = vadd.f32 %v365, %v715
        %v782 = vadd.f32 %v365, %v716
        %v783 = vadd.f32 %v365, %v717
        %v784 = vadd.f32 %v365, %v718
        %v785 = vadd.f32 %v365, %v719
        %v786 = vadd.f32 %v365, %v720
        %v787 = vadd.f32 %v365, %v721
        %v788 = vadd.f32 %v365, %v722
        %v789 = vadd.f32 %v365, %v723
        %v790 = vadd.f32 %v365, %v724
        %v791 = vadd.f32 %v365, %v725
        %v792 = vadd.f32 %v365, %v726
        %v793 = vadd.f32 %v365, %v727
        %v794 = vadd.f32 %v365, %v728
        %v795 = vadd.f32 %v365, %v729
        %v796 = vadd.f32 %v365, %v730
        %v797 = vadd.f32 %v365, %v731
        %v798 = vadd.f32 %v365, %v732
        %v799 = vadd.f32 %v365, %v733
        %v800 = vadd.f32 %v365, %v734
        %v801 = vadd.f32 %v365, %v735
        %v802 = vadd.f32 %v365, %v736
        %v803 = vadd.f32 %v365, %v737
        %v804 = vadd.f32 %v365, %v738
        %v805 = vadd.f32 %v365, %v739
        %v806 = vadd.f32 %v365, %v740
        %v807 = vadd.f32 %v365, %v741
        %v808 = vadd.f32 %v365, %v742
        %v809 = vadd.f32 %v365, %v743
        %v810 = vadd.f32 %v365, %v744
        %v811 = vadd.f32 %v365, %v745
        %v812 = vadd.f32 %v365, %v746
        %v813 = vadd.f32 %v365, %v747
        %v814 = vadd.f32 %v365, %v748
        %v815 = vadd.f32 %v365, %v749
        %v816 = vadd.f32 %v365, %v750
        %v817 = vadd.f32 %v365, %v751
        %v818 = vadd.f32 %v365, %v752
        %v819 = vadd.f32 %v365, %v753
        %v820 = vadd.f32 %v365, %v754
        %v821 = vadd.f32 %v365, %v755
        %v822 = vadd.f32 %v365, %v756
        %v823 = vadd.f32 %v365, %v757
        %v824 = vadd.f32 %v365, %v758
        %v825 = vadd.f32 %v365, %v759
        %v826 = vadd.f32 %v365, %v760
        %v827 = vadd.f32 %v365, %v761
        %v828 = vadd.f32 %v365, %v762
        %v829 = vadd.f32 %v365, %v763
        %v830 = vadd.f32 %v365, %v764
        %v831 = vadd.f32 %v365, %v765
        %v832 = vadd.f32 %v365, %v766
        %v833 = vadd.f32 %v365, %v767
        %v834 = vadd.f32 %v365, %v768
        %v835 = vadd.f32 %v365, %v769
        %s836 = scalar_lea.vmem %s1, 1
        %v837 = vld [vmem:[%s836] sm:$0x1]
        %v839 = vlaneseq
        %v840 = vshrl.u32 %v839, 7
        %v841 = vsub.s32 0, %v840
        %v842 = vrot.slane %v837, %v841
        %v844 = vmul.f32 %v370, %v842
        %v845 = vmul.f32 %v375, %v842
        %v846 = vmul.f32 %v380, %v842
        %v847 = vmul.f32 %v385, %v842
        %v848 = vmul.f32 %v390, %v842
        %v849 = vmul.f32 %v395, %v842
        %v850 = vmul.f32 %v400, %v842
        %v851 = vmul.f32 %v405, %v842
        %v852 = vmul.f32 %v410, %v842
        %v853 = vmul.f32 %v415, %v842
        %v854 = vmul.f32 %v420, %v842
        %v855 = vmul.f32 %v425, %v842
        %v856 = vmul.f32 %v430, %v842
        %v857 = vmul.f32 %v435, %v842
        %v858 = vmul.f32 %v440, %v842
        %v859 = vmul.f32 %v445, %v842
        %v860 = vmul.f32 %v450, %v842
        %v861 = vmul.f32 %v455, %v842
        %v862 = vmul.f32 %v460, %v842
        %v863 = vmul.f32 %v465, %v842
        %v864 = vmul.f32 %v470, %v842
        %v865 = vmul.f32 %v475, %v842
        %v866 = vmul.f32 %v480, %v842
        %v867 = vmul.f32 %v485, %v842
        %v868 = vmul.f32 %v490, %v842
        %v869 = vmul.f32 %v495, %v842
        %v870 = vmul.f32 %v500, %v842
        %v871 = vmul.f32 %v505, %v842
        %v872 = vmul.f32 %v510, %v842
        %v873 = vmul.f32 %v515, %v842
        %v874 = vmul.f32 %v520, %v842
        %v875 = vmul.f32 %v525, %v842
        %v876 = vmul.f32 %v530, %v842
        %v877 = vmul.f32 %v535, %v842
        %v878 = vmul.f32 %v540, %v842
        %v879 = vmul.f32 %v545, %v842
        %v880 = vmul.f32 %v550, %v842
        %v881 = vmul.f32 %v555, %v842
        %v882 = vmul.f32 %v560, %v842
        %v883 = vmul.f32 %v565, %v842
        %v884 = vmul.f32 %v570, %v842
        %v885 = vmul.f32 %v575, %v842
        %v886 = vmul.f32 %v580, %v842
        %v887 = vmul.f32 %v585, %v842
        %v888 = vmul.f32 %v590, %v842
        %v889 = vmul.f32 %v595, %v842
        %v890 = vmul.f32 %v600, %v842
        %v891 = vmul.f32 %v605, %v842
        %v892 = vmul.f32 %v610, %v842
        %v893 = vmul.f32 %v615, %v842
        %v894 = vmul.f32 %v620, %v842
        %v895 = vmul.f32 %v625, %v842
        %v896 = vmul.f32 %v630, %v842
        %v897 = vmul.f32 %v635, %v842
        %v898 = vmul.f32 %v640, %v842
        %v899 = vmul.f32 %v645, %v842
        %v900 = vmul.f32 %v650, %v842
        %v901 = vmul.f32 %v655, %v842
        %v902 = vmul.f32 %v660, %v842
        %v903 = vmul.f32 %v665, %v842
        %v904 = vmul.f32 %v670, %v842
        %v905 = vmul.f32 %v675, %v842
        %v906 = vmul.f32 %v680, %v842
        %v907 = vmul.f32 %v685, %v842
        %v908 = vmul.f32 %v690, %v842
        %v909 = vmul.f32 %v695, %v842
        %vm976 = vcmask 1046528
        %v977 = vrot.slane %v844, 1
        %v978 = vrot.slane %v845, 1
        %v979 = vsel %vm976, %v977, %v978
        %v980 = vrot.slane %v846, 1
        %v981 = vsel %vm976, %v978, %v980
        %v982 = vrot.slane %v847, 1
        %v983 = vsel %vm976, %v980, %v982
        %v984 = vrot.slane %v848, 1
        %v985 = vsel %vm976, %v982, %v984
        %v986 = vrot.slane %v849, 1
        %v987 = vsel %vm976, %v984, %v986
        %v988 = vrot.slane %v850, 1
        %v989 = vsel %vm976, %v986, %v988
        %v990 = vrot.slane %v851, 1
        %v991 = vsel %vm976, %v988, %v990
        %v992 = vrot.slane %v852, 1
        %v993 = vsel %vm976, %v990, %v992
        %v994 = vrot.slane %v853, 1
        %v995 = vsel %vm976, %v992, %v994
        %v996 = vrot.slane %v854, 1
        %v997 = vsel %vm976, %v994, %v996
        %v998 = vrot.slane %v855, 1
        %v999 = vsel %vm976, %v996, %v998
        %v1000 = vrot.slane %v856, 1
        %v1001 = vsel %vm976, %v998, %v1000
        %v1002 = vrot.slane %v857, 1
        %v1003 = vsel %vm976, %v1000, %v1002
        %v1004 = vrot.slane %v858, 1
        %v1005 = vsel %vm976, %v1002, %v1004
        %v1006 = vrot.slane %v859, 1
        %v1007 = vsel %vm976, %v1004, %v1006
        %v1008 = vrot.slane %v860, 1
        %v1009 = vsel %vm976, %v1006, %v1008
        %v1010 = vrot.slane %v861, 1
        %v1011 = vsel %vm976, %v1008, %v1010
        %v1012 = vrot.slane %v862, 1
        %v1013 = vsel %vm976, %v1010, %v1012
        %v1014 = vrot.slane %v863, 1
        %v1015 = vsel %vm976, %v1012, %v1014
        %v1016 = vrot.slane %v864, 1
        %v1017 = vsel %vm976, %v1014, %v1016
        %v1018 = vrot.slane %v865, 1
        %v1019 = vsel %vm976, %v1016, %v1018
        %v1020 = vrot.slane %v866, 1
        %v1021 = vsel %vm976, %v1018, %v1020
        %v1022 = vrot.slane %v867, 1
        %v1023 = vsel %vm976, %v1020, %v1022
        %v1024 = vrot.slane %v868, 1
        %v1025 = vsel %vm976, %v1022, %v1024
        %v1026 = vrot.slane %v869, 1
        %v1027 = vsel %vm976, %v1024, %v1026
        %v1028 = vrot.slane %v870, 1
        %v1029 = vsel %vm976, %v1026, %v1028
        %v1030 = vrot.slane %v871, 1
        %v1031 = vsel %vm976, %v1028, %v1030
        %v1032 = vrot.slane %v872, 1
        %v1033 = vsel %vm976, %v1030, %v1032
        %v1034 = vrot.slane %v873, 1
        %v1035 = vsel %vm976, %v1032, %v1034
        %v1036 = vrot.slane %v874, 1
        %v1037 = vsel %vm976, %v1034, %v1036
        %v1038 = vrot.slane %v875, 1
        %v1039 = vsel %vm976, %v1036, %v1038
        %v1040 = vrot.slane %v876, 1
        %v1041 = vsel %vm976, %v1038, %v1040
        %v1042 = vrot.slane %v877, 1
        %v1043 = vsel %vm976, %v1040, %v1042
        %v1044 = vrot.slane %v878, 1
        %v1045 = vsel %vm976, %v1042, %v1044
        %v1046 = vrot.slane %v879, 1
        %v1047 = vsel %vm976, %v1044, %v1046
        %v1048 = vrot.slane %v880, 1
        %v1049 = vsel %vm976, %v1046, %v1048
        %v1050 = vrot.slane %v881, 1
        %v1051 = vsel %vm976, %v1048, %v1050
        %v1052 = vrot.slane %v882, 1
        %v1053 = vsel %vm976, %v1050, %v1052
        %v1054 = vrot.slane %v883, 1
        %v1055 = vsel %vm976, %v1052, %v1054
        %v1056 = vrot.slane %v884, 1
        %v1057 = vsel %vm976, %v1054, %v1056
        %v1058 = vrot.slane %v885, 1
        %v1059 = vsel %vm976, %v1056, %v1058
        %v1060 = vrot.slane %v886, 1
        %v1061 = vsel %vm976, %v1058, %v1060
        %v1062 = vrot.slane %v887, 1
        %v1063 = vsel %vm976, %v1060, %v1062
        %v1064 = vrot.slane %v888, 1
        %v1065 = vsel %vm976, %v1062, %v1064
        %v1066 = vrot.slane %v889, 1
        %v1067 = vsel %vm976, %v1064, %v1066
        %v1068 = vrot.slane %v890, 1
        %v1069 = vsel %vm976, %v1066, %v1068
        %v1070 = vrot.slane %v891, 1
        %v1071 = vsel %vm976, %v1068, %v1070
        %v1072 = vrot.slane %v892, 1
        %v1073 = vsel %vm976, %v1070, %v1072
        %v1074 = vrot.slane %v893, 1
        %v1075 = vsel %vm976, %v1072, %v1074
        %v1076 = vrot.slane %v894, 1
        %v1077 = vsel %vm976, %v1074, %v1076
        %v1078 = vrot.slane %v895, 1
        %v1079 = vsel %vm976, %v1076, %v1078
        %v1080 = vrot.slane %v896, 1
        %v1081 = vsel %vm976, %v1078, %v1080
        %v1082 = vrot.slane %v897, 1
        %v1083 = vsel %vm976, %v1080, %v1082
        %v1084 = vrot.slane %v898, 1
        %v1085 = vsel %vm976, %v1082, %v1084
        %v1086 = vrot.slane %v899, 1
        %v1087 = vsel %vm976, %v1084, %v1086
        %v1088 = vrot.slane %v900, 1
        %v1089 = vsel %vm976, %v1086, %v1088
        %v1090 = vrot.slane %v901, 1
        %v1091 = vsel %vm976, %v1088, %v1090
        %v1092 = vrot.slane %v902, 1
        %v1093 = vsel %vm976, %v1090, %v1092
        %v1094 = vrot.slane %v903, 1
        %v1095 = vsel %vm976, %v1092, %v1094
        %v1096 = vrot.slane %v904, 1
        %v1097 = vsel %vm976, %v1094, %v1096
        %v1098 = vrot.slane %v905, 1
        %v1099 = vsel %vm976, %v1096, %v1098
        %v1100 = vrot.slane %v906, 1
        %v1101 = vsel %vm976, %v1098, %v1100
        %v1102 = vrot.slane %v907, 1
        %v1103 = vsel %vm976, %v1100, %v1102
        %v1104 = vrot.slane %v908, 1
        %v1105 = vsel %vm976, %v1102, %v1104
        %v1106 = vrot.slane %v909, 1
        %v1107 = vsel %vm976, %v1104, %v1106
        %v1174 = vadd.f32 %v770, %v979
        %v1175 = vadd.f32 %v771, %v981
        %v1176 = vadd.f32 %v772, %v983
        %v1177 = vadd.f32 %v773, %v985
        %v1178 = vadd.f32 %v774, %v987
        %v1179 = vadd.f32 %v775, %v989
        %v1180 = vadd.f32 %v776, %v991
        %v1181 = vadd.f32 %v777, %v993
        %v1182 = vadd.f32 %v778, %v995
        %v1183 = vadd.f32 %v779, %v997
        %v1184 = vadd.f32 %v780, %v999
        %v1185 = vadd.f32 %v781, %v1001
        %v1186 = vadd.f32 %v782, %v1003
        %v1187 = vadd.f32 %v783, %v1005
        %v1188 = vadd.f32 %v784, %v1007
        %v1189 = vadd.f32 %v785, %v1009
        %v1190 = vadd.f32 %v786, %v1011
        %v1191 = vadd.f32 %v787, %v1013
        %v1192 = vadd.f32 %v788, %v1015
        %v1193 = vadd.f32 %v789, %v1017
        %v1194 = vadd.f32 %v790, %v1019
        %v1195 = vadd.f32 %v791, %v1021
        %v1196 = vadd.f32 %v792, %v1023
        %v1197 = vadd.f32 %v793, %v1025
        %v1198 = vadd.f32 %v794, %v1027
        %v1199 = vadd.f32 %v795, %v1029
        %v1200 = vadd.f32 %v796, %v1031
        %v1201 = vadd.f32 %v797, %v1033
        %v1202 = vadd.f32 %v798, %v1035
        %v1203 = vadd.f32 %v799, %v1037
        %v1204 = vadd.f32 %v800, %v1039
        %v1205 = vadd.f32 %v801, %v1041
        %v1206 = vadd.f32 %v802, %v1043
        %v1207 = vadd.f32 %v803, %v1045
        %v1208 = vadd.f32 %v804, %v1047
        %v1209 = vadd.f32 %v805, %v1049
        %v1210 = vadd.f32 %v806, %v1051
        %v1211 = vadd.f32 %v807, %v1053
        %v1212 = vadd.f32 %v808, %v1055
        %v1213 = vadd.f32 %v809, %v1057
        %v1214 = vadd.f32 %v810, %v1059
        %v1215 = vadd.f32 %v811, %v1061
        %v1216 = vadd.f32 %v812, %v1063
        %v1217 = vadd.f32 %v813, %v1065
        %v1218 = vadd.f32 %v814, %v1067
        %v1219 = vadd.f32 %v815, %v1069
        %v1220 = vadd.f32 %v816, %v1071
        %v1221 = vadd.f32 %v817, %v1073
        %v1222 = vadd.f32 %v818, %v1075
        %v1223 = vadd.f32 %v819, %v1077
        %v1224 = vadd.f32 %v820, %v1079
        %v1225 = vadd.f32 %v821, %v1081
        %v1226 = vadd.f32 %v822, %v1083
        %v1227 = vadd.f32 %v823, %v1085
        %v1228 = vadd.f32 %v824, %v1087
        %v1229 = vadd.f32 %v825, %v1089
        %v1230 = vadd.f32 %v826, %v1091
        %v1231 = vadd.f32 %v827, %v1093
        %v1232 = vadd.f32 %v828, %v1095
        %v1233 = vadd.f32 %v829, %v1097
        %v1234 = vadd.f32 %v830, %v1099
        %v1235 = vadd.f32 %v831, %v1101
        %v1236 = vadd.f32 %v832, %v1103
        %v1237 = vadd.f32 %v833, %v1105
        %v1238 = vadd.f32 %v834, %v1107
        %v1239 = vadd.f32 %v835, %v1106
        %s1240 = scalar_lea.vmem %s1, 2
        %v1241 = vld [vmem:[%s1240] sm:$0x1]
        %v1243 = vlaneseq
        %v1244 = vshrl.u32 %v1243, 7
        %v1245 = vsub.s32 0, %v1244
        %v1246 = vrot.slane %v1241, %v1245
        %v1248 = vmul.f32 %v370, %v1246
        %v1249 = vmul.f32 %v375, %v1246
        %v1250 = vmul.f32 %v380, %v1246
        %v1251 = vmul.f32 %v385, %v1246
        %v1252 = vmul.f32 %v390, %v1246
        %v1253 = vmul.f32 %v395, %v1246
        %v1254 = vmul.f32 %v400, %v1246
        %v1255 = vmul.f32 %v405, %v1246
        %v1256 = vmul.f32 %v410, %v1246
        %v1257 = vmul.f32 %v415, %v1246
        %v1258 = vmul.f32 %v420, %v1246
        %v1259 = vmul.f32 %v425, %v1246
        %v1260 = vmul.f32 %v430, %v1246
        %v1261 = vmul.f32 %v435, %v1246
        %v1262 = vmul.f32 %v440, %v1246
        %v1263 = vmul.f32 %v445, %v1246
        %v1264 = vmul.f32 %v450, %v1246
        %v1265 = vmul.f32 %v455, %v1246
        %v1266 = vmul.f32 %v460, %v1246
        %v1267 = vmul.f32 %v465, %v1246
        %v1268 = vmul.f32 %v470, %v1246
        %v1269 = vmul.f32 %v475, %v1246
        %v1270 = vmul.f32 %v480, %v1246
        %v1271 = vmul.f32 %v485, %v1246
        %v1272 = vmul.f32 %v490, %v1246
        %v1273 = vmul.f32 %v495, %v1246
        %v1274 = vmul.f32 %v500, %v1246
        %v1275 = vmul.f32 %v505, %v1246
        %v1276 = vmul.f32 %v510, %v1246
        %v1277 = vmul.f32 %v515, %v1246
        %v1278 = vmul.f32 %v520, %v1246
        %v1279 = vmul.f32 %v525, %v1246
        %v1280 = vmul.f32 %v530, %v1246
        %v1281 = vmul.f32 %v535, %v1246
        %v1282 = vmul.f32 %v540, %v1246
        %v1283 = vmul.f32 %v545, %v1246
        %v1284 = vmul.f32 %v550, %v1246
        %v1285 = vmul.f32 %v555, %v1246
        %v1286 = vmul.f32 %v560, %v1246
        %v1287 = vmul.f32 %v565, %v1246
        %v1288 = vmul.f32 %v570, %v1246
        %v1289 = vmul.f32 %v575, %v1246
        %v1290 = vmul.f32 %v580, %v1246
        %v1291 = vmul.f32 %v585, %v1246
        %v1292 = vmul.f32 %v590, %v1246
        %v1293 = vmul.f32 %v595, %v1246
        %v1294 = vmul.f32 %v600, %v1246
        %v1295 = vmul.f32 %v605, %v1246
        %v1296 = vmul.f32 %v610, %v1246
        %v1297 = vmul.f32 %v615, %v1246
        %v1298 = vmul.f32 %v620, %v1246
        %v1299 = vmul.f32 %v625, %v1246
        %v1300 = vmul.f32 %v630, %v1246
        %v1301 = vmul.f32 %v635, %v1246
        %v1302 = vmul.f32 %v640, %v1246
        %v1303 = vmul.f32 %v645, %v1246
        %v1304 = vmul.f32 %v650, %v1246
        %v1305 = vmul.f32 %v655, %v1246
        %v1306 = vmul.f32 %v660, %v1246
        %v1307 = vmul.f32 %v665, %v1246
        %v1308 = vmul.f32 %v670, %v1246
        %v1309 = vmul.f32 %v675, %v1246
        %v1310 = vmul.f32 %v680, %v1246
        %v1311 = vmul.f32 %v685, %v1246
        %v1312 = vmul.f32 %v690, %v1246
        %v1313 = vmul.f32 %v695, %v1246
        %vm1380 = vcmask 1045504
        %v1381 = vrot.slane %v1248, 2
        %v1382 = vrot.slane %v1249, 2
        %v1383 = vsel %vm1380, %v1381, %v1382
        %v1384 = vrot.slane %v1250, 2
        %v1385 = vsel %vm1380, %v1382, %v1384
        %v1386 = vrot.slane %v1251, 2
        %v1387 = vsel %vm1380, %v1384, %v1386
        %v1388 = vrot.slane %v1252, 2
        %v1389 = vsel %vm1380, %v1386, %v1388
        %v1390 = vrot.slane %v1253, 2
        %v1391 = vsel %vm1380, %v1388, %v1390
        %v1392 = vrot.slane %v1254, 2
        %v1393 = vsel %vm1380, %v1390, %v1392
        %v1394 = vrot.slane %v1255, 2
        %v1395 = vsel %vm1380, %v1392, %v1394
        %v1396 = vrot.slane %v1256, 2
        %v1397 = vsel %vm1380, %v1394, %v1396
        %v1398 = vrot.slane %v1257, 2
        %v1399 = vsel %vm1380, %v1396, %v1398
        %v1400 = vrot.slane %v1258, 2
        %v1401 = vsel %vm1380, %v1398, %v1400
        %v1402 = vrot.slane %v1259, 2
        %v1403 = vsel %vm1380, %v1400, %v1402
        %v1404 = vrot.slane %v1260, 2
        %v1405 = vsel %vm1380, %v1402, %v1404
        %v1406 = vrot.slane %v1261, 2
        %v1407 = vsel %vm1380, %v1404, %v1406
        %v1408 = vrot.slane %v1262, 2
        %v1409 = vsel %vm1380, %v1406, %v1408
        %v1410 = vrot.slane %v1263, 2
        %v1411 = vsel %vm1380, %v1408, %v1410
        %v1412 = vrot.slane %v1264, 2
        %v1413 = vsel %vm1380, %v1410, %v1412
        %v1414 = vrot.slane %v1265, 2
        %v1415 = vsel %vm1380, %v1412, %v1414
        %v1416 = vrot.slane %v1266, 2
        %v1417 = vsel %vm1380, %v1414, %v1416
        %v1418 = vrot.slane %v1267, 2
        %v1419 = vsel %vm1380, %v1416, %v1418
        %v1420 = vrot.slane %v1268, 2
        %v1421 = vsel %vm1380, %v1418, %v1420
        %v1422 = vrot.slane %v1269, 2
        %v1423 = vsel %vm1380, %v1420, %v1422
        %v1424 = vrot.slane %v1270, 2
        %v1425 = vsel %vm1380, %v1422, %v1424
        %v1426 = vrot.slane %v1271, 2
        %v1427 = vsel %vm1380, %v1424, %v1426
        %v1428 = vrot.slane %v1272, 2
        %v1429 = vsel %vm1380, %v1426, %v1428
        %v1430 = vrot.slane %v1273, 2
        %v1431 = vsel %vm1380, %v1428, %v1430
        %v1432 = vrot.slane %v1274, 2
        %v1433 = vsel %vm1380, %v1430, %v1432
        %v1434 = vrot.slane %v1275, 2
        %v1435 = vsel %vm1380, %v1432, %v1434
        %v1436 = vrot.slane %v1276, 2
        %v1437 = vsel %vm1380, %v1434, %v1436
        %v1438 = vrot.slane %v1277, 2
        %v1439 = vsel %vm1380, %v1436, %v1438
        %v1440 = vrot.slane %v1278, 2
        %v1441 = vsel %vm1380, %v1438, %v1440
        %v1442 = vrot.slane %v1279, 2
        %v1443 = vsel %vm1380, %v1440, %v1442
        %v1444 = vrot.slane %v1280, 2
        %v1445 = vsel %vm1380, %v1442, %v1444
        %v1446 = vrot.slane %v1281, 2
        %v1447 = vsel %vm1380, %v1444, %v1446
        %v1448 = vrot.slane %v1282, 2
        %v1449 = vsel %vm1380, %v1446, %v1448
        %v1450 = vrot.slane %v1283, 2
        %v1451 = vsel %vm1380, %v1448, %v1450
        %v1452 = vrot.slane %v1284, 2
        %v1453 = vsel %vm1380, %v1450, %v1452
        %v1454 = vrot.slane %v1285, 2
        %v1455 = vsel %vm1380, %v1452, %v1454
        %v1456 = vrot.slane %v1286, 2
        %v1457 = vsel %vm1380, %v1454, %v1456
        %v1458 = vrot.slane %v1287, 2
        %v1459 = vsel %vm1380, %v1456, %v1458
        %v1460 = vrot.slane %v1288, 2
        %v1461 = vsel %vm1380, %v1458, %v1460
        %v1462 = vrot.slane %v1289, 2
        %v1463 = vsel %vm1380, %v1460, %v1462
        %v1464 = vrot.slane %v1290, 2
        %v1465 = vsel %vm1380, %v1462, %v1464
        %v1466 = vrot.slane %v1291, 2
        %v1467 = vsel %vm1380, %v1464, %v1466
        %v1468 = vrot.slane %v1292, 2
        %v1469 = vsel %vm1380, %v1466, %v1468
        %v1470 = vrot.slane %v1293, 2
        %v1471 = vsel %vm1380, %v1468, %v1470
        %v1472 = vrot.slane %v1294, 2
        %v1473 = vsel %vm1380, %v1470, %v1472
        %v1474 = vrot.slane %v1295, 2
        %v1475 = vsel %vm1380, %v1472, %v1474
        %v1476 = vrot.slane %v1296, 2
        %v1477 = vsel %vm1380, %v1474, %v1476
        %v1478 = vrot.slane %v1297, 2
        %v1479 = vsel %vm1380, %v1476, %v1478
        %v1480 = vrot.slane %v1298, 2
        %v1481 = vsel %vm1380, %v1478, %v1480
        %v1482 = vrot.slane %v1299, 2
        %v1483 = vsel %vm1380, %v1480, %v1482
        %v1484 = vrot.slane %v1300, 2
        %v1485 = vsel %vm1380, %v1482, %v1484
        %v1486 = vrot.slane %v1301, 2
        %v1487 = vsel %vm1380, %v1484, %v1486
        %v1488 = vrot.slane %v1302, 2
        %v1489 = vsel %vm1380, %v1486, %v1488
        %v1490 = vrot.slane %v1303, 2
        %v1491 = vsel %vm1380, %v1488, %v1490
        %v1492 = vrot.slane %v1304, 2
        %v1493 = vsel %vm1380, %v1490, %v1492
        %v1494 = vrot.slane %v1305, 2
        %v1495 = vsel %vm1380, %v1492, %v1494
        %v1496 = vrot.slane %v1306, 2
        %v1497 = vsel %vm1380, %v1494, %v1496
        %v1498 = vrot.slane %v1307, 2
        %v1499 = vsel %vm1380, %v1496, %v1498
        %v1500 = vrot.slane %v1308, 2
        %v1501 = vsel %vm1380, %v1498, %v1500
        %v1502 = vrot.slane %v1309, 2
        %v1503 = vsel %vm1380, %v1500, %v1502
        %v1504 = vrot.slane %v1310, 2
        %v1505 = vsel %vm1380, %v1502, %v1504
        %v1506 = vrot.slane %v1311, 2
        %v1507 = vsel %vm1380, %v1504, %v1506
        %v1508 = vrot.slane %v1312, 2
        %v1509 = vsel %vm1380, %v1506, %v1508
        %v1510 = vrot.slane %v1313, 2
        %v1511 = vsel %vm1380, %v1508, %v1510
        %v1578 = vadd.f32 %v1174, %v1383
        %v1579 = vadd.f32 %v1175, %v1385
        %v1580 = vadd.f32 %v1176, %v1387
        %v1581 = vadd.f32 %v1177, %v1389
        %v1582 = vadd.f32 %v1178, %v1391
        %v1583 = vadd.f32 %v1179, %v1393
        %v1584 = vadd.f32 %v1180, %v1395
        %v1585 = vadd.f32 %v1181, %v1397
        %v1586 = vadd.f32 %v1182, %v1399
        %v1587 = vadd.f32 %v1183, %v1401
        %v1588 = vadd.f32 %v1184, %v1403
        %v1589 = vadd.f32 %v1185, %v1405
        %v1590 = vadd.f32 %v1186, %v1407
        %v1591 = vadd.f32 %v1187, %v1409
        %v1592 = vadd.f32 %v1188, %v1411
        %v1593 = vadd.f32 %v1189, %v1413
        %v1594 = vadd.f32 %v1190, %v1415
        %v1595 = vadd.f32 %v1191, %v1417
        %v1596 = vadd.f32 %v1192, %v1419
        %v1597 = vadd.f32 %v1193, %v1421
        %v1598 = vadd.f32 %v1194, %v1423
        %v1599 = vadd.f32 %v1195, %v1425
        %v1600 = vadd.f32 %v1196, %v1427
        %v1601 = vadd.f32 %v1197, %v1429
        %v1602 = vadd.f32 %v1198, %v1431
        %v1603 = vadd.f32 %v1199, %v1433
        %v1604 = vadd.f32 %v1200, %v1435
        %v1605 = vadd.f32 %v1201, %v1437
        %v1606 = vadd.f32 %v1202, %v1439
        %v1607 = vadd.f32 %v1203, %v1441
        %v1608 = vadd.f32 %v1204, %v1443
        %v1609 = vadd.f32 %v1205, %v1445
        %v1610 = vadd.f32 %v1206, %v1447
        %v1611 = vadd.f32 %v1207, %v1449
        %v1612 = vadd.f32 %v1208, %v1451
        %v1613 = vadd.f32 %v1209, %v1453
        %v1614 = vadd.f32 %v1210, %v1455
        %v1615 = vadd.f32 %v1211, %v1457
        %v1616 = vadd.f32 %v1212, %v1459
        %v1617 = vadd.f32 %v1213, %v1461
        %v1618 = vadd.f32 %v1214, %v1463
        %v1619 = vadd.f32 %v1215, %v1465
        %v1620 = vadd.f32 %v1216, %v1467
        %v1621 = vadd.f32 %v1217, %v1469
        %v1622 = vadd.f32 %v1218, %v1471
        %v1623 = vadd.f32 %v1219, %v1473
        %v1624 = vadd.f32 %v1220, %v1475
        %v1625 = vadd.f32 %v1221, %v1477
        %v1626 = vadd.f32 %v1222, %v1479
        %v1627 = vadd.f32 %v1223, %v1481
        %v1628 = vadd.f32 %v1224, %v1483
        %v1629 = vadd.f32 %v1225, %v1485
        %v1630 = vadd.f32 %v1226, %v1487
        %v1631 = vadd.f32 %v1227, %v1489
        %v1632 = vadd.f32 %v1228, %v1491
        %v1633 = vadd.f32 %v1229, %v1493
        %v1634 = vadd.f32 %v1230, %v1495
        %v1635 = vadd.f32 %v1231, %v1497
        %v1636 = vadd.f32 %v1232, %v1499
        %v1637 = vadd.f32 %v1233, %v1501
        %v1638 = vadd.f32 %v1234, %v1503
        %v1639 = vadd.f32 %v1235, %v1505
        %v1640 = vadd.f32 %v1236, %v1507
        %v1641 = vadd.f32 %v1237, %v1509
        %v1642 = vadd.f32 %v1238, %v1511
        %v1643 = vadd.f32 %v1239, %v1510
        %1645 = vset.pattern.permute.xlu0 0
        %1646 = vperm.xlu0 %1645, %v354
        %v1647 = vpop.permute.xlu0 %1646
        %1650 = vset.pattern.permute.xlu0 0
        %1651 = vperm.xlu0 %1650, %v355
        %v1652 = vpop.permute.xlu0 %1651
        %1655 = vset.pattern.permute.xlu0 0
        %1656 = vperm.xlu0 %1655, %v356
        %v1657 = vpop.permute.xlu0 %1656
        %s1659 = scalar_lea.vmem %s1, 3
        %v1660 = vld [vmem:[%s1659] sm:$0x1]
        %v1662 = vlaneseq
        %v1663 = vshrl.u32 %v1662, 7
        %v1664 = vsub.s32 0, %v1663
        %v1665 = vrot.slane %v1660, %v1664
        %v1667 = vmul.f32 %v385, %v1665
        %v1668 = vmul.f32 %v390, %v1665
        %v1669 = vmul.f32 %v395, %v1665
        %v1670 = vmul.f32 %v400, %v1665
        %v1671 = vmul.f32 %v405, %v1665
        %v1672 = vmul.f32 %v410, %v1665
        %v1673 = vmul.f32 %v415, %v1665
        %v1674 = vmul.f32 %v420, %v1665
        %v1675 = vmul.f32 %v425, %v1665
        %v1676 = vmul.f32 %v430, %v1665
        %v1677 = vmul.f32 %v435, %v1665
        %v1678 = vmul.f32 %v440, %v1665
        %v1679 = vmul.f32 %v445, %v1665
        %v1680 = vmul.f32 %v450, %v1665
        %v1681 = vmul.f32 %v455, %v1665
        %v1682 = vmul.f32 %v460, %v1665
        %v1683 = vmul.f32 %v465, %v1665
        %v1684 = vmul.f32 %v470, %v1665
        %v1685 = vmul.f32 %v475, %v1665
        %v1686 = vmul.f32 %v480, %v1665
        %v1687 = vmul.f32 %v485, %v1665
        %v1688 = vmul.f32 %v490, %v1665
        %v1689 = vmul.f32 %v495, %v1665
        %v1690 = vmul.f32 %v500, %v1665
        %v1691 = vmul.f32 %v505, %v1665
        %v1692 = vmul.f32 %v510, %v1665
        %v1693 = vmul.f32 %v515, %v1665
        %v1694 = vmul.f32 %v520, %v1665
        %v1695 = vmul.f32 %v525, %v1665
        %v1696 = vmul.f32 %v530, %v1665
        %v1697 = vmul.f32 %v535, %v1665
        %v1698 = vmul.f32 %v540, %v1665
        %v1699 = vmul.f32 %v545, %v1665
        %v1700 = vmul.f32 %v550, %v1665
        %v1701 = vmul.f32 %v555, %v1665
        %v1702 = vmul.f32 %v560, %v1665
        %v1703 = vmul.f32 %v565, %v1665
        %v1704 = vmul.f32 %v570, %v1665
        %v1705 = vmul.f32 %v575, %v1665
        %v1706 = vmul.f32 %v580, %v1665
        %v1707 = vmul.f32 %v585, %v1665
        %v1708 = vmul.f32 %v590, %v1665
        %v1709 = vmul.f32 %v595, %v1665
        %v1710 = vmul.f32 %v600, %v1665
        %v1711 = vmul.f32 %v605, %v1665
        %v1712 = vmul.f32 %v610, %v1665
        %v1713 = vmul.f32 %v615, %v1665
        %v1714 = vmul.f32 %v620, %v1665
        %v1715 = vmul.f32 %v625, %v1665
        %v1716 = vmul.f32 %v630, %v1665
        %v1717 = vmul.f32 %v635, %v1665
        %v1718 = vmul.f32 %v640, %v1665
        %v1719 = vmul.f32 %v645, %v1665
        %v1720 = vmul.f32 %v650, %v1665
        %v1721 = vmul.f32 %v655, %v1665
        %v1722 = vmul.f32 %v660, %v1665
        %v1723 = vmul.f32 %v665, %v1665
        %v1724 = vmul.f32 %v670, %v1665
        %v1725 = vmul.f32 %v675, %v1665
        %v1726 = vmul.f32 %v680, %v1665
        %v1727 = vmul.f32 %v685, %v1665
        %v1728 = vmul.f32 %v690, %v1665
        %v1729 = vmul.f32 %v695, %v1665
        %v1730 = vmul.f32 %v1647, %v1665
        %v1731 = vmul.f32 %v1652, %v1665
        %v1732 = vmul.f32 %v1657, %v1665
        %v1733 = vadd.f32 %v1578, %v1667
        %v1734 = vadd.f32 %v1579, %v1668
        %v1735 = vadd.f32 %v1580, %v1669
        %v1736 = vadd.f32 %v1581, %v1670
        %v1737 = vadd.f32 %v1582, %v1671
        %v1738 = vadd.f32 %v1583, %v1672
        %v1739 = vadd.f32 %v1584, %v1673
        %v1740 = vadd.f32 %v1585, %v1674
        %v1741 = vadd.f32 %v1586, %v1675
        %v1742 = vadd.f32 %v1587, %v1676
        %v1743 = vadd.f32 %v1588, %v1677
        %v1744 = vadd.f32 %v1589, %v1678
        %v1745 = vadd.f32 %v1590, %v1679
        %v1746 = vadd.f32 %v1591, %v1680
        %v1747 = vadd.f32 %v1592, %v1681
        %v1748 = vadd.f32 %v1593, %v1682
        %v1749 = vadd.f32 %v1594, %v1683
        %v1750 = vadd.f32 %v1595, %v1684
        %v1751 = vadd.f32 %v1596, %v1685
        %v1752 = vadd.f32 %v1597, %v1686
        %v1753 = vadd.f32 %v1598, %v1687
        %v1754 = vadd.f32 %v1599, %v1688
        %v1755 = vadd.f32 %v1600, %v1689
        %v1756 = vadd.f32 %v1601, %v1690
        %v1757 = vadd.f32 %v1602, %v1691
        %v1758 = vadd.f32 %v1603, %v1692
        %v1759 = vadd.f32 %v1604, %v1693
        %v1760 = vadd.f32 %v1605, %v1694
        %v1761 = vadd.f32 %v1606, %v1695
        %v1762 = vadd.f32 %v1607, %v1696
        %v1763 = vadd.f32 %v1608, %v1697
        %v1764 = vadd.f32 %v1609, %v1698
        %v1765 = vadd.f32 %v1610, %v1699
        %v1766 = vadd.f32 %v1611, %v1700
        %v1767 = vadd.f32 %v1612, %v1701
        %v1768 = vadd.f32 %v1613, %v1702
        %v1769 = vadd.f32 %v1614, %v1703
        %v1770 = vadd.f32 %v1615, %v1704
        %v1771 = vadd.f32 %v1616, %v1705
        %v1772 = vadd.f32 %v1617, %v1706
        %v1773 = vadd.f32 %v1618, %v1707
        %v1774 = vadd.f32 %v1619, %v1708
        %v1775 = vadd.f32 %v1620, %v1709
        %v1776 = vadd.f32 %v1621, %v1710
        %v1777 = vadd.f32 %v1622, %v1711
        %v1778 = vadd.f32 %v1623, %v1712
        %v1779 = vadd.f32 %v1624, %v1713
        %v1780 = vadd.f32 %v1625, %v1714
        %v1781 = vadd.f32 %v1626, %v1715
        %v1782 = vadd.f32 %v1627, %v1716
        %v1783 = vadd.f32 %v1628, %v1717
        %v1784 = vadd.f32 %v1629, %v1718
        %v1785 = vadd.f32 %v1630, %v1719
        %v1786 = vadd.f32 %v1631, %v1720
        %v1787 = vadd.f32 %v1632, %v1721
        %v1788 = vadd.f32 %v1633, %v1722
        %v1789 = vadd.f32 %v1634, %v1723
        %v1790 = vadd.f32 %v1635, %v1724
        %v1791 = vadd.f32 %v1636, %v1725
        %v1792 = vadd.f32 %v1637, %v1726
        %v1793 = vadd.f32 %v1638, %v1727
        %v1794 = vadd.f32 %v1639, %v1728
        %v1795 = vadd.f32 %v1640, %v1729
        %v1796 = vadd.f32 %v1641, %v1730
        %v1797 = vadd.f32 %v1642, %v1731
        %v1798 = vadd.f32 %v1643, %v1732
        %s1799 = scalar_lea.vmem %s1, 4
        %v1800 = vld [vmem:[%s1799] sm:$0x1]
        %v1802 = vlaneseq
        %v1803 = vshrl.u32 %v1802, 7
        %v1804 = vsub.s32 0, %v1803
        %v1805 = vrot.slane %v1800, %v1804
        %v1807 = vmul.f32 %v385, %v1805
        %v1808 = vmul.f32 %v390, %v1805
        %v1809 = vmul.f32 %v395, %v1805
        %v1810 = vmul.f32 %v400, %v1805
        %v1811 = vmul.f32 %v405, %v1805
        %v1812 = vmul.f32 %v410, %v1805
        %v1813 = vmul.f32 %v415, %v1805
        %v1814 = vmul.f32 %v420, %v1805
        %v1815 = vmul.f32 %v425, %v1805
        %v1816 = vmul.f32 %v430, %v1805
        %v1817 = vmul.f32 %v435, %v1805
        %v1818 = vmul.f32 %v440, %v1805
        %v1819 = vmul.f32 %v445, %v1805
        %v1820 = vmul.f32 %v450, %v1805
        %v1821 = vmul.f32 %v455, %v1805
        %v1822 = vmul.f32 %v460, %v1805
        %v1823 = vmul.f32 %v465, %v1805
        %v1824 = vmul.f32 %v470, %v1805
        %v1825 = vmul.f32 %v475, %v1805
        %v1826 = vmul.f32 %v480, %v1805
        %v1827 = vmul.f32 %v485, %v1805
        %v1828 = vmul.f32 %v490, %v1805
        %v1829 = vmul.f32 %v495, %v1805
        %v1830 = vmul.f32 %v500, %v1805
        %v1831 = vmul.f32 %v505, %v1805
        %v1832 = vmul.f32 %v510, %v1805
        %v1833 = vmul.f32 %v515, %v1805
        %v1834 = vmul.f32 %v520, %v1805
        %v1835 = vmul.f32 %v525, %v1805
        %v1836 = vmul.f32 %v530, %v1805
        %v1837 = vmul.f32 %v535, %v1805
        %v1838 = vmul.f32 %v540, %v1805
        %v1839 = vmul.f32 %v545, %v1805
        %v1840 = vmul.f32 %v550, %v1805
        %v1841 = vmul.f32 %v555, %v1805
        %v1842 = vmul.f32 %v560, %v1805
        %v1843 = vmul.f32 %v565, %v1805
        %v1844 = vmul.f32 %v570, %v1805
        %v1845 = vmul.f32 %v575, %v1805
        %v1846 = vmul.f32 %v580, %v1805
        %v1847 = vmul.f32 %v585, %v1805
        %v1848 = vmul.f32 %v590, %v1805
        %v1849 = vmul.f32 %v595, %v1805
        %v1850 = vmul.f32 %v600, %v1805
        %v1851 = vmul.f32 %v605, %v1805
        %v1852 = vmul.f32 %v610, %v1805
        %v1853 = vmul.f32 %v615, %v1805
        %v1854 = vmul.f32 %v620, %v1805
        %v1855 = vmul.f32 %v625, %v1805
        %v1856 = vmul.f32 %v630, %v1805
        %v1857 = vmul.f32 %v635, %v1805
        %v1858 = vmul.f32 %v640, %v1805
        %v1859 = vmul.f32 %v645, %v1805
        %v1860 = vmul.f32 %v650, %v1805
        %v1861 = vmul.f32 %v655, %v1805
        %v1862 = vmul.f32 %v660, %v1805
        %v1863 = vmul.f32 %v665, %v1805
        %v1864 = vmul.f32 %v670, %v1805
        %v1865 = vmul.f32 %v675, %v1805
        %v1866 = vmul.f32 %v680, %v1805
        %v1867 = vmul.f32 %v685, %v1805
        %v1868 = vmul.f32 %v690, %v1805
        %v1869 = vmul.f32 %v695, %v1805
        %v1870 = vmul.f32 %v1647, %v1805
        %v1871 = vmul.f32 %v1652, %v1805
        %v1872 = vmul.f32 %v1657, %v1805
        %v1939 = vrot.slane %v1807, 1
        %v1940 = vrot.slane %v1808, 1
        %v1941 = vsel %vm976, %v1939, %v1940
        %v1942 = vrot.slane %v1809, 1
        %v1943 = vsel %vm976, %v1940, %v1942
        %v1944 = vrot.slane %v1810, 1
        %v1945 = vsel %vm976, %v1942, %v1944
        %v1946 = vrot.slane %v1811, 1
        %v1947 = vsel %vm976, %v1944, %v1946
        %v1948 = vrot.slane %v1812, 1
        %v1949 = vsel %vm976, %v1946, %v1948
        %v1950 = vrot.slane %v1813, 1
        %v1951 = vsel %vm976, %v1948, %v1950
        %v1952 = vrot.slane %v1814, 1
        %v1953 = vsel %vm976, %v1950, %v1952
        %v1954 = vrot.slane %v1815, 1
        %v1955 = vsel %vm976, %v1952, %v1954
        %v1956 = vrot.slane %v1816, 1
        %v1957 = vsel %vm976, %v1954, %v1956
        %v1958 = vrot.slane %v1817, 1
        %v1959 = vsel %vm976, %v1956, %v1958
        %v1960 = vrot.slane %v1818, 1
        %v1961 = vsel %vm976, %v1958, %v1960
        %v1962 = vrot.slane %v1819, 1
        %v1963 = vsel %vm976, %v1960, %v1962
        %v1964 = vrot.slane %v1820, 1
        %v1965 = vsel %vm976, %v1962, %v1964
        %v1966 = vrot.slane %v1821, 1
        %v1967 = vsel %vm976, %v1964, %v1966
        %v1968 = vrot.slane %v1822, 1
        %v1969 = vsel %vm976, %v1966, %v1968
        %v1970 = vrot.slane %v1823, 1
        %v1971 = vsel %vm976, %v1968, %v1970
        %v1972 = vrot.slane %v1824, 1
        %v1973 = vsel %vm976, %v1970, %v1972
        %v1974 = vrot.slane %v1825, 1
        %v1975 = vsel %vm976, %v1972, %v1974
        %v1976 = vrot.slane %v1826, 1
        %v1977 = vsel %vm976, %v1974, %v1976
        %v1978 = vrot.slane %v1827, 1
        %v1979 = vsel %vm976, %v1976, %v1978
        %v1980 = vrot.slane %v1828, 1
        %v1981 = vsel %vm976, %v1978, %v1980
        %v1982 = vrot.slane %v1829, 1
        %v1983 = vsel %vm976, %v1980, %v1982
        %v1984 = vrot.slane %v1830, 1
        %v1985 = vsel %vm976, %v1982, %v1984
        %v1986 = vrot.slane %v1831, 1
        %v1987 = vsel %vm976, %v1984, %v1986
        %v1988 = vrot.slane %v1832, 1
        %v1989 = vsel %vm976, %v1986, %v1988
        %v1990 = vrot.slane %v1833, 1
        %v1991 = vsel %vm976, %v1988, %v1990
        %v1992 = vrot.slane %v1834, 1
        %v1993 = vsel %vm976, %v1990, %v1992
        %v1994 = vrot.slane %v1835, 1
        %v1995 = vsel %vm976, %v1992, %v1994
        %v1996 = vrot.slane %v1836, 1
        %v1997 = vsel %vm976, %v1994, %v1996
        %v1998 = vrot.slane %v1837, 1
        %v1999 = vsel %vm976, %v1996, %v1998
        %v2000 = vrot.slane %v1838, 1
        %v2001 = vsel %vm976, %v1998, %v2000
        %v2002 = vrot.slane %v1839, 1
        %v2003 = vsel %vm976, %v2000, %v2002
        %v2004 = vrot.slane %v1840, 1
        %v2005 = vsel %vm976, %v2002, %v2004
        %v2006 = vrot.slane %v1841, 1
        %v2007 = vsel %vm976, %v2004, %v2006
        %v2008 = vrot.slane %v1842, 1
        %v2009 = vsel %vm976, %v2006, %v2008
        %v2010 = vrot.slane %v1843, 1
        %v2011 = vsel %vm976, %v2008, %v2010
        %v2012 = vrot.slane %v1844, 1
        %v2013 = vsel %vm976, %v2010, %v2012
        %v2014 = vrot.slane %v1845, 1
        %v2015 = vsel %vm976, %v2012, %v2014
        %v2016 = vrot.slane %v1846, 1
        %v2017 = vsel %vm976, %v2014, %v2016
        %v2018 = vrot.slane %v1847, 1
        %v2019 = vsel %vm976, %v2016, %v2018
        %v2020 = vrot.slane %v1848, 1
        %v2021 = vsel %vm976, %v2018, %v2020
        %v2022 = vrot.slane %v1849, 1
        %v2023 = vsel %vm976, %v2020, %v2022
        %v2024 = vrot.slane %v1850, 1
        %v2025 = vsel %vm976, %v2022, %v2024
        %v2026 = vrot.slane %v1851, 1
        %v2027 = vsel %vm976, %v2024, %v2026
        %v2028 = vrot.slane %v1852, 1
        %v2029 = vsel %vm976, %v2026, %v2028
        %v2030 = vrot.slane %v1853, 1
        %v2031 = vsel %vm976, %v2028, %v2030
        %v2032 = vrot.slane %v1854, 1
        %v2033 = vsel %vm976, %v2030, %v2032
        %v2034 = vrot.slane %v1855, 1
        %v2035 = vsel %vm976, %v2032, %v2034
        %v2036 = vrot.slane %v1856, 1
        %v2037 = vsel %vm976, %v2034, %v2036
        %v2038 = vrot.slane %v1857, 1
        %v2039 = vsel %vm976, %v2036, %v2038
        %v2040 = vrot.slane %v1858, 1
        %v2041 = vsel %vm976, %v2038, %v2040
        %v2042 = vrot.slane %v1859, 1
        %v2043 = vsel %vm976, %v2040, %v2042
        %v2044 = vrot.slane %v1860, 1
        %v2045 = vsel %vm976, %v2042, %v2044
        %v2046 = vrot.slane %v1861, 1
        %v2047 = vsel %vm976, %v2044, %v2046
        %v2048 = vrot.slane %v1862, 1
        %v2049 = vsel %vm976, %v2046, %v2048
        %v2050 = vrot.slane %v1863, 1
        %v2051 = vsel %vm976, %v2048, %v2050
        %v2052 = vrot.slane %v1864, 1
        %v2053 = vsel %vm976, %v2050, %v2052
        %v2054 = vrot.slane %v1865, 1
        %v2055 = vsel %vm976, %v2052, %v2054
        %v2056 = vrot.slane %v1866, 1
        %v2057 = vsel %vm976, %v2054, %v2056
        %v2058 = vrot.slane %v1867, 1
        %v2059 = vsel %vm976, %v2056, %v2058
        %v2060 = vrot.slane %v1868, 1
        %v2061 = vsel %vm976, %v2058, %v2060
        %v2062 = vrot.slane %v1869, 1
        %v2063 = vsel %vm976, %v2060, %v2062
        %v2064 = vrot.slane %v1870, 1
        %v2065 = vsel %vm976, %v2062, %v2064
        %v2066 = vrot.slane %v1871, 1
        %v2067 = vsel %vm976, %v2064, %v2066
        %v2068 = vrot.slane %v1872, 1
        %v2069 = vsel %vm976, %v2066, %v2068
        %v2136 = vadd.f32 %v1733, %v1941
        %v2137 = vadd.f32 %v1734, %v1943
        %v2138 = vadd.f32 %v1735, %v1945
        %v2139 = vadd.f32 %v1736, %v1947
        %v2140 = vadd.f32 %v1737, %v1949
        %v2141 = vadd.f32 %v1738, %v1951
        %v2142 = vadd.f32 %v1739, %v1953
        %v2143 = vadd.f32 %v1740, %v1955
        %v2144 = vadd.f32 %v1741, %v1957
        %v2145 = vadd.f32 %v1742, %v1959
        %v2146 = vadd.f32 %v1743, %v1961
        %v2147 = vadd.f32 %v1744, %v1963
        %v2148 = vadd.f32 %v1745, %v1965
        %v2149 = vadd.f32 %v1746, %v1967
        %v2150 = vadd.f32 %v1747, %v1969
        %v2151 = vadd.f32 %v1748, %v1971
        %v2152 = vadd.f32 %v1749, %v1973
        %v2153 = vadd.f32 %v1750, %v1975
        %v2154 = vadd.f32 %v1751, %v1977
        %v2155 = vadd.f32 %v1752, %v1979
        %v2156 = vadd.f32 %v1753, %v1981
        %v2157 = vadd.f32 %v1754, %v1983
        %v2158 = vadd.f32 %v1755, %v1985
        %v2159 = vadd.f32 %v1756, %v1987
        %v2160 = vadd.f32 %v1757, %v1989
        %v2161 = vadd.f32 %v1758, %v1991
        %v2162 = vadd.f32 %v1759, %v1993
        %v2163 = vadd.f32 %v1760, %v1995
        %v2164 = vadd.f32 %v1761, %v1997
        %v2165 = vadd.f32 %v1762, %v1999
        %v2166 = vadd.f32 %v1763, %v2001
        %v2167 = vadd.f32 %v1764, %v2003
        %v2168 = vadd.f32 %v1765, %v2005
        %v2169 = vadd.f32 %v1766, %v2007
        %v2170 = vadd.f32 %v1767, %v2009
        %v2171 = vadd.f32 %v1768, %v2011
        %v2172 = vadd.f32 %v1769, %v2013
        %v2173 = vadd.f32 %v1770, %v2015
        %v2174 = vadd.f32 %v1771, %v2017
        %v2175 = vadd.f32 %v1772, %v2019
        %v2176 = vadd.f32 %v1773, %v2021
        %v2177 = vadd.f32 %v1774, %v2023
        %v2178 = vadd.f32 %v1775, %v2025
        %v2179 = vadd.f32 %v1776, %v2027
        %v2180 = vadd.f32 %v1777, %v2029
        %v2181 = vadd.f32 %v1778, %v2031
        %v2182 = vadd.f32 %v1779, %v2033
        %v2183 = vadd.f32 %v1780, %v2035
        %v2184 = vadd.f32 %v1781, %v2037
        %v2185 = vadd.f32 %v1782, %v2039
        %v2186 = vadd.f32 %v1783, %v2041
        %v2187 = vadd.f32 %v1784, %v2043
        %v2188 = vadd.f32 %v1785, %v2045
        %v2189 = vadd.f32 %v1786, %v2047
        %v2190 = vadd.f32 %v1787, %v2049
        %v2191 = vadd.f32 %v1788, %v2051
        %v2192 = vadd.f32 %v1789, %v2053
        %v2193 = vadd.f32 %v1790, %v2055
        %v2194 = vadd.f32 %v1791, %v2057
        %v2195 = vadd.f32 %v1792, %v2059
        %v2196 = vadd.f32 %v1793, %v2061
        %v2197 = vadd.f32 %v1794, %v2063
        %v2198 = vadd.f32 %v1795, %v2065
        %v2199 = vadd.f32 %v1796, %v2067
        %v2200 = vadd.f32 %v1797, %v2069
        %v2201 = vadd.f32 %v1798, %v2068
        %s2202 = scalar_lea.vmem %s1, 5
        %v2203 = vld [vmem:[%s2202] sm:$0x1]
        %v2205 = vlaneseq
        %v2206 = vshrl.u32 %v2205, 7
        %v2207 = vsub.s32 0, %v2206
        %v2208 = vrot.slane %v2203, %v2207
        %v2210 = vmul.f32 %v385, %v2208
        %v2211 = vmul.f32 %v390, %v2208
        %v2212 = vmul.f32 %v395, %v2208
        %v2213 = vmul.f32 %v400, %v2208
        %v2214 = vmul.f32 %v405, %v2208
        %v2215 = vmul.f32 %v410, %v2208
        %v2216 = vmul.f32 %v415, %v2208
        %v2217 = vmul.f32 %v420, %v2208
        %v2218 = vmul.f32 %v425, %v2208
        %v2219 = vmul.f32 %v430, %v2208
        %v2220 = vmul.f32 %v435, %v2208
        %v2221 = vmul.f32 %v440, %v2208
        %v2222 = vmul.f32 %v445, %v2208
        %v2223 = vmul.f32 %v450, %v2208
        %v2224 = vmul.f32 %v455, %v2208
        %v2225 = vmul.f32 %v460, %v2208
        %v2226 = vmul.f32 %v465, %v2208
        %v2227 = vmul.f32 %v470, %v2208
        %v2228 = vmul.f32 %v475, %v2208
        %v2229 = vmul.f32 %v480, %v2208
        %v2230 = vmul.f32 %v485, %v2208
        %v2231 = vmul.f32 %v490, %v2208
        %v2232 = vmul.f32 %v495, %v2208
        %v2233 = vmul.f32 %v500, %v2208
        %v2234 = vmul.f32 %v505, %v2208
        %v2235 = vmul.f32 %v510, %v2208
        %v2236 = vmul.f32 %v515, %v2208
        %v2237 = vmul.f32 %v520, %v2208
        %v2238 = vmul.f32 %v525, %v2208
        %v2239 = vmul.f32 %v530, %v2208
        %v2240 = vmul.f32 %v535, %v2208
        %v2241 = vmul.f32 %v540, %v2208
        %v2242 = vmul.f32 %v545, %v2208
        %v2243 = vmul.f32 %v550, %v2208
        %v2244 = vmul.f32 %v555, %v2208
        %v2245 = vmul.f32 %v560, %v2208
        %v2246 = vmul.f32 %v565, %v2208
        %v2247 = vmul.f32 %v570, %v2208
        %v2248 = vmul.f32 %v575, %v2208
        %v2249 = vmul.f32 %v580, %v2208
        %v2250 = vmul.f32 %v585, %v2208
        %v2251 = vmul.f32 %v590, %v2208
        %v2252 = vmul.f32 %v595, %v2208
        %v2253 = vmul.f32 %v600, %v2208
        %v2254 = vmul.f32 %v605, %v2208
        %v2255 = vmul.f32 %v610, %v2208
        %v2256 = vmul.f32 %v615, %v2208
        %v2257 = vmul.f32 %v620, %v2208
        %v2258 = vmul.f32 %v625, %v2208
        %v2259 = vmul.f32 %v630, %v2208
        %v2260 = vmul.f32 %v635, %v2208
        %v2261 = vmul.f32 %v640, %v2208
        %v2262 = vmul.f32 %v645, %v2208
        %v2263 = vmul.f32 %v650, %v2208
        %v2264 = vmul.f32 %v655, %v2208
        %v2265 = vmul.f32 %v660, %v2208
        %v2266 = vmul.f32 %v665, %v2208
        %v2267 = vmul.f32 %v670, %v2208
        %v2268 = vmul.f32 %v675, %v2208
        %v2269 = vmul.f32 %v680, %v2208
        %v2270 = vmul.f32 %v685, %v2208
        %v2271 = vmul.f32 %v690, %v2208
        %v2272 = vmul.f32 %v695, %v2208
        %v2273 = vmul.f32 %v1647, %v2208
        %v2274 = vmul.f32 %v1652, %v2208
        %v2275 = vmul.f32 %v1657, %v2208
        %v2342 = vrot.slane %v2210, 2
        %v2343 = vrot.slane %v2211, 2
        %v2344 = vsel %vm1380, %v2342, %v2343
        %v2345 = vrot.slane %v2212, 2
        %v2346 = vsel %vm1380, %v2343, %v2345
        %v2347 = vrot.slane %v2213, 2
        %v2348 = vsel %vm1380, %v2345, %v2347
        %v2349 = vrot.slane %v2214, 2
        %v2350 = vsel %vm1380, %v2347, %v2349
        %v2351 = vrot.slane %v2215, 2
        %v2352 = vsel %vm1380, %v2349, %v2351
        %v2353 = vrot.slane %v2216, 2
        %v2354 = vsel %vm1380, %v2351, %v2353
        %v2355 = vrot.slane %v2217, 2
        %v2356 = vsel %vm1380, %v2353, %v2355
        %v2357 = vrot.slane %v2218, 2
        %v2358 = vsel %vm1380, %v2355, %v2357
        %v2359 = vrot.slane %v2219, 2
        %v2360 = vsel %vm1380, %v2357, %v2359
        %v2361 = vrot.slane %v2220, 2
        %v2362 = vsel %vm1380, %v2359, %v2361
        %v2363 = vrot.slane %v2221, 2
        %v2364 = vsel %vm1380, %v2361, %v2363
        %v2365 = vrot.slane %v2222, 2
        %v2366 = vsel %vm1380, %v2363, %v2365
        %v2367 = vrot.slane %v2223, 2
        %v2368 = vsel %vm1380, %v2365, %v2367
        %v2369 = vrot.slane %v2224, 2
        %v2370 = vsel %vm1380, %v2367, %v2369
        %v2371 = vrot.slane %v2225, 2
        %v2372 = vsel %vm1380, %v2369, %v2371
        %v2373 = vrot.slane %v2226, 2
        %v2374 = vsel %vm1380, %v2371, %v2373
        %v2375 = vrot.slane %v2227, 2
        %v2376 = vsel %vm1380, %v2373, %v2375
        %v2377 = vrot.slane %v2228, 2
        %v2378 = vsel %vm1380, %v2375, %v2377
        %v2379 = vrot.slane %v2229, 2
        %v2380 = vsel %vm1380, %v2377, %v2379
        %v2381 = vrot.slane %v2230, 2
        %v2382 = vsel %vm1380, %v2379, %v2381
        %v2383 = vrot.slane %v2231, 2
        %v2384 = vsel %vm1380, %v2381, %v2383
        %v2385 = vrot.slane %v2232, 2
        %v2386 = vsel %vm1380, %v2383, %v2385
        %v2387 = vrot.slane %v2233, 2
        %v2388 = vsel %vm1380, %v2385, %v2387
        %v2389 = vrot.slane %v2234, 2
        %v2390 = vsel %vm1380, %v2387, %v2389
        %v2391 = vrot.slane %v2235, 2
        %v2392 = vsel %vm1380, %v2389, %v2391
        %v2393 = vrot.slane %v2236, 2
        %v2394 = vsel %vm1380, %v2391, %v2393
        %v2395 = vrot.slane %v2237, 2
        %v2396 = vsel %vm1380, %v2393, %v2395
        %v2397 = vrot.slane %v2238, 2
        %v2398 = vsel %vm1380, %v2395, %v2397
        %v2399 = vrot.slane %v2239, 2
        %v2400 = vsel %vm1380, %v2397, %v2399
        %v2401 = vrot.slane %v2240, 2
        %v2402 = vsel %vm1380, %v2399, %v2401
        %v2403 = vrot.slane %v2241, 2
        %v2404 = vsel %vm1380, %v2401, %v2403
        %v2405 = vrot.slane %v2242, 2
        %v2406 = vsel %vm1380, %v2403, %v2405
        %v2407 = vrot.slane %v2243, 2
        %v2408 = vsel %vm1380, %v2405, %v2407
        %v2409 = vrot.slane %v2244, 2
        %v2410 = vsel %vm1380, %v2407, %v2409
        %v2411 = vrot.slane %v2245, 2
        %v2412 = vsel %vm1380, %v2409, %v2411
        %v2413 = vrot.slane %v2246, 2
        %v2414 = vsel %vm1380, %v2411, %v2413
        %v2415 = vrot.slane %v2247, 2
        %v2416 = vsel %vm1380, %v2413, %v2415
        %v2417 = vrot.slane %v2248, 2
        %v2418 = vsel %vm1380, %v2415, %v2417
        %v2419 = vrot.slane %v2249, 2
        %v2420 = vsel %vm1380, %v2417, %v2419
        %v2421 = vrot.slane %v2250, 2
        %v2422 = vsel %vm1380, %v2419, %v2421
        %v2423 = vrot.slane %v2251, 2
        %v2424 = vsel %vm1380, %v2421, %v2423
        %v2425 = vrot.slane %v2252, 2
        %v2426 = vsel %vm1380, %v2423, %v2425
        %v2427 = vrot.slane %v2253, 2
        %v2428 = vsel %vm1380, %v2425, %v2427
        %v2429 = vrot.slane %v2254, 2
        %v2430 = vsel %vm1380, %v2427, %v2429
        %v2431 = vrot.slane %v2255, 2
        %v2432 = vsel %vm1380, %v2429, %v2431
        %v2433 = vrot.slane %v2256, 2
        %v2434 = vsel %vm1380, %v2431, %v2433
        %v2435 = vrot.slane %v2257, 2
        %v2436 = vsel %vm1380, %v2433, %v2435
        %v2437 = vrot.slane %v2258, 2
        %v2438 = vsel %vm1380, %v2435, %v2437
        %v2439 = vrot.slane %v2259, 2
        %v2440 = vsel %vm1380, %v2437, %v2439
        %v2441 = vrot.slane %v2260, 2
        %v2442 = vsel %vm1380, %v2439, %v2441
        %v2443 = vrot.slane %v2261, 2
        %v2444 = vsel %vm1380, %v2441, %v2443
        %v2445 = vrot.slane %v2262, 2
        %v2446 = vsel %vm1380, %v2443, %v2445
        %v2447 = vrot.slane %v2263, 2
        %v2448 = vsel %vm1380, %v2445, %v2447
        %v2449 = vrot.slane %v2264, 2
        %v2450 = vsel %vm1380, %v2447, %v2449
        %v2451 = vrot.slane %v2265, 2
        %v2452 = vsel %vm1380, %v2449, %v2451
        %v2453 = vrot.slane %v2266, 2
        %v2454 = vsel %vm1380, %v2451, %v2453
        %v2455 = vrot.slane %v2267, 2
        %v2456 = vsel %vm1380, %v2453, %v2455
        %v2457 = vrot.slane %v2268, 2
        %v2458 = vsel %vm1380, %v2455, %v2457
        %v2459 = vrot.slane %v2269, 2
        %v2460 = vsel %vm1380, %v2457, %v2459
        %v2461 = vrot.slane %v2270, 2
        %v2462 = vsel %vm1380, %v2459, %v2461
        %v2463 = vrot.slane %v2271, 2
        %v2464 = vsel %vm1380, %v2461, %v2463
        %v2465 = vrot.slane %v2272, 2
        %v2466 = vsel %vm1380, %v2463, %v2465
        %v2467 = vrot.slane %v2273, 2
        %v2468 = vsel %vm1380, %v2465, %v2467
        %v2469 = vrot.slane %v2274, 2
        %v2470 = vsel %vm1380, %v2467, %v2469
        %v2471 = vrot.slane %v2275, 2
        %v2472 = vsel %vm1380, %v2469, %v2471
        %v2539 = vadd.f32 %v2136, %v2344
        %v2540 = vadd.f32 %v2137, %v2346
        %v2541 = vadd.f32 %v2138, %v2348
        %v2542 = vadd.f32 %v2139, %v2350
        %v2543 = vadd.f32 %v2140, %v2352
        %v2544 = vadd.f32 %v2141, %v2354
        %v2545 = vadd.f32 %v2142, %v2356
        %v2546 = vadd.f32 %v2143, %v2358
        %v2547 = vadd.f32 %v2144, %v2360
        %v2548 = vadd.f32 %v2145, %v2362
        %v2549 = vadd.f32 %v2146, %v2364
        %v2550 = vadd.f32 %v2147, %v2366
        %v2551 = vadd.f32 %v2148, %v2368
        %v2552 = vadd.f32 %v2149, %v2370
        %v2553 = vadd.f32 %v2150, %v2372
        %v2554 = vadd.f32 %v2151, %v2374
        %v2555 = vadd.f32 %v2152, %v2376
        %v2556 = vadd.f32 %v2153, %v2378
        %v2557 = vadd.f32 %v2154, %v2380
        %v2558 = vadd.f32 %v2155, %v2382
        %v2559 = vadd.f32 %v2156, %v2384
        %v2560 = vadd.f32 %v2157, %v2386
        %v2561 = vadd.f32 %v2158, %v2388
        %v2562 = vadd.f32 %v2159, %v2390
        %v2563 = vadd.f32 %v2160, %v2392
        %v2564 = vadd.f32 %v2161, %v2394
        %v2565 = vadd.f32 %v2162, %v2396
        %v2566 = vadd.f32 %v2163, %v2398
        %v2567 = vadd.f32 %v2164, %v2400
        %v2568 = vadd.f32 %v2165, %v2402
        %v2569 = vadd.f32 %v2166, %v2404
        %v2570 = vadd.f32 %v2167, %v2406
        %v2571 = vadd.f32 %v2168, %v2408
        %v2572 = vadd.f32 %v2169, %v2410
        %v2573 = vadd.f32 %v2170, %v2412
        %v2574 = vadd.f32 %v2171, %v2414
        %v2575 = vadd.f32 %v2172, %v2416
        %v2576 = vadd.f32 %v2173, %v2418
        %v2577 = vadd.f32 %v2174, %v2420
        %v2578 = vadd.f32 %v2175, %v2422
        %v2579 = vadd.f32 %v2176, %v2424
        %v2580 = vadd.f32 %v2177, %v2426
        %v2581 = vadd.f32 %v2178, %v2428
        %v2582 = vadd.f32 %v2179, %v2430
        %v2583 = vadd.f32 %v2180, %v2432
        %v2584 = vadd.f32 %v2181, %v2434
        %v2585 = vadd.f32 %v2182, %v2436
        %v2586 = vadd.f32 %v2183, %v2438
        %v2587 = vadd.f32 %v2184, %v2440
        %v2588 = vadd.f32 %v2185, %v2442
        %v2589 = vadd.f32 %v2186, %v2444
        %v2590 = vadd.f32 %v2187, %v2446
        %v2591 = vadd.f32 %v2188, %v2448
        %v2592 = vadd.f32 %v2189, %v2450
        %v2593 = vadd.f32 %v2190, %v2452
        %v2594 = vadd.f32 %v2191, %v2454
        %v2595 = vadd.f32 %v2192, %v2456
        %v2596 = vadd.f32 %v2193, %v2458
        %v2597 = vadd.f32 %v2194, %v2460
        %v2598 = vadd.f32 %v2195, %v2462
        %v2599 = vadd.f32 %v2196, %v2464
        %v2600 = vadd.f32 %v2197, %v2466
        %v2601 = vadd.f32 %v2198, %v2468
        %v2602 = vadd.f32 %v2199, %v2470
        %v2603 = vadd.f32 %v2200, %v2472
        %v2604 = vadd.f32 %v2201, %v2471
        %2606 = vset.pattern.permute.xlu0 0
        %2607 = vperm.xlu0 %2606, %v357
        %v2608 = vpop.permute.xlu0 %2607
        %2611 = vset.pattern.permute.xlu0 0
        %2612 = vperm.xlu0 %2611, %v358
        %v2613 = vpop.permute.xlu0 %2612
        %2616 = vset.pattern.permute.xlu0 0
        %2617 = vperm.xlu0 %2616, %v359
        %v2618 = vpop.permute.xlu0 %2617
        %s2620 = scalar_lea.vmem %s1, 6
        %v2621 = vld [vmem:[%s2620] sm:$0x1]
        %v2623 = vlaneseq
        %v2624 = vshrl.u32 %v2623, 7
        %v2625 = vsub.s32 0, %v2624
        %v2626 = vrot.slane %v2621, %v2625
        %v2628 = vmul.f32 %v400, %v2626
        %v2629 = vmul.f32 %v405, %v2626
        %v2630 = vmul.f32 %v410, %v2626
        %v2631 = vmul.f32 %v415, %v2626
        %v2632 = vmul.f32 %v420, %v2626
        %v2633 = vmul.f32 %v425, %v2626
        %v2634 = vmul.f32 %v430, %v2626
        %v2635 = vmul.f32 %v435, %v2626
        %v2636 = vmul.f32 %v440, %v2626
        %v2637 = vmul.f32 %v445, %v2626
        %v2638 = vmul.f32 %v450, %v2626
        %v2639 = vmul.f32 %v455, %v2626
        %v2640 = vmul.f32 %v460, %v2626
        %v2641 = vmul.f32 %v465, %v2626
        %v2642 = vmul.f32 %v470, %v2626
        %v2643 = vmul.f32 %v475, %v2626
        %v2644 = vmul.f32 %v480, %v2626
        %v2645 = vmul.f32 %v485, %v2626
        %v2646 = vmul.f32 %v490, %v2626
        %v2647 = vmul.f32 %v495, %v2626
        %v2648 = vmul.f32 %v500, %v2626
        %v2649 = vmul.f32 %v505, %v2626
        %v2650 = vmul.f32 %v510, %v2626
        %v2651 = vmul.f32 %v515, %v2626
        %v2652 = vmul.f32 %v520, %v2626
        %v2653 = vmul.f32 %v525, %v2626
        %v2654 = vmul.f32 %v530, %v2626
        %v2655 = vmul.f32 %v535, %v2626
        %v2656 = vmul.f32 %v540, %v2626
        %v2657 = vmul.f32 %v545, %v2626
        %v2658 = vmul.f32 %v550, %v2626
        %v2659 = vmul.f32 %v555, %v2626
        %v2660 = vmul.f32 %v560, %v2626
        %v2661 = vmul.f32 %v565, %v2626
        %v2662 = vmul.f32 %v570, %v2626
        %v2663 = vmul.f32 %v575, %v2626
        %v2664 = vmul.f32 %v580, %v2626
        %v2665 = vmul.f32 %v585, %v2626
        %v2666 = vmul.f32 %v590, %v2626
        %v2667 = vmul.f32 %v595, %v2626
        %v2668 = vmul.f32 %v600, %v2626
        %v2669 = vmul.f32 %v605, %v2626
        %v2670 = vmul.f32 %v610, %v2626
        %v2671 = vmul.f32 %v615, %v2626
        %v2672 = vmul.f32 %v620, %v2626
        %v2673 = vmul.f32 %v625, %v2626
        %v2674 = vmul.f32 %v630, %v2626
        %v2675 = vmul.f32 %v635, %v2626
        %v2676 = vmul.f32 %v640, %v2626
        %v2677 = vmul.f32 %v645, %v2626
        %v2678 = vmul.f32 %v650, %v2626
        %v2679 = vmul.f32 %v655, %v2626
        %v2680 = vmul.f32 %v660, %v2626
        %v2681 = vmul.f32 %v665, %v2626
        %v2682 = vmul.f32 %v670, %v2626
        %v2683 = vmul.f32 %v675, %v2626
        %v2684 = vmul.f32 %v680, %v2626
        %v2685 = vmul.f32 %v685, %v2626
        %v2686 = vmul.f32 %v690, %v2626
        %v2687 = vmul.f32 %v695, %v2626
        %v2688 = vmul.f32 %v1647, %v2626
        %v2689 = vmul.f32 %v1652, %v2626
        %v2690 = vmul.f32 %v1657, %v2626
        %v2691 = vmul.f32 %v2608, %v2626
        %v2692 = vmul.f32 %v2613, %v2626
        %v2693 = vmul.f32 %v2618, %v2626
        %v2694 = vadd.f32 %v2539, %v2628
        %v2695 = vadd.f32 %v2540, %v2629
        %v2696 = vadd.f32 %v2541, %v2630
        %v2697 = vadd.f32 %v2542, %v2631
        %v2698 = vadd.f32 %v2543, %v2632
        %v2699 = vadd.f32 %v2544, %v2633
        %v2700 = vadd.f32 %v2545, %v2634
        %v2701 = vadd.f32 %v2546, %v2635
        %v2702 = vadd.f32 %v2547, %v2636
        %v2703 = vadd.f32 %v2548, %v2637
        %v2704 = vadd.f32 %v2549, %v2638
        %v2705 = vadd.f32 %v2550, %v2639
        %v2706 = vadd.f32 %v2551, %v2640
        %v2707 = vadd.f32 %v2552, %v2641
        %v2708 = vadd.f32 %v2553, %v2642
        %v2709 = vadd.f32 %v2554, %v2643
        %v2710 = vadd.f32 %v2555, %v2644
        %v2711 = vadd.f32 %v2556, %v2645
        %v2712 = vadd.f32 %v2557, %v2646
        %v2713 = vadd.f32 %v2558, %v2647
        %v2714 = vadd.f32 %v2559, %v2648
        %v2715 = vadd.f32 %v2560, %v2649
        %v2716 = vadd.f32 %v2561, %v2650
        %v2717 = vadd.f32 %v2562, %v2651
        %v2718 = vadd.f32 %v2563, %v2652
        %v2719 = vadd.f32 %v2564, %v2653
        %v2720 = vadd.f32 %v2565, %v2654
        %v2721 = vadd.f32 %v2566, %v2655
        %v2722 = vadd.f32 %v2567, %v2656
        %v2723 = vadd.f32 %v2568, %v2657
        %v2724 = vadd.f32 %v2569, %v2658
        %v2725 = vadd.f32 %v2570, %v2659
        %v2726 = vadd.f32 %v2571, %v2660
        %v2727 = vadd.f32 %v2572, %v2661
        %v2728 = vadd.f32 %v2573, %v2662
        %v2729 = vadd.f32 %v2574, %v2663
        %v2730 = vadd.f32 %v2575, %v2664
        %v2731 = vadd.f32 %v2576, %v2665
        %v2732 = vadd.f32 %v2577, %v2666
        %v2733 = vadd.f32 %v2578, %v2667
        %v2734 = vadd.f32 %v2579, %v2668
        %v2735 = vadd.f32 %v2580, %v2669
        %v2736 = vadd.f32 %v2581, %v2670
        %v2737 = vadd.f32 %v2582, %v2671
        %v2738 = vadd.f32 %v2583, %v2672
        %v2739 = vadd.f32 %v2584, %v2673
        %v2740 = vadd.f32 %v2585, %v2674
        %v2741 = vadd.f32 %v2586, %v2675
        %v2742 = vadd.f32 %v2587, %v2676
        %v2743 = vadd.f32 %v2588, %v2677
        %v2744 = vadd.f32 %v2589, %v2678
        %v2745 = vadd.f32 %v2590, %v2679
        %v2746 = vadd.f32 %v2591, %v2680
        %v2747 = vadd.f32 %v2592, %v2681
        %v2748 = vadd.f32 %v2593, %v2682
        %v2749 = vadd.f32 %v2594, %v2683
        %v2750 = vadd.f32 %v2595, %v2684
        %v2751 = vadd.f32 %v2596, %v2685
        %v2752 = vadd.f32 %v2597, %v2686
        %v2753 = vadd.f32 %v2598, %v2687
        %v2754 = vadd.f32 %v2599, %v2688
        %v2755 = vadd.f32 %v2600, %v2689
        %v2756 = vadd.f32 %v2601, %v2690
        %v2757 = vadd.f32 %v2602, %v2691
        %v2758 = vadd.f32 %v2603, %v2692
        %v2759 = vadd.f32 %v2604, %v2693
        %s2760 = scalar_lea.vmem %s1, 7
        %v2761 = vld [vmem:[%s2760] sm:$0x1]
        %v2763 = vlaneseq
        %v2764 = vshrl.u32 %v2763, 7
        %v2765 = vsub.s32 0, %v2764
        %v2766 = vrot.slane %v2761, %v2765
        %v2768 = vmul.f32 %v400, %v2766
        %v2769 = vmul.f32 %v405, %v2766
        %v2770 = vmul.f32 %v410, %v2766
        %v2771 = vmul.f32 %v415, %v2766
        %v2772 = vmul.f32 %v420, %v2766
        %v2773 = vmul.f32 %v425, %v2766
        %v2774 = vmul.f32 %v430, %v2766
        %v2775 = vmul.f32 %v435, %v2766
        %v2776 = vmul.f32 %v440, %v2766
        %v2777 = vmul.f32 %v445, %v2766
        %v2778 = vmul.f32 %v450, %v2766
        %v2779 = vmul.f32 %v455, %v2766
        %v2780 = vmul.f32 %v460, %v2766
        %v2781 = vmul.f32 %v465, %v2766
        %v2782 = vmul.f32 %v470, %v2766
        %v2783 = vmul.f32 %v475, %v2766
        %v2784 = vmul.f32 %v480, %v2766
        %v2785 = vmul.f32 %v485, %v2766
        %v2786 = vmul.f32 %v490, %v2766
        %v2787 = vmul.f32 %v495, %v2766
        %v2788 = vmul.f32 %v500, %v2766
        %v2789 = vmul.f32 %v505, %v2766
        %v2790 = vmul.f32 %v510, %v2766
        %v2791 = vmul.f32 %v515, %v2766
        %v2792 = vmul.f32 %v520, %v2766
        %v2793 = vmul.f32 %v525, %v2766
        %v2794 = vmul.f32 %v530, %v2766
        %v2795 = vmul.f32 %v535, %v2766
        %v2796 = vmul.f32 %v540, %v2766
        %v2797 = vmul.f32 %v545, %v2766
        %v2798 = vmul.f32 %v550, %v2766
        %v2799 = vmul.f32 %v555, %v2766
        %v2800 = vmul.f32 %v560, %v2766
        %v2801 = vmul.f32 %v565, %v2766
        %v2802 = vmul.f32 %v570, %v2766
        %v2803 = vmul.f32 %v575, %v2766
        %v2804 = vmul.f32 %v580, %v2766
        %v2805 = vmul.f32 %v585, %v2766
        %v2806 = vmul.f32 %v590, %v2766
        %v2807 = vmul.f32 %v595, %v2766
        %v2808 = vmul.f32 %v600, %v2766
        %v2809 = vmul.f32 %v605, %v2766
        %v2810 = vmul.f32 %v610, %v2766
        %v2811 = vmul.f32 %v615, %v2766
        %v2812 = vmul.f32 %v620, %v2766
        %v2813 = vmul.f32 %v625, %v2766
        %v2814 = vmul.f32 %v630, %v2766
        %v2815 = vmul.f32 %v635, %v2766
        %v2816 = vmul.f32 %v640, %v2766
        %v2817 = vmul.f32 %v645, %v2766
        %v2818 = vmul.f32 %v650, %v2766
        %v2819 = vmul.f32 %v655, %v2766
        %v2820 = vmul.f32 %v660, %v2766
        %v2821 = vmul.f32 %v665, %v2766
        %v2822 = vmul.f32 %v670, %v2766
        %v2823 = vmul.f32 %v675, %v2766
        %v2824 = vmul.f32 %v680, %v2766
        %v2825 = vmul.f32 %v685, %v2766
        %v2826 = vmul.f32 %v690, %v2766
        %v2827 = vmul.f32 %v695, %v2766
        %v2828 = vmul.f32 %v1647, %v2766
        %v2829 = vmul.f32 %v1652, %v2766
        %v2830 = vmul.f32 %v1657, %v2766
        %v2831 = vmul.f32 %v2608, %v2766
        %v2832 = vmul.f32 %v2613, %v2766
        %v2833 = vmul.f32 %v2618, %v2766
        %v2900 = vrot.slane %v2768, 1
        %v2901 = vrot.slane %v2769, 1
        %v2902 = vsel %vm976, %v2900, %v2901
        %v2903 = vrot.slane %v2770, 1
        %v2904 = vsel %vm976, %v2901, %v2903
        %v2905 = vrot.slane %v2771, 1
        %v2906 = vsel %vm976, %v2903, %v2905
        %v2907 = vrot.slane %v2772, 1
        %v2908 = vsel %vm976, %v2905, %v2907
        %v2909 = vrot.slane %v2773, 1
        %v2910 = vsel %vm976, %v2907, %v2909
        %v2911 = vrot.slane %v2774, 1
        %v2912 = vsel %vm976, %v2909, %v2911
        %v2913 = vrot.slane %v2775, 1
        %v2914 = vsel %vm976, %v2911, %v2913
        %v2915 = vrot.slane %v2776, 1
        %v2916 = vsel %vm976, %v2913, %v2915
        %v2917 = vrot.slane %v2777, 1
        %v2918 = vsel %vm976, %v2915, %v2917
        %v2919 = vrot.slane %v2778, 1
        %v2920 = vsel %vm976, %v2917, %v2919
        %v2921 = vrot.slane %v2779, 1
        %v2922 = vsel %vm976, %v2919, %v2921
        %v2923 = vrot.slane %v2780, 1
        %v2924 = vsel %vm976, %v2921, %v2923
        %v2925 = vrot.slane %v2781, 1
        %v2926 = vsel %vm976, %v2923, %v2925
        %v2927 = vrot.slane %v2782, 1
        %v2928 = vsel %vm976, %v2925, %v2927
        %v2929 = vrot.slane %v2783, 1
        %v2930 = vsel %vm976, %v2927, %v2929
        %v2931 = vrot.slane %v2784, 1
        %v2932 = vsel %vm976, %v2929, %v2931
        %v2933 = vrot.slane %v2785, 1
        %v2934 = vsel %vm976, %v2931, %v2933
        %v2935 = vrot.slane %v2786, 1
        %v2936 = vsel %vm976, %v2933, %v2935
        %v2937 = vrot.slane %v2787, 1
        %v2938 = vsel %vm976, %v2935, %v2937
        %v2939 = vrot.slane %v2788, 1
        %v2940 = vsel %vm976, %v2937, %v2939
        %v2941 = vrot.slane %v2789, 1
        %v2942 = vsel %vm976, %v2939, %v2941
        %v2943 = vrot.slane %v2790, 1
        %v2944 = vsel %vm976, %v2941, %v2943
        %v2945 = vrot.slane %v2791, 1
        %v2946 = vsel %vm976, %v2943, %v2945
        %v2947 = vrot.slane %v2792, 1
        %v2948 = vsel %vm976, %v2945, %v2947
        %v2949 = vrot.slane %v2793, 1
        %v2950 = vsel %vm976, %v2947, %v2949
        %v2951 = vrot.slane %v2794, 1
        %v2952 = vsel %vm976, %v2949, %v2951
        %v2953 = vrot.slane %v2795, 1
        %v2954 = vsel %vm976, %v2951, %v2953
        %v2955 = vrot.slane %v2796, 1
        %v2956 = vsel %vm976, %v2953, %v2955
        %v2957 = vrot.slane %v2797, 1
        %v2958 = vsel %vm976, %v2955, %v2957
        %v2959 = vrot.slane %v2798, 1
        %v2960 = vsel %vm976, %v2957, %v2959
        %v2961 = vrot.slane %v2799, 1
        %v2962 = vsel %vm976, %v2959, %v2961
        %v2963 = vrot.slane %v2800, 1
        %v2964 = vsel %vm976, %v2961, %v2963
        %v2965 = vrot.slane %v2801, 1
        %v2966 = vsel %vm976, %v2963, %v2965
        %v2967 = vrot.slane %v2802, 1
        %v2968 = vsel %vm976, %v2965, %v2967
        %v2969 = vrot.slane %v2803, 1
        %v2970 = vsel %vm976, %v2967, %v2969
        %v2971 = vrot.slane %v2804, 1
        %v2972 = vsel %vm976, %v2969, %v2971
        %v2973 = vrot.slane %v2805, 1
        %v2974 = vsel %vm976, %v2971, %v2973
        %v2975 = vrot.slane %v2806, 1
        %v2976 = vsel %vm976, %v2973, %v2975
        %v2977 = vrot.slane %v2807, 1
        %v2978 = vsel %vm976, %v2975, %v2977
        %v2979 = vrot.slane %v2808, 1
        %v2980 = vsel %vm976, %v2977, %v2979
        %v2981 = vrot.slane %v2809, 1
        %v2982 = vsel %vm976, %v2979, %v2981
        %v2983 = vrot.slane %v2810, 1
        %v2984 = vsel %vm976, %v2981, %v2983
        %v2985 = vrot.slane %v2811, 1
        %v2986 = vsel %vm976, %v2983, %v2985
        %v2987 = vrot.slane %v2812, 1
        %v2988 = vsel %vm976, %v2985, %v2987
        %v2989 = vrot.slane %v2813, 1
        %v2990 = vsel %vm976, %v2987, %v2989
        %v2991 = vrot.slane %v2814, 1
        %v2992 = vsel %vm976, %v2989, %v2991
        %v2993 = vrot.slane %v2815, 1
        %v2994 = vsel %vm976, %v2991, %v2993
        %v2995 = vrot.slane %v2816, 1
        %v2996 = vsel %vm976, %v2993, %v2995
        %v2997 = vrot.slane %v2817, 1
        %v2998 = vsel %vm976, %v2995, %v2997
        %v2999 = vrot.slane %v2818, 1
        %v3000 = vsel %vm976, %v2997, %v2999
        %v3001 = vrot.slane %v2819, 1
        %v3002 = vsel %vm976, %v2999, %v3001
        %v3003 = vrot.slane %v2820, 1
        %v3004 = vsel %vm976, %v3001, %v3003
        %v3005 = vrot.slane %v2821, 1
        %v3006 = vsel %vm976, %v3003, %v3005
        %v3007 = vrot.slane %v2822, 1
        %v3008 = vsel %vm976, %v3005, %v3007
        %v3009 = vrot.slane %v2823, 1
        %v3010 = vsel %vm976, %v3007, %v3009
        %v3011 = vrot.slane %v2824, 1
        %v3012 = vsel %vm976, %v3009, %v3011
        %v3013 = vrot.slane %v2825, 1
        %v3014 = vsel %vm976, %v3011, %v3013
        %v3015 = vrot.slane %v2826, 1
        %v3016 = vsel %vm976, %v3013, %v3015
        %v3017 = vrot.slane %v2827, 1
        %v3018 = vsel %vm976, %v3015, %v3017
        %v3019 = vrot.slane %v2828, 1
        %v3020 = vsel %vm976, %v3017, %v3019
        %v3021 = vrot.slane %v2829, 1
        %v3022 = vsel %vm976, %v3019, %v3021
        %v3023 = vrot.slane %v2830, 1
        %v3024 = vsel %vm976, %v3021, %v3023
        %v3025 = vrot.slane %v2831, 1
        %v3026 = vsel %vm976, %v3023, %v3025
        %v3027 = vrot.slane %v2832, 1
        %v3028 = vsel %vm976, %v3025, %v3027
        %v3029 = vrot.slane %v2833, 1
        %v3030 = vsel %vm976, %v3027, %v3029
        %v3097 = vadd.f32 %v2694, %v2902
        %v3098 = vadd.f32 %v2695, %v2904
        %v3099 = vadd.f32 %v2696, %v2906
        %v3100 = vadd.f32 %v2697, %v2908
        %v3101 = vadd.f32 %v2698, %v2910
        %v3102 = vadd.f32 %v2699, %v2912
        %v3103 = vadd.f32 %v2700, %v2914
        %v3104 = vadd.f32 %v2701, %v2916
        %v3105 = vadd.f32 %v2702, %v2918
        %v3106 = vadd.f32 %v2703, %v2920
        %v3107 = vadd.f32 %v2704, %v2922
        %v3108 = vadd.f32 %v2705, %v2924
        %v3109 = vadd.f32 %v2706, %v2926
        %v3110 = vadd.f32 %v2707, %v2928
        %v3111 = vadd.f32 %v2708, %v2930
        %v3112 = vadd.f32 %v2709, %v2932
        %v3113 = vadd.f32 %v2710, %v2934
        %v3114 = vadd.f32 %v2711, %v2936
        %v3115 = vadd.f32 %v2712, %v2938
        %v3116 = vadd.f32 %v2713, %v2940
        %v3117 = vadd.f32 %v2714, %v2942
        %v3118 = vadd.f32 %v2715, %v2944
        %v3119 = vadd.f32 %v2716, %v2946
        %v3120 = vadd.f32 %v2717, %v2948
        %v3121 = vadd.f32 %v2718, %v2950
        %v3122 = vadd.f32 %v2719, %v2952
        %v3123 = vadd.f32 %v2720, %v2954
        %v3124 = vadd.f32 %v2721, %v2956
        %v3125 = vadd.f32 %v2722, %v2958
        %v3126 = vadd.f32 %v2723, %v2960
        %v3127 = vadd.f32 %v2724, %v2962
        %v3128 = vadd.f32 %v2725, %v2964
        %v3129 = vadd.f32 %v2726, %v2966
        %v3130 = vadd.f32 %v2727, %v2968
        %v3131 = vadd.f32 %v2728, %v2970
        %v3132 = vadd.f32 %v2729, %v2972
        %v3133 = vadd.f32 %v2730, %v2974
        %v3134 = vadd.f32 %v2731, %v2976
        %v3135 = vadd.f32 %v2732, %v2978
        %v3136 = vadd.f32 %v2733, %v2980
        %v3137 = vadd.f32 %v2734, %v2982
        %v3138 = vadd.f32 %v2735, %v2984
        %v3139 = vadd.f32 %v2736, %v2986
        %v3140 = vadd.f32 %v2737, %v2988
        %v3141 = vadd.f32 %v2738, %v2990
        %v3142 = vadd.f32 %v2739, %v2992
        %v3143 = vadd.f32 %v2740, %v2994
        %v3144 = vadd.f32 %v2741, %v2996
        %v3145 = vadd.f32 %v2742, %v2998
        %v3146 = vadd.f32 %v2743, %v3000
        %v3147 = vadd.f32 %v2744, %v3002
        %v3148 = vadd.f32 %v2745, %v3004
        %v3149 = vadd.f32 %v2746, %v3006
        %v3150 = vadd.f32 %v2747, %v3008
        %v3151 = vadd.f32 %v2748, %v3010
        %v3152 = vadd.f32 %v2749, %v3012
        %v3153 = vadd.f32 %v2750, %v3014
        %v3154 = vadd.f32 %v2751, %v3016
        %v3155 = vadd.f32 %v2752, %v3018
        %v3156 = vadd.f32 %v2753, %v3020
        %v3157 = vadd.f32 %v2754, %v3022
        %v3158 = vadd.f32 %v2755, %v3024
        %v3159 = vadd.f32 %v2756, %v3026
        %v3160 = vadd.f32 %v2757, %v3028
        %v3161 = vadd.f32 %v2758, %v3030
        %v3162 = vadd.f32 %v2759, %v3029
        %s3163 = scalar_lea.vmem %s1, 8
        %v3164 = vld [vmem:[%s3163] sm:$0x1]
        %v3166 = vlaneseq
        %v3167 = vshrl.u32 %v3166, 7
        %v3168 = vsub.s32 0, %v3167
        %v3169 = vrot.slane %v3164, %v3168
        %v3171 = vmul.f32 %v400, %v3169
        %v3172 = vmul.f32 %v405, %v3169
        %v3173 = vmul.f32 %v410, %v3169
        %v3174 = vmul.f32 %v415, %v3169
        %v3175 = vmul.f32 %v420, %v3169
        %v3176 = vmul.f32 %v425, %v3169
        %v3177 = vmul.f32 %v430, %v3169
        %v3178 = vmul.f32 %v435, %v3169
        %v3179 = vmul.f32 %v440, %v3169
        %v3180 = vmul.f32 %v445, %v3169
        %v3181 = vmul.f32 %v450, %v3169
        %v3182 = vmul.f32 %v455, %v3169
        %v3183 = vmul.f32 %v460, %v3169
        %v3184 = vmul.f32 %v465, %v3169
        %v3185 = vmul.f32 %v470, %v3169
        %v3186 = vmul.f32 %v475, %v3169
        %v3187 = vmul.f32 %v480, %v3169
        %v3188 = vmul.f32 %v485, %v3169
        %v3189 = vmul.f32 %v490, %v3169
        %v3190 = vmul.f32 %v495, %v3169
        %v3191 = vmul.f32 %v500, %v3169
        %v3192 = vmul.f32 %v505, %v3169
        %v3193 = vmul.f32 %v510, %v3169
        %v3194 = vmul.f32 %v515, %v3169
        %v3195 = vmul.f32 %v520, %v3169
        %v3196 = vmul.f32 %v525, %v3169
        %v3197 = vmul.f32 %v530, %v3169
        %v3198 = vmul.f32 %v535, %v3169
        %v3199 = vmul.f32 %v540, %v3169
        %v3200 = vmul.f32 %v545, %v3169
        %v3201 = vmul.f32 %v550, %v3169
        %v3202 = vmul.f32 %v555, %v3169
        %v3203 = vmul.f32 %v560, %v3169
        %v3204 = vmul.f32 %v565, %v3169
        %v3205 = vmul.f32 %v570, %v3169
        %v3206 = vmul.f32 %v575, %v3169
        %v3207 = vmul.f32 %v580, %v3169
        %v3208 = vmul.f32 %v585, %v3169
        %v3209 = vmul.f32 %v590, %v3169
        %v3210 = vmul.f32 %v595, %v3169
        %v3211 = vmul.f32 %v600, %v3169
        %v3212 = vmul.f32 %v605, %v3169
        %v3213 = vmul.f32 %v610, %v3169
        %v3214 = vmul.f32 %v615, %v3169
        %v3215 = vmul.f32 %v620, %v3169
        %v3216 = vmul.f32 %v625, %v3169
        %v3217 = vmul.f32 %v630, %v3169
        %v3218 = vmul.f32 %v635, %v3169
        %v3219 = vmul.f32 %v640, %v3169
        %v3220 = vmul.f32 %v645, %v3169
        %v3221 = vmul.f32 %v650, %v3169
        %v3222 = vmul.f32 %v655, %v3169
        %v3223 = vmul.f32 %v660, %v3169
        %v3224 = vmul.f32 %v665, %v3169
        %v3225 = vmul.f32 %v670, %v3169
        %v3226 = vmul.f32 %v675, %v3169
        %v3227 = vmul.f32 %v680, %v3169
        %v3228 = vmul.f32 %v685, %v3169
        %v3229 = vmul.f32 %v690, %v3169
        %v3230 = vmul.f32 %v695, %v3169
        %v3231 = vmul.f32 %v1647, %v3169
        %v3232 = vmul.f32 %v1652, %v3169
        %v3233 = vmul.f32 %v1657, %v3169
        %v3234 = vmul.f32 %v2608, %v3169
        %v3235 = vmul.f32 %v2613, %v3169
        %v3236 = vmul.f32 %v2618, %v3169
        %v3303 = vrot.slane %v3171, 2
        %v3304 = vrot.slane %v3172, 2
        %v3305 = vsel %vm1380, %v3303, %v3304
        %v3306 = vrot.slane %v3173, 2
        %v3307 = vsel %vm1380, %v3304, %v3306
        %v3308 = vrot.slane %v3174, 2
        %v3309 = vsel %vm1380, %v3306, %v3308
        %v3310 = vrot.slane %v3175, 2
        %v3311 = vsel %vm1380, %v3308, %v3310
        %v3312 = vrot.slane %v3176, 2
        %v3313 = vsel %vm1380, %v3310, %v3312
        %v3314 = vrot.slane %v3177, 2
        %v3315 = vsel %vm1380, %v3312, %v3314
        %v3316 = vrot.slane %v3178, 2
        %v3317 = vsel %vm1380, %v3314, %v3316
        %v3318 = vrot.slane %v3179, 2
        %v3319 = vsel %vm1380, %v3316, %v3318
        %v3320 = vrot.slane %v3180, 2
        %v3321 = vsel %vm1380, %v3318, %v3320
        %v3322 = vrot.slane %v3181, 2
        %v3323 = vsel %vm1380, %v3320, %v3322
        %v3324 = vrot.slane %v3182, 2
        %v3325 = vsel %vm1380, %v3322, %v3324
        %v3326 = vrot.slane %v3183, 2
        %v3327 = vsel %vm1380, %v3324, %v3326
        %v3328 = vrot.slane %v3184, 2
        %v3329 = vsel %vm1380, %v3326, %v3328
        %v3330 = vrot.slane %v3185, 2
        %v3331 = vsel %vm1380, %v3328, %v3330
        %v3332 = vrot.slane %v3186, 2
        %v3333 = vsel %vm1380, %v3330, %v3332
        %v3334 = vrot.slane %v3187, 2
        %v3335 = vsel %vm1380, %v3332, %v3334
        %v3336 = vrot.slane %v3188, 2
        %v3337 = vsel %vm1380, %v3334, %v3336
        %v3338 = vrot.slane %v3189, 2
        %v3339 = vsel %vm1380, %v3336, %v3338
        %v3340 = vrot.slane %v3190, 2
        %v3341 = vsel %vm1380, %v3338, %v3340
        %v3342 = vrot.slane %v3191, 2
        %v3343 = vsel %vm1380, %v3340, %v3342
        %v3344 = vrot.slane %v3192, 2
        %v3345 = vsel %vm1380, %v3342, %v3344
        %v3346 = vrot.slane %v3193, 2
        %v3347 = vsel %vm1380, %v3344, %v3346
        %v3348 = vrot.slane %v3194, 2
        %v3349 = vsel %vm1380, %v3346, %v3348
        %v3350 = vrot.slane %v3195, 2
        %v3351 = vsel %vm1380, %v3348, %v3350
        %v3352 = vrot.slane %v3196, 2
        %v3353 = vsel %vm1380, %v3350, %v3352
        %v3354 = vrot.slane %v3197, 2
        %v3355 = vsel %vm1380, %v3352, %v3354
        %v3356 = vrot.slane %v3198, 2
        %v3357 = vsel %vm1380, %v3354, %v3356
        %v3358 = vrot.slane %v3199, 2
        %v3359 = vsel %vm1380, %v3356, %v3358
        %v3360 = vrot.slane %v3200, 2
        %v3361 = vsel %vm1380, %v3358, %v3360
        %v3362 = vrot.slane %v3201, 2
        %v3363 = vsel %vm1380, %v3360, %v3362
        %v3364 = vrot.slane %v3202, 2
        %v3365 = vsel %vm1380, %v3362, %v3364
        %v3366 = vrot.slane %v3203, 2
        %v3367 = vsel %vm1380, %v3364, %v3366
        %v3368 = vrot.slane %v3204, 2
        %v3369 = vsel %vm1380, %v3366, %v3368
        %v3370 = vrot.slane %v3205, 2
        %v3371 = vsel %vm1380, %v3368, %v3370
        %v3372 = vrot.slane %v3206, 2
        %v3373 = vsel %vm1380, %v3370, %v3372
        %v3374 = vrot.slane %v3207, 2
        %v3375 = vsel %vm1380, %v3372, %v3374
        %v3376 = vrot.slane %v3208, 2
        %v3377 = vsel %vm1380, %v3374, %v3376
        %v3378 = vrot.slane %v3209, 2
        %v3379 = vsel %vm1380, %v3376, %v3378
        %v3380 = vrot.slane %v3210, 2
        %v3381 = vsel %vm1380, %v3378, %v3380
        %v3382 = vrot.slane %v3211, 2
        %v3383 = vsel %vm1380, %v3380, %v3382
        %v3384 = vrot.slane %v3212, 2
        %v3385 = vsel %vm1380, %v3382, %v3384
        %v3386 = vrot.slane %v3213, 2
        %v3387 = vsel %vm1380, %v3384, %v3386
        %v3388 = vrot.slane %v3214, 2
        %v3389 = vsel %vm1380, %v3386, %v3388
        %v3390 = vrot.slane %v3215, 2
        %v3391 = vsel %vm1380, %v3388, %v3390
        %v3392 = vrot.slane %v3216, 2
        %v3393 = vsel %vm1380, %v3390, %v3392
        %v3394 = vrot.slane %v3217, 2
        %v3395 = vsel %vm1380, %v3392, %v3394
        %v3396 = vrot.slane %v3218, 2
        %v3397 = vsel %vm1380, %v3394, %v3396
        %v3398 = vrot.slane %v3219, 2
        %v3399 = vsel %vm1380, %v3396, %v3398
        %v3400 = vrot.slane %v3220, 2
        %v3401 = vsel %vm1380, %v3398, %v3400
        %v3402 = vrot.slane %v3221, 2
        %v3403 = vsel %vm1380, %v3400, %v3402
        %v3404 = vrot.slane %v3222, 2
        %v3405 = vsel %vm1380, %v3402, %v3404
        %v3406 = vrot.slane %v3223, 2
        %v3407 = vsel %vm1380, %v3404, %v3406
        %v3408 = vrot.slane %v3224, 2
        %v3409 = vsel %vm1380, %v3406, %v3408
        %v3410 = vrot.slane %v3225, 2
        %v3411 = vsel %vm1380, %v3408, %v3410
        %v3412 = vrot.slane %v3226, 2
        %v3413 = vsel %vm1380, %v3410, %v3412
        %v3414 = vrot.slane %v3227, 2
        %v3415 = vsel %vm1380, %v3412, %v3414
        %v3416 = vrot.slane %v3228, 2
        %v3417 = vsel %vm1380, %v3414, %v3416
        %v3418 = vrot.slane %v3229, 2
        %v3419 = vsel %vm1380, %v3416, %v3418
        %v3420 = vrot.slane %v3230, 2
        %v3421 = vsel %vm1380, %v3418, %v3420
        %v3422 = vrot.slane %v3231, 2
        %v3423 = vsel %vm1380, %v3420, %v3422
        %v3424 = vrot.slane %v3232, 2
        %v3425 = vsel %vm1380, %v3422, %v3424
        %v3426 = vrot.slane %v3233, 2
        %v3427 = vsel %vm1380, %v3424, %v3426
        %v3428 = vrot.slane %v3234, 2
        %v3429 = vsel %vm1380, %v3426, %v3428
        %v3430 = vrot.slane %v3235, 2
        %v3431 = vsel %vm1380, %v3428, %v3430
        %v3432 = vrot.slane %v3236, 2
        %v3433 = vsel %vm1380, %v3430, %v3432
        %v3500 = vadd.f32 %v3097, %v3305
        %v3501 = vadd.f32 %v3098, %v3307
        %v3502 = vadd.f32 %v3099, %v3309
        %v3503 = vadd.f32 %v3100, %v3311
        %v3504 = vadd.f32 %v3101, %v3313
        %v3505 = vadd.f32 %v3102, %v3315
        %v3506 = vadd.f32 %v3103, %v3317
        %v3507 = vadd.f32 %v3104, %v3319
        %v3508 = vadd.f32 %v3105, %v3321
        %v3509 = vadd.f32 %v3106, %v3323
        %v3510 = vadd.f32 %v3107, %v3325
        %v3511 = vadd.f32 %v3108, %v3327
        %v3512 = vadd.f32 %v3109, %v3329
        %v3513 = vadd.f32 %v3110, %v3331
        %v3514 = vadd.f32 %v3111, %v3333
        %v3515 = vadd.f32 %v3112, %v3335
        %v3516 = vadd.f32 %v3113, %v3337
        %v3517 = vadd.f32 %v3114, %v3339
        %v3518 = vadd.f32 %v3115, %v3341
        %v3519 = vadd.f32 %v3116, %v3343
        %v3520 = vadd.f32 %v3117, %v3345
        %v3521 = vadd.f32 %v3118, %v3347
        %v3522 = vadd.f32 %v3119, %v3349
        %v3523 = vadd.f32 %v3120, %v3351
        %v3524 = vadd.f32 %v3121, %v3353
        %v3525 = vadd.f32 %v3122, %v3355
        %v3526 = vadd.f32 %v3123, %v3357
        %v3527 = vadd.f32 %v3124, %v3359
        %v3528 = vadd.f32 %v3125, %v3361
        %v3529 = vadd.f32 %v3126, %v3363
        %v3530 = vadd.f32 %v3127, %v3365
        %v3531 = vadd.f32 %v3128, %v3367
        %v3532 = vadd.f32 %v3129, %v3369
        %v3533 = vadd.f32 %v3130, %v3371
        %v3534 = vadd.f32 %v3131, %v3373
        %v3535 = vadd.f32 %v3132, %v3375
        %v3536 = vadd.f32 %v3133, %v3377
        %v3537 = vadd.f32 %v3134, %v3379
        %v3538 = vadd.f32 %v3135, %v3381
        %v3539 = vadd.f32 %v3136, %v3383
        %v3540 = vadd.f32 %v3137, %v3385
        %v3541 = vadd.f32 %v3138, %v3387
        %v3542 = vadd.f32 %v3139, %v3389
        %v3543 = vadd.f32 %v3140, %v3391
        %v3544 = vadd.f32 %v3141, %v3393
        %v3545 = vadd.f32 %v3142, %v3395
        %v3546 = vadd.f32 %v3143, %v3397
        %v3547 = vadd.f32 %v3144, %v3399
        %v3548 = vadd.f32 %v3145, %v3401
        %v3549 = vadd.f32 %v3146, %v3403
        %v3550 = vadd.f32 %v3147, %v3405
        %v3551 = vadd.f32 %v3148, %v3407
        %v3552 = vadd.f32 %v3149, %v3409
        %v3553 = vadd.f32 %v3150, %v3411
        %v3554 = vadd.f32 %v3151, %v3413
        %v3555 = vadd.f32 %v3152, %v3415
        %v3556 = vadd.f32 %v3153, %v3417
        %v3557 = vadd.f32 %v3154, %v3419
        %v3558 = vadd.f32 %v3155, %v3421
        %v3559 = vadd.f32 %v3156, %v3423
        %v3560 = vadd.f32 %v3157, %v3425
        %v3561 = vadd.f32 %v3158, %v3427
        %v3562 = vadd.f32 %v3159, %v3429
        %v3563 = vadd.f32 %v3160, %v3431
        %v3564 = vadd.f32 %v3161, %v3433
        %v3565 = vadd.f32 %v3162, %v3432
        %v3566 = vmax.f32 %v3500, 0.0
        %v3567 = vmax.f32 %v3501, 0.0
        %v3568 = vmax.f32 %v3502, 0.0
        %v3569 = vmax.f32 %v3503, 0.0
        %v3570 = vmax.f32 %v3504, 0.0
        %v3571 = vmax.f32 %v3505, 0.0
        %v3572 = vmax.f32 %v3506, 0.0
        %v3573 = vmax.f32 %v3507, 0.0
        %v3574 = vmax.f32 %v3508, 0.0
        %v3575 = vmax.f32 %v3509, 0.0
        %v3576 = vmax.f32 %v3510, 0.0
        %v3577 = vmax.f32 %v3511, 0.0
        %v3578 = vmax.f32 %v3512, 0.0
        %v3579 = vmax.f32 %v3513, 0.0
        %v3580 = vmax.f32 %v3514, 0.0
        %v3581 = vmax.f32 %v3515, 0.0
        %v3582 = vmax.f32 %v3516, 0.0
        %v3583 = vmax.f32 %v3517, 0.0
        %v3584 = vmax.f32 %v3518, 0.0
        %v3585 = vmax.f32 %v3519, 0.0
        %v3586 = vmax.f32 %v3520, 0.0
        %v3587 = vmax.f32 %v3521, 0.0
        %v3588 = vmax.f32 %v3522, 0.0
        %v3589 = vmax.f32 %v3523, 0.0
        %v3590 = vmax.f32 %v3524, 0.0
        %v3591 = vmax.f32 %v3525, 0.0
        %v3592 = vmax.f32 %v3526, 0.0
        %v3593 = vmax.f32 %v3527, 0.0
        %v3594 = vmax.f32 %v3528, 0.0
        %v3595 = vmax.f32 %v3529, 0.0
        %v3596 = vmax.f32 %v3530, 0.0
        %v3597 = vmax.f32 %v3531, 0.0
        %v3598 = vmax.f32 %v3532, 0.0
        %v3599 = vmax.f32 %v3533, 0.0
        %v3600 = vmax.f32 %v3534, 0.0
        %v3601 = vmax.f32 %v3535, 0.0
        %v3602 = vmax.f32 %v3536, 0.0
        %v3603 = vmax.f32 %v3537, 0.0
        %v3604 = vmax.f32 %v3538, 0.0
        %v3605 = vmax.f32 %v3539, 0.0
        %v3606 = vmax.f32 %v3540, 0.0
        %v3607 = vmax.f32 %v3541, 0.0
        %v3608 = vmax.f32 %v3542, 0.0
        %v3609 = vmax.f32 %v3543, 0.0
        %v3610 = vmax.f32 %v3544, 0.0
        %v3611 = vmax.f32 %v3545, 0.0
        %v3612 = vmax.f32 %v3546, 0.0
        %v3613 = vmax.f32 %v3547, 0.0
        %v3614 = vmax.f32 %v3548, 0.0
        %v3615 = vmax.f32 %v3549, 0.0
        %v3616 = vmax.f32 %v3550, 0.0
        %v3617 = vmax.f32 %v3551, 0.0
        %v3618 = vmax.f32 %v3552, 0.0
        %v3619 = vmax.f32 %v3553, 0.0
        %v3620 = vmax.f32 %v3554, 0.0
        %v3621 = vmax.f32 %v3555, 0.0
        %v3622 = vmax.f32 %v3556, 0.0
        %v3623 = vmax.f32 %v3557, 0.0
        %v3624 = vmax.f32 %v3558, 0.0
        %v3625 = vmax.f32 %v3559, 0.0
        %v3626 = vmax.f32 %v3560, 0.0
        %v3627 = vmax.f32 %v3561, 0.0
        %v3628 = vmax.f32 %v3562, 0.0
        %v3629 = vmax.f32 %v3563, 0.0
        %v3630 = vmax.f32 %v3564, 0.0
        %v3631 = vmax.f32 %v3565, 0.0
        %v3632 = vpack.c.bf16 %v3567, %v3566
        %v3633 = vpack.c.bf16 %v3569, %v3568
        %v3634 = vpack.c.bf16 %v3571, %v3570
        %v3635 = vpack.c.bf16 %v3573, %v3572
        %v3636 = vpack.c.bf16 %v3575, %v3574
        %v3637 = vpack.c.bf16 %v3577, %v3576
        %v3638 = vpack.c.bf16 %v3579, %v3578
        %v3639 = vpack.c.bf16 %v3581, %v3580
        %v3640 = vpack.c.bf16 %v3583, %v3582
        %v3641 = vpack.c.bf16 %v3585, %v3584
        %v3642 = vpack.c.bf16 %v3587, %v3586
        %v3643 = vpack.c.bf16 %v3589, %v3588
        %v3644 = vpack.c.bf16 %v3591, %v3590
        %v3645 = vpack.c.bf16 %v3593, %v3592
        %v3646 = vpack.c.bf16 %v3595, %v3594
        %v3647 = vpack.c.bf16 %v3597, %v3596
        %v3648 = vpack.c.bf16 %v3599, %v3598
        %v3649 = vpack.c.bf16 %v3601, %v3600
        %v3650 = vpack.c.bf16 %v3603, %v3602
        %v3651 = vpack.c.bf16 %v3605, %v3604
        %v3652 = vpack.c.bf16 %v3607, %v3606
        %v3653 = vpack.c.bf16 %v3609, %v3608
        %v3654 = vpack.c.bf16 %v3611, %v3610
        %v3655 = vpack.c.bf16 %v3613, %v3612
        %v3656 = vpack.c.bf16 %v3615, %v3614
        %v3657 = vpack.c.bf16 %v3617, %v3616
        %v3658 = vpack.c.bf16 %v3619, %v3618
        %v3659 = vpack.c.bf16 %v3621, %v3620
        %v3660 = vpack.c.bf16 %v3623, %v3622
        %v3661 = vpack.c.bf16 %v3625, %v3624
        %v3662 = vpack.c.bf16 %v3627, %v3626
        %v3663 = vpack.c.bf16 %v3629, %v3628
        %v3664 = vpack.c.bf16 %v3631, %v3630
        %v3698 = vunpack.c.l.b16 %v3632
        %v3699 = vunpack.c.h.b16 %v3632
        %v3700 = vunpack.c.l.b16 %v3633
        %v3701 = vunpack.c.h.b16 %v3633
        %v3702 = vunpack.c.l.b16 %v3634
        %v3703 = vunpack.c.h.b16 %v3634
        %v3704 = vunpack.c.l.b16 %v3635
        %v3705 = vunpack.c.h.b16 %v3635
        %v3706 = vunpack.c.l.b16 %v3636
        %v3707 = vunpack.c.h.b16 %v3636
        %v3708 = vunpack.c.l.b16 %v3637
        %v3709 = vunpack.c.h.b16 %v3637
        %v3710 = vunpack.c.l.b16 %v3638
        %v3711 = vunpack.c.h.b16 %v3638
        %v3712 = vunpack.c.l.b16 %v3639
        %v3713 = vunpack.c.h.b16 %v3639
        %v3714 = vunpack.c.l.b16 %v3640
        %v3715 = vunpack.c.h.b16 %v3640
        %v3716 = vunpack.c.l.b16 %v3641
        %v3717 = vunpack.c.h.b16 %v3641
        %v3718 = vunpack.c.l.b16 %v3642
        %v3719 = vunpack.c.h.b16 %v3642
        %v3720 = vunpack.c.l.b16 %v3643
        %v3721 = vunpack.c.h.b16 %v3643
        %v3722 = vunpack.c.l.b16 %v3644
        %v3723 = vunpack.c.h.b16 %v3644
        %v3724 = vunpack.c.l.b16 %v3645
        %v3725 = vunpack.c.h.b16 %v3645
        %v3726 = vunpack.c.l.b16 %v3646
        %v3727 = vunpack.c.h.b16 %v3646
        %v3728 = vunpack.c.l.b16 %v3647
        %v3729 = vunpack.c.h.b16 %v3647
        %v3730 = vunpack.c.l.b16 %v3648
        %v3731 = vunpack.c.h.b16 %v3648
        %v3732 = vunpack.c.l.b16 %v3649
        %v3733 = vunpack.c.h.b16 %v3649
        %v3734 = vunpack.c.l.b16 %v3650
        %v3735 = vunpack.c.h.b16 %v3650
        %v3736 = vunpack.c.l.b16 %v3651
        %v3737 = vunpack.c.h.b16 %v3651
        %v3738 = vunpack.c.l.b16 %v3652
        %v3739 = vunpack.c.h.b16 %v3652
        %v3740 = vunpack.c.l.b16 %v3653
        %v3741 = vunpack.c.h.b16 %v3653
        %v3742 = vunpack.c.l.b16 %v3654
        %v3743 = vunpack.c.h.b16 %v3654
        %v3744 = vunpack.c.l.b16 %v3655
        %v3745 = vunpack.c.h.b16 %v3655
        %v3746 = vunpack.c.l.b16 %v3656
        %v3747 = vunpack.c.h.b16 %v3656
        %v3748 = vunpack.c.l.b16 %v3657
        %v3749 = vunpack.c.h.b16 %v3657
        %v3750 = vunpack.c.l.b16 %v3658
        %v3751 = vunpack.c.h.b16 %v3658
        %v3752 = vunpack.c.l.b16 %v3659
        %v3753 = vunpack.c.h.b16 %v3659
        %v3754 = vunpack.c.l.b16 %v3660
        %v3755 = vunpack.c.h.b16 %v3660
        %v3756 = vunpack.c.l.b16 %v3661
        %v3757 = vunpack.c.h.b16 %v3661
        %v3758 = vunpack.c.l.b16 %v3662
        %v3759 = vunpack.c.h.b16 %v3662
        %v3760 = vunpack.c.l.b16 %v3663
        %v3761 = vunpack.c.h.b16 %v3663
        %v3762 = vunpack.c.l.b16 %v3664
        %v3763 = vunpack.c.h.b16 %v3664
        %v3764 = vpack.c.b16 %v3698, %v3698
        %v3765 = vpack.c.b16 %v3699, %v3699
        %v3766 = vpack.c.b16 %v3700, %v3700
        %v3767 = vpack.c.b16 %v3701, %v3701
        %v3768 = vpack.c.b16 %v3702, %v3702
        %v3769 = vpack.c.b16 %v3703, %v3703
        %v3770 = vpack.c.b16 %v3704, %v3704
        %v3771 = vpack.c.b16 %v3705, %v3705
        %v3772 = vpack.c.b16 %v3706, %v3706
        %v3773 = vpack.c.b16 %v3707, %v3707
        %v3774 = vpack.c.b16 %v3708, %v3708
        %v3775 = vpack.c.b16 %v3709, %v3709
        %v3776 = vpack.c.b16 %v3710, %v3710
        %v3777 = vpack.c.b16 %v3711, %v3711
        %v3778 = vpack.c.b16 %v3712, %v3712
        %v3779 = vpack.c.b16 %v3713, %v3713
        %v3780 = vpack.c.b16 %v3714, %v3714
        %v3781 = vpack.c.b16 %v3715, %v3715
        %v3782 = vpack.c.b16 %v3716, %v3716
        %v3783 = vpack.c.b16 %v3717, %v3717
        %v3784 = vpack.c.b16 %v3718, %v3718
        %v3785 = vpack.c.b16 %v3719, %v3719
        %v3786 = vpack.c.b16 %v3720, %v3720
        %v3787 = vpack.c.b16 %v3721, %v3721
        %v3788 = vpack.c.b16 %v3722, %v3722
        %v3789 = vpack.c.b16 %v3723, %v3723
        %v3790 = vpack.c.b16 %v3724, %v3724
        %v3791 = vpack.c.b16 %v3725, %v3725
        %v3792 = vpack.c.b16 %v3726, %v3726
        %v3793 = vpack.c.b16 %v3727, %v3727
        %v3794 = vpack.c.b16 %v3728, %v3728
        %v3795 = vpack.c.b16 %v3729, %v3729
        %v3796 = vpack.c.b16 %v3730, %v3730
        %v3797 = vpack.c.b16 %v3731, %v3731
        %v3798 = vpack.c.b16 %v3732, %v3732
        %v3799 = vpack.c.b16 %v3733, %v3733
        %v3800 = vpack.c.b16 %v3734, %v3734
        %v3801 = vpack.c.b16 %v3735, %v3735
        %v3802 = vpack.c.b16 %v3736, %v3736
        %v3803 = vpack.c.b16 %v3737, %v3737
        %v3804 = vpack.c.b16 %v3738, %v3738
        %v3805 = vpack.c.b16 %v3739, %v3739
        %v3806 = vpack.c.b16 %v3740, %v3740
        %v3807 = vpack.c.b16 %v3741, %v3741
        %v3808 = vpack.c.b16 %v3742, %v3742
        %v3809 = vpack.c.b16 %v3743, %v3743
        %v3810 = vpack.c.b16 %v3744, %v3744
        %v3811 = vpack.c.b16 %v3745, %v3745
        %v3812 = vpack.c.b16 %v3746, %v3746
        %v3813 = vpack.c.b16 %v3747, %v3747
        %v3814 = vpack.c.b16 %v3748, %v3748
        %v3815 = vpack.c.b16 %v3749, %v3749
        %v3816 = vpack.c.b16 %v3750, %v3750
        %v3817 = vpack.c.b16 %v3751, %v3751
        %v3818 = vpack.c.b16 %v3752, %v3752
        %v3819 = vpack.c.b16 %v3753, %v3753
        %v3820 = vpack.c.b16 %v3754, %v3754
        %v3821 = vpack.c.b16 %v3755, %v3755
        %v3822 = vpack.c.b16 %v3756, %v3756
        %v3823 = vpack.c.b16 %v3757, %v3757
        %v3824 = vpack.c.b16 %v3758, %v3758
        %v3825 = vpack.c.b16 %v3759, %v3759
        %v3826 = vpack.c.b16 %v3760, %v3760
        %v3827 = vpack.c.b16 %v3761, %v3761
        %v3828 = vpack.c.b16 %v3762, %v3762
        %v3829 = vpack.c.b16 %v3763, %v3763
        %3896 = vst.msk [vmem:[#allocation2] sm:$0xf] %vm281, %v3764
        %3897 = vst.msk [vmem:[#allocation2 + $0x4] sm:$0xf] %vm281, %v3765
        %3898 = vst.msk [vmem:[#allocation2 + $0x8] sm:$0xf] %vm281, %v3766
        %3899 = vst.msk [vmem:[#allocation2 + $0xc] sm:$0xf] %vm281, %v3767
        %3900 = vst.msk [vmem:[#allocation2 + $0x10] sm:$0xf] %vm281, %v3768
        %3901 = vst.msk [vmem:[#allocation2 + $0x14] sm:$0xf] %vm281, %v3769
        %3902 = vst.msk [vmem:[#allocation2 + $0x18] sm:$0xf] %vm281, %v3770
        %3903 = vst.msk [vmem:[#allocation2 + $0x1c] sm:$0xf] %vm281, %v3771
        %3904 = vst.msk [vmem:[#allocation2 + $0x20] sm:$0xf] %vm281, %v3772
        %3905 = vst.msk [vmem:[#allocation2 + $0x24] sm:$0xf] %vm281, %v3773
        %3906 = vst.msk [vmem:[#allocation2 + $0x28] sm:$0xf] %vm281, %v3774
        %3907 = vst.msk [vmem:[#allocation2 + $0x2c] sm:$0xf] %vm281, %v3775
        %3908 = vst.msk [vmem:[#allocation2 + $0x30] sm:$0xf] %vm281, %v3776
        %3909 = vst.msk [vmem:[#allocation2 + $0x34] sm:$0xf] %vm281, %v3777
        %3910 = vst.msk [vmem:[#allocation2 + $0x38] sm:$0xf] %vm281, %v3778
        %3911 = vst.msk [vmem:[#allocation2 + $0x3c] sm:$0xf] %vm281, %v3779
        %3912 = vst.msk [vmem:[#allocation2 + $0x40] sm:$0xf] %vm281, %v3780
        %3913 = vst.msk [vmem:[#allocation2 + $0x44] sm:$0xf] %vm281, %v3781
        %3914 = vst.msk [vmem:[#allocation2 + $0x48] sm:$0xf] %vm281, %v3782
        %3915 = vst.msk [vmem:[#allocation2 + $0x4c] sm:$0xf] %vm281, %v3783
        %3916 = vst.msk [vmem:[#allocation2 + $0x50] sm:$0xf] %vm281, %v3784
        %3917 = vst.msk [vmem:[#allocation2 + $0x54] sm:$0xf] %vm281, %v3785
        %3918 = vst.msk [vmem:[#allocation2 + $0x58] sm:$0xf] %vm281, %v3786
        %3919 = vst.msk [vmem:[#allocation2 + $0x5c] sm:$0xf] %vm281, %v3787
        %3920 = vst.msk [vmem:[#allocation2 + $0x60] sm:$0xf] %vm281, %v3788
        %3921 = vst.msk [vmem:[#allocation2 + $0x64] sm:$0xf] %vm281, %v3789
        %3922 = vst.msk [vmem:[#allocation2 + $0x68] sm:$0xf] %vm281, %v3790
        %3923 = vst.msk [vmem:[#allocation2 + $0x6c] sm:$0xf] %vm281, %v3791
        %3924 = vst.msk [vmem:[#allocation2 + $0x70] sm:$0xf] %vm281, %v3792
        %3925 = vst.msk [vmem:[#allocation2 + $0x74] sm:$0xf] %vm281, %v3793
        %3926 = vst.msk [vmem:[#allocation2 + $0x78] sm:$0xf] %vm281, %v3794
        %3927 = vst.msk [vmem:[#allocation2 + $0x7c] sm:$0xf] %vm281, %v3795
        %3928 = vst.msk [vmem:[#allocation2 + $0x80] sm:$0xf] %vm281, %v3796
        %3929 = vst.msk [vmem:[#allocation2 + $0x84] sm:$0xf] %vm281, %v3797
        %3930 = vst.msk [vmem:[#allocation2 + $0x88] sm:$0xf] %vm281, %v3798
        %3931 = vst.msk [vmem:[#allocation2 + $0x8c] sm:$0xf] %vm281, %v3799
        %3932 = vst.msk [vmem:[#allocation2 + $0x90] sm:$0xf] %vm281, %v3800
        %3933 = vst.msk [vmem:[#allocation2 + $0x94] sm:$0xf] %vm281, %v3801
        %3934 = vst.msk [vmem:[#allocation2 + $0x98] sm:$0xf] %vm281, %v3802
        %3935 = vst.msk [vmem:[#allocation2 + $0x9c] sm:$0xf] %vm281, %v3803
        %3936 = vst.msk [vmem:[#allocation2 + $0xa0] sm:$0xf] %vm281, %v3804
        %3937 = vst.msk [vmem:[#allocation2 + $0xa4] sm:$0xf] %vm281, %v3805
        %3938 = vst.msk [vmem:[#allocation2 + $0xa8] sm:$0xf] %vm281, %v3806
        %3939 = vst.msk [vmem:[#allocation2 + $0xac] sm:$0xf] %vm281, %v3807
        %3940 = vst.msk [vmem:[#allocation2 + $0xb0] sm:$0xf] %vm281, %v3808
        %3941 = vst.msk [vmem:[#allocation2 + $0xb4] sm:$0xf] %vm281, %v3809
        %3942 = vst.msk [vmem:[#allocation2 + $0xb8] sm:$0xf] %vm281, %v3810
        %3943 = vst.msk [vmem:[#allocation2 + $0xbc] sm:$0xf] %vm281, %v3811
        %3944 = vst.msk [vmem:[#allocation2 + $0xc0] sm:$0xf] %vm281, %v3812
        %3945 = vst.msk [vmem:[#allocation2 + $0xc4] sm:$0xf] %vm281, %v3813
        %3946 = vst.msk [vmem:[#allocation2 + $0xc8] sm:$0xf] %vm281, %v3814
        %3947 = vst.msk [vmem:[#allocation2 + $0xcc] sm:$0xf] %vm281, %v3815
        %3948 = vst.msk [vmem:[#allocation2 + $0xd0] sm:$0xf] %vm281, %v3816
        %3949 = vst.msk [vmem:[#allocation2 + $0xd4] sm:$0xf] %vm281, %v3817
        %3950 = vst.msk [vmem:[#allocation2 + $0xd8] sm:$0xf] %vm281, %v3818
        %3951 = vst.msk [vmem:[#allocation2 + $0xdc] sm:$0xf] %vm281, %v3819
        %3952 = vst.msk [vmem:[#allocation2 + $0xe0] sm:$0xf] %vm281, %v3820
        %3953 = vst.msk [vmem:[#allocation2 + $0xe4] sm:$0xf] %vm281, %v3821
        %3954 = vst.msk [vmem:[#allocation2 + $0xe8] sm:$0xf] %vm281, %v3822
        %3955 = vst.msk [vmem:[#allocation2 + $0xec] sm:$0xf] %vm281, %v3823
        %3956 = vst.msk [vmem:[#allocation2 + $0xf0] sm:$0xf] %vm281, %v3824
        %3957 = vst.msk [vmem:[#allocation2 + $0xf4] sm:$0xf] %vm281, %v3825
        %3958 = vst.msk [vmem:[#allocation2 + $0xf8] sm:$0xf] %vm281, %v3826
        %3959 = vst.msk [vmem:[#allocation2 + $0xfc] sm:$0xf] %vm281, %v3827
        %3960 = vst.msk [vmem:[#allocation2 + $0x100] sm:$0xf] %vm281, %v3828
        %vm3961 = vcmask 518144
        %3962 = vst.msk [vmem:[#allocation2 + $0x104] sm:$0x7] %vm3961, %v3829
        %v3963 = vld [vmem:[#allocation2] sm:$0xf]
        %v3964 = vld [vmem:[#allocation2 + $0x4] sm:$0xf]
        %v3965 = vld [vmem:[#allocation2 + $0x8] sm:$0xf]
        %v3966 = vld [vmem:[#allocation2 + $0xc] sm:$0xf]
        %v3967 = vld [vmem:[#allocation2 + $0x10] sm:$0xf]
        %v3968 = vld [vmem:[#allocation2 + $0x14] sm:$0xf]
        %v3969 = vld [vmem:[#allocation2 + $0x18] sm:$0xf]
        %v3970 = vld [vmem:[#allocation2 + $0x1c] sm:$0xf]
        %v3971 = vld [vmem:[#allocation2 + $0x20] sm:$0xf]
        %v3972 = vld [vmem:[#allocation2 + $0x24] sm:$0xf]
        %v3973 = vld [vmem:[#allocation2 + $0x28] sm:$0xf]
        %v3974 = vld [vmem:[#allocation2 + $0x2c] sm:$0xf]
        %v3975 = vld [vmem:[#allocation2 + $0x30] sm:$0xf]
        %v3976 = vld [vmem:[#allocation2 + $0x34] sm:$0xf]
        %v3977 = vld [vmem:[#allocation2 + $0x38] sm:$0xf]
        %v3978 = vld [vmem:[#allocation2 + $0x3c] sm:$0xf]
        %v3979 = vld [vmem:[#allocation2 + $0x40] sm:$0xf]
        %v3980 = vld [vmem:[#allocation2 + $0x44] sm:$0xf]
        %v3981 = vld [vmem:[#allocation2 + $0x48] sm:$0xf]
        %v3982 = vld [vmem:[#allocation2 + $0x4c] sm:$0xf]
        %v3983 = vld [vmem:[#allocation2 + $0x50] sm:$0xf]
        %v3984 = vld [vmem:[#allocation2 + $0x54] sm:$0xf]
        %v3985 = vld [vmem:[#allocation2 + $0x58] sm:$0xf]
        %v3986 = vld [vmem:[#allocation2 + $0x5c] sm:$0xf]
        %v3987 = vld [vmem:[#allocation2 + $0x60] sm:$0xf]
        %v3988 = vld [vmem:[#allocation2 + $0x64] sm:$0xf]
        %v3989 = vld [vmem:[#allocation2 + $0x68] sm:$0xf]
        %v3990 = vld [vmem:[#allocation2 + $0x6c] sm:$0xf]
        %v3991 = vld [vmem:[#allocation2 + $0x70] sm:$0xf]
        %v3992 = vld [vmem:[#allocation2 + $0x74] sm:$0xf]
        %v3993 = vld [vmem:[#allocation2 + $0x78] sm:$0xf]
        %v3994 = vld [vmem:[#allocation2 + $0x7c] sm:$0xf]
        %v3995 = vld [vmem:[#allocation2 + $0x80] sm:$0xf]
        %v3996 = vld [vmem:[#allocation2 + $0x84] sm:$0xf]
        %v3997 = vld [vmem:[#allocation2 + $0x88] sm:$0xf]
        %v3998 = vld [vmem:[#allocation2 + $0x8c] sm:$0xf]
        %v3999 = vld [vmem:[#allocation2 + $0x90] sm:$0xf]
        %v4000 = vld [vmem:[#allocation2 + $0x94] sm:$0xf]
        %v4001 = vld [vmem:[#allocation2 + $0x98] sm:$0xf]
        %v4002 = vld [vmem:[#allocation2 + $0x9c] sm:$0xf]
        %v4003 = vld [vmem:[#allocation2 + $0xa0] sm:$0xf]
        %v4004 = vld [vmem:[#allocation2 + $0xa4] sm:$0xf]
        %v4005 = vld [vmem:[#allocation2 + $0xa8] sm:$0xf]
        %v4006 = vld [vmem:[#allocation2 + $0xac] sm:$0xf]
        %v4007 = vld [vmem:[#allocation2 + $0xb0] sm:$0xf]
        %v4008 = vld [vmem:[#allocation2 + $0xb4] sm:$0xf]
        %v4009 = vld [vmem:[#allocation2 + $0xb8] sm:$0xf]
        %v4010 = vld [vmem:[#allocation2 + $0xbc] sm:$0xf]
        %v4011 = vld [vmem:[#allocation2 + $0xc0] sm:$0xf]
        %v4012 = vld [vmem:[#allocation2 + $0xc4] sm:$0xf]
        %v4013 = vld [vmem:[#allocation2 + $0xc8] sm:$0xf]
        %v4014 = vld [vmem:[#allocation2 + $0xcc] sm:$0xf]
        %v4015 = vld [vmem:[#allocation2 + $0xd0] sm:$0xf]
        %v4016 = vld [vmem:[#allocation2 + $0xd4] sm:$0xf]
        %v4017 = vld [vmem:[#allocation2 + $0xd8] sm:$0xf]
        %v4018 = vld [vmem:[#allocation2 + $0xdc] sm:$0xf]
        %v4019 = vld [vmem:[#allocation2 + $0xe0] sm:$0xf]
        %v4020 = vld [vmem:[#allocation2 + $0xe4] sm:$0xf]
        %v4021 = vld [vmem:[#allocation2 + $0xe8] sm:$0xf]
        %v4022 = vld [vmem:[#allocation2 + $0xec] sm:$0xf]
        %4023 = vst.msk [vmem:[#allocation3] sm:$0xf] %vm281, %v3963
        %4024 = vst.msk [vmem:[#allocation3 + $0x14] sm:$0xf] %vm281, %v3964
        %4025 = vst.msk [vmem:[#allocation3 + $0x28] sm:$0xf] %vm281, %v3965
        %4026 = vst.msk [vmem:[#allocation3 + $0x3c] sm:$0xf] %vm281, %v3966
        %4027 = vst.msk [vmem:[#allocation3 + $0x50] sm:$0xf] %vm281, %v3967
        %4028 = vst.msk [vmem:[#allocation3 + $0x64] sm:$0xf] %vm281, %v3968
        %4029 = vst.msk [vmem:[#allocation3 + $0x78] sm:$0xf] %vm281, %v3969
        %4030 = vst.msk [vmem:[#allocation3 + $0x8c] sm:$0xf] %vm281, %v3970
        %4031 = vst.msk [vmem:[#allocation3 + $0xa0] sm:$0xf] %vm281, %v3971
        %4032 = vst.msk [vmem:[#allocation3 + $0xb4] sm:$0xf] %vm281, %v3972
        %4033 = vst.msk [vmem:[#allocation3 + $0xc8] sm:$0xf] %vm281, %v3973
        %4034 = vst.msk [vmem:[#allocation3 + $0xdc] sm:$0xf] %vm281, %v3974
        %4035 = vst.msk [vmem:[#allocation3 + $0xf0] sm:$0xf] %vm281, %v3975
        %4036 = vst.msk [vmem:[#allocation3 + $0x104] sm:$0xf] %vm281, %v3976
        %4037 = vst.msk [vmem:[#allocation3 + $0x118] sm:$0xf] %vm281, %v3977
        %4038 = vst.msk [vmem:[#allocation3 + $0x12c] sm:$0xf] %vm281, %v3978
        %4039 = vst.msk [vmem:[#allocation3 + $0x140] sm:$0xf] %vm281, %v3979
        %4040 = vst.msk [vmem:[#allocation3 + $0x154] sm:$0xf] %vm281, %v3980
        %4041 = vst.msk [vmem:[#allocation3 + $0x168] sm:$0xf] %vm281, %v3981
        %4042 = vst.msk [vmem:[#allocation3 + $0x17c] sm:$0xf] %vm281, %v3982
        %4043 = vst.msk [vmem:[#allocation3 + $0x190] sm:$0xf] %vm281, %v3983
        %4044 = vst.msk [vmem:[#allocation3 + $0x1a4] sm:$0xf] %vm281, %v3984
        %4045 = vst.msk [vmem:[#allocation3 + $0x1b8] sm:$0xf] %vm281, %v3985
        %4046 = vst.msk [vmem:[#allocation3 + $0x1cc] sm:$0xf] %vm281, %v3986
        %4047 = vst.msk [vmem:[#allocation3 + $0x1e0] sm:$0xf] %vm281, %v3987
        %4048 = vst.msk [vmem:[#allocation3 + $0x1f4] sm:$0xf] %vm281, %v3988
        %4049 = vst.msk [vmem:[#allocation3 + $0x208] sm:$0xf] %vm281, %v3989
        %4050 = vst.msk [vmem:[#allocation3 + $0x21c] sm:$0xf] %vm281, %v3990
        %4051 = vst.msk [vmem:[#allocation3 + $0x230] sm:$0xf] %vm281, %v3991
        %4052 = vst.msk [vmem:[#allocation3 + $0x244] sm:$0xf] %vm281, %v3992
        %4053 = vst.msk [vmem:[#allocation3 + $0x258] sm:$0xf] %vm281, %v3993
        %4054 = vst.msk [vmem:[#allocation3 + $0x26c] sm:$0xf] %vm281, %v3994
        %4055 = vst.msk [vmem:[#allocation3 + $0x280] sm:$0xf] %vm281, %v3995
        %4056 = vst.msk [vmem:[#allocation3 + $0x294] sm:$0xf] %vm281, %v3996
        %4057 = vst.msk [vmem:[#allocation3 + $0x2a8] sm:$0xf] %vm281, %v3997
        %4058 = vst.msk [vmem:[#allocation3 + $0x2bc] sm:$0xf] %vm281, %v3998
        %4059 = vst.msk [vmem:[#allocation3 + $0x2d0] sm:$0xf] %vm281, %v3999
        %4060 = vst.msk [vmem:[#allocation3 + $0x2e4] sm:$0xf] %vm281, %v4000
        %4061 = vst.msk [vmem:[#allocation3 + $0x2f8] sm:$0xf] %vm281, %v4001
        %4062 = vst.msk [vmem:[#allocation3 + $0x30c] sm:$0xf] %vm281, %v4002
        %4063 = vst.msk [vmem:[#allocation3 + $0x320] sm:$0xf] %vm281, %v4003
        %4064 = vst.msk [vmem:[#allocation3 + $0x334] sm:$0xf] %vm281, %v4004
        %4065 = vst.msk [vmem:[#allocation3 + $0x348] sm:$0xf] %vm281, %v4005
        %4066 = vst.msk [vmem:[#allocation3 + $0x35c] sm:$0xf] %vm281, %v4006
        %4067 = vst.msk [vmem:[#allocation3 + $0x370] sm:$0xf] %vm281, %v4007
        %4068 = vst.msk [vmem:[#allocation3 + $0x384] sm:$0xf] %vm281, %v4008
        %4069 = vst.msk [vmem:[#allocation3 + $0x398] sm:$0xf] %vm281, %v4009
        %4070 = vst.msk [vmem:[#allocation3 + $0x3ac] sm:$0xf] %vm281, %v4010
        %4071 = vst.msk [vmem:[#allocation3 + $0x3c0] sm:$0xf] %vm281, %v4011
        %4072 = vst.msk [vmem:[#allocation3 + $0x3d4] sm:$0xf] %vm281, %v4012
        %4073 = vst.msk [vmem:[#allocation3 + $0x3e8] sm:$0xf] %vm281, %v4013
        %4074 = vst.msk [vmem:[#allocation3 + $0x3fc] sm:$0xf] %vm281, %v4014
        %4075 = vst.msk [vmem:[#allocation3 + $0x410] sm:$0xf] %vm281, %v4015
        %4076 = vst.msk [vmem:[#allocation3 + $0x424] sm:$0xf] %vm281, %v4016
        %4077 = vst.msk [vmem:[#allocation3 + $0x438] sm:$0xf] %vm281, %v4017
        %4078 = vst.msk [vmem:[#allocation3 + $0x44c] sm:$0xf] %vm281, %v4018
        %4079 = vst.msk [vmem:[#allocation3 + $0x460] sm:$0xf] %vm281, %v4019
        %4080 = vst.msk [vmem:[#allocation3 + $0x474] sm:$0xf] %vm281, %v4020
        %4081 = vst.msk [vmem:[#allocation3 + $0x488] sm:$0xf] %vm281, %v4021
        %4082 = vst.msk [vmem:[#allocation3 + $0x49c] sm:$0xf] %vm281, %v4022
        %v4083 = vld [vmem:[#allocation2] sm:$0xf]
        %v4084 = vld [vmem:[#allocation2 + $0x4] sm:$0xf]
        %v4085 = vld [vmem:[#allocation2 + $0x8] sm:$0xf]
        %v4086 = vld [vmem:[#allocation2 + $0xc] sm:$0xf]
        %v4087 = vld [vmem:[#allocation2 + $0x10] sm:$0xf]
        %v4088 = vld [vmem:[#allocation2 + $0x14] sm:$0xf]
        %v4089 = vld [vmem:[#allocation2 + $0x18] sm:$0xf]
        %v4090 = vld [vmem:[#allocation2 + $0x1c] sm:$0xf]
        %v4091 = vld [vmem:[#allocation2 + $0x20] sm:$0xf]
        %v4092 = vld [vmem:[#allocation2 + $0x24] sm:$0xf]
        %v4093 = vld [vmem:[#allocation2 + $0x28] sm:$0xf]
        %v4094 = vld [vmem:[#allocation2 + $0x2c] sm:$0xf]
        %v4095 = vld [vmem:[#allocation2 + $0x30] sm:$0xf]
        %v4096 = vld [vmem:[#allocation2 + $0x34] sm:$0xf]
        %v4097 = vld [vmem:[#allocation2 + $0x38] sm:$0xf]
        %v4098 = vld [vmem:[#allocation2 + $0x3c] sm:$0xf]
        %v4099 = vld [vmem:[#allocation2 + $0x40] sm:$0xf]
        %v4100 = vld [vmem:[#allocation2 + $0x44] sm:$0xf]
        %v4101 = vld [vmem:[#allocation2 + $0x48] sm:$0xf]
        %v4102 = vld [vmem:[#allocation2 + $0x4c] sm:$0xf]
        %v4103 = vld [vmem:[#allocation2 + $0x50] sm:$0xf]
        %v4104 = vld [vmem:[#allocation2 + $0x54] sm:$0xf]
        %v4105 = vld [vmem:[#allocation2 + $0x58] sm:$0xf]
        %v4106 = vld [vmem:[#allocation2 + $0x5c] sm:$0xf]
        %v4107 = vld [vmem:[#allocation2 + $0x60] sm:$0xf]
        %v4108 = vld [vmem:[#allocation2 + $0x64] sm:$0xf]
        %v4109 = vld [vmem:[#allocation2 + $0x68] sm:$0xf]
        %v4110 = vld [vmem:[#allocation2 + $0x6c] sm:$0xf]
        %v4111 = vld [vmem:[#allocation2 + $0x70] sm:$0xf]
        %v4112 = vld [vmem:[#allocation2 + $0x74] sm:$0xf]
        %v4113 = vld [vmem:[#allocation2 + $0x78] sm:$0xf]
        %v4114 = vld [vmem:[#allocation2 + $0x7c] sm:$0xf]
        %v4115 = vld [vmem:[#allocation2 + $0x80] sm:$0xf]
        %v4116 = vld [vmem:[#allocation2 + $0x84] sm:$0xf]
        %v4117 = vld [vmem:[#allocation2 + $0x88] sm:$0xf]
        %v4118 = vld [vmem:[#allocation2 + $0x8c] sm:$0xf]
        %v4119 = vld [vmem:[#allocation2 + $0x90] sm:$0xf]
        %v4120 = vld [vmem:[#allocation2 + $0x94] sm:$0xf]
        %v4121 = vld [vmem:[#allocation2 + $0x98] sm:$0xf]
        %v4122 = vld [vmem:[#allocation2 + $0x9c] sm:$0xf]
        %v4123 = vld [vmem:[#allocation2 + $0xa0] sm:$0xf]
        %v4124 = vld [vmem:[#allocation2 + $0xa4] sm:$0xf]
        %v4125 = vld [vmem:[#allocation2 + $0xa8] sm:$0xf]
        %v4126 = vld [vmem:[#allocation2 + $0xac] sm:$0xf]
        %v4127 = vld [vmem:[#allocation2 + $0xb0] sm:$0xf]
        %v4128 = vld [vmem:[#allocation2 + $0xb4] sm:$0xf]
        %v4129 = vld [vmem:[#allocation2 + $0xb8] sm:$0xf]
        %v4130 = vld [vmem:[#allocation2 + $0xbc] sm:$0xf]
        %v4131 = vld [vmem:[#allocation2 + $0xc0] sm:$0xf]
        %v4132 = vld [vmem:[#allocation2 + $0xc4] sm:$0xf]
        %v4133 = vld [vmem:[#allocation2 + $0xc8] sm:$0xf]
        %v4134 = vld [vmem:[#allocation2 + $0xcc] sm:$0xf]
        %v4135 = vld [vmem:[#allocation2 + $0xd0] sm:$0xf]
        %v4136 = vld [vmem:[#allocation2 + $0xd4] sm:$0xf]
        %v4137 = vld [vmem:[#allocation2 + $0xd8] sm:$0xf]
        %v4138 = vld [vmem:[#allocation2 + $0xdc] sm:$0xf]
        %v4139 = vld [vmem:[#allocation2 + $0xe0] sm:$0xf]
        %v4140 = vld [vmem:[#allocation2 + $0xe4] sm:$0xf]
        %v4141 = vld [vmem:[#allocation2 + $0xe8] sm:$0xf]
        %v4142 = vld [vmem:[#allocation2 + $0xec] sm:$0xf]
        %v4143 = vld [vmem:[#allocation2 + $0xf0] sm:$0x1]
        %vm4144 = vsmask.f32 3328
        %vm4145 = vsmask.f32 7440
        %vm4146 = vmor %vm4144, %vm4145
        %v4148 = vshrl.u32 %v4083, 16
        %v4150 = vrot.slane %v4148, 4
        %v4151 = vshll.u32 %v4083, 16
        %v4153 = vrot.slane %v4151, 5
        %v4154 = vor.u32 %v4150, %v4153
        %v4155 = vrot.slane %v4154, 4
        %v4157 = vshll.u32 %v4084, 16
        %v4159 = vrot.slane %v4157, 5
        %v4160 = vsel %vm4146, %v4155, %v4159
        %v4161 = vshrl.u32 %v4084, 16
        %v4163 = vrot.slane %v4161, 4
        %v4164 = vor.u32 %v4163, %v4159
        %v4165 = vrot.slane %v4164, 4
        %v4167 = vshll.u32 %v4085, 16
        %v4169 = vrot.slane %v4167, 5
        %v4170 = vsel %vm4146, %v4165, %v4169
        %v4171 = vshrl.u32 %v4085, 16
        %v4173 = vrot.slane %v4171, 4
        %v4174 = vor.u32 %v4173, %v4169
        %v4175 = vrot.slane %v4174, 4
        %v4177 = vshll.u32 %v4086, 16
        %v4179 = vrot.slane %v4177, 5
        %v4180 = vsel %vm4146, %v4175, %v4179
        %v4181 = vshrl.u32 %v4086, 16
        %v4183 = vrot.slane %v4181, 4
        %v4184 = vor.u32 %v4183, %v4179
        %v4185 = vrot.slane %v4184, 4
        %v4187 = vshll.u32 %v4087, 16
        %v4189 = vrot.slane %v4187, 5
        %v4190 = vsel %vm4146, %v4185, %v4189
        %v4191 = vshrl.u32 %v4087, 16
        %v4193 = vrot.slane %v4191, 4
        %v4194 = vor.u32 %v4193, %v4189
        %v4195 = vrot.slane %v4194, 4
        %v4197 = vshll.u32 %v4088, 16
        %v4199 = vrot.slane %v4197, 5
        %v4200 = vsel %vm4146, %v4195, %v4199
        %v4201 = vshrl.u32 %v4088, 16
        %v4203 = vrot.slane %v4201, 4
        %v4204 = vor.u32 %v4203, %v4199
        %v4205 = vrot.slane %v4204, 4
        %v4207 = vshll.u32 %v4089, 16
        %v4209 = vrot.slane %v4207, 5
        %v4210 = vsel %vm4146, %v4205, %v4209
        %v4211 = vshrl.u32 %v4089, 16
        %v4213 = vrot.slane %v4211, 4
        %v4214 = vor.u32 %v4213, %v4209
        %v4215 = vrot.slane %v4214, 4
        %v4217 = vshll.u32 %v4090, 16
        %v4219 = vrot.slane %v4217, 5
        %v4220 = vsel %vm4146, %v4215, %v4219
        %v4221 = vshrl.u32 %v4090, 16
        %v4223 = vrot.slane %v4221, 4
        %v4224 = vor.u32 %v4223, %v4219
        %v4225 = vrot.slane %v4224, 4
        %v4227 = vshll.u32 %v4091, 16
        %v4229 = vrot.slane %v4227, 5
        %v4230 = vsel %vm4146, %v4225, %v4229
        %v4231 = vshrl.u32 %v4091, 16
        %v4233 = vrot.slane %v4231, 4
        %v4234 = vor.u32 %v4233, %v4229
        %v4235 = vrot.slane %v4234, 4
        %v4237 = vshll.u32 %v4092, 16
        %v4239 = vrot.slane %v4237, 5
        %v4240 = vsel %vm4146, %v4235, %v4239
        %v4241 = vshrl.u32 %v4092, 16
        %v4243 = vrot.slane %v4241, 4
        %v4244 = vor.u32 %v4243, %v4239
        %v4245 = vrot.slane %v4244, 4
        %v4247 = vshll.u32 %v4093, 16
        %v4249 = vrot.slane %v4247, 5
        %v4250 = vsel %vm4146, %v4245, %v4249
        %v4251 = vshrl.u32 %v4093, 16
        %v4253 = vrot.slane %v4251, 4
        %v4254 = vor.u32 %v4253, %v4249
        %v4255 = vrot.slane %v4254, 4
        %v4257 = vshll.u32 %v4094, 16
        %v4259 = vrot.slane %v4257, 5
        %v4260 = vsel %vm4146, %v4255, %v4259
        %v4261 = vshrl.u32 %v4094, 16
        %v4263 = vrot.slane %v4261, 4
        %v4264 = vor.u32 %v4263, %v4259
        %v4265 = vrot.slane %v4264, 4
        %v4267 = vshll.u32 %v4095, 16
        %v4269 = vrot.slane %v4267, 5
        %v4270 = vsel %vm4146, %v4265, %v4269
        %v4271 = vshrl.u32 %v4095, 16
        %v4273 = vrot.slane %v4271, 4
        %v4274 = vor.u32 %v4273, %v4269
        %v4275 = vrot.slane %v4274, 4
        %v4277 = vshll.u32 %v4096, 16
        %v4279 = vrot.slane %v4277, 5
        %v4280 = vsel %vm4146, %v4275, %v4279
        %v4281 = vshrl.u32 %v4096, 16
        %v4283 = vrot.slane %v4281, 4
        %v4284 = vor.u32 %v4283, %v4279
        %v4285 = vrot.slane %v4284, 4
        %v4287 = vshll.u32 %v4097, 16
        %v4289 = vrot.slane %v4287, 5
        %v4290 = vsel %vm4146, %v4285, %v4289
        %v4291 = vshrl.u32 %v4097, 16
        %v4293 = vrot.slane %v4291, 4
        %v4294 = vor.u32 %v4293, %v4289
        %v4295 = vrot.slane %v4294, 4
        %v4297 = vshll.u32 %v4098, 16
        %v4299 = vrot.slane %v4297, 5
        %v4300 = vsel %vm4146, %v4295, %v4299
        %v4301 = vshrl.u32 %v4098, 16
        %v4303 = vrot.slane %v4301, 4
        %v4304 = vor.u32 %v4303, %v4299
        %v4305 = vrot.slane %v4304, 4
        %v4307 = vshll.u32 %v4099, 16
        %v4309 = vrot.slane %v4307, 5
        %v4310 = vsel %vm4146, %v4305, %v4309
        %v4311 = vshrl.u32 %v4099, 16
        %v4313 = vrot.slane %v4311, 4
        %v4314 = vor.u32 %v4313, %v4309
        %v4315 = vrot.slane %v4314, 4
        %v4317 = vshll.u32 %v4100, 16
        %v4319 = vrot.slane %v4317, 5
        %v4320 = vsel %vm4146, %v4315, %v4319
        %v4321 = vshrl.u32 %v4100, 16
        %v4323 = vrot.slane %v4321, 4
        %v4324 = vor.u32 %v4323, %v4319
        %v4325 = vrot.slane %v4324, 4
        %v4327 = vshll.u32 %v4101, 16
        %v4329 = vrot.slane %v4327, 5
        %v4330 = vsel %vm4146, %v4325, %v4329
        %v4331 = vshrl.u32 %v4101, 16
        %v4333 = vrot.slane %v4331, 4
        %v4334 = vor.u32 %v4333, %v4329
        %v4335 = vrot.slane %v4334, 4
        %v4337 = vshll.u32 %v4102, 16
        %v4339 = vrot.slane %v4337, 5
        %v4340 = vsel %vm4146, %v4335, %v4339
        %v4341 = vshrl.u32 %v4102, 16
        %v4343 = vrot.slane %v4341, 4
        %v4344 = vor.u32 %v4343, %v4339
        %v4345 = vrot.slane %v4344, 4
        %v4347 = vshll.u32 %v4103, 16
        %v4349 = vrot.slane %v4347, 5
        %v4350 = vsel %vm4146, %v4345, %v4349
        %v4351 = vshrl.u32 %v4103, 16
        %v4353 = vrot.slane %v4351, 4
        %v4354 = vor.u32 %v4353, %v4349
        %v4355 = vrot.slane %v4354, 4
        %v4357 = vshll.u32 %v4104, 16
        %v4359 = vrot.slane %v4357, 5
        %v4360 = vsel %vm4146, %v4355, %v4359
        %v4361 = vshrl.u32 %v4104, 16
        %v4363 = vrot.slane %v4361, 4
        %v4364 = vor.u32 %v4363, %v4359
        %v4365 = vrot.slane %v4364, 4
        %v4367 = vshll.u32 %v4105, 16
        %v4369 = vrot.slane %v4367, 5
        %v4370 = vsel %vm4146, %v4365, %v4369
        %v4371 = vshrl.u32 %v4105, 16
        %v4373 = vrot.slane %v4371, 4
        %v4374 = vor.u32 %v4373, %v4369
        %v4375 = vrot.slane %v4374, 4
        %v4377 = vshll.u32 %v4106, 16
        %v4379 = vrot.slane %v4377, 5
        %v4380 = vsel %vm4146, %v4375, %v4379
        %v4381 = vshrl.u32 %v4106, 16
        %v4383 = vrot.slane %v4381, 4
        %v4384 = vor.u32 %v4383, %v4379
        %v4385 = vrot.slane %v4384, 4
        %v4387 = vshll.u32 %v4107, 16
        %v4389 = vrot.slane %v4387, 5
        %v4390 = vsel %vm4146, %v4385, %v4389
        %v4391 = vshrl.u32 %v4107, 16
        %v4393 = vrot.slane %v4391, 4
        %v4394 = vor.u32 %v4393, %v4389
        %v4395 = vrot.slane %v4394, 4
        %v4397 = vshll.u32 %v4108, 16
        %v4399 = vrot.slane %v4397, 5
        %v4400 = vsel %vm4146, %v4395, %v4399
        %v4401 = vshrl.u32 %v4108, 16
        %v4403 = vrot.slane %v4401, 4
        %v4404 = vor.u32 %v4403, %v4399
        %v4405 = vrot.slane %v4404, 4
        %v4407 = vshll.u32 %v4109, 16
        %v4409 = vrot.slane %v4407, 5
        %v4410 = vsel %vm4146, %v4405, %v4409
        %v4411 = vshrl.u32 %v4109, 16
        %v4413 = vrot.slane %v4411, 4
        %v4414 = vor.u32 %v4413, %v4409
        %v4415 = vrot.slane %v4414, 4
        %v4417 = vshll.u32 %v4110, 16
        %v4419 = vrot.slane %v4417, 5
        %v4420 = vsel %vm4146, %v4415, %v4419
        %v4421 = vshrl.u32 %v4110, 16
        %v4423 = vrot.slane %v4421, 4
        %v4424 = vor.u32 %v4423, %v4419
        %v4425 = vrot.slane %v4424, 4
        %v4427 = vshll.u32 %v4111, 16
        %v4429 = vrot.slane %v4427, 5
        %v4430 = vsel %vm4146, %v4425, %v4429
        %v4431 = vshrl.u32 %v4111, 16
        %v4433 = vrot.slane %v4431, 4
        %v4434 = vor.u32 %v4433, %v4429
        %v4435 = vrot.slane %v4434, 4
        %v4437 = vshll.u32 %v4112, 16
        %v4439 = vrot.slane %v4437, 5
        %v4440 = vsel %vm4146, %v4435, %v4439
        %v4441 = vshrl.u32 %v4112, 16
        %v4443 = vrot.slane %v4441, 4
        %v4444 = vor.u32 %v4443, %v4439
        %v4445 = vrot.slane %v4444, 4
        %v4447 = vshll.u32 %v4113, 16
        %v4449 = vrot.slane %v4447, 5
        %v4450 = vsel %vm4146, %v4445, %v4449
        %v4451 = vshrl.u32 %v4113, 16
        %v4453 = vrot.slane %v4451, 4
        %v4454 = vor.u32 %v4453, %v4449
        %v4455 = vrot.slane %v4454, 4
        %v4457 = vshll.u32 %v4114, 16
        %v4459 = vrot.slane %v4457, 5
        %v4460 = vsel %vm4146, %v4455, %v4459
        %v4461 = vshrl.u32 %v4114, 16
        %v4463 = vrot.slane %v4461, 4
        %v4464 = vor.u32 %v4463, %v4459
        %v4465 = vrot.slane %v4464, 4
        %v4467 = vshll.u32 %v4115, 16
        %v4469 = vrot.slane %v4467, 5
        %v4470 = vsel %vm4146, %v4465, %v4469
        %v4471 = vshrl.u32 %v4115, 16
        %v4473 = vrot.slane %v4471, 4
        %v4474 = vor.u32 %v4473, %v4469
        %v4475 = vrot.slane %v4474, 4
        %v4477 = vshll.u32 %v4116, 16
        %v4479 = vrot.slane %v4477, 5
        %v4480 = vsel %vm4146, %v4475, %v4479
        %v4481 = vshrl.u32 %v4116, 16
        %v4483 = vrot.slane %v4481, 4
        %v4484 = vor.u32 %v4483, %v4479
        %v4485 = vrot.slane %v4484, 4
        %v4487 = vshll.u32 %v4117, 16
        %v4489 = vrot.slane %v4487, 5
        %v4490 = vsel %vm4146, %v4485, %v4489
        %v4491 = vshrl.u32 %v4117, 16
        %v4493 = vrot.slane %v4491, 4
        %v4494 = vor.u32 %v4493, %v4489
        %v4495 = vrot.slane %v4494, 4
        %v4497 = vshll.u32 %v4118, 16
        %v4499 = vrot.slane %v4497, 5
        %v4500 = vsel %vm4146, %v4495, %v4499
        %v4501 = vshrl.u32 %v4118, 16
        %v4503 = vrot.slane %v4501, 4
        %v4504 = vor.u32 %v4503, %v4499
        %v4505 = vrot.slane %v4504, 4
        %v4507 = vshll.u32 %v4119, 16
        %v4509 = vrot.slane %v4507, 5
        %v4510 = vsel %vm4146, %v4505, %v4509
        %v4511 = vshrl.u32 %v4119, 16
        %v4513 = vrot.slane %v4511, 4
        %v4514 = vor.u32 %v4513, %v4509
        %v4515 = vrot.slane %v4514, 4
        %v4517 = vshll.u32 %v4120, 16
        %v4519 = vrot.slane %v4517, 5
        %v4520 = vsel %vm4146, %v4515, %v4519
        %v4521 = vshrl.u32 %v4120, 16
        %v4523 = vrot.slane %v4521, 4
        %v4524 = vor.u32 %v4523, %v4519
        %v4525 = vrot.slane %v4524, 4
        %v4527 = vshll.u32 %v4121, 16
        %v4529 = vrot.slane %v4527, 5
        %v4530 = vsel %vm4146, %v4525, %v4529
        %v4531 = vshrl.u32 %v4121, 16
        %v4533 = vrot.slane %v4531, 4
        %v4534 = vor.u32 %v4533, %v4529
        %v4535 = vrot.slane %v4534, 4
        %v4537 = vshll.u32 %v4122, 16
        %v4539 = vrot.slane %v4537, 5
        %v4540 = vsel %vm4146, %v4535, %v4539
        %v4541 = vshrl.u32 %v4122, 16
        %v4543 = vrot.slane %v4541, 4
        %v4544 = vor.u32 %v4543, %v4539
        %v4545 = vrot.slane %v4544, 4
        %v4547 = vshll.u32 %v4123, 16
        %v4549 = vrot.slane %v4547, 5
        %v4550 = vsel %vm4146, %v4545, %v4549
        %v4551 = vshrl.u32 %v4123, 16
        %v4553 = vrot.slane %v4551, 4
        %v4554 = vor.u32 %v4553, %v4549
        %v4555 = vrot.slane %v4554, 4
        %v4557 = vshll.u32 %v4124, 16
        %v4559 = vrot.slane %v4557, 5
        %v4560 = vsel %vm4146, %v4555, %v4559
        %v4561 = vshrl.u32 %v4124, 16
        %v4563 = vrot.slane %v4561, 4
        %v4564 = vor.u32 %v4563, %v4559
        %v4565 = vrot.slane %v4564, 4
        %v4567 = vshll.u32 %v4125, 16
        %v4569 = vrot.slane %v4567, 5
        %v4570 = vsel %vm4146, %v4565, %v4569
        %v4571 = vshrl.u32 %v4125, 16
        %v4573 = vrot.slane %v4571, 4
        %v4574 = vor.u32 %v4573, %v4569
        %v4575 = vrot.slane %v4574, 4
        %v4577 = vshll.u32 %v4126, 16
        %v4579 = vrot.slane %v4577, 5
        %v4580 = vsel %vm4146, %v4575, %v4579
        %v4581 = vshrl.u32 %v4126, 16
        %v4583 = vrot.slane %v4581, 4
        %v4584 = vor.u32 %v4583, %v4579
        %v4585 = vrot.slane %v4584, 4
        %v4587 = vshll.u32 %v4127, 16
        %v4589 = vrot.slane %v4587, 5
        %v4590 = vsel %vm4146, %v4585, %v4589
        %v4591 = vshrl.u32 %v4127, 16
        %v4593 = vrot.slane %v4591, 4
        %v4594 = vor.u32 %v4593, %v4589
        %v4595 = vrot.slane %v4594, 4
        %v4597 = vshll.u32 %v4128, 16
        %v4599 = vrot.slane %v4597, 5
        %v4600 = vsel %vm4146, %v4595, %v4599
        %v4601 = vshrl.u32 %v4128, 16
        %v4603 = vrot.slane %v4601, 4
        %v4604 = vor.u32 %v4603, %v4599
        %v4605 = vrot.slane %v4604, 4
        %v4607 = vshll.u32 %v4129, 16
        %v4609 = vrot.slane %v4607, 5
        %v4610 = vsel %vm4146, %v4605, %v4609
        %v4611 = vshrl.u32 %v4129, 16
        %v4613 = vrot.slane %v4611, 4
        %v4614 = vor.u32 %v4613, %v4609
        %v4615 = vrot.slane %v4614, 4
        %v4617 = vshll.u32 %v4130, 16
        %v4619 = vrot.slane %v4617, 5
        %v4620 = vsel %vm4146, %v4615, %v4619
        %v4621 = vshrl.u32 %v4130, 16
        %v4623 = vrot.slane %v4621, 4
        %v4624 = vor.u32 %v4623, %v4619
        %v4625 = vrot.slane %v4624, 4
        %v4627 = vshll.u32 %v4131, 16
        %v4629 = vrot.slane %v4627, 5
        %v4630 = vsel %vm4146, %v4625, %v4629
        %v4631 = vshrl.u32 %v4131, 16
        %v4633 = vrot.slane %v4631, 4
        %v4634 = vor.u32 %v4633, %v4629
        %v4635 = vrot.slane %v4634, 4
        %v4637 = vshll.u32 %v4132, 16
        %v4639 = vrot.slane %v4637, 5
        %v4640 = vsel %vm4146, %v4635, %v4639
        %v4641 = vshrl.u32 %v4132, 16
        %v4643 = vrot.slane %v4641, 4
        %v4644 = vor.u32 %v4643, %v4639
        %v4645 = vrot.slane %v4644, 4
        %v4647 = vshll.u32 %v4133, 16
        %v4649 = vrot.slane %v4647, 5
        %v4650 = vsel %vm4146, %v4645, %v4649
        %v4651 = vshrl.u32 %v4133, 16
        %v4653 = vrot.slane %v4651, 4
        %v4654 = vor.u32 %v4653, %v4649
        %v4655 = vrot.slane %v4654, 4
        %v4657 = vshll.u32 %v4134, 16
        %v4659 = vrot.slane %v4657, 5
        %v4660 = vsel %vm4146, %v4655, %v4659
        %v4661 = vshrl.u32 %v4134, 16
        %v4663 = vrot.slane %v4661, 4
        %v4664 = vor.u32 %v4663, %v4659
        %v4665 = vrot.slane %v4664, 4
        %v4667 = vshll.u32 %v4135, 16
        %v4669 = vrot.slane %v4667, 5
        %v4670 = vsel %vm4146, %v4665, %v4669
        %v4671 = vshrl.u32 %v4135, 16
        %v4673 = vrot.slane %v4671, 4
        %v4674 = vor.u32 %v4673, %v4669
        %v4675 = vrot.slane %v4674, 4
        %v4677 = vshll.u32 %v4136, 16
        %v4679 = vrot.slane %v4677, 5
        %v4680 = vsel %vm4146, %v4675, %v4679
        %v4681 = vshrl.u32 %v4136, 16
        %v4683 = vrot.slane %v4681, 4
        %v4684 = vor.u32 %v4683, %v4679
        %v4685 = vrot.slane %v4684, 4
        %v4687 = vshll.u32 %v4137, 16
        %v4689 = vrot.slane %v4687, 5
        %v4690 = vsel %vm4146, %v4685, %v4689
        %v4691 = vshrl.u32 %v4137, 16
        %v4693 = vrot.slane %v4691, 4
        %v4694 = vor.u32 %v4693, %v4689
        %v4695 = vrot.slane %v4694, 4
        %v4697 = vshll.u32 %v4138, 16
        %v4699 = vrot.slane %v4697, 5
        %v4700 = vsel %vm4146, %v4695, %v4699
        %v4701 = vshrl.u32 %v4138, 16
        %v4703 = vrot.slane %v4701, 4
        %v4704 = vor.u32 %v4703, %v4699
        %v4705 = vrot.slane %v4704, 4
        %v4707 = vshll.u32 %v4139, 16
        %v4709 = vrot.slane %v4707, 5
        %v4710 = vsel %vm4146, %v4705, %v4709
        %v4711 = vshrl.u32 %v4139, 16
        %v4713 = vrot.slane %v4711, 4
        %v4714 = vor.u32 %v4713, %v4709
        %v4715 = vrot.slane %v4714, 4
        %v4717 = vshll.u32 %v4140, 16
        %v4719 = vrot.slane %v4717, 5
        %v4720 = vsel %vm4146, %v4715, %v4719
        %v4721 = vshrl.u32 %v4140, 16
        %v4723 = vrot.slane %v4721, 4
        %v4724 = vor.u32 %v4723, %v4719
        %v4725 = vrot.slane %v4724, 4
        %v4727 = vshll.u32 %v4141, 16
        %v4729 = vrot.slane %v4727, 5
        %v4730 = vsel %vm4146, %v4725, %v4729
        %v4731 = vshrl.u32 %v4141, 16
        %v4733 = vrot.slane %v4731, 4
        %v4734 = vor.u32 %v4733, %v4729
        %v4735 = vrot.slane %v4734, 4
        %v4737 = vshll.u32 %v4142, 16
        %v4739 = vrot.slane %v4737, 5
        %v4740 = vsel %vm4146, %v4735, %v4739
        %v4741 = vshrl.u32 %v4142, 16
        %v4743 = vrot.slane %v4741, 4
        %v4744 = vor.u32 %v4743, %v4739
        %v4745 = vrot.slane %v4744, 4
        %v4747 = vshll.u32 %v4143, 16
        %v4749 = vrot.slane %v4747, 5
        %v4750 = vsel %vm4146, %v4745, %v4749
        %4751 = vrot.lane.b32.xlu0 %v4160, 64
        %v4752 = vpop.permute.xlu0 %4751
        %4753 = vrot.lane.b32.xlu0 %v4170, 64
        %v4754 = vpop.permute.xlu0 %4753
        %4755 = vrot.lane.b32.xlu0 %v4180, 64
        %v4756 = vpop.permute.xlu0 %4755
        %4757 = vrot.lane.b32.xlu0 %v4190, 64
        %v4758 = vpop.permute.xlu0 %4757
        %4759 = vrot.lane.b32.xlu0 %v4200, 64
        %v4760 = vpop.permute.xlu0 %4759
        %4761 = vrot.lane.b32.xlu0 %v4210, 64
        %v4762 = vpop.permute.xlu0 %4761
        %4763 = vrot.lane.b32.xlu0 %v4220, 64
        %v4764 = vpop.permute.xlu0 %4763
        %4765 = vrot.lane.b32.xlu0 %v4230, 64
        %v4766 = vpop.permute.xlu0 %4765
        %4767 = vrot.lane.b32.xlu0 %v4240, 64
        %v4768 = vpop.permute.xlu0 %4767
        %4769 = vrot.lane.b32.xlu0 %v4250, 64
        %v4770 = vpop.permute.xlu0 %4769
        %4771 = vrot.lane.b32.xlu0 %v4260, 64
        %v4772 = vpop.permute.xlu0 %4771
        %4773 = vrot.lane.b32.xlu0 %v4270, 64
        %v4774 = vpop.permute.xlu0 %4773
        %4775 = vrot.lane.b32.xlu0 %v4280, 64
        %v4776 = vpop.permute.xlu0 %4775
        %4777 = vrot.lane.b32.xlu0 %v4290, 64
        %v4778 = vpop.permute.xlu0 %4777
        %4779 = vrot.lane.b32.xlu0 %v4300, 64
        %v4780 = vpop.permute.xlu0 %4779
        %4781 = vrot.lane.b32.xlu0 %v4310, 64
        %v4782 = vpop.permute.xlu0 %4781
        %4783 = vrot.lane.b32.xlu0 %v4320, 64
        %v4784 = vpop.permute.xlu0 %4783
        %4785 = vrot.lane.b32.xlu0 %v4330, 64
        %v4786 = vpop.permute.xlu0 %4785
        %4787 = vrot.lane.b32.xlu0 %v4340, 64
        %v4788 = vpop.permute.xlu0 %4787
        %4789 = vrot.lane.b32.xlu0 %v4350, 64
        %v4790 = vpop.permute.xlu0 %4789
        %4791 = vrot.lane.b32.xlu0 %v4360, 64
        %v4792 = vpop.permute.xlu0 %4791
        %4793 = vrot.lane.b32.xlu0 %v4370, 64
        %v4794 = vpop.permute.xlu0 %4793
        %4795 = vrot.lane.b32.xlu0 %v4380, 64
        %v4796 = vpop.permute.xlu0 %4795
        %4797 = vrot.lane.b32.xlu0 %v4390, 64
        %v4798 = vpop.permute.xlu0 %4797
        %4799 = vrot.lane.b32.xlu0 %v4400, 64
        %v4800 = vpop.permute.xlu0 %4799
        %4801 = vrot.lane.b32.xlu0 %v4410, 64
        %v4802 = vpop.permute.xlu0 %4801
        %4803 = vrot.lane.b32.xlu0 %v4420, 64
        %v4804 = vpop.permute.xlu0 %4803
        %4805 = vrot.lane.b32.xlu0 %v4430, 64
        %v4806 = vpop.permute.xlu0 %4805
        %4807 = vrot.lane.b32.xlu0 %v4440, 64
        %v4808 = vpop.permute.xlu0 %4807
        %4809 = vrot.lane.b32.xlu0 %v4450, 64
        %v4810 = vpop.permute.xlu0 %4809
        %4811 = vrot.lane.b32.xlu0 %v4460, 64
        %v4812 = vpop.permute.xlu0 %4811
        %4813 = vrot.lane.b32.xlu0 %v4470, 64
        %v4814 = vpop.permute.xlu0 %4813
        %4815 = vrot.lane.b32.xlu0 %v4480, 64
        %v4816 = vpop.permute.xlu0 %4815
        %4817 = vrot.lane.b32.xlu0 %v4490, 64
        %v4818 = vpop.permute.xlu0 %4817
        %4819 = vrot.lane.b32.xlu0 %v4500, 64
        %v4820 = vpop.permute.xlu0 %4819
        %4821 = vrot.lane.b32.xlu0 %v4510, 64
        %v4822 = vpop.permute.xlu0 %4821
        %4823 = vrot.lane.b32.xlu0 %v4520, 64
        %v4824 = vpop.permute.xlu0 %4823
        %4825 = vrot.lane.b32.xlu0 %v4530, 64
        %v4826 = vpop.permute.xlu0 %4825
        %4827 = vrot.lane.b32.xlu0 %v4540, 64
        %v4828 = vpop.permute.xlu0 %4827
        %4829 = vrot.lane.b32.xlu0 %v4550, 64
        %v4830 = vpop.permute.xlu0 %4829
        %4831 = vrot.lane.b32.xlu0 %v4560, 64
        %v4832 = vpop.permute.xlu0 %4831
        %4833 = vrot.lane.b32.xlu0 %v4570, 64
        %v4834 = vpop.permute.xlu0 %4833
        %4835 = vrot.lane.b32.xlu0 %v4580, 64
        %v4836 = vpop.permute.xlu0 %4835
        %4837 = vrot.lane.b32.xlu0 %v4590, 64
        %v4838 = vpop.permute.xlu0 %4837
        %4839 = vrot.lane.b32.xlu0 %v4600, 64
        %v4840 = vpop.permute.xlu0 %4839
        %4841 = vrot.lane.b32.xlu0 %v4610, 64
        %v4842 = vpop.permute.xlu0 %4841
        %4843 = vrot.lane.b32.xlu0 %v4620, 64
        %v4844 = vpop.permute.xlu0 %4843
        %4845 = vrot.lane.b32.xlu0 %v4630, 64
        %v4846 = vpop.permute.xlu0 %4845
        %4847 = vrot.lane.b32.xlu0 %v4640, 64
        %v4848 = vpop.permute.xlu0 %4847
        %4849 = vrot.lane.b32.xlu0 %v4650, 64
        %v4850 = vpop.permute.xlu0 %4849
        %4851 = vrot.lane.b32.xlu0 %v4660, 64
        %v4852 = vpop.permute.xlu0 %4851
        %4853 = vrot.lane.b32.xlu0 %v4670, 64
        %v4854 = vpop.permute.xlu0 %4853
        %4855 = vrot.lane.b32.xlu0 %v4680, 64
        %v4856 = vpop.permute.xlu0 %4855
        %4857 = vrot.lane.b32.xlu0 %v4690, 64
        %v4858 = vpop.permute.xlu0 %4857
        %4859 = vrot.lane.b32.xlu0 %v4700, 64
        %v4860 = vpop.permute.xlu0 %4859
        %4861 = vrot.lane.b32.xlu0 %v4710, 64
        %v4862 = vpop.permute.xlu0 %4861
        %4863 = vrot.lane.b32.xlu0 %v4720, 64
        %v4864 = vpop.permute.xlu0 %4863
        %4865 = vrot.lane.b32.xlu0 %v4730, 64
        %v4866 = vpop.permute.xlu0 %4865
        %4867 = vrot.lane.b32.xlu0 %v4740, 64
        %v4868 = vpop.permute.xlu0 %4867
        %4869 = vrot.lane.b32.xlu0 %v4750, 64
        %v4870 = vpop.permute.xlu0 %4869
        %vm4931 = vcmask 1043968
        %4932 = vst.msk [vmem:[#allocation3] sm:$0xf] %vm4931, %v4752
        %4933 = vst.msk [vmem:[#allocation3 + $0x14] sm:$0xf] %vm4931, %v4754
        %4934 = vst.msk [vmem:[#allocation3 + $0x28] sm:$0xf] %vm4931, %v4756
        %4935 = vst.msk [vmem:[#allocation3 + $0x3c] sm:$0xf] %vm4931, %v4758
        %4936 = vst.msk [vmem:[#allocation3 + $0x50] sm:$0xf] %vm4931, %v4760
        %4937 = vst.msk [vmem:[#allocation3 + $0x64] sm:$0xf] %vm4931, %v4762
        %4938 = vst.msk [vmem:[#allocation3 + $0x78] sm:$0xf] %vm4931, %v4764
        %4939 = vst.msk [vmem:[#allocation3 + $0x8c] sm:$0xf] %vm4931, %v4766
        %4940 = vst.msk [vmem:[#allocation3 + $0xa0] sm:$0xf] %vm4931, %v4768
        %4941 = vst.msk [vmem:[#allocation3 + $0xb4] sm:$0xf] %vm4931, %v4770
        %4942 = vst.msk [vmem:[#allocation3 + $0xc8] sm:$0xf] %vm4931, %v4772
        %4943 = vst.msk [vmem:[#allocation3 + $0xdc] sm:$0xf] %vm4931, %v4774
        %4944 = vst.msk [vmem:[#allocation3 + $0xf0] sm:$0xf] %vm4931, %v4776
        %4945 = vst.msk [vmem:[#allocation3 + $0x104] sm:$0xf] %vm4931, %v4778
        %4946 = vst.msk [vmem:[#allocation3 + $0x118] sm:$0xf] %vm4931, %v4780
        %4947 = vst.msk [vmem:[#allocation3 + $0x12c] sm:$0xf] %vm4931, %v4782
        %4948 = vst.msk [vmem:[#allocation3 + $0x140] sm:$0xf] %vm4931, %v4784
        %4949 = vst.msk [vmem:[#allocation3 + $0x154] sm:$0xf] %vm4931, %v4786
        %4950 = vst.msk [vmem:[#allocation3 + $0x168] sm:$0xf] %vm4931, %v4788
        %4951 = vst.msk [vmem:[#allocation3 + $0x17c] sm:$0xf] %vm4931, %v4790
        %4952 = vst.msk [vmem:[#allocation3 + $0x190] sm:$0xf] %vm4931, %v4792
        %4953 = vst.msk [vmem:[#allocation3 + $0x1a4] sm:$0xf] %vm4931, %v4794
        %4954 = vst.msk [vmem:[#allocation3 + $0x1b8] sm:$0xf] %vm4931, %v4796
        %4955 = vst.msk [vmem:[#allocation3 + $0x1cc] sm:$0xf] %vm4931, %v4798
        %4956 = vst.msk [vmem:[#allocation3 + $0x1e0] sm:$0xf] %vm4931, %v4800
        %4957 = vst.msk [vmem:[#allocation3 + $0x1f4] sm:$0xf] %vm4931, %v4802
        %4958 = vst.msk [vmem:[#allocation3 + $0x208] sm:$0xf] %vm4931, %v4804
        %4959 = vst.msk [vmem:[#allocation3 + $0x21c] sm:$0xf] %vm4931, %v4806
        %4960 = vst.msk [vmem:[#allocation3 + $0x230] sm:$0xf] %vm4931, %v4808
        %4961 = vst.msk [vmem:[#allocation3 + $0x244] sm:$0xf] %vm4931, %v4810
        %4962 = vst.msk [vmem:[#allocation3 + $0x258] sm:$0xf] %vm4931, %v4812
        %4963 = vst.msk [vmem:[#allocation3 + $0x26c] sm:$0xf] %vm4931, %v4814
        %4964 = vst.msk [vmem:[#allocation3 + $0x280] sm:$0xf] %vm4931, %v4816
        %4965 = vst.msk [vmem:[#allocation3 + $0x294] sm:$0xf] %vm4931, %v4818
        %4966 = vst.msk [vmem:[#allocation3 + $0x2a8] sm:$0xf] %vm4931, %v4820
        %4967 = vst.msk [vmem:[#allocation3 + $0x2bc] sm:$0xf] %vm4931, %v4822
        %4968 = vst.msk [vmem:[#allocation3 + $0x2d0] sm:$0xf] %vm4931, %v4824
        %4969 = vst.msk [vmem:[#allocation3 + $0x2e4] sm:$0xf] %vm4931, %v4826
        %4970 = vst.msk [vmem:[#allocation3 + $0x2f8] sm:$0xf] %vm4931, %v4828
        %4971 = vst.msk [vmem:[#allocation3 + $0x30c] sm:$0xf] %vm4931, %v4830
        %4972 = vst.msk [vmem:[#allocation3 + $0x320] sm:$0xf] %vm4931, %v4832
        %4973 = vst.msk [vmem:[#allocation3 + $0x334] sm:$0xf] %vm4931, %v4834
        %4974 = vst.msk [vmem:[#allocation3 + $0x348] sm:$0xf] %vm4931, %v4836
        %4975 = vst.msk [vmem:[#allocation3 + $0x35c] sm:$0xf] %vm4931, %v4838
        %4976 = vst.msk [vmem:[#allocation3 + $0x370] sm:$0xf] %vm4931, %v4840
        %4977 = vst.msk [vmem:[#allocation3 + $0x384] sm:$0xf] %vm4931, %v4842
        %4978 = vst.msk [vmem:[#allocation3 + $0x398] sm:$0xf] %vm4931, %v4844
        %4979 = vst.msk [vmem:[#allocation3 + $0x3ac] sm:$0xf] %vm4931, %v4846
        %4980 = vst.msk [vmem:[#allocation3 + $0x3c0] sm:$0xf] %vm4931, %v4848
        %4981 = vst.msk [vmem:[#allocation3 + $0x3d4] sm:$0xf] %vm4931, %v4850
        %4982 = vst.msk [vmem:[#allocation3 + $0x3e8] sm:$0xf] %vm4931, %v4852
        %4983 = vst.msk [vmem:[#allocation3 + $0x3fc] sm:$0xf] %vm4931, %v4854
        %4984 = vst.msk [vmem:[#allocation3 + $0x410] sm:$0xf] %vm4931, %v4856
        %4985 = vst.msk [vmem:[#allocation3 + $0x424] sm:$0xf] %vm4931, %v4858
        %4986 = vst.msk [vmem:[#allocation3 + $0x438] sm:$0xf] %vm4931, %v4860
        %4987 = vst.msk [vmem:[#allocation3 + $0x44c] sm:$0xf] %vm4931, %v4862
        %4988 = vst.msk [vmem:[#allocation3 + $0x460] sm:$0xf] %vm4931, %v4864
        %4989 = vst.msk [vmem:[#allocation3 + $0x474] sm:$0xf] %vm4931, %v4866
        %4990 = vst.msk [vmem:[#allocation3 + $0x488] sm:$0xf] %vm4931, %v4868
        %4991 = vst.msk [vmem:[#allocation3 + $0x49c] sm:$0xf] %vm4931, %v4870
        %v4992 = vld [vmem:[#allocation2] sm:$0xe]
        %v4993 = vld [vmem:[#allocation2 + $0x4] sm:$0xf]
        %v4994 = vld [vmem:[#allocation2 + $0x8] sm:$0xf]
        %v4995 = vld [vmem:[#allocation2 + $0xc] sm:$0xf]
        %v4996 = vld [vmem:[#allocation2 + $0x10] sm:$0xf]
        %v4997 = vld [vmem:[#allocation2 + $0x14] sm:$0xf]
        %v4998 = vld [vmem:[#allocation2 + $0x18] sm:$0xf]
        %v4999 = vld [vmem:[#allocation2 + $0x1c] sm:$0xf]
        %v5000 = vld [vmem:[#allocation2 + $0x20] sm:$0xf]
        %v5001 = vld [vmem:[#allocation2 + $0x24] sm:$0xf]
        %v5002 = vld [vmem:[#allocation2 + $0x28] sm:$0xf]
        %v5003 = vld [vmem:[#allocation2 + $0x2c] sm:$0xf]
        %v5004 = vld [vmem:[#allocation2 + $0x30] sm:$0xf]
        %v5005 = vld [vmem:[#allocation2 + $0x34] sm:$0xf]
        %v5006 = vld [vmem:[#allocation2 + $0x38] sm:$0xf]
        %v5007 = vld [vmem:[#allocation2 + $0x3c] sm:$0xf]
        %v5008 = vld [vmem:[#allocation2 + $0x40] sm:$0xf]
        %v5009 = vld [vmem:[#allocation2 + $0x44] sm:$0xf]
        %v5010 = vld [vmem:[#allocation2 + $0x48] sm:$0xf]
        %v5011 = vld [vmem:[#allocation2 + $0x4c] sm:$0xf]
        %v5012 = vld [vmem:[#allocation2 + $0x50] sm:$0xf]
        %v5013 = vld [vmem:[#allocation2 + $0x54] sm:$0xf]
        %v5014 = vld [vmem:[#allocation2 + $0x58] sm:$0xf]
        %v5015 = vld [vmem:[#allocation2 + $0x5c] sm:$0xf]
        %v5016 = vld [vmem:[#allocation2 + $0x60] sm:$0xf]
        %v5017 = vld [vmem:[#allocation2 + $0x64] sm:$0xf]
        %v5018 = vld [vmem:[#allocation2 + $0x68] sm:$0xf]
        %v5019 = vld [vmem:[#allocation2 + $0x6c] sm:$0xf]
        %v5020 = vld [vmem:[#allocation2 + $0x70] sm:$0xf]
        %v5021 = vld [vmem:[#allocation2 + $0x74] sm:$0xf]
        %v5022 = vld [vmem:[#allocation2 + $0x78] sm:$0xf]
        %v5023 = vld [vmem:[#allocation2 + $0x7c] sm:$0xf]
        %v5024 = vld [vmem:[#allocation2 + $0x80] sm:$0xf]
        %v5025 = vld [vmem:[#allocation2 + $0x84] sm:$0xf]
        %v5026 = vld [vmem:[#allocation2 + $0x88] sm:$0xf]
        %v5027 = vld [vmem:[#allocation2 + $0x8c] sm:$0xf]
        %v5028 = vld [vmem:[#allocation2 + $0x90] sm:$0xf]
        %v5029 = vld [vmem:[#allocation2 + $0x94] sm:$0xf]
        %v5030 = vld [vmem:[#allocation2 + $0x98] sm:$0xf]
        %v5031 = vld [vmem:[#allocation2 + $0x9c] sm:$0xf]
        %v5032 = vld [vmem:[#allocation2 + $0xa0] sm:$0xf]
        %v5033 = vld [vmem:[#allocation2 + $0xa4] sm:$0xf]
        %v5034 = vld [vmem:[#allocation2 + $0xa8] sm:$0xf]
        %v5035 = vld [vmem:[#allocation2 + $0xac] sm:$0xf]
        %v5036 = vld [vmem:[#allocation2 + $0xb0] sm:$0xf]
        %v5037 = vld [vmem:[#allocation2 + $0xb4] sm:$0xf]
        %v5038 = vld [vmem:[#allocation2 + $0xb8] sm:$0xf]
        %v5039 = vld [vmem:[#allocation2 + $0xbc] sm:$0xf]
        %v5040 = vld [vmem:[#allocation2 + $0xc0] sm:$0xf]
        %v5041 = vld [vmem:[#allocation2 + $0xc4] sm:$0xf]
        %v5042 = vld [vmem:[#allocation2 + $0xc8] sm:$0xf]
        %v5043 = vld [vmem:[#allocation2 + $0xcc] sm:$0xf]
        %v5044 = vld [vmem:[#allocation2 + $0xd0] sm:$0xf]
        %v5045 = vld [vmem:[#allocation2 + $0xd4] sm:$0xf]
        %v5046 = vld [vmem:[#allocation2 + $0xd8] sm:$0xf]
        %v5047 = vld [vmem:[#allocation2 + $0xdc] sm:$0xf]
        %v5048 = vld [vmem:[#allocation2 + $0xe0] sm:$0xf]
        %v5049 = vld [vmem:[#allocation2 + $0xe4] sm:$0xf]
        %v5050 = vld [vmem:[#allocation2 + $0xe8] sm:$0xf]
        %v5051 = vld [vmem:[#allocation2 + $0xec] sm:$0xf]
        %v5052 = vld [vmem:[#allocation2 + $0xf0] sm:$0x1]
        %vm5114 = vcmask 1042432
        %vm5115 = vcmask 1046532
        %vm5116 = vmor %vm5114, %vm5115
        %v5117 = vrot.slane %v4992, 5
        %v5118 = vrot.slane %v5117, 4
        %v5119 = vrot.slane %v4993, 5
        %v5120 = vsel %vm5116, %v5118, %v5119
        %v5121 = vrot.slane %v5119, 4
        %v5122 = vrot.slane %v4994, 5
        %v5123 = vsel %vm5116, %v5121, %v5122
        %v5124 = vrot.slane %v5122, 4
        %v5125 = vrot.slane %v4995, 5
        %v5126 = vsel %vm5116, %v5124, %v5125
        %v5127 = vrot.slane %v5125, 4
        %v5128 = vrot.slane %v4996, 5
        %v5129 = vsel %vm5116, %v5127, %v5128
        %v5130 = vrot.slane %v5128, 4
        %v5131 = vrot.slane %v4997, 5
        %v5132 = vsel %vm5116, %v5130, %v5131
        %v5133 = vrot.slane %v5131, 4
        %v5134 = vrot.slane %v4998, 5
        %v5135 = vsel %vm5116, %v5133, %v5134
        %v5136 = vrot.slane %v5134, 4
        %v5137 = vrot.slane %v4999, 5
        %v5138 = vsel %vm5116, %v5136, %v5137
        %v5139 = vrot.slane %v5137, 4
        %v5140 = vrot.slane %v5000, 5
        %v5141 = vsel %vm5116, %v5139, %v5140
        %v5142 = vrot.slane %v5140, 4
        %v5143 = vrot.slane %v5001, 5
        %v5144 = vsel %vm5116, %v5142, %v5143
        %v5145 = vrot.slane %v5143, 4
        %v5146 = vrot.slane %v5002, 5
        %v5147 = vsel %vm5116, %v5145, %v5146
        %v5148 = vrot.slane %v5146, 4
        %v5149 = vrot.slane %v5003, 5
        %v5150 = vsel %vm5116, %v5148, %v5149
        %v5151 = vrot.slane %v5149, 4
        %v5152 = vrot.slane %v5004, 5
        %v5153 = vsel %vm5116, %v5151, %v5152
        %v5154 = vrot.slane %v5152, 4
        %v5155 = vrot.slane %v5005, 5
        %v5156 = vsel %vm5116, %v5154, %v5155
        %v5157 = vrot.slane %v5155, 4
        %v5158 = vrot.slane %v5006, 5
        %v5159 = vsel %vm5116, %v5157, %v5158
        %v5160 = vrot.slane %v5158, 4
        %v5161 = vrot.slane %v5007, 5
        %v5162 = vsel %vm5116, %v5160, %v5161
        %v5163 = vrot.slane %v5161, 4
        %v5164 = vrot.slane %v5008, 5
        %v5165 = vsel %vm5116, %v5163, %v5164
        %v5166 = vrot.slane %v5164, 4
        %v5167 = vrot.slane %v5009, 5
        %v5168 = vsel %vm5116, %v5166, %v5167
        %v5169 = vrot.slane %v5167, 4
        %v5170 = vrot.slane %v5010, 5
        %v5171 = vsel %vm5116, %v5169, %v5170
        %v5172 = vrot.slane %v5170, 4
        %v5173 = vrot.slane %v5011, 5
        %v5174 = vsel %vm5116, %v5172, %v5173
        %v5175 = vrot.slane %v5173, 4
        %v5176 = vrot.slane %v5012, 5
        %v5177 = vsel %vm5116, %v5175, %v5176
        %v5178 = vrot.slane %v5176, 4
        %v5179 = vrot.slane %v5013, 5
        %v5180 = vsel %vm5116, %v5178, %v5179
        %v5181 = vrot.slane %v5179, 4
        %v5182 = vrot.slane %v5014, 5
        %v5183 = vsel %vm5116, %v5181, %v5182
        %v5184 = vrot.slane %v5182, 4
        %v5185 = vrot.slane %v5015, 5
        %v5186 = vsel %vm5116, %v5184, %v5185
        %v5187 = vrot.slane %v5185, 4
        %v5188 = vrot.slane %v5016, 5
        %v5189 = vsel %vm5116, %v5187, %v5188
        %v5190 = vrot.slane %v5188, 4
        %v5191 = vrot.slane %v5017, 5
        %v5192 = vsel %vm5116, %v5190, %v5191
        %v5193 = vrot.slane %v5191, 4
        %v5194 = vrot.slane %v5018, 5
        %v5195 = vsel %vm5116, %v5193, %v5194
        %v5196 = vrot.slane %v5194, 4
        %v5197 = vrot.slane %v5019, 5
        %v5198 = vsel %vm5116, %v5196, %v5197
        %v5199 = vrot.slane %v5197, 4
        %v5200 = vrot.slane %v5020, 5
        %v5201 = vsel %vm5116, %v5199, %v5200
        %v5202 = vrot.slane %v5200, 4
        %v5203 = vrot.slane %v5021, 5
        %v5204 = vsel %vm5116, %v5202, %v5203
        %v5205 = vrot.slane %v5203, 4
        %v5206 = vrot.slane %v5022, 5
        %v5207 = vsel %vm5116, %v5205, %v5206
        %v5208 = vrot.slane %v5206, 4
        %v5209 = vrot.slane %v5023, 5
        %v5210 = vsel %vm5116, %v5208, %v5209
        %v5211 = vrot.slane %v5209, 4
        %v5212 = vrot.slane %v5024, 5
        %v5213 = vsel %vm5116, %v5211, %v5212
        %v5214 = vrot.slane %v5212, 4
        %v5215 = vrot.slane %v5025, 5
        %v5216 = vsel %vm5116, %v5214, %v5215
        %v5217 = vrot.slane %v5215, 4
        %v5218 = vrot.slane %v5026, 5
        %v5219 = vsel %vm5116, %v5217, %v5218
        %v5220 = vrot.slane %v5218, 4
        %v5221 = vrot.slane %v5027, 5
        %v5222 = vsel %vm5116, %v5220, %v5221
        %v5223 = vrot.slane %v5221, 4
        %v5224 = vrot.slane %v5028, 5
        %v5225 = vsel %vm5116, %v5223, %v5224
        %v5226 = vrot.slane %v5224, 4
        %v5227 = vrot.slane %v5029, 5
        %v5228 = vsel %vm5116, %v5226, %v5227
        %v5229 = vrot.slane %v5227, 4
        %v5230 = vrot.slane %v5030, 5
        %v5231 = vsel %vm5116, %v5229, %v5230
        %v5232 = vrot.slane %v5230, 4
        %v5233 = vrot.slane %v5031, 5
        %v5234 = vsel %vm5116, %v5232, %v5233
        %v5235 = vrot.slane %v5233, 4
        %v5236 = vrot.slane %v5032, 5
        %v5237 = vsel %vm5116, %v5235, %v5236
        %v5238 = vrot.slane %v5236, 4
        %v5239 = vrot.slane %v5033, 5
        %v5240 = vsel %vm5116, %v5238, %v5239
        %v5241 = vrot.slane %v5239, 4
        %v5242 = vrot.slane %v5034, 5
        %v5243 = vsel %vm5116, %v5241, %v5242
        %v5244 = vrot.slane %v5242, 4
        %v5245 = vrot.slane %v5035, 5
        %v5246 = vsel %vm5116, %v5244, %v5245
        %v5247 = vrot.slane %v5245, 4
        %v5248 = vrot.slane %v5036, 5
        %v5249 = vsel %vm5116, %v5247, %v5248
        %v5250 = vrot.slane %v5248, 4
        %v5251 = vrot.slane %v5037, 5
        %v5252 = vsel %vm5116, %v5250, %v5251
        %v5253 = vrot.slane %v5251, 4
        %v5254 = vrot.slane %v5038, 5
        %v5255 = vsel %vm5116, %v5253, %v5254
        %v5256 = vrot.slane %v5254, 4
        %v5257 = vrot.slane %v5039, 5
        %v5258 = vsel %vm5116, %v5256, %v5257
        %v5259 = vrot.slane %v5257, 4
        %v5260 = vrot.slane %v5040, 5
        %v5261 = vsel %vm5116, %v5259, %v5260
        %v5262 = vrot.slane %v5260, 4
        %v5263 = vrot.slane %v5041, 5
        %v5264 = vsel %vm5116, %v5262, %v5263
        %v5265 = vrot.slane %v5263, 4
        %v5266 = vrot.slane %v5042, 5
        %v5267 = vsel %vm5116, %v5265, %v5266
        %v5268 = vrot.slane %v5266, 4
        %v5269 = vrot.slane %v5043, 5
        %v5270 = vsel %vm5116, %v5268, %v5269
        %v5271 = vrot.slane %v5269, 4
        %v5272 = vrot.slane %v5044, 5
        %v5273 = vsel %vm5116, %v5271, %v5272
        %v5274 = vrot.slane %v5272, 4
        %v5275 = vrot.slane %v5045, 5
        %v5276 = vsel %vm5116, %v5274, %v5275
        %v5277 = vrot.slane %v5275, 4
        %v5278 = vrot.slane %v5046, 5
        %v5279 = vsel %vm5116, %v5277, %v5278
        %v5280 = vrot.slane %v5278, 4
        %v5281 = vrot.slane %v5047, 5
        %v5282 = vsel %vm5116, %v5280, %v5281
        %v5283 = vrot.slane %v5281, 4
        %v5284 = vrot.slane %v5048, 5
        %v5285 = vsel %vm5116, %v5283, %v5284
        %v5286 = vrot.slane %v5284, 4
        %v5287 = vrot.slane %v5049, 5
        %v5288 = vsel %vm5116, %v5286, %v5287
        %v5289 = vrot.slane %v5287, 4
        %v5290 = vrot.slane %v5050, 5
        %v5291 = vsel %vm5116, %v5289, %v5290
        %v5292 = vrot.slane %v5290, 4
        %v5293 = vrot.slane %v5051, 5
        %v5294 = vsel %vm5116, %v5292, %v5293
        %v5295 = vrot.slane %v5293, 4
        %v5296 = vrot.slane %v5052, 5
        %v5297 = vsel %vm5116, %v5295, %v5296
        %5358 = vst.msk [vmem:[#allocation3 + $0x4] sm:$0xf] %vm281, %v5120
        %5359 = vst.msk [vmem:[#allocation3 + $0x18] sm:$0xf] %vm281, %v5123
        %5360 = vst.msk [vmem:[#allocation3 + $0x2c] sm:$0xf] %vm281, %v5126
        %5361 = vst.msk [vmem:[#allocation3 + $0x40] sm:$0xf] %vm281, %v5129
        %5362 = vst.msk [vmem:[#allocation3 + $0x54] sm:$0xf] %vm281, %v5132
        %5363 = vst.msk [vmem:[#allocation3 + $0x68] sm:$0xf] %vm281, %v5135
        %5364 = vst.msk [vmem:[#allocation3 + $0x7c] sm:$0xf] %vm281, %v5138
        %5365 = vst.msk [vmem:[#allocation3 + $0x90] sm:$0xf] %vm281, %v5141
        %5366 = vst.msk [vmem:[#allocation3 + $0xa4] sm:$0xf] %vm281, %v5144
        %5367 = vst.msk [vmem:[#allocation3 + $0xb8] sm:$0xf] %vm281, %v5147
        %5368 = vst.msk [vmem:[#allocation3 + $0xcc] sm:$0xf] %vm281, %v5150
        %5369 = vst.msk [vmem:[#allocation3 + $0xe0] sm:$0xf] %vm281, %v5153
        %5370 = vst.msk [vmem:[#allocation3 + $0xf4] sm:$0xf] %vm281, %v5156
        %5371 = vst.msk [vmem:[#allocation3 + $0x108] sm:$0xf] %vm281, %v5159
        %5372 = vst.msk [vmem:[#allocation3 + $0x11c] sm:$0xf] %vm281, %v5162
        %5373 = vst.msk [vmem:[#allocation3 + $0x130] sm:$0xf] %vm281, %v5165
        %5374 = vst.msk [vmem:[#allocation3 + $0x144] sm:$0xf] %vm281, %v5168
        %5375 = vst.msk [vmem:[#allocation3 + $0x158] sm:$0xf] %vm281, %v5171
        %5376 = vst.msk [vmem:[#allocation3 + $0x16c] sm:$0xf] %vm281, %v5174
        %5377 = vst.msk [vmem:[#allocation3 + $0x180] sm:$0xf] %vm281, %v5177
        %5378 = vst.msk [vmem:[#allocation3 + $0x194] sm:$0xf] %vm281, %v5180
        %5379 = vst.msk [vmem:[#allocation3 + $0x1a8] sm:$0xf] %vm281, %v5183
        %5380 = vst.msk [vmem:[#allocation3 + $0x1bc] sm:$0xf] %vm281, %v5186
        %5381 = vst.msk [vmem:[#allocation3 + $0x1d0] sm:$0xf] %vm281, %v5189
        %5382 = vst.msk [vmem:[#allocation3 + $0x1e4] sm:$0xf] %vm281, %v5192
        %5383 = vst.msk [vmem:[#allocation3 + $0x1f8] sm:$0xf] %vm281, %v5195
        %5384 = vst.msk [vmem:[#allocation3 + $0x20c] sm:$0xf] %vm281, %v5198
        %5385 = vst.msk [vmem:[#allocation3 + $0x220] sm:$0xf] %vm281, %v5201
        %5386 = vst.msk [vmem:[#allocation3 + $0x234] sm:$0xf] %vm281, %v5204
        %5387 = vst.msk [vmem:[#allocation3 + $0x248] sm:$0xf] %vm281, %v5207
        %5388 = vst.msk [vmem:[#allocation3 + $0x25c] sm:$0xf] %vm281, %v5210
        %5389 = vst.msk [vmem:[#allocation3 + $0x270] sm:$0xf] %vm281, %v5213
        %5390 = vst.msk [vmem:[#allocation3 + $0x284] sm:$0xf] %vm281, %v5216
        %5391 = vst.msk [vmem:[#allocation3 + $0x298] sm:$0xf] %vm281, %v5219
        %5392 = vst.msk [vmem:[#allocation3 + $0x2ac] sm:$0xf] %vm281, %v5222
        %5393 = vst.msk [vmem:[#allocation3 + $0x2c0] sm:$0xf] %vm281, %v5225
        %5394 = vst.msk [vmem:[#allocation3 + $0x2d4] sm:$0xf] %vm281, %v5228
        %5395 = vst.msk [vmem:[#allocation3 + $0x2e8] sm:$0xf] %vm281, %v5231
        %5396 = vst.msk [vmem:[#allocation3 + $0x2fc] sm:$0xf] %vm281, %v5234
        %5397 = vst.msk [vmem:[#allocation3 + $0x310] sm:$0xf] %vm281, %v5237
        %5398 = vst.msk [vmem:[#allocation3 + $0x324] sm:$0xf] %vm281, %v5240
        %5399 = vst.msk [vmem:[#allocation3 + $0x338] sm:$0xf] %vm281, %v5243
        %5400 = vst.msk [vmem:[#allocation3 + $0x34c] sm:$0xf] %vm281, %v5246
        %5401 = vst.msk [vmem:[#allocation3 + $0x360] sm:$0xf] %vm281, %v5249
        %5402 = vst.msk [vmem:[#allocation3 + $0x374] sm:$0xf] %vm281, %v5252
        %5403 = vst.msk [vmem:[#allocation3 + $0x388] sm:$0xf] %vm281, %v5255
        %5404 = vst.msk [vmem:[#allocation3 + $0x39c] sm:$0xf] %vm281, %v5258
        %5405 = vst.msk [vmem:[#allocation3 + $0x3b0] sm:$0xf] %vm281, %v5261
        %5406 = vst.msk [vmem:[#allocation3 + $0x3c4] sm:$0xf] %vm281, %v5264
        %5407 = vst.msk [vmem:[#allocation3 + $0x3d8] sm:$0xf] %vm281, %v5267
        %5408 = vst.msk [vmem:[#allocation3 + $0x3ec] sm:$0xf] %vm281, %v5270
        %5409 = vst.msk [vmem:[#allocation3 + $0x400] sm:$0xf] %vm281, %v5273
        %5410 = vst.msk [vmem:[#allocation3 + $0x414] sm:$0xf] %vm281, %v5276
        %5411 = vst.msk [vmem:[#allocation3 + $0x428] sm:$0xf] %vm281, %v5279
        %5412 = vst.msk [vmem:[#allocation3 + $0x43c] sm:$0xf] %vm281, %v5282
        %5413 = vst.msk [vmem:[#allocation3 + $0x450] sm:$0xf] %vm281, %v5285
        %5414 = vst.msk [vmem:[#allocation3 + $0x464] sm:$0xf] %vm281, %v5288
        %5415 = vst.msk [vmem:[#allocation3 + $0x478] sm:$0xf] %vm281, %v5291
        %5416 = vst.msk [vmem:[#allocation3 + $0x48c] sm:$0xf] %vm281, %v5294
        %5417 = vst.msk [vmem:[#allocation3 + $0x4a0] sm:$0xf] %vm281, %v5297
        %v5418 = vld [vmem:[#allocation2 + $0xc] sm:$0xf]
        %v5419 = vld [vmem:[#allocation2 + $0x10] sm:$0xf]
        %v5420 = vld [vmem:[#allocation2 + $0x14] sm:$0xf]
        %v5421 = vld [vmem:[#allocation2 + $0x18] sm:$0xf]
        %v5422 = vld [vmem:[#allocation2 + $0x1c] sm:$0xf]
        %v5423 = vld [vmem:[#allocation2 + $0x20] sm:$0xf]
        %v5424 = vld [vmem:[#allocation2 + $0x24] sm:$0xf]
        %v5425 = vld [vmem:[#allocation2 + $0x28] sm:$0xf]
        %v5426 = vld [vmem:[#allocation2 + $0x2c] sm:$0xf]
        %v5427 = vld [vmem:[#allocation2 + $0x30] sm:$0xf]
        %v5428 = vld [vmem:[#allocation2 + $0x34] sm:$0xf]
        %v5429 = vld [vmem:[#allocation2 + $0x38] sm:$0xf]
        %v5430 = vld [vmem:[#allocation2 + $0x3c] sm:$0xf]
        %v5431 = vld [vmem:[#allocation2 + $0x40] sm:$0xf]
        %v5432 = vld [vmem:[#allocation2 + $0x44] sm:$0xf]
        %v5433 = vld [vmem:[#allocation2 + $0x48] sm:$0xf]
        %v5434 = vld [vmem:[#allocation2 + $0x4c] sm:$0xf]
        %v5435 = vld [vmem:[#allocation2 + $0x50] sm:$0xf]
        %v5436 = vld [vmem:[#allocation2 + $0x54] sm:$0xf]
        %v5437 = vld [vmem:[#allocation2 + $0x58] sm:$0xf]
        %v5438 = vld [vmem:[#allocation2 + $0x5c] sm:$0xf]
        %v5439 = vld [vmem:[#allocation2 + $0x60] sm:$0xf]
        %v5440 = vld [vmem:[#allocation2 + $0x64] sm:$0xf]
        %v5441 = vld [vmem:[#allocation2 + $0x68] sm:$0xf]
        %v5442 = vld [vmem:[#allocation2 + $0x6c] sm:$0xf]
        %v5443 = vld [vmem:[#allocation2 + $0x70] sm:$0xf]
        %v5444 = vld [vmem:[#allocation2 + $0x74] sm:$0xf]
        %v5445 = vld [vmem:[#allocation2 + $0x78] sm:$0xf]
        %v5446 = vld [vmem:[#allocation2 + $0x7c] sm:$0xf]
        %v5447 = vld [vmem:[#allocation2 + $0x80] sm:$0xf]
        %v5448 = vld [vmem:[#allocation2 + $0x84] sm:$0xf]
        %v5449 = vld [vmem:[#allocation2 + $0x88] sm:$0xf]
        %v5450 = vld [vmem:[#allocation2 + $0x8c] sm:$0xf]
        %v5451 = vld [vmem:[#allocation2 + $0x90] sm:$0xf]
        %v5452 = vld [vmem:[#allocation2 + $0x94] sm:$0xf]
        %v5453 = vld [vmem:[#allocation2 + $0x98] sm:$0xf]
        %v5454 = vld [vmem:[#allocation2 + $0x9c] sm:$0xf]
        %v5455 = vld [vmem:[#allocation2 + $0xa0] sm:$0xf]
        %v5456 = vld [vmem:[#allocation2 + $0xa4] sm:$0xf]
        %v5457 = vld [vmem:[#allocation2 + $0xa8] sm:$0xf]
        %v5458 = vld [vmem:[#allocation2 + $0xac] sm:$0xf]
        %v5459 = vld [vmem:[#allocation2 + $0xb0] sm:$0xf]
        %v5460 = vld [vmem:[#allocation2 + $0xb4] sm:$0xf]
        %v5461 = vld [vmem:[#allocation2 + $0xb8] sm:$0xf]
        %v5462 = vld [vmem:[#allocation2 + $0xbc] sm:$0xf]
        %v5463 = vld [vmem:[#allocation2 + $0xc0] sm:$0xf]
        %v5464 = vld [vmem:[#allocation2 + $0xc4] sm:$0xf]
        %v5465 = vld [vmem:[#allocation2 + $0xc8] sm:$0xf]
        %v5466 = vld [vmem:[#allocation2 + $0xcc] sm:$0xf]
        %v5467 = vld [vmem:[#allocation2 + $0xd0] sm:$0xf]
        %v5468 = vld [vmem:[#allocation2 + $0xd4] sm:$0xf]
        %v5469 = vld [vmem:[#allocation2 + $0xd8] sm:$0xf]
        %v5470 = vld [vmem:[#allocation2 + $0xdc] sm:$0xf]
        %v5471 = vld [vmem:[#allocation2 + $0xe0] sm:$0xf]
        %v5472 = vld [vmem:[#allocation2 + $0xe4] sm:$0xf]
        %v5473 = vld [vmem:[#allocation2 + $0xe8] sm:$0xf]
        %v5474 = vld [vmem:[#allocation2 + $0xec] sm:$0xf]
        %v5475 = vld [vmem:[#allocation2 + $0xf0] sm:$0xf]
        %v5476 = vld [vmem:[#allocation2 + $0xf4] sm:$0xf]
        %v5477 = vld [vmem:[#allocation2 + $0xf8] sm:$0xf]
        %5538 = vrot.lane.b32.xlu0 %v5418, 64
        %v5539 = vpop.permute.xlu0 %5538
        %5540 = vrot.lane.b32.xlu0 %v5419, 64
        %v5541 = vpop.permute.xlu0 %5540
        %5542 = vrot.lane.b32.xlu0 %v5420, 64
        %v5543 = vpop.permute.xlu0 %5542
        %5544 = vrot.lane.b32.xlu0 %v5421, 64
        %v5545 = vpop.permute.xlu0 %5544
        %5546 = vrot.lane.b32.xlu0 %v5422, 64
        %v5547 = vpop.permute.xlu0 %5546
        %5548 = vrot.lane.b32.xlu0 %v5423, 64
        %v5549 = vpop.permute.xlu0 %5548
        %5550 = vrot.lane.b32.xlu0 %v5424, 64
        %v5551 = vpop.permute.xlu0 %5550
        %5552 = vrot.lane.b32.xlu0 %v5425, 64
        %v5553 = vpop.permute.xlu0 %5552
        %5554 = vrot.lane.b32.xlu0 %v5426, 64
        %v5555 = vpop.permute.xlu0 %5554
        %5556 = vrot.lane.b32.xlu0 %v5427, 64
        %v5557 = vpop.permute.xlu0 %5556
        %5558 = vrot.lane.b32.xlu0 %v5428, 64
        %v5559 = vpop.permute.xlu0 %5558
        %5560 = vrot.lane.b32.xlu0 %v5429, 64
        %v5561 = vpop.permute.xlu0 %5560
        %5562 = vrot.lane.b32.xlu0 %v5430, 64
        %v5563 = vpop.permute.xlu0 %5562
        %5564 = vrot.lane.b32.xlu0 %v5431, 64
        %v5565 = vpop.permute.xlu0 %5564
        %5566 = vrot.lane.b32.xlu0 %v5432, 64
        %v5567 = vpop.permute.xlu0 %5566
        %5568 = vrot.lane.b32.xlu0 %v5433, 64
        %v5569 = vpop.permute.xlu0 %5568
        %5570 = vrot.lane.b32.xlu0 %v5434, 64
        %v5571 = vpop.permute.xlu0 %5570
        %5572 = vrot.lane.b32.xlu0 %v5435, 64
        %v5573 = vpop.permute.xlu0 %5572
        %5574 = vrot.lane.b32.xlu0 %v5436, 64
        %v5575 = vpop.permute.xlu0 %5574
        %5576 = vrot.lane.b32.xlu0 %v5437, 64
        %v5577 = vpop.permute.xlu0 %5576
        %5578 = vrot.lane.b32.xlu0 %v5438, 64
        %v5579 = vpop.permute.xlu0 %5578
        %5580 = vrot.lane.b32.xlu0 %v5439, 64
        %v5581 = vpop.permute.xlu0 %5580
        %5582 = vrot.lane.b32.xlu0 %v5440, 64
        %v5583 = vpop.permute.xlu0 %5582
        %5584 = vrot.lane.b32.xlu0 %v5441, 64
        %v5585 = vpop.permute.xlu0 %5584
        %5586 = vrot.lane.b32.xlu0 %v5442, 64
        %v5587 = vpop.permute.xlu0 %5586
        %5588 = vrot.lane.b32.xlu0 %v5443, 64
        %v5589 = vpop.permute.xlu0 %5588
        %5590 = vrot.lane.b32.xlu0 %v5444, 64
        %v5591 = vpop.permute.xlu0 %5590
        %5592 = vrot.lane.b32.xlu0 %v5445, 64
        %v5593 = vpop.permute.xlu0 %5592
        %5594 = vrot.lane.b32.xlu0 %v5446, 64
        %v5595 = vpop.permute.xlu0 %5594
        %5596 = vrot.lane.b32.xlu0 %v5447, 64
        %v5597 = vpop.permute.xlu0 %5596
        %5598 = vrot.lane.b32.xlu0 %v5448, 64
        %v5599 = vpop.permute.xlu0 %5598
        %5600 = vrot.lane.b32.xlu0 %v5449, 64
        %v5601 = vpop.permute.xlu0 %5600
        %5602 = vrot.lane.b32.xlu0 %v5450, 64
        %v5603 = vpop.permute.xlu0 %5602
        %5604 = vrot.lane.b32.xlu0 %v5451, 64
        %v5605 = vpop.permute.xlu0 %5604
        %5606 = vrot.lane.b32.xlu0 %v5452, 64
        %v5607 = vpop.permute.xlu0 %5606
        %5608 = vrot.lane.b32.xlu0 %v5453, 64
        %v5609 = vpop.permute.xlu0 %5608
        %5610 = vrot.lane.b32.xlu0 %v5454, 64
        %v5611 = vpop.permute.xlu0 %5610
        %5612 = vrot.lane.b32.xlu0 %v5455, 64
        %v5613 = vpop.permute.xlu0 %5612
        %5614 = vrot.lane.b32.xlu0 %v5456, 64
        %v5615 = vpop.permute.xlu0 %5614
        %5616 = vrot.lane.b32.xlu0 %v5457, 64
        %v5617 = vpop.permute.xlu0 %5616
        %5618 = vrot.lane.b32.xlu0 %v5458, 64
        %v5619 = vpop.permute.xlu0 %5618
        %5620 = vrot.lane.b32.xlu0 %v5459, 64
        %v5621 = vpop.permute.xlu0 %5620
        %5622 = vrot.lane.b32.xlu0 %v5460, 64
        %v5623 = vpop.permute.xlu0 %5622
        %5624 = vrot.lane.b32.xlu0 %v5461, 64
        %v5625 = vpop.permute.xlu0 %5624
        %5626 = vrot.lane.b32.xlu0 %v5462, 64
        %v5627 = vpop.permute.xlu0 %5626
        %5628 = vrot.lane.b32.xlu0 %v5463, 64
        %v5629 = vpop.permute.xlu0 %5628
        %5630 = vrot.lane.b32.xlu0 %v5464, 64
        %v5631 = vpop.permute.xlu0 %5630
        %5632 = vrot.lane.b32.xlu0 %v5465, 64
        %v5633 = vpop.permute.xlu0 %5632
        %5634 = vrot.lane.b32.xlu0 %v5466, 64
        %v5635 = vpop.permute.xlu0 %5634
        %5636 = vrot.lane.b32.xlu0 %v5467, 64
        %v5637 = vpop.permute.xlu0 %5636
        %5638 = vrot.lane.b32.xlu0 %v5468, 64
        %v5639 = vpop.permute.xlu0 %5638
        %5640 = vrot.lane.b32.xlu0 %v5469, 64
        %v5641 = vpop.permute.xlu0 %5640
        %5642 = vrot.lane.b32.xlu0 %v5470, 64
        %v5643 = vpop.permute.xlu0 %5642
        %5644 = vrot.lane.b32.xlu0 %v5471, 64
        %v5645 = vpop.permute.xlu0 %5644
        %5646 = vrot.lane.b32.xlu0 %v5472, 64
        %v5647 = vpop.permute.xlu0 %5646
        %5648 = vrot.lane.b32.xlu0 %v5473, 64
        %v5649 = vpop.permute.xlu0 %5648
        %5650 = vrot.lane.b32.xlu0 %v5474, 64
        %v5651 = vpop.permute.xlu0 %5650
        %5652 = vrot.lane.b32.xlu0 %v5475, 64
        %v5653 = vpop.permute.xlu0 %5652
        %5654 = vrot.lane.b32.xlu0 %v5476, 64
        %v5655 = vpop.permute.xlu0 %5654
        %5656 = vrot.lane.b32.xlu0 %v5477, 64
        %v5657 = vpop.permute.xlu0 %5656
        %5718 = vst.msk [vmem:[#allocation3 + $0x4] sm:$0xf] %vm4931, %v5539
        %5719 = vst.msk [vmem:[#allocation3 + $0x18] sm:$0xf] %vm4931, %v5541
        %5720 = vst.msk [vmem:[#allocation3 + $0x2c] sm:$0xf] %vm4931, %v5543
        %5721 = vst.msk [vmem:[#allocation3 + $0x40] sm:$0xf] %vm4931, %v5545
        %5722 = vst.msk [vmem:[#allocation3 + $0x54] sm:$0xf] %vm4931, %v5547
        %5723 = vst.msk [vmem:[#allocation3 + $0x68] sm:$0xf] %vm4931, %v5549
        %5724 = vst.msk [vmem:[#allocation3 + $0x7c] sm:$0xf] %vm4931, %v5551
        %5725 = vst.msk [vmem:[#allocation3 + $0x90] sm:$0xf] %vm4931, %v5553
        %5726 = vst.msk [vmem:[#allocation3 + $0xa4] sm:$0xf] %vm4931, %v5555
        %5727 = vst.msk [vmem:[#allocation3 + $0xb8] sm:$0xf] %vm4931, %v5557
        %5728 = vst.msk [vmem:[#allocation3 + $0xcc] sm:$0xf] %vm4931, %v5559
        %5729 = vst.msk [vmem:[#allocation3 + $0xe0] sm:$0xf] %vm4931, %v5561
        %5730 = vst.msk [vmem:[#allocation3 + $0xf4] sm:$0xf] %vm4931, %v5563
        %5731 = vst.msk [vmem:[#allocation3 + $0x108] sm:$0xf] %vm4931, %v5565
        %5732 = vst.msk [vmem:[#allocation3 + $0x11c] sm:$0xf] %vm4931, %v5567
        %5733 = vst.msk [vmem:[#allocation3 + $0x130] sm:$0xf] %vm4931, %v5569
        %5734 = vst.msk [vmem:[#allocation3 + $0x144] sm:$0xf] %vm4931, %v5571
        %5735 = vst.msk [vmem:[#allocation3 + $0x158] sm:$0xf] %vm4931, %v5573
        %5736 = vst.msk [vmem:[#allocation3 + $0x16c] sm:$0xf] %vm4931, %v5575
        %5737 = vst.msk [vmem:[#allocation3 + $0x180] sm:$0xf] %vm4931, %v5577
        %5738 = vst.msk [vmem:[#allocation3 + $0x194] sm:$0xf] %vm4931, %v5579
        %5739 = vst.msk [vmem:[#allocation3 + $0x1a8] sm:$0xf] %vm4931, %v5581
        %5740 = vst.msk [vmem:[#allocation3 + $0x1bc] sm:$0xf] %vm4931, %v5583
        %5741 = vst.msk [vmem:[#allocation3 + $0x1d0] sm:$0xf] %vm4931, %v5585
        %5742 = vst.msk [vmem:[#allocation3 + $0x1e4] sm:$0xf] %vm4931, %v5587
        %5743 = vst.msk [vmem:[#allocation3 + $0x1f8] sm:$0xf] %vm4931, %v5589
        %5744 = vst.msk [vmem:[#allocation3 + $0x20c] sm:$0xf] %vm4931, %v5591
        %5745 = vst.msk [vmem:[#allocation3 + $0x220] sm:$0xf] %vm4931, %v5593
        %5746 = vst.msk [vmem:[#allocation3 + $0x234] sm:$0xf] %vm4931, %v5595
        %5747 = vst.msk [vmem:[#allocation3 + $0x248] sm:$0xf] %vm4931, %v5597
        %5748 = vst.msk [vmem:[#allocation3 + $0x25c] sm:$0xf] %vm4931, %v5599
        %5749 = vst.msk [vmem:[#allocation3 + $0x270] sm:$0xf] %vm4931, %v5601
        %5750 = vst.msk [vmem:[#allocation3 + $0x284] sm:$0xf] %vm4931, %v5603
        %5751 = vst.msk [vmem:[#allocation3 + $0x298] sm:$0xf] %vm4931, %v5605
        %5752 = vst.msk [vmem:[#allocation3 + $0x2ac] sm:$0xf] %vm4931, %v5607
        %5753 = vst.msk [vmem:[#allocation3 + $0x2c0] sm:$0xf] %vm4931, %v5609
        %5754 = vst.msk [vmem:[#allocation3 + $0x2d4] sm:$0xf] %vm4931, %v5611
        %5755 = vst.msk [vmem:[#allocation3 + $0x2e8] sm:$0xf] %vm4931, %v5613
        %5756 = vst.msk [vmem:[#allocation3 + $0x2fc] sm:$0xf] %vm4931, %v5615
        %5757 = vst.msk [vmem:[#allocation3 + $0x310] sm:$0xf] %vm4931, %v5617
        %5758 = vst.msk [vmem:[#allocation3 + $0x324] sm:$0xf] %vm4931, %v5619
        %5759 = vst.msk [vmem:[#allocation3 + $0x338] sm:$0xf] %vm4931, %v5621
        %5760 = vst.msk [vmem:[#allocation3 + $0x34c] sm:$0xf] %vm4931, %v5623
        %5761 = vst.msk [vmem:[#allocation3 + $0x360] sm:$0xf] %vm4931, %v5625
        %5762 = vst.msk [vmem:[#allocation3 + $0x374] sm:$0xf] %vm4931, %v5627
        %5763 = vst.msk [vmem:[#allocation3 + $0x388] sm:$0xf] %vm4931, %v5629
        %5764 = vst.msk [vmem:[#allocation3 + $0x39c] sm:$0xf] %vm4931, %v5631
        %5765 = vst.msk [vmem:[#allocation3 + $0x3b0] sm:$0xf] %vm4931, %v5633
        %5766 = vst.msk [vmem:[#allocation3 + $0x3c4] sm:$0xf] %vm4931, %v5635
        %5767 = vst.msk [vmem:[#allocation3 + $0x3d8] sm:$0xf] %vm4931, %v5637
        %5768 = vst.msk [vmem:[#allocation3 + $0x3ec] sm:$0xf] %vm4931, %v5639
        %5769 = vst.msk [vmem:[#allocation3 + $0x400] sm:$0xf] %vm4931, %v5641
        %5770 = vst.msk [vmem:[#allocation3 + $0x414] sm:$0xf] %vm4931, %v5643
        %5771 = vst.msk [vmem:[#allocation3 + $0x428] sm:$0xf] %vm4931, %v5645
        %5772 = vst.msk [vmem:[#allocation3 + $0x43c] sm:$0xf] %vm4931, %v5647
        %5773 = vst.msk [vmem:[#allocation3 + $0x450] sm:$0xf] %vm4931, %v5649
        %5774 = vst.msk [vmem:[#allocation3 + $0x464] sm:$0xf] %vm4931, %v5651
        %5775 = vst.msk [vmem:[#allocation3 + $0x478] sm:$0xf] %vm4931, %v5653
        %5776 = vst.msk [vmem:[#allocation3 + $0x48c] sm:$0xf] %vm4931, %v5655
        %5777 = vst.msk [vmem:[#allocation3 + $0x4a0] sm:$0xf] %vm4931, %v5657
        %v5778 = vld [vmem:[#allocation2 + $0xc] sm:$0xf]
        %v5779 = vld [vmem:[#allocation2 + $0x10] sm:$0xf]
        %v5780 = vld [vmem:[#allocation2 + $0x14] sm:$0xf]
        %v5781 = vld [vmem:[#allocation2 + $0x18] sm:$0xf]
        %v5782 = vld [vmem:[#allocation2 + $0x1c] sm:$0xf]
        %v5783 = vld [vmem:[#allocation2 + $0x20] sm:$0xf]
        %v5784 = vld [vmem:[#allocation2 + $0x24] sm:$0xf]
        %v5785 = vld [vmem:[#allocation2 + $0x28] sm:$0xf]
        %v5786 = vld [vmem:[#allocation2 + $0x2c] sm:$0xf]
        %v5787 = vld [vmem:[#allocation2 + $0x30] sm:$0xf]
        %v5788 = vld [vmem:[#allocation2 + $0x34] sm:$0xf]
        %v5789 = vld [vmem:[#allocation2 + $0x38] sm:$0xf]
        %v5790 = vld [vmem:[#allocation2 + $0x3c] sm:$0xf]
        %v5791 = vld [vmem:[#allocation2 + $0x40] sm:$0xf]
        %v5792 = vld [vmem:[#allocation2 + $0x44] sm:$0xf]
        %v5793 = vld [vmem:[#allocation2 + $0x48] sm:$0xf]
        %v5794 = vld [vmem:[#allocation2 + $0x4c] sm:$0xf]
        %v5795 = vld [vmem:[#allocation2 + $0x50] sm:$0xf]
        %v5796 = vld [vmem:[#allocation2 + $0x54] sm:$0xf]
        %v5797 = vld [vmem:[#allocation2 + $0x58] sm:$0xf]
        %v5798 = vld [vmem:[#allocation2 + $0x5c] sm:$0xf]
        %v5799 = vld [vmem:[#allocation2 + $0x60] sm:$0xf]
        %v5800 = vld [vmem:[#allocation2 + $0x64] sm:$0xf]
        %v5801 = vld [vmem:[#allocation2 + $0x68] sm:$0xf]
        %v5802 = vld [vmem:[#allocation2 + $0x6c] sm:$0xf]
        %v5803 = vld [vmem:[#allocation2 + $0x70] sm:$0xf]
        %v5804 = vld [vmem:[#allocation2 + $0x74] sm:$0xf]
        %v5805 = vld [vmem:[#allocation2 + $0x78] sm:$0xf]
        %v5806 = vld [vmem:[#allocation2 + $0x7c] sm:$0xf]
        %v5807 = vld [vmem:[#allocation2 + $0x80] sm:$0xf]
        %v5808 = vld [vmem:[#allocation2 + $0x84] sm:$0xf]
        %v5809 = vld [vmem:[#allocation2 + $0x88] sm:$0xf]
        %v5810 = vld [vmem:[#allocation2 + $0x8c] sm:$0xf]
        %v5811 = vld [vmem:[#allocation2 + $0x90] sm:$0xf]
        %v5812 = vld [vmem:[#allocation2 + $0x94] sm:$0xf]
        %v5813 = vld [vmem:[#allocation2 + $0x98] sm:$0xf]
        %v5814 = vld [vmem:[#allocation2 + $0x9c] sm:$0xf]
        %v5815 = vld [vmem:[#allocation2 + $0xa0] sm:$0xf]
        %v5816 = vld [vmem:[#allocation2 + $0xa4] sm:$0xf]
        %v5817 = vld [vmem:[#allocation2 + $0xa8] sm:$0xf]
        %v5818 = vld [vmem:[#allocation2 + $0xac] sm:$0xf]
        %v5819 = vld [vmem:[#allocation2 + $0xb0] sm:$0xf]
        %v5820 = vld [vmem:[#allocation2 + $0xb4] sm:$0xf]
        %v5821 = vld [vmem:[#allocation2 + $0xb8] sm:$0xf]
        %v5822 = vld [vmem:[#allocation2 + $0xbc] sm:$0xf]
        %v5823 = vld [vmem:[#allocation2 + $0xc0] sm:$0xf]
        %v5824 = vld [vmem:[#allocation2 + $0xc4] sm:$0xf]
        %v5825 = vld [vmem:[#allocation2 + $0xc8] sm:$0xf]
        %v5826 = vld [vmem:[#allocation2 + $0xcc] sm:$0xf]
        %v5827 = vld [vmem:[#allocation2 + $0xd0] sm:$0xf]
        %v5828 = vld [vmem:[#allocation2 + $0xd4] sm:$0xf]
        %v5829 = vld [vmem:[#allocation2 + $0xd8] sm:$0xf]
        %v5830 = vld [vmem:[#allocation2 + $0xdc] sm:$0xf]
        %v5831 = vld [vmem:[#allocation2 + $0xe0] sm:$0xf]
        %v5832 = vld [vmem:[#allocation2 + $0xe4] sm:$0xf]
        %v5833 = vld [vmem:[#allocation2 + $0xe8] sm:$0xf]
        %v5834 = vld [vmem:[#allocation2 + $0xec] sm:$0xf]
        %v5835 = vld [vmem:[#allocation2 + $0xf0] sm:$0xf]
        %v5836 = vld [vmem:[#allocation2 + $0xf4] sm:$0xf]
        %v5837 = vld [vmem:[#allocation2 + $0xf8] sm:$0xf]
        %v5838 = vld [vmem:[#allocation2 + $0xfc] sm:$0x1]
        %v5840 = vshrl.u32 %v5778, 16
        %v5842 = vrot.slane %v5840, 4
        %v5843 = vshll.u32 %v5778, 16
        %v5845 = vrot.slane %v5843, 5
        %v5846 = vor.u32 %v5842, %v5845
        %v5847 = vrot.slane %v5846, 4
        %v5849 = vshll.u32 %v5779, 16
        %v5851 = vrot.slane %v5849, 5
        %v5852 = vsel %vm4146, %v5847, %v5851
        %v5853 = vshrl.u32 %v5779, 16
        %v5855 = vrot.slane %v5853, 4
        %v5856 = vor.u32 %v5855, %v5851
        %v5857 = vrot.slane %v5856, 4
        %v5859 = vshll.u32 %v5780, 16
        %v5861 = vrot.slane %v5859, 5
        %v5862 = vsel %vm4146, %v5857, %v5861
        %v5863 = vshrl.u32 %v5780, 16
        %v5865 = vrot.slane %v5863, 4
        %v5866 = vor.u32 %v5865, %v5861
        %v5867 = vrot.slane %v5866, 4
        %v5869 = vshll.u32 %v5781, 16
        %v5871 = vrot.slane %v5869, 5
        %v5872 = vsel %vm4146, %v5867, %v5871
        %v5873 = vshrl.u32 %v5781, 16
        %v5875 = vrot.slane %v5873, 4
        %v5876 = vor.u32 %v5875, %v5871
        %v5877 = vrot.slane %v5876, 4
        %v5879 = vshll.u32 %v5782, 16
        %v5881 = vrot.slane %v5879, 5
        %v5882 = vsel %vm4146, %v5877, %v5881
        %v5883 = vshrl.u32 %v5782, 16
        %v5885 = vrot.slane %v5883, 4
        %v5886 = vor.u32 %v5885, %v5881
        %v5887 = vrot.slane %v5886, 4
        %v5889 = vshll.u32 %v5783, 16
        %v5891 = vrot.slane %v5889, 5
        %v5892 = vsel %vm4146, %v5887, %v5891
        %v5893 = vshrl.u32 %v5783, 16
        %v5895 = vrot.slane %v5893, 4
        %v5896 = vor.u32 %v5895, %v5891
        %v5897 = vrot.slane %v5896, 4
        %v5899 = vshll.u32 %v5784, 16
        %v5901 = vrot.slane %v5899, 5
        %v5902 = vsel %vm4146, %v5897, %v5901
        %v5903 = vshrl.u32 %v5784, 16
        %v5905 = vrot.slane %v5903, 4
        %v5906 = vor.u32 %v5905, %v5901
        %v5907 = vrot.slane %v5906, 4
        %v5909 = vshll.u32 %v5785, 16
        %v5911 = vrot.slane %v5909, 5
        %v5912 = vsel %vm4146, %v5907, %v5911
        %v5913 = vshrl.u32 %v5785, 16
        %v5915 = vrot.slane %v5913, 4
        %v5916 = vor.u32 %v5915, %v5911
        %v5917 = vrot.slane %v5916, 4
        %v5919 = vshll.u32 %v5786, 16
        %v5921 = vrot.slane %v5919, 5
        %v5922 = vsel %vm4146, %v5917, %v5921
        %v5923 = vshrl.u32 %v5786, 16
        %v5925 = vrot.slane %v5923, 4
        %v5926 = vor.u32 %v5925, %v5921
        %v5927 = vrot.slane %v5926, 4
        %v5929 = vshll.u32 %v5787, 16
        %v5931 = vrot.slane %v5929, 5
        %v5932 = vsel %vm4146, %v5927, %v5931
        %v5933 = vshrl.u32 %v5787, 16
        %v5935 = vrot.slane %v5933, 4
        %v5936 = vor.u32 %v5935, %v5931
        %v5937 = vrot.slane %v5936, 4
        %v5939 = vshll.u32 %v5788, 16
        %v5941 = vrot.slane %v5939, 5
        %v5942 = vsel %vm4146, %v5937, %v5941
        %v5943 = vshrl.u32 %v5788, 16
        %v5945 = vrot.slane %v5943, 4
        %v5946 = vor.u32 %v5945, %v5941
        %v5947 = vrot.slane %v5946, 4
        %v5949 = vshll.u32 %v5789, 16
        %v5951 = vrot.slane %v5949, 5
        %v5952 = vsel %vm4146, %v5947, %v5951
        %v5953 = vshrl.u32 %v5789, 16
        %v5955 = vrot.slane %v5953, 4
        %v5956 = vor.u32 %v5955, %v5951
        %v5957 = vrot.slane %v5956, 4
        %v5959 = vshll.u32 %v5790, 16
        %v5961 = vrot.slane %v5959, 5
        %v5962 = vsel %vm4146, %v5957, %v5961
        %v5963 = vshrl.u32 %v5790, 16
        %v5965 = vrot.slane %v5963, 4
        %v5966 = vor.u32 %v5965, %v5961
        %v5967 = vrot.slane %v5966, 4
        %v5969 = vshll.u32 %v5791, 16
        %v5971 = vrot.slane %v5969, 5
        %v5972 = vsel %vm4146, %v5967, %v5971
        %v5973 = vshrl.u32 %v5791, 16
        %v5975 = vrot.slane %v5973, 4
        %v5976 = vor.u32 %v5975, %v5971
        %v5977 = vrot.slane %v5976, 4
        %v5979 = vshll.u32 %v5792, 16
        %v5981 = vrot.slane %v5979, 5
        %v5982 = vsel %vm4146, %v5977, %v5981
        %v5983 = vshrl.u32 %v5792, 16
        %v5985 = vrot.slane %v5983, 4
        %v5986 = vor.u32 %v5985, %v5981
        %v5987 = vrot.slane %v5986, 4
        %v5989 = vshll.u32 %v5793, 16
        %v5991 = vrot.slane %v5989, 5
        %v5992 = vsel %vm4146, %v5987, %v5991
        %v5993 = vshrl.u32 %v5793, 16
        %v5995 = vrot.slane %v5993, 4
        %v5996 = vor.u32 %v5995, %v5991
        %v5997 = vrot.slane %v5996, 4
        %v5999 = vshll.u32 %v5794, 16
        %v6001 = vrot.slane %v5999, 5
        %v6002 = vsel %vm4146, %v5997, %v6001
        %v6003 = vshrl.u32 %v5794, 16
        %v6005 = vrot.slane %v6003, 4
        %v6006 = vor.u32 %v6005, %v6001
        %v6007 = vrot.slane %v6006, 4
        %v6009 = vshll.u32 %v5795, 16
        %v6011 = vrot.slane %v6009, 5
        %v6012 = vsel %vm4146, %v6007, %v6011
        %v6013 = vshrl.u32 %v5795, 16
        %v6015 = vrot.slane %v6013, 4
        %v6016 = vor.u32 %v6015, %v6011
        %v6017 = vrot.slane %v6016, 4
        %v6019 = vshll.u32 %v5796, 16
        %v6021 = vrot.slane %v6019, 5
        %v6022 = vsel %vm4146, %v6017, %v6021
        %v6023 = vshrl.u32 %v5796, 16
        %v6025 = vrot.slane %v6023, 4
        %v6026 = vor.u32 %v6025, %v6021
        %v6027 = vrot.slane %v6026, 4
        %v6029 = vshll.u32 %v5797, 16
        %v6031 = vrot.slane %v6029, 5
        %v6032 = vsel %vm4146, %v6027, %v6031
        %v6033 = vshrl.u32 %v5797, 16
        %v6035 = vrot.slane %v6033, 4
        %v6036 = vor.u32 %v6035, %v6031
        %v6037 = vrot.slane %v6036, 4
        %v6039 = vshll.u32 %v5798, 16
        %v6041 = vrot.slane %v6039, 5
        %v6042 = vsel %vm4146, %v6037, %v6041
        %v6043 = vshrl.u32 %v5798, 16
        %v6045 = vrot.slane %v6043, 4
        %v6046 = vor.u32 %v6045, %v6041
        %v6047 = vrot.slane %v6046, 4
        %v6049 = vshll.u32 %v5799, 16
        %v6051 = vrot.slane %v6049, 5
        %v6052 = vsel %vm4146, %v6047, %v6051
        %v6053 = vshrl.u32 %v5799, 16
        %v6055 = vrot.slane %v6053, 4
        %v6056 = vor.u32 %v6055, %v6051
        %v6057 = vrot.slane %v6056, 4
        %v6059 = vshll.u32 %v5800, 16
        %v6061 = vrot.slane %v6059, 5
        %v6062 = vsel %vm4146, %v6057, %v6061
        %v6063 = vshrl.u32 %v5800, 16
        %v6065 = vrot.slane %v6063, 4
        %v6066 = vor.u32 %v6065, %v6061
        %v6067 = vrot.slane %v6066, 4
        %v6069 = vshll.u32 %v5801, 16
        %v6071 = vrot.slane %v6069, 5
        %v6072 = vsel %vm4146, %v6067, %v6071
        %v6073 = vshrl.u32 %v5801, 16
        %v6075 = vrot.slane %v6073, 4
        %v6076 = vor.u32 %v6075, %v6071
        %v6077 = vrot.slane %v6076, 4
        %v6079 = vshll.u32 %v5802, 16
        %v6081 = vrot.slane %v6079, 5
        %v6082 = vsel %vm4146, %v6077, %v6081
        %v6083 = vshrl.u32 %v5802, 16
        %v6085 = vrot.slane %v6083, 4
        %v6086 = vor.u32 %v6085, %v6081
        %v6087 = vrot.slane %v6086, 4
        %v6089 = vshll.u32 %v5803, 16
        %v6091 = vrot.slane %v6089, 5
        %v6092 = vsel %vm4146, %v6087, %v6091
        %v6093 = vshrl.u32 %v5803, 16
        %v6095 = vrot.slane %v6093, 4
        %v6096 = vor.u32 %v6095, %v6091
        %v6097 = vrot.slane %v6096, 4
        %v6099 = vshll.u32 %v5804, 16
        %v6101 = vrot.slane %v6099, 5
        %v6102 = vsel %vm4146, %v6097, %v6101
        %v6103 = vshrl.u32 %v5804, 16
        %v6105 = vrot.slane %v6103, 4
        %v6106 = vor.u32 %v6105, %v6101
        %v6107 = vrot.slane %v6106, 4
        %v6109 = vshll.u32 %v5805, 16
        %v6111 = vrot.slane %v6109, 5
        %v6112 = vsel %vm4146, %v6107, %v6111
        %v6113 = vshrl.u32 %v5805, 16
        %v6115 = vrot.slane %v6113, 4
        %v6116 = vor.u32 %v6115, %v6111
        %v6117 = vrot.slane %v6116, 4
        %v6119 = vshll.u32 %v5806, 16
        %v6121 = vrot.slane %v6119, 5
        %v6122 = vsel %vm4146, %v6117, %v6121
        %v6123 = vshrl.u32 %v5806, 16
        %v6125 = vrot.slane %v6123, 4
        %v6126 = vor.u32 %v6125, %v6121
        %v6127 = vrot.slane %v6126, 4
        %v6129 = vshll.u32 %v5807, 16
        %v6131 = vrot.slane %v6129, 5
        %v6132 = vsel %vm4146, %v6127, %v6131
        %v6133 = vshrl.u32 %v5807, 16
        %v6135 = vrot.slane %v6133, 4
        %v6136 = vor.u32 %v6135, %v6131
        %v6137 = vrot.slane %v6136, 4
        %v6139 = vshll.u32 %v5808, 16
        %v6141 = vrot.slane %v6139, 5
        %v6142 = vsel %vm4146, %v6137, %v6141
        %v6143 = vshrl.u32 %v5808, 16
        %v6145 = vrot.slane %v6143, 4
        %v6146 = vor.u32 %v6145, %v6141
        %v6147 = vrot.slane %v6146, 4
        %v6149 = vshll.u32 %v5809, 16
        %v6151 = vrot.slane %v6149, 5
        %v6152 = vsel %vm4146, %v6147, %v6151
        %v6153 = vshrl.u32 %v5809, 16
        %v6155 = vrot.slane %v6153, 4
        %v6156 = vor.u32 %v6155, %v6151
        %v6157 = vrot.slane %v6156, 4
        %v6159 = vshll.u32 %v5810, 16
        %v6161 = vrot.slane %v6159, 5
        %v6162 = vsel %vm4146, %v6157, %v6161
        %v6163 = vshrl.u32 %v5810, 16
        %v6165 = vrot.slane %v6163, 4
        %v6166 = vor.u32 %v6165, %v6161
        %v6167 = vrot.slane %v6166, 4
        %v6169 = vshll.u32 %v5811, 16
        %v6171 = vrot.slane %v6169, 5
        %v6172 = vsel %vm4146, %v6167, %v6171
        %v6173 = vshrl.u32 %v5811, 16
        %v6175 = vrot.slane %v6173, 4
        %v6176 = vor.u32 %v6175, %v6171
        %v6177 = vrot.slane %v6176, 4
        %v6179 = vshll.u32 %v5812, 16
        %v6181 = vrot.slane %v6179, 5
        %v6182 = vsel %vm4146, %v6177, %v6181
        %v6183 = vshrl.u32 %v5812, 16
        %v6185 = vrot.slane %v6183, 4
        %v6186 = vor.u32 %v6185, %v6181
        %v6187 = vrot.slane %v6186, 4
        %v6189 = vshll.u32 %v5813, 16
        %v6191 = vrot.slane %v6189, 5
        %v6192 = vsel %vm4146, %v6187, %v6191
        %v6193 = vshrl.u32 %v5813, 16
        %v6195 = vrot.slane %v6193, 4
        %v6196 = vor.u32 %v6195, %v6191
        %v6197 = vrot.slane %v6196, 4
        %v6199 = vshll.u32 %v5814, 16
        %v6201 = vrot.slane %v6199, 5
        %v6202 = vsel %vm4146, %v6197, %v6201
        %v6203 = vshrl.u32 %v5814, 16
        %v6205 = vrot.slane %v6203, 4
        %v6206 = vor.u32 %v6205, %v6201
        %v6207 = vrot.slane %v6206, 4
        %v6209 = vshll.u32 %v5815, 16
        %v6211 = vrot.slane %v6209, 5
        %v6212 = vsel %vm4146, %v6207, %v6211
        %v6213 = vshrl.u32 %v5815, 16
        %v6215 = vrot.slane %v6213, 4
        %v6216 = vor.u32 %v6215, %v6211
        %v6217 = vrot.slane %v6216, 4
        %v6219 = vshll.u32 %v5816, 16
        %v6221 = vrot.slane %v6219, 5
        %v6222 = vsel %vm4146, %v6217, %v6221
        %v6223 = vshrl.u32 %v5816, 16
        %v6225 = vrot.slane %v6223, 4
        %v6226 = vor.u32 %v6225, %v6221
        %v6227 = vrot.slane %v6226, 4
        %v6229 = vshll.u32 %v5817, 16
        %v6231 = vrot.slane %v6229, 5
        %v6232 = vsel %vm4146, %v6227, %v6231
        %v6233 = vshrl.u32 %v5817, 16
        %v6235 = vrot.slane %v6233, 4
        %v6236 = vor.u32 %v6235, %v6231
        %v6237 = vrot.slane %v6236, 4
        %v6239 = vshll.u32 %v5818, 16
        %v6241 = vrot.slane %v6239, 5
        %v6242 = vsel %vm4146, %v6237, %v6241
        %v6243 = vshrl.u32 %v5818, 16
        %v6245 = vrot.slane %v6243, 4
        %v6246 = vor.u32 %v6245, %v6241
        %v6247 = vrot.slane %v6246, 4
        %v6249 = vshll.u32 %v5819, 16
        %v6251 = vrot.slane %v6249, 5
        %v6252 = vsel %vm4146, %v6247, %v6251
        %v6253 = vshrl.u32 %v5819, 16
        %v6255 = vrot.slane %v6253, 4
        %v6256 = vor.u32 %v6255, %v6251
        %v6257 = vrot.slane %v6256, 4
        %v6259 = vshll.u32 %v5820, 16
        %v6261 = vrot.slane %v6259, 5
        %v6262 = vsel %vm4146, %v6257, %v6261
        %v6263 = vshrl.u32 %v5820, 16
        %v6265 = vrot.slane %v6263, 4
        %v6266 = vor.u32 %v6265, %v6261
        %v6267 = vrot.slane %v6266, 4
        %v6269 = vshll.u32 %v5821, 16
        %v6271 = vrot.slane %v6269, 5
        %v6272 = vsel %vm4146, %v6267, %v6271
        %v6273 = vshrl.u32 %v5821, 16
        %v6275 = vrot.slane %v6273, 4
        %v6276 = vor.u32 %v6275, %v6271
        %v6277 = vrot.slane %v6276, 4
        %v6279 = vshll.u32 %v5822, 16
        %v6281 = vrot.slane %v6279, 5
        %v6282 = vsel %vm4146, %v6277, %v6281
        %v6283 = vshrl.u32 %v5822, 16
        %v6285 = vrot.slane %v6283, 4
        %v6286 = vor.u32 %v6285, %v6281
        %v6287 = vrot.slane %v6286, 4
        %v6289 = vshll.u32 %v5823, 16
        %v6291 = vrot.slane %v6289, 5
        %v6292 = vsel %vm4146, %v6287, %v6291
        %v6293 = vshrl.u32 %v5823, 16
        %v6295 = vrot.slane %v6293, 4
        %v6296 = vor.u32 %v6295, %v6291
        %v6297 = vrot.slane %v6296, 4
        %v6299 = vshll.u32 %v5824, 16
        %v6301 = vrot.slane %v6299, 5
        %v6302 = vsel %vm4146, %v6297, %v6301
        %v6303 = vshrl.u32 %v5824, 16
        %v6305 = vrot.slane %v6303, 4
        %v6306 = vor.u32 %v6305, %v6301
        %v6307 = vrot.slane %v6306, 4
        %v6309 = vshll.u32 %v5825, 16
        %v6311 = vrot.slane %v6309, 5
        %v6312 = vsel %vm4146, %v6307, %v6311
        %v6313 = vshrl.u32 %v5825, 16
        %v6315 = vrot.slane %v6313, 4
        %v6316 = vor.u32 %v6315, %v6311
        %v6317 = vrot.slane %v6316, 4
        %v6319 = vshll.u32 %v5826, 16
        %v6321 = vrot.slane %v6319, 5
        %v6322 = vsel %vm4146, %v6317, %v6321
        %v6323 = vshrl.u32 %v5826, 16
        %v6325 = vrot.slane %v6323, 4
        %v6326 = vor.u32 %v6325, %v6321
        %v6327 = vrot.slane %v6326, 4
        %v6329 = vshll.u32 %v5827, 16
        %v6331 = vrot.slane %v6329, 5
        %v6332 = vsel %vm4146, %v6327, %v6331
        %v6333 = vshrl.u32 %v5827, 16
        %v6335 = vrot.slane %v6333, 4
        %v6336 = vor.u32 %v6335, %v6331
        %v6337 = vrot.slane %v6336, 4
        %v6339 = vshll.u32 %v5828, 16
        %v6341 = vrot.slane %v6339, 5
        %v6342 = vsel %vm4146, %v6337, %v6341
        %v6343 = vshrl.u32 %v5828, 16
        %v6345 = vrot.slane %v6343, 4
        %v6346 = vor.u32 %v6345, %v6341
        %v6347 = vrot.slane %v6346, 4
        %v6349 = vshll.u32 %v5829, 16
        %v6351 = vrot.slane %v6349, 5
        %v6352 = vsel %vm4146, %v6347, %v6351
        %v6353 = vshrl.u32 %v5829, 16
        %v6355 = vrot.slane %v6353, 4
        %v6356 = vor.u32 %v6355, %v6351
        %v6357 = vrot.slane %v6356, 4
        %v6359 = vshll.u32 %v5830, 16
        %v6361 = vrot.slane %v6359, 5
        %v6362 = vsel %vm4146, %v6357, %v6361
        %v6363 = vshrl.u32 %v5830, 16
        %v6365 = vrot.slane %v6363, 4
        %v6366 = vor.u32 %v6365, %v6361
        %v6367 = vrot.slane %v6366, 4
        %v6369 = vshll.u32 %v5831, 16
        %v6371 = vrot.slane %v6369, 5
        %v6372 = vsel %vm4146, %v6367, %v6371
        %v6373 = vshrl.u32 %v5831, 16
        %v6375 = vrot.slane %v6373, 4
        %v6376 = vor.u32 %v6375, %v6371
        %v6377 = vrot.slane %v6376, 4
        %v6379 = vshll.u32 %v5832, 16
        %v6381 = vrot.slane %v6379, 5
        %v6382 = vsel %vm4146, %v6377, %v6381
        %v6383 = vshrl.u32 %v5832, 16
        %v6385 = vrot.slane %v6383, 4
        %v6386 = vor.u32 %v6385, %v6381
        %v6387 = vrot.slane %v6386, 4
        %v6389 = vshll.u32 %v5833, 16
        %v6391 = vrot.slane %v6389, 5
        %v6392 = vsel %vm4146, %v6387, %v6391
        %v6393 = vshrl.u32 %v5833, 16
        %v6395 = vrot.slane %v6393, 4
        %v6396 = vor.u32 %v6395, %v6391
        %v6397 = vrot.slane %v6396, 4
        %v6399 = vshll.u32 %v5834, 16
        %v6401 = vrot.slane %v6399, 5
        %v6402 = vsel %vm4146, %v6397, %v6401
        %v6403 = vshrl.u32 %v5834, 16
        %v6405 = vrot.slane %v6403, 4
        %v6406 = vor.u32 %v6405, %v6401
        %v6407 = vrot.slane %v6406, 4
        %v6409 = vshll.u32 %v5835, 16
        %v6411 = vrot.slane %v6409, 5
        %v6412 = vsel %vm4146, %v6407, %v6411
        %v6413 = vshrl.u32 %v5835, 16
        %v6415 = vrot.slane %v6413, 4
        %v6416 = vor.u32 %v6415, %v6411
        %v6417 = vrot.slane %v6416, 4
        %v6419 = vshll.u32 %v5836, 16
        %v6421 = vrot.slane %v6419, 5
        %v6422 = vsel %vm4146, %v6417, %v6421
        %v6423 = vshrl.u32 %v5836, 16
        %v6425 = vrot.slane %v6423, 4
        %v6426 = vor.u32 %v6425, %v6421
        %v6427 = vrot.slane %v6426, 4
        %v6429 = vshll.u32 %v5837, 16
        %v6431 = vrot.slane %v6429, 5
        %v6432 = vsel %vm4146, %v6427, %v6431
        %v6433 = vshrl.u32 %v5837, 16
        %v6435 = vrot.slane %v6433, 4
        %v6436 = vor.u32 %v6435, %v6431
        %v6437 = vrot.slane %v6436, 4
        %v6439 = vshll.u32 %v5838, 16
        %v6441 = vrot.slane %v6439, 5
        %v6442 = vsel %vm4146, %v6437, %v6441
        %6503 = vst.msk [vmem:[#allocation3 + $0x8] sm:$0xf] %vm281, %v5852
        %6504 = vst.msk [vmem:[#allocation3 + $0x1c] sm:$0xf] %vm281, %v5862
        %6505 = vst.msk [vmem:[#allocation3 + $0x30] sm:$0xf] %vm281, %v5872
        %6506 = vst.msk [vmem:[#allocation3 + $0x44] sm:$0xf] %vm281, %v5882
        %6507 = vst.msk [vmem:[#allocation3 + $0x58] sm:$0xf] %vm281, %v5892
        %6508 = vst.msk [vmem:[#allocation3 + $0x6c] sm:$0xf] %vm281, %v5902
        %6509 = vst.msk [vmem:[#allocation3 + $0x80] sm:$0xf] %vm281, %v5912
        %6510 = vst.msk [vmem:[#allocation3 + $0x94] sm:$0xf] %vm281, %v5922
        %6511 = vst.msk [vmem:[#allocation3 + $0xa8] sm:$0xf] %vm281, %v5932
        %6512 = vst.msk [vmem:[#allocation3 + $0xbc] sm:$0xf] %vm281, %v5942
        %6513 = vst.msk [vmem:[#allocation3 + $0xd0] sm:$0xf] %vm281, %v5952
        %6514 = vst.msk [vmem:[#allocation3 + $0xe4] sm:$0xf] %vm281, %v5962
        %6515 = vst.msk [vmem:[#allocation3 + $0xf8] sm:$0xf] %vm281, %v5972
        %6516 = vst.msk [vmem:[#allocation3 + $0x10c] sm:$0xf] %vm281, %v5982
        %6517 = vst.msk [vmem:[#allocation3 + $0x120] sm:$0xf] %vm281, %v5992
        %6518 = vst.msk [vmem:[#allocation3 + $0x134] sm:$0xf] %vm281, %v6002
        %6519 = vst.msk [vmem:[#allocation3 + $0x148] sm:$0xf] %vm281, %v6012
        %6520 = vst.msk [vmem:[#allocation3 + $0x15c] sm:$0xf] %vm281, %v6022
        %6521 = vst.msk [vmem:[#allocation3 + $0x170] sm:$0xf] %vm281, %v6032
        %6522 = vst.msk [vmem:[#allocation3 + $0x184] sm:$0xf] %vm281, %v6042
        %6523 = vst.msk [vmem:[#allocation3 + $0x198] sm:$0xf] %vm281, %v6052
        %6524 = vst.msk [vmem:[#allocation3 + $0x1ac] sm:$0xf] %vm281, %v6062
        %6525 = vst.msk [vmem:[#allocation3 + $0x1c0] sm:$0xf] %vm281, %v6072
        %6526 = vst.msk [vmem:[#allocation3 + $0x1d4] sm:$0xf] %vm281, %v6082
        %6527 = vst.msk [vmem:[#allocation3 + $0x1e8] sm:$0xf] %vm281, %v6092
        %6528 = vst.msk [vmem:[#allocation3 + $0x1fc] sm:$0xf] %vm281, %v6102
        %6529 = vst.msk [vmem:[#allocation3 + $0x210] sm:$0xf] %vm281, %v6112
        %6530 = vst.msk [vmem:[#allocation3 + $0x224] sm:$0xf] %vm281, %v6122
        %6531 = vst.msk [vmem:[#allocation3 + $0x238] sm:$0xf] %vm281, %v6132
        %6532 = vst.msk [vmem:[#allocation3 + $0x24c] sm:$0xf] %vm281, %v6142
        %6533 = vst.msk [vmem:[#allocation3 + $0x260] sm:$0xf] %vm281, %v6152
        %6534 = vst.msk [vmem:[#allocation3 + $0x274] sm:$0xf] %vm281, %v6162
        %6535 = vst.msk [vmem:[#allocation3 + $0x288] sm:$0xf] %vm281, %v6172
        %6536 = vst.msk [vmem:[#allocation3 + $0x29c] sm:$0xf] %vm281, %v6182
        %6537 = vst.msk [vmem:[#allocation3 + $0x2b0] sm:$0xf] %vm281, %v6192
        %6538 = vst.msk [vmem:[#allocation3 + $0x2c4] sm:$0xf] %vm281, %v6202
        %6539 = vst.msk [vmem:[#allocation3 + $0x2d8] sm:$0xf] %vm281, %v6212
        %6540 = vst.msk [vmem:[#allocation3 + $0x2ec] sm:$0xf] %vm281, %v6222
        %6541 = vst.msk [vmem:[#allocation3 + $0x300] sm:$0xf] %vm281, %v6232
        %6542 = vst.msk [vmem:[#allocation3 + $0x314] sm:$0xf] %vm281, %v6242
        %6543 = vst.msk [vmem:[#allocation3 + $0x328] sm:$0xf] %vm281, %v6252
        %6544 = vst.msk [vmem:[#allocation3 + $0x33c] sm:$0xf] %vm281, %v6262
        %6545 = vst.msk [vmem:[#allocation3 + $0x350] sm:$0xf] %vm281, %v6272
        %6546 = vst.msk [vmem:[#allocation3 + $0x364] sm:$0xf] %vm281, %v6282
        %6547 = vst.msk [vmem:[#allocation3 + $0x378] sm:$0xf] %vm281, %v6292
        %6548 = vst.msk [vmem:[#allocation3 + $0x38c] sm:$0xf] %vm281, %v6302
        %6549 = vst.msk [vmem:[#allocation3 + $0x3a0] sm:$0xf] %vm281, %v6312
        %6550 = vst.msk [vmem:[#allocation3 + $0x3b4] sm:$0xf] %vm281, %v6322
        %6551 = vst.msk [vmem:[#allocation3 + $0x3c8] sm:$0xf] %vm281, %v6332
        %6552 = vst.msk [vmem:[#allocation3 + $0x3dc] sm:$0xf] %vm281, %v6342
        %6553 = vst.msk [vmem:[#allocation3 + $0x3f0] sm:$0xf] %vm281, %v6352
        %6554 = vst.msk [vmem:[#allocation3 + $0x404] sm:$0xf] %vm281, %v6362
        %6555 = vst.msk [vmem:[#allocation3 + $0x418] sm:$0xf] %vm281, %v6372
        %6556 = vst.msk [vmem:[#allocation3 + $0x42c] sm:$0xf] %vm281, %v6382
        %6557 = vst.msk [vmem:[#allocation3 + $0x440] sm:$0xf] %vm281, %v6392
        %6558 = vst.msk [vmem:[#allocation3 + $0x454] sm:$0xf] %vm281, %v6402
        %6559 = vst.msk [vmem:[#allocation3 + $0x468] sm:$0xf] %vm281, %v6412
        %6560 = vst.msk [vmem:[#allocation3 + $0x47c] sm:$0xf] %vm281, %v6422
        %6561 = vst.msk [vmem:[#allocation3 + $0x490] sm:$0xf] %vm281, %v6432
        %6562 = vst.msk [vmem:[#allocation3 + $0x4a4] sm:$0xf] %vm281, %v6442
        %v6563 = vld [vmem:[#allocation2 + $0xc] sm:$0xe]
        %v6564 = vld [vmem:[#allocation2 + $0x10] sm:$0xf]
        %v6565 = vld [vmem:[#allocation2 + $0x14] sm:$0xf]
        %v6566 = vld [vmem:[#allocation2 + $0x18] sm:$0xf]
        %v6567 = vld [vmem:[#allocation2 + $0x1c] sm:$0xf]
        %v6568 = vld [vmem:[#allocation2 + $0x20] sm:$0xf]
        %v6569 = vld [vmem:[#allocation2 + $0x24] sm:$0xf]
        %v6570 = vld [vmem:[#allocation2 + $0x28] sm:$0xf]
        %v6571 = vld [vmem:[#allocation2 + $0x2c] sm:$0xf]
        %v6572 = vld [vmem:[#allocation2 + $0x30] sm:$0xf]
        %v6573 = vld [vmem:[#allocation2 + $0x34] sm:$0xf]
        %v6574 = vld [vmem:[#allocation2 + $0x38] sm:$0xf]
        %v6575 = vld [vmem:[#allocation2 + $0x3c] sm:$0xf]
        %v6576 = vld [vmem:[#allocation2 + $0x40] sm:$0xf]
        %v6577 = vld [vmem:[#allocation2 + $0x44] sm:$0xf]
        %v6578 = vld [vmem:[#allocation2 + $0x48] sm:$0xf]
        %v6579 = vld [vmem:[#allocation2 + $0x4c] sm:$0xf]
        %v6580 = vld [vmem:[#allocation2 + $0x50] sm:$0xf]
        %v6581 = vld [vmem:[#allocation2 + $0x54] sm:$0xf]
        %v6582 = vld [vmem:[#allocation2 + $0x58] sm:$0xf]
        %v6583 = vld [vmem:[#allocation2 + $0x5c] sm:$0xf]
        %v6584 = vld [vmem:[#allocation2 + $0x60] sm:$0xf]
        %v6585 = vld [vmem:[#allocation2 + $0x64] sm:$0xf]
        %v6586 = vld [vmem:[#allocation2 + $0x68] sm:$0xf]
        %v6587 = vld [vmem:[#allocation2 + $0x6c] sm:$0xf]
        %v6588 = vld [vmem:[#allocation2 + $0x70] sm:$0xf]
        %v6589 = vld [vmem:[#allocation2 + $0x74] sm:$0xf]
        %v6590 = vld [vmem:[#allocation2 + $0x78] sm:$0xf]
        %v6591 = vld [vmem:[#allocation2 + $0x7c] sm:$0xf]
        %v6592 = vld [vmem:[#allocation2 + $0x80] sm:$0xf]
        %v6593 = vld [vmem:[#allocation2 + $0x84] sm:$0xf]
        %v6594 = vld [vmem:[#allocation2 + $0x88] sm:$0xf]
        %v6595 = vld [vmem:[#allocation2 + $0x8c] sm:$0xf]
        %v6596 = vld [vmem:[#allocation2 + $0x90] sm:$0xf]
        %v6597 = vld [vmem:[#allocation2 + $0x94] sm:$0xf]
        %v6598 = vld [vmem:[#allocation2 + $0x98] sm:$0xf]
        %v6599 = vld [vmem:[#allocation2 + $0x9c] sm:$0xf]
        %v6600 = vld [vmem:[#allocation2 + $0xa0] sm:$0xf]
        %v6601 = vld [vmem:[#allocation2 + $0xa4] sm:$0xf]
        %v6602 = vld [vmem:[#allocation2 + $0xa8] sm:$0xf]
        %v6603 = vld [vmem:[#allocation2 + $0xac] sm:$0xf]
        %v6604 = vld [vmem:[#allocation2 + $0xb0] sm:$0xf]
        %v6605 = vld [vmem:[#allocation2 + $0xb4] sm:$0xf]
        %v6606 = vld [vmem:[#allocation2 + $0xb8] sm:$0xf]
        %v6607 = vld [vmem:[#allocation2 + $0xbc] sm:$0xf]
        %v6608 = vld [vmem:[#allocation2 + $0xc0] sm:$0xf]
        %v6609 = vld [vmem:[#allocation2 + $0xc4] sm:$0xf]
        %v6610 = vld [vmem:[#allocation2 + $0xc8] sm:$0xf]
        %v6611 = vld [vmem:[#allocation2 + $0xcc] sm:$0xf]
        %v6612 = vld [vmem:[#allocation2 + $0xd0] sm:$0xf]
        %v6613 = vld [vmem:[#allocation2 + $0xd4] sm:$0xf]
        %v6614 = vld [vmem:[#allocation2 + $0xd8] sm:$0xf]
        %v6615 = vld [vmem:[#allocation2 + $0xdc] sm:$0xf]
        %v6616 = vld [vmem:[#allocation2 + $0xe0] sm:$0xf]
        %v6617 = vld [vmem:[#allocation2 + $0xe4] sm:$0xf]
        %v6618 = vld [vmem:[#allocation2 + $0xe8] sm:$0xf]
        %v6619 = vld [vmem:[#allocation2 + $0xec] sm:$0xf]
        %v6620 = vld [vmem:[#allocation2 + $0xf0] sm:$0xf]
        %v6621 = vld [vmem:[#allocation2 + $0xf4] sm:$0xf]
        %v6622 = vld [vmem:[#allocation2 + $0xf8] sm:$0xf]
        %v6623 = vld [vmem:[#allocation2 + $0xfc] sm:$0x1]
        %v6685 = vrot.slane %v6563, 5
        %v6686 = vrot.slane %v6685, 4
        %v6687 = vrot.slane %v6564, 5
        %v6688 = vsel %vm5116, %v6686, %v6687
        %v6689 = vrot.slane %v6687, 4
        %v6690 = vrot.slane %v6565, 5
        %v6691 = vsel %vm5116, %v6689, %v6690
        %v6692 = vrot.slane %v6690, 4
        %v6693 = vrot.slane %v6566, 5
        %v6694 = vsel %vm5116, %v6692, %v6693
        %v6695 = vrot.slane %v6693, 4
        %v6696 = vrot.slane %v6567, 5
        %v6697 = vsel %vm5116, %v6695, %v6696
        %v6698 = vrot.slane %v6696, 4
        %v6699 = vrot.slane %v6568, 5
        %v6700 = vsel %vm5116, %v6698, %v6699
        %v6701 = vrot.slane %v6699, 4
        %v6702 = vrot.slane %v6569, 5
        %v6703 = vsel %vm5116, %v6701, %v6702
        %v6704 = vrot.slane %v6702, 4
        %v6705 = vrot.slane %v6570, 5
        %v6706 = vsel %vm5116, %v6704, %v6705
        %v6707 = vrot.slane %v6705, 4
        %v6708 = vrot.slane %v6571, 5
        %v6709 = vsel %vm5116, %v6707, %v6708
        %v6710 = vrot.slane %v6708, 4
        %v6711 = vrot.slane %v6572, 5
        %v6712 = vsel %vm5116, %v6710, %v6711
        %v6713 = vrot.slane %v6711, 4
        %v6714 = vrot.slane %v6573, 5
        %v6715 = vsel %vm5116, %v6713, %v6714
        %v6716 = vrot.slane %v6714, 4
        %v6717 = vrot.slane %v6574, 5
        %v6718 = vsel %vm5116, %v6716, %v6717
        %v6719 = vrot.slane %v6717, 4
        %v6720 = vrot.slane %v6575, 5
        %v6721 = vsel %vm5116, %v6719, %v6720
        %v6722 = vrot.slane %v6720, 4
        %v6723 = vrot.slane %v6576, 5
        %v6724 = vsel %vm5116, %v6722, %v6723
        %v6725 = vrot.slane %v6723, 4
        %v6726 = vrot.slane %v6577, 5
        %v6727 = vsel %vm5116, %v6725, %v6726
        %v6728 = vrot.slane %v6726, 4
        %v6729 = vrot.slane %v6578, 5
        %v6730 = vsel %vm5116, %v6728, %v6729
        %v6731 = vrot.slane %v6729, 4
        %v6732 = vrot.slane %v6579, 5
        %v6733 = vsel %vm5116, %v6731, %v6732
        %v6734 = vrot.slane %v6732, 4
        %v6735 = vrot.slane %v6580, 5
        %v6736 = vsel %vm5116, %v6734, %v6735
        %v6737 = vrot.slane %v6735, 4
        %v6738 = vrot.slane %v6581, 5
        %v6739 = vsel %vm5116, %v6737, %v6738
        %v6740 = vrot.slane %v6738, 4
        %v6741 = vrot.slane %v6582, 5
        %v6742 = vsel %vm5116, %v6740, %v6741
        %v6743 = vrot.slane %v6741, 4
        %v6744 = vrot.slane %v6583, 5
        %v6745 = vsel %vm5116, %v6743, %v6744
        %v6746 = vrot.slane %v6744, 4
        %v6747 = vrot.slane %v6584, 5
        %v6748 = vsel %vm5116, %v6746, %v6747
        %v6749 = vrot.slane %v6747, 4
        %v6750 = vrot.slane %v6585, 5
        %v6751 = vsel %vm5116, %v6749, %v6750
        %v6752 = vrot.slane %v6750, 4
        %v6753 = vrot.slane %v6586, 5
        %v6754 = vsel %vm5116, %v6752, %v6753
        %v6755 = vrot.slane %v6753, 4
        %v6756 = vrot.slane %v6587, 5
        %v6757 = vsel %vm5116, %v6755, %v6756
        %v6758 = vrot.slane %v6756, 4
        %v6759 = vrot.slane %v6588, 5
        %v6760 = vsel %vm5116, %v6758, %v6759
        %v6761 = vrot.slane %v6759, 4
        %v6762 = vrot.slane %v6589, 5
        %v6763 = vsel %vm5116, %v6761, %v6762
        %v6764 = vrot.slane %v6762, 4
        %v6765 = vrot.slane %v6590, 5
        %v6766 = vsel %vm5116, %v6764, %v6765
        %v6767 = vrot.slane %v6765, 4
        %v6768 = vrot.slane %v6591, 5
        %v6769 = vsel %vm5116, %v6767, %v6768
        %v6770 = vrot.slane %v6768, 4
        %v6771 = vrot.slane %v6592, 5
        %v6772 = vsel %vm5116, %v6770, %v6771
        %v6773 = vrot.slane %v6771, 4
        %v6774 = vrot.slane %v6593, 5
        %v6775 = vsel %vm5116, %v6773, %v6774
        %v6776 = vrot.slane %v6774, 4
        %v6777 = vrot.slane %v6594, 5
        %v6778 = vsel %vm5116, %v6776, %v6777
        %v6779 = vrot.slane %v6777, 4
        %v6780 = vrot.slane %v6595, 5
        %v6781 = vsel %vm5116, %v6779, %v6780
        %v6782 = vrot.slane %v6780, 4
        %v6783 = vrot.slane %v6596, 5
        %v6784 = vsel %vm5116, %v6782, %v6783
        %v6785 = vrot.slane %v6783, 4
        %v6786 = vrot.slane %v6597, 5
        %v6787 = vsel %vm5116, %v6785, %v6786
        %v6788 = vrot.slane %v6786, 4
        %v6789 = vrot.slane %v6598, 5
        %v6790 = vsel %vm5116, %v6788, %v6789
        %v6791 = vrot.slane %v6789, 4
        %v6792 = vrot.slane %v6599, 5
        %v6793 = vsel %vm5116, %v6791, %v6792
        %v6794 = vrot.slane %v6792, 4
        %v6795 = vrot.slane %v6600, 5
        %v6796 = vsel %vm5116, %v6794, %v6795
        %v6797 = vrot.slane %v6795, 4
        %v6798 = vrot.slane %v6601, 5
        %v6799 = vsel %vm5116, %v6797, %v6798
        %v6800 = vrot.slane %v6798, 4
        %v6801 = vrot.slane %v6602, 5
        %v6802 = vsel %vm5116, %v6800, %v6801
        %v6803 = vrot.slane %v6801, 4
        %v6804 = vrot.slane %v6603, 5
        %v6805 = vsel %vm5116, %v6803, %v6804
        %v6806 = vrot.slane %v6804, 4
        %v6807 = vrot.slane %v6604, 5
        %v6808 = vsel %vm5116, %v6806, %v6807
        %v6809 = vrot.slane %v6807, 4
        %v6810 = vrot.slane %v6605, 5
        %v6811 = vsel %vm5116, %v6809, %v6810
        %v6812 = vrot.slane %v6810, 4
        %v6813 = vrot.slane %v6606, 5
        %v6814 = vsel %vm5116, %v6812, %v6813
        %v6815 = vrot.slane %v6813, 4
        %v6816 = vrot.slane %v6607, 5
        %v6817 = vsel %vm5116, %v6815, %v6816
        %v6818 = vrot.slane %v6816, 4
        %v6819 = vrot.slane %v6608, 5
        %v6820 = vsel %vm5116, %v6818, %v6819
        %v6821 = vrot.slane %v6819, 4
        %v6822 = vrot.slane %v6609, 5
        %v6823 = vsel %vm5116, %v6821, %v6822
        %v6824 = vrot.slane %v6822, 4
        %v6825 = vrot.slane %v6610, 5
        %v6826 = vsel %vm5116, %v6824, %v6825
        %v6827 = vrot.slane %v6825, 4
        %v6828 = vrot.slane %v6611, 5
        %v6829 = vsel %vm5116, %v6827, %v6828
        %v6830 = vrot.slane %v6828, 4
        %v6831 = vrot.slane %v6612, 5
        %v6832 = vsel %vm5116, %v6830, %v6831
        %v6833 = vrot.slane %v6831, 4
        %v6834 = vrot.slane %v6613, 5
        %v6835 = vsel %vm5116, %v6833, %v6834
        %v6836 = vrot.slane %v6834, 4
        %v6837 = vrot.slane %v6614, 5
        %v6838 = vsel %vm5116, %v6836, %v6837
        %v6839 = vrot.slane %v6837, 4
        %v6840 = vrot.slane %v6615, 5
        %v6841 = vsel %vm5116, %v6839, %v6840
        %v6842 = vrot.slane %v6840, 4
        %v6843 = vrot.slane %v6616, 5
        %v6844 = vsel %vm5116, %v6842, %v6843
        %v6845 = vrot.slane %v6843, 4
        %v6846 = vrot.slane %v6617, 5
        %v6847 = vsel %vm5116, %v6845, %v6846
        %v6848 = vrot.slane %v6846, 4
        %v6849 = vrot.slane %v6618, 5
        %v6850 = vsel %vm5116, %v6848, %v6849
        %v6851 = vrot.slane %v6849, 4
        %v6852 = vrot.slane %v6619, 5
        %v6853 = vsel %vm5116, %v6851, %v6852
        %v6854 = vrot.slane %v6852, 4
        %v6855 = vrot.slane %v6620, 5
        %v6856 = vsel %vm5116, %v6854, %v6855
        %v6857 = vrot.slane %v6855, 4
        %v6858 = vrot.slane %v6621, 5
        %v6859 = vsel %vm5116, %v6857, %v6858
        %v6860 = vrot.slane %v6858, 4
        %v6861 = vrot.slane %v6622, 5
        %v6862 = vsel %vm5116, %v6860, %v6861
        %v6863 = vrot.slane %v6861, 4
        %v6864 = vrot.slane %v6623, 5
        %v6865 = vsel %vm5116, %v6863, %v6864
        %6866 = vrot.lane.b32.xlu0 %v6688, 64
        %v6867 = vpop.permute.xlu0 %6866
        %6868 = vrot.lane.b32.xlu0 %v6691, 64
        %v6869 = vpop.permute.xlu0 %6868
        %6870 = vrot.lane.b32.xlu0 %v6694, 64
        %v6871 = vpop.permute.xlu0 %6870
        %6872 = vrot.lane.b32.xlu0 %v6697, 64
        %v6873 = vpop.permute.xlu0 %6872
        %6874 = vrot.lane.b32.xlu0 %v6700, 64
        %v6875 = vpop.permute.xlu0 %6874
        %6876 = vrot.lane.b32.xlu0 %v6703, 64
        %v6877 = vpop.permute.xlu0 %6876
        %6878 = vrot.lane.b32.xlu0 %v6706, 64
        %v6879 = vpop.permute.xlu0 %6878
        %6880 = vrot.lane.b32.xlu0 %v6709, 64
        %v6881 = vpop.permute.xlu0 %6880
        %6882 = vrot.lane.b32.xlu0 %v6712, 64
        %v6883 = vpop.permute.xlu0 %6882
        %6884 = vrot.lane.b32.xlu0 %v6715, 64
        %v6885 = vpop.permute.xlu0 %6884
        %6886 = vrot.lane.b32.xlu0 %v6718, 64
        %v6887 = vpop.permute.xlu0 %6886
        %6888 = vrot.lane.b32.xlu0 %v6721, 64
        %v6889 = vpop.permute.xlu0 %6888
        %6890 = vrot.lane.b32.xlu0 %v6724, 64
        %v6891 = vpop.permute.xlu0 %6890
        %6892 = vrot.lane.b32.xlu0 %v6727, 64
        %v6893 = vpop.permute.xlu0 %6892
        %6894 = vrot.lane.b32.xlu0 %v6730, 64
        %v6895 = vpop.permute.xlu0 %6894
        %6896 = vrot.lane.b32.xlu0 %v6733, 64
        %v6897 = vpop.permute.xlu0 %6896
        %6898 = vrot.lane.b32.xlu0 %v6736, 64
        %v6899 = vpop.permute.xlu0 %6898
        %6900 = vrot.lane.b32.xlu0 %v6739, 64
        %v6901 = vpop.permute.xlu0 %6900
        %6902 = vrot.lane.b32.xlu0 %v6742, 64
        %v6903 = vpop.permute.xlu0 %6902
        %6904 = vrot.lane.b32.xlu0 %v6745, 64
        %v6905 = vpop.permute.xlu0 %6904
        %6906 = vrot.lane.b32.xlu0 %v6748, 64
        %v6907 = vpop.permute.xlu0 %6906
        %6908 = vrot.lane.b32.xlu0 %v6751, 64
        %v6909 = vpop.permute.xlu0 %6908
        %6910 = vrot.lane.b32.xlu0 %v6754, 64
        %v6911 = vpop.permute.xlu0 %6910
        %6912 = vrot.lane.b32.xlu0 %v6757, 64
        %v6913 = vpop.permute.xlu0 %6912
        %6914 = vrot.lane.b32.xlu0 %v6760, 64
        %v6915 = vpop.permute.xlu0 %6914
        %6916 = vrot.lane.b32.xlu0 %v6763, 64
        %v6917 = vpop.permute.xlu0 %6916
        %6918 = vrot.lane.b32.xlu0 %v6766, 64
        %v6919 = vpop.permute.xlu0 %6918
        %6920 = vrot.lane.b32.xlu0 %v6769, 64
        %v6921 = vpop.permute.xlu0 %6920
        %6922 = vrot.lane.b32.xlu0 %v6772, 64
        %v6923 = vpop.permute.xlu0 %6922
        %6924 = vrot.lane.b32.xlu0 %v6775, 64
        %v6925 = vpop.permute.xlu0 %6924
        %6926 = vrot.lane.b32.xlu0 %v6778, 64
        %v6927 = vpop.permute.xlu0 %6926
        %6928 = vrot.lane.b32.xlu0 %v6781, 64
        %v6929 = vpop.permute.xlu0 %6928
        %6930 = vrot.lane.b32.xlu0 %v6784, 64
        %v6931 = vpop.permute.xlu0 %6930
        %6932 = vrot.lane.b32.xlu0 %v6787, 64
        %v6933 = vpop.permute.xlu0 %6932
        %6934 = vrot.lane.b32.xlu0 %v6790, 64
        %v6935 = vpop.permute.xlu0 %6934
        %6936 = vrot.lane.b32.xlu0 %v6793, 64
        %v6937 = vpop.permute.xlu0 %6936
        %6938 = vrot.lane.b32.xlu0 %v6796, 64
        %v6939 = vpop.permute.xlu0 %6938
        %6940 = vrot.lane.b32.xlu0 %v6799, 64
        %v6941 = vpop.permute.xlu0 %6940
        %6942 = vrot.lane.b32.xlu0 %v6802, 64
        %v6943 = vpop.permute.xlu0 %6942
        %6944 = vrot.lane.b32.xlu0 %v6805, 64
        %v6945 = vpop.permute.xlu0 %6944
        %6946 = vrot.lane.b32.xlu0 %v6808, 64
        %v6947 = vpop.permute.xlu0 %6946
        %6948 = vrot.lane.b32.xlu0 %v6811, 64
        %v6949 = vpop.permute.xlu0 %6948
        %6950 = vrot.lane.b32.xlu0 %v6814, 64
        %v6951 = vpop.permute.xlu0 %6950
        %6952 = vrot.lane.b32.xlu0 %v6817, 64
        %v6953 = vpop.permute.xlu0 %6952
        %6954 = vrot.lane.b32.xlu0 %v6820, 64
        %v6955 = vpop.permute.xlu0 %6954
        %6956 = vrot.lane.b32.xlu0 %v6823, 64
        %v6957 = vpop.permute.xlu0 %6956
        %6958 = vrot.lane.b32.xlu0 %v6826, 64
        %v6959 = vpop.permute.xlu0 %6958
        %6960 = vrot.lane.b32.xlu0 %v6829, 64
        %v6961 = vpop.permute.xlu0 %6960
        %6962 = vrot.lane.b32.xlu0 %v6832, 64
        %v6963 = vpop.permute.xlu0 %6962
        %6964 = vrot.lane.b32.xlu0 %v6835, 64
        %v6965 = vpop.permute.xlu0 %6964
        %6966 = vrot.lane.b32.xlu0 %v6838, 64
        %v6967 = vpop.permute.xlu0 %6966
        %6968 = vrot.lane.b32.xlu0 %v6841, 64
        %v6969 = vpop.permute.xlu0 %6968
        %6970 = vrot.lane.b32.xlu0 %v6844, 64
        %v6971 = vpop.permute.xlu0 %6970
        %6972 = vrot.lane.b32.xlu0 %v6847, 64
        %v6973 = vpop.permute.xlu0 %6972
        %6974 = vrot.lane.b32.xlu0 %v6850, 64
        %v6975 = vpop.permute.xlu0 %6974
        %6976 = vrot.lane.b32.xlu0 %v6853, 64
        %v6977 = vpop.permute.xlu0 %6976
        %6978 = vrot.lane.b32.xlu0 %v6856, 64
        %v6979 = vpop.permute.xlu0 %6978
        %6980 = vrot.lane.b32.xlu0 %v6859, 64
        %v6981 = vpop.permute.xlu0 %6980
        %6982 = vrot.lane.b32.xlu0 %v6862, 64
        %v6983 = vpop.permute.xlu0 %6982
        %6984 = vrot.lane.b32.xlu0 %v6865, 64
        %v6985 = vpop.permute.xlu0 %6984
        %7046 = vst.msk [vmem:[#allocation3 + $0x8] sm:$0xf] %vm4931, %v6867
        %7047 = vst.msk [vmem:[#allocation3 + $0x1c] sm:$0xf] %vm4931, %v6869
        %7048 = vst.msk [vmem:[#allocation3 + $0x30] sm:$0xf] %vm4931, %v6871
        %7049 = vst.msk [vmem:[#allocation3 + $0x44] sm:$0xf] %vm4931, %v6873
        %7050 = vst.msk [vmem:[#allocation3 + $0x58] sm:$0xf] %vm4931, %v6875
        %7051 = vst.msk [vmem:[#allocation3 + $0x6c] sm:$0xf] %vm4931, %v6877
        %7052 = vst.msk [vmem:[#allocation3 + $0x80] sm:$0xf] %vm4931, %v6879
        %7053 = vst.msk [vmem:[#allocation3 + $0x94] sm:$0xf] %vm4931, %v6881
        %7054 = vst.msk [vmem:[#allocation3 + $0xa8] sm:$0xf] %vm4931, %v6883
        %7055 = vst.msk [vmem:[#allocation3 + $0xbc] sm:$0xf] %vm4931, %v6885
        %7056 = vst.msk [vmem:[#allocation3 + $0xd0] sm:$0xf] %vm4931, %v6887
        %7057 = vst.msk [vmem:[#allocation3 + $0xe4] sm:$0xf] %vm4931, %v6889
        %7058 = vst.msk [vmem:[#allocation3 + $0xf8] sm:$0xf] %vm4931, %v6891
        %7059 = vst.msk [vmem:[#allocation3 + $0x10c] sm:$0xf] %vm4931, %v6893
        %7060 = vst.msk [vmem:[#allocation3 + $0x120] sm:$0xf] %vm4931, %v6895
        %7061 = vst.msk [vmem:[#allocation3 + $0x134] sm:$0xf] %vm4931, %v6897
        %7062 = vst.msk [vmem:[#allocation3 + $0x148] sm:$0xf] %vm4931, %v6899
        %7063 = vst.msk [vmem:[#allocation3 + $0x15c] sm:$0xf] %vm4931, %v6901
        %7064 = vst.msk [vmem:[#allocation3 + $0x170] sm:$0xf] %vm4931, %v6903
        %7065 = vst.msk [vmem:[#allocation3 + $0x184] sm:$0xf] %vm4931, %v6905
        %7066 = vst.msk [vmem:[#allocation3 + $0x198] sm:$0xf] %vm4931, %v6907
        %7067 = vst.msk [vmem:[#allocation3 + $0x1ac] sm:$0xf] %vm4931, %v6909
        %7068 = vst.msk [vmem:[#allocation3 + $0x1c0] sm:$0xf] %vm4931, %v6911
        %7069 = vst.msk [vmem:[#allocation3 + $0x1d4] sm:$0xf] %vm4931, %v6913
        %7070 = vst.msk [vmem:[#allocation3 + $0x1e8] sm:$0xf] %vm4931, %v6915
        %7071 = vst.msk [vmem:[#allocation3 + $0x1fc] sm:$0xf] %vm4931, %v6917
        %7072 = vst.msk [vmem:[#allocation3 + $0x210] sm:$0xf] %vm4931, %v6919
        %7073 = vst.msk [vmem:[#allocation3 + $0x224] sm:$0xf] %vm4931, %v6921
        %7074 = vst.msk [vmem:[#allocation3 + $0x238] sm:$0xf] %vm4931, %v6923
        %7075 = vst.msk [vmem:[#allocation3 + $0x24c] sm:$0xf] %vm4931, %v6925
        %7076 = vst.msk [vmem:[#allocation3 + $0x260] sm:$0xf] %vm4931, %v6927
        %7077 = vst.msk [vmem:[#allocation3 + $0x274] sm:$0xf] %vm4931, %v6929
        %7078 = vst.msk [vmem:[#allocation3 + $0x288] sm:$0xf] %vm4931, %v6931
        %7079 = vst.msk [vmem:[#allocation3 + $0x29c] sm:$0xf] %vm4931, %v6933
        %7080 = vst.msk [vmem:[#allocation3 + $0x2b0] sm:$0xf] %vm4931, %v6935
        %7081 = vst.msk [vmem:[#allocation3 + $0x2c4] sm:$0xf] %vm4931, %v6937
        %7082 = vst.msk [vmem:[#allocation3 + $0x2d8] sm:$0xf] %vm4931, %v6939
        %7083 = vst.msk [vmem:[#allocation3 + $0x2ec] sm:$0xf] %vm4931, %v6941
        %7084 = vst.msk [vmem:[#allocation3 + $0x300] sm:$0xf] %vm4931, %v6943
        %7085 = vst.msk [vmem:[#allocation3 + $0x314] sm:$0xf] %vm4931, %v6945
        %7086 = vst.msk [vmem:[#allocation3 + $0x328] sm:$0xf] %vm4931, %v6947
        %7087 = vst.msk [vmem:[#allocation3 + $0x33c] sm:$0xf] %vm4931, %v6949
        %7088 = vst.msk [vmem:[#allocation3 + $0x350] sm:$0xf] %vm4931, %v6951
        %7089 = vst.msk [vmem:[#allocation3 + $0x364] sm:$0xf] %vm4931, %v6953
        %7090 = vst.msk [vmem:[#allocation3 + $0x378] sm:$0xf] %vm4931, %v6955
        %7091 = vst.msk [vmem:[#allocation3 + $0x38c] sm:$0xf] %vm4931, %v6957
        %7092 = vst.msk [vmem:[#allocation3 + $0x3a0] sm:$0xf] %vm4931, %v6959
        %7093 = vst.msk [vmem:[#allocation3 + $0x3b4] sm:$0xf] %vm4931, %v6961
        %7094 = vst.msk [vmem:[#allocation3 + $0x3c8] sm:$0xf] %vm4931, %v6963
        %7095 = vst.msk [vmem:[#allocation3 + $0x3dc] sm:$0xf] %vm4931, %v6965
        %7096 = vst.msk [vmem:[#allocation3 + $0x3f0] sm:$0xf] %vm4931, %v6967
        %7097 = vst.msk [vmem:[#allocation3 + $0x404] sm:$0xf] %vm4931, %v6969
        %7098 = vst.msk [vmem:[#allocation3 + $0x418] sm:$0xf] %vm4931, %v6971
        %7099 = vst.msk [vmem:[#allocation3 + $0x42c] sm:$0xf] %vm4931, %v6973
        %7100 = vst.msk [vmem:[#allocation3 + $0x440] sm:$0xf] %vm4931, %v6975
        %7101 = vst.msk [vmem:[#allocation3 + $0x454] sm:$0xf] %vm4931, %v6977
        %7102 = vst.msk [vmem:[#allocation3 + $0x468] sm:$0xf] %vm4931, %v6979
        %7103 = vst.msk [vmem:[#allocation3 + $0x47c] sm:$0xf] %vm4931, %v6981
        %7104 = vst.msk [vmem:[#allocation3 + $0x490] sm:$0xf] %vm4931, %v6983
        %7105 = vst.msk [vmem:[#allocation3 + $0x4a4] sm:$0xf] %vm4931, %v6985
        %v7106 = vld [vmem:[#allocation2 + $0x18] sm:$0xf]
        %v7107 = vld [vmem:[#allocation2 + $0x1c] sm:$0xf]
        %v7108 = vld [vmem:[#allocation2 + $0x20] sm:$0xf]
        %v7109 = vld [vmem:[#allocation2 + $0x24] sm:$0xf]
        %v7110 = vld [vmem:[#allocation2 + $0x28] sm:$0xf]
        %v7111 = vld [vmem:[#allocation2 + $0x2c] sm:$0xf]
        %v7112 = vld [vmem:[#allocation2 + $0x30] sm:$0xf]
        %v7113 = vld [vmem:[#allocation2 + $0x34] sm:$0xf]
        %v7114 = vld [vmem:[#allocation2 + $0x38] sm:$0xf]
        %v7115 = vld [vmem:[#allocation2 + $0x3c] sm:$0xf]
        %v7116 = vld [vmem:[#allocation2 + $0x40] sm:$0xf]
        %v7117 = vld [vmem:[#allocation2 + $0x44] sm:$0xf]
        %v7118 = vld [vmem:[#allocation2 + $0x48] sm:$0xf]
        %v7119 = vld [vmem:[#allocation2 + $0x4c] sm:$0xf]
        %v7120 = vld [vmem:[#allocation2 + $0x50] sm:$0xf]
        %v7121 = vld [vmem:[#allocation2 + $0x54] sm:$0xf]
        %v7122 = vld [vmem:[#allocation2 + $0x58] sm:$0xf]
        %v7123 = vld [vmem:[#allocation2 + $0x5c] sm:$0xf]
        %v7124 = vld [vmem:[#allocation2 + $0x60] sm:$0xf]
        %v7125 = vld [vmem:[#allocation2 + $0x64] sm:$0xf]
        %v7126 = vld [vmem:[#allocation2 + $0x68] sm:$0xf]
        %v7127 = vld [vmem:[#allocation2 + $0x6c] sm:$0xf]
        %v7128 = vld [vmem:[#allocation2 + $0x70] sm:$0xf]
        %v7129 = vld [vmem:[#allocation2 + $0x74] sm:$0xf]
        %v7130 = vld [vmem:[#allocation2 + $0x78] sm:$0xf]
        %v7131 = vld [vmem:[#allocation2 + $0x7c] sm:$0xf]
        %v7132 = vld [vmem:[#allocation2 + $0x80] sm:$0xf]
        %v7133 = vld [vmem:[#allocation2 + $0x84] sm:$0xf]
        %v7134 = vld [vmem:[#allocation2 + $0x88] sm:$0xf]
        %v7135 = vld [vmem:[#allocation2 + $0x8c] sm:$0xf]
        %v7136 = vld [vmem:[#allocation2 + $0x90] sm:$0xf]
        %v7137 = vld [vmem:[#allocation2 + $0x94] sm:$0xf]
        %v7138 = vld [vmem:[#allocation2 + $0x98] sm:$0xf]
        %v7139 = vld [vmem:[#allocation2 + $0x9c] sm:$0xf]
        %v7140 = vld [vmem:[#allocation2 + $0xa0] sm:$0xf]
        %v7141 = vld [vmem:[#allocation2 + $0xa4] sm:$0xf]
        %v7142 = vld [vmem:[#allocation2 + $0xa8] sm:$0xf]
        %v7143 = vld [vmem:[#allocation2 + $0xac] sm:$0xf]
        %v7144 = vld [vmem:[#allocation2 + $0xb0] sm:$0xf]
        %v7145 = vld [vmem:[#allocation2 + $0xb4] sm:$0xf]
        %v7146 = vld [vmem:[#allocation2 + $0xb8] sm:$0xf]
        %v7147 = vld [vmem:[#allocation2 + $0xbc] sm:$0xf]
        %v7148 = vld [vmem:[#allocation2 + $0xc0] sm:$0xf]
        %v7149 = vld [vmem:[#allocation2 + $0xc4] sm:$0xf]
        %v7150 = vld [vmem:[#allocation2 + $0xc8] sm:$0xf]
        %v7151 = vld [vmem:[#allocation2 + $0xcc] sm:$0xf]
        %v7152 = vld [vmem:[#allocation2 + $0xd0] sm:$0xf]
        %v7153 = vld [vmem:[#allocation2 + $0xd4] sm:$0xf]
        %v7154 = vld [vmem:[#allocation2 + $0xd8] sm:$0xf]
        %v7155 = vld [vmem:[#allocation2 + $0xdc] sm:$0xf]
        %v7156 = vld [vmem:[#allocation2 + $0xe0] sm:$0xf]
        %v7157 = vld [vmem:[#allocation2 + $0xe4] sm:$0xf]
        %v7158 = vld [vmem:[#allocation2 + $0xe8] sm:$0xf]
        %v7159 = vld [vmem:[#allocation2 + $0xec] sm:$0xf]
        %v7160 = vld [vmem:[#allocation2 + $0xf0] sm:$0xf]
        %v7161 = vld [vmem:[#allocation2 + $0xf4] sm:$0xf]
        %v7162 = vld [vmem:[#allocation2 + $0xf8] sm:$0xf]
        %v7163 = vld [vmem:[#allocation2 + $0xfc] sm:$0xf]
        %v7164 = vld [vmem:[#allocation2 + $0x100] sm:$0xf]
        %v7165 = vld [vmem:[#allocation2 + $0x104] sm:$0xf]
        %7166 = vst.msk [vmem:[#allocation3 + $0xc] sm:$0xf] %vm281, %v7106
        %7167 = vst.msk [vmem:[#allocation3 + $0x20] sm:$0xf] %vm281, %v7107
        %7168 = vst.msk [vmem:[#allocation3 + $0x34] sm:$0xf] %vm281, %v7108
        %7169 = vst.msk [vmem:[#allocation3 + $0x48] sm:$0xf] %vm281, %v7109
        %7170 = vst.msk [vmem:[#allocation3 + $0x5c] sm:$0xf] %vm281, %v7110
        %7171 = vst.msk [vmem:[#allocation3 + $0x70] sm:$0xf] %vm281, %v7111
        %7172 = vst.msk [vmem:[#allocation3 + $0x84] sm:$0xf] %vm281, %v7112
        %7173 = vst.msk [vmem:[#allocation3 + $0x98] sm:$0xf] %vm281, %v7113
        %7174 = vst.msk [vmem:[#allocation3 + $0xac] sm:$0xf] %vm281, %v7114
        %7175 = vst.msk [vmem:[#allocation3 + $0xc0] sm:$0xf] %vm281, %v7115
        %7176 = vst.msk [vmem:[#allocation3 + $0xd4] sm:$0xf] %vm281, %v7116
        %7177 = vst.msk [vmem:[#allocation3 + $0xe8] sm:$0xf] %vm281, %v7117
        %7178 = vst.msk [vmem:[#allocation3 + $0xfc] sm:$0xf] %vm281, %v7118
        %7179 = vst.msk [vmem:[#allocation3 + $0x110] sm:$0xf] %vm281, %v7119
        %7180 = vst.msk [vmem:[#allocation3 + $0x124] sm:$0xf] %vm281, %v7120
        %7181 = vst.msk [vmem:[#allocation3 + $0x138] sm:$0xf] %vm281, %v7121
        %7182 = vst.msk [vmem:[#allocation3 + $0x14c] sm:$0xf] %vm281, %v7122
        %7183 = vst.msk [vmem:[#allocation3 + $0x160] sm:$0xf] %vm281, %v7123
        %7184 = vst.msk [vmem:[#allocation3 + $0x174] sm:$0xf] %vm281, %v7124
        %7185 = vst.msk [vmem:[#allocation3 + $0x188] sm:$0xf] %vm281, %v7125
        %7186 = vst.msk [vmem:[#allocation3 + $0x19c] sm:$0xf] %vm281, %v7126
        %7187 = vst.msk [vmem:[#allocation3 + $0x1b0] sm:$0xf] %vm281, %v7127
        %7188 = vst.msk [vmem:[#allocation3 + $0x1c4] sm:$0xf] %vm281, %v7128
        %7189 = vst.msk [vmem:[#allocation3 + $0x1d8] sm:$0xf] %vm281, %v7129
        %7190 = vst.msk [vmem:[#allocation3 + $0x1ec] sm:$0xf] %vm281, %v7130
        %7191 = vst.msk [vmem:[#allocation3 + $0x200] sm:$0xf] %vm281, %v7131
        %7192 = vst.msk [vmem:[#allocation3 + $0x214] sm:$0xf] %vm281, %v7132
        %7193 = vst.msk [vmem:[#allocation3 + $0x228] sm:$0xf] %vm281, %v7133
        %7194 = vst.msk [vmem:[#allocation3 + $0x23c] sm:$0xf] %vm281, %v7134
        %7195 = vst.msk [vmem:[#allocation3 + $0x250] sm:$0xf] %vm281, %v7135
        %7196 = vst.msk [vmem:[#allocation3 + $0x264] sm:$0xf] %vm281, %v7136
        %7197 = vst.msk [vmem:[#allocation3 + $0x278] sm:$0xf] %vm281, %v7137
        %7198 = vst.msk [vmem:[#allocation3 + $0x28c] sm:$0xf] %vm281, %v7138
        %7199 = vst.msk [vmem:[#allocation3 + $0x2a0] sm:$0xf] %vm281, %v7139
        %7200 = vst.msk [vmem:[#allocation3 + $0x2b4] sm:$0xf] %vm281, %v7140
        %7201 = vst.msk [vmem:[#allocation3 + $0x2c8] sm:$0xf] %vm281, %v7141
        %7202 = vst.msk [vmem:[#allocation3 + $0x2dc] sm:$0xf] %vm281, %v7142
        %7203 = vst.msk [vmem:[#allocation3 + $0x2f0] sm:$0xf] %vm281, %v7143
        %7204 = vst.msk [vmem:[#allocation3 + $0x304] sm:$0xf] %vm281, %v7144
        %7205 = vst.msk [vmem:[#allocation3 + $0x318] sm:$0xf] %vm281, %v7145
        %7206 = vst.msk [vmem:[#allocation3 + $0x32c] sm:$0xf] %vm281, %v7146
        %7207 = vst.msk [vmem:[#allocation3 + $0x340] sm:$0xf] %vm281, %v7147
        %7208 = vst.msk [vmem:[#allocation3 + $0x354] sm:$0xf] %vm281, %v7148
        %7209 = vst.msk [vmem:[#allocation3 + $0x368] sm:$0xf] %vm281, %v7149
        %7210 = vst.msk [vmem:[#allocation3 + $0x37c] sm:$0xf] %vm281, %v7150
        %7211 = vst.msk [vmem:[#allocation3 + $0x390] sm:$0xf] %vm281, %v7151
        %7212 = vst.msk [vmem:[#allocation3 + $0x3a4] sm:$0xf] %vm281, %v7152
        %7213 = vst.msk [vmem:[#allocation3 + $0x3b8] sm:$0xf] %vm281, %v7153
        %7214 = vst.msk [vmem:[#allocation3 + $0x3cc] sm:$0xf] %vm281, %v7154
        %7215 = vst.msk [vmem:[#allocation3 + $0x3e0] sm:$0xf] %vm281, %v7155
        %7216 = vst.msk [vmem:[#allocation3 + $0x3f4] sm:$0xf] %vm281, %v7156
        %7217 = vst.msk [vmem:[#allocation3 + $0x408] sm:$0xf] %vm281, %v7157
        %7218 = vst.msk [vmem:[#allocation3 + $0x41c] sm:$0xf] %vm281, %v7158
        %7219 = vst.msk [vmem:[#allocation3 + $0x430] sm:$0xf] %vm281, %v7159
        %7220 = vst.msk [vmem:[#allocation3 + $0x444] sm:$0xf] %vm281, %v7160
        %7221 = vst.msk [vmem:[#allocation3 + $0x458] sm:$0xf] %vm281, %v7161
        %7222 = vst.msk [vmem:[#allocation3 + $0x46c] sm:$0xf] %vm281, %v7162
        %7223 = vst.msk [vmem:[#allocation3 + $0x480] sm:$0xf] %vm281, %v7163
        %7224 = vst.msk [vmem:[#allocation3 + $0x494] sm:$0xf] %vm281, %v7164
        %7225 = vst.msk [vmem:[#allocation3 + $0x4a8] sm:$0xf] %vm281, %v7165
        %v7226 = vld [vmem:[#allocation2 + $0x18] sm:$0xf]
        %v7227 = vld [vmem:[#allocation2 + $0x1c] sm:$0xf]
        %v7228 = vld [vmem:[#allocation2 + $0x20] sm:$0xf]
        %v7229 = vld [vmem:[#allocation2 + $0x24] sm:$0xf]
        %v7230 = vld [vmem:[#allocation2 + $0x28] sm:$0xf]
        %v7231 = vld [vmem:[#allocation2 + $0x2c] sm:$0xf]
        %v7232 = vld [vmem:[#allocation2 + $0x30] sm:$0xf]
        %v7233 = vld [vmem:[#allocation2 + $0x34] sm:$0xf]
        %v7234 = vld [vmem:[#allocation2 + $0x38] sm:$0xf]
        %v7235 = vld [vmem:[#allocation2 + $0x3c] sm:$0xf]
        %v7236 = vld [vmem:[#allocation2 + $0x40] sm:$0xf]
        %v7237 = vld [vmem:[#allocation2 + $0x44] sm:$0xf]
        %v7238 = vld [vmem:[#allocation2 + $0x48] sm:$0xf]
        %v7239 = vld [vmem:[#allocation2 + $0x4c] sm:$0xf]
        %v7240 = vld [vmem:[#allocation2 + $0x50] sm:$0xf]
        %v7241 = vld [vmem:[#allocation2 + $0x54] sm:$0xf]
        %v7242 = vld [vmem:[#allocation2 + $0x58] sm:$0xf]
        %v7243 = vld [vmem:[#allocation2 + $0x5c] sm:$0xf]
        %v7244 = vld [vmem:[#allocation2 + $0x60] sm:$0xf]
        %v7245 = vld [vmem:[#allocation2 + $0x64] sm:$0xf]
        %v7246 = vld [vmem:[#allocation2 + $0x68] sm:$0xf]
        %v7247 = vld [vmem:[#allocation2 + $0x6c] sm:$0xf]
        %v7248 = vld [vmem:[#allocation2 + $0x70] sm:$0xf]
        %v7249 = vld [vmem:[#allocation2 + $0x74] sm:$0xf]
        %v7250 = vld [vmem:[#allocation2 + $0x78] sm:$0xf]
        %v7251 = vld [vmem:[#allocation2 + $0x7c] sm:$0xf]
        %v7252 = vld [vmem:[#allocation2 + $0x80] sm:$0xf]
        %v7253 = vld [vmem:[#allocation2 + $0x84] sm:$0xf]
        %v7254 = vld [vmem:[#allocation2 + $0x88] sm:$0xf]
        %v7255 = vld [vmem:[#allocation2 + $0x8c] sm:$0xf]
        %v7256 = vld [vmem:[#allocation2 + $0x90] sm:$0xf]
        %v7257 = vld [vmem:[#allocation2 + $0x94] sm:$0xf]
        %v7258 = vld [vmem:[#allocation2 + $0x98] sm:$0xf]
        %v7259 = vld [vmem:[#allocation2 + $0x9c] sm:$0xf]
        %v7260 = vld [vmem:[#allocation2 + $0xa0] sm:$0xf]
        %v7261 = vld [vmem:[#allocation2 + $0xa4] sm:$0xf]
        %v7262 = vld [vmem:[#allocation2 + $0xa8] sm:$0xf]
        %v7263 = vld [vmem:[#allocation2 + $0xac] sm:$0xf]
        %v7264 = vld [vmem:[#allocation2 + $0xb0] sm:$0xf]
        %v7265 = vld [vmem:[#allocation2 + $0xb4] sm:$0xf]
        %v7266 = vld [vmem:[#allocation2 + $0xb8] sm:$0xf]
        %v7267 = vld [vmem:[#allocation2 + $0xbc] sm:$0xf]
        %v7268 = vld [vmem:[#allocation2 + $0xc0] sm:$0xf]
        %v7269 = vld [vmem:[#allocation2 + $0xc4] sm:$0xf]
        %v7270 = vld [vmem:[#allocation2 + $0xc8] sm:$0xf]
        %v7271 = vld [vmem:[#allocation2 + $0xcc] sm:$0xf]
        %v7272 = vld [vmem:[#allocation2 + $0xd0] sm:$0xf]
        %v7273 = vld [vmem:[#allocation2 + $0xd4] sm:$0xf]
        %v7274 = vld [vmem:[#allocation2 + $0xd8] sm:$0xf]
        %v7275 = vld [vmem:[#allocation2 + $0xdc] sm:$0xf]
        %v7276 = vld [vmem:[#allocation2 + $0xe0] sm:$0xf]
        %v7277 = vld [vmem:[#allocation2 + $0xe4] sm:$0xf]
        %v7278 = vld [vmem:[#allocation2 + $0xe8] sm:$0xf]
        %v7279 = vld [vmem:[#allocation2 + $0xec] sm:$0xf]
        %v7280 = vld [vmem:[#allocation2 + $0xf0] sm:$0xf]
        %v7281 = vld [vmem:[#allocation2 + $0xf4] sm:$0xf]
        %v7282 = vld [vmem:[#allocation2 + $0xf8] sm:$0xf]
        %v7283 = vld [vmem:[#allocation2 + $0xfc] sm:$0xf]
        %v7284 = vld [vmem:[#allocation2 + $0x100] sm:$0xf]
        %v7285 = vld [vmem:[#allocation2 + $0x104] sm:$0xf]
        %v7286 = vld [vmem:[#allocation2 + $0x108] sm:$0x1]
        %v7288 = vshrl.u32 %v7226, 16
        %v7290 = vrot.slane %v7288, 4
        %v7291 = vshll.u32 %v7226, 16
        %v7293 = vrot.slane %v7291, 5
        %v7294 = vor.u32 %v7290, %v7293
        %v7295 = vrot.slane %v7294, 4
        %v7297 = vshll.u32 %v7227, 16
        %v7299 = vrot.slane %v7297, 5
        %v7300 = vsel %vm4146, %v7295, %v7299
        %v7301 = vshrl.u32 %v7227, 16
        %v7303 = vrot.slane %v7301, 4
        %v7304 = vor.u32 %v7303, %v7299
        %v7305 = vrot.slane %v7304, 4
        %v7307 = vshll.u32 %v7228, 16
        %v7309 = vrot.slane %v7307, 5
        %v7310 = vsel %vm4146, %v7305, %v7309
        %v7311 = vshrl.u32 %v7228, 16
        %v7313 = vrot.slane %v7311, 4
        %v7314 = vor.u32 %v7313, %v7309
        %v7315 = vrot.slane %v7314, 4
        %v7317 = vshll.u32 %v7229, 16
        %v7319 = vrot.slane %v7317, 5
        %v7320 = vsel %vm4146, %v7315, %v7319
        %v7321 = vshrl.u32 %v7229, 16
        %v7323 = vrot.slane %v7321, 4
        %v7324 = vor.u32 %v7323, %v7319
        %v7325 = vrot.slane %v7324, 4
        %v7327 = vshll.u32 %v7230, 16
        %v7329 = vrot.slane %v7327, 5
        %v7330 = vsel %vm4146, %v7325, %v7329
        %v7331 = vshrl.u32 %v7230, 16
        %v7333 = vrot.slane %v7331, 4
        %v7334 = vor.u32 %v7333, %v7329
        %v7335 = vrot.slane %v7334, 4
        %v7337 = vshll.u32 %v7231, 16
        %v7339 = vrot.slane %v7337, 5
        %v7340 = vsel %vm4146, %v7335, %v7339
        %v7341 = vshrl.u32 %v7231, 16
        %v7343 = vrot.slane %v7341, 4
        %v7344 = vor.u32 %v7343, %v7339
        %v7345 = vrot.slane %v7344, 4
        %v7347 = vshll.u32 %v7232, 16
        %v7349 = vrot.slane %v7347, 5
        %v7350 = vsel %vm4146, %v7345, %v7349
        %v7351 = vshrl.u32 %v7232, 16
        %v7353 = vrot.slane %v7351, 4
        %v7354 = vor.u32 %v7353, %v7349
        %v7355 = vrot.slane %v7354, 4
        %v7357 = vshll.u32 %v7233, 16
        %v7359 = vrot.slane %v7357, 5
        %v7360 = vsel %vm4146, %v7355, %v7359
        %v7361 = vshrl.u32 %v7233, 16
        %v7363 = vrot.slane %v7361, 4
        %v7364 = vor.u32 %v7363, %v7359
        %v7365 = vrot.slane %v7364, 4
        %v7367 = vshll.u32 %v7234, 16
        %v7369 = vrot.slane %v7367, 5
        %v7370 = vsel %vm4146, %v7365, %v7369
        %v7371 = vshrl.u32 %v7234, 16
        %v7373 = vrot.slane %v7371, 4
        %v7374 = vor.u32 %v7373, %v7369
        %v7375 = vrot.slane %v7374, 4
        %v7377 = vshll.u32 %v7235, 16
        %v7379 = vrot.slane %v7377, 5
        %v7380 = vsel %vm4146, %v7375, %v7379
        %v7381 = vshrl.u32 %v7235, 16
        %v7383 = vrot.slane %v7381, 4
        %v7384 = vor.u32 %v7383, %v7379
        %v7385 = vrot.slane %v7384, 4
        %v7387 = vshll.u32 %v7236, 16
        %v7389 = vrot.slane %v7387, 5
        %v7390 = vsel %vm4146, %v7385, %v7389
        %v7391 = vshrl.u32 %v7236, 16
        %v7393 = vrot.slane %v7391, 4
        %v7394 = vor.u32 %v7393, %v7389
        %v7395 = vrot.slane %v7394, 4
        %v7397 = vshll.u32 %v7237, 16
        %v7399 = vrot.slane %v7397, 5
        %v7400 = vsel %vm4146, %v7395, %v7399
        %v7401 = vshrl.u32 %v7237, 16
        %v7403 = vrot.slane %v7401, 4
        %v7404 = vor.u32 %v7403, %v7399
        %v7405 = vrot.slane %v7404, 4
        %v7407 = vshll.u32 %v7238, 16
        %v7409 = vrot.slane %v7407, 5
        %v7410 = vsel %vm4146, %v7405, %v7409
        %v7411 = vshrl.u32 %v7238, 16
        %v7413 = vrot.slane %v7411, 4
        %v7414 = vor.u32 %v7413, %v7409
        %v7415 = vrot.slane %v7414, 4
        %v7417 = vshll.u32 %v7239, 16
        %v7419 = vrot.slane %v7417, 5
        %v7420 = vsel %vm4146, %v7415, %v7419
        %v7421 = vshrl.u32 %v7239, 16
        %v7423 = vrot.slane %v7421, 4
        %v7424 = vor.u32 %v7423, %v7419
        %v7425 = vrot.slane %v7424, 4
        %v7427 = vshll.u32 %v7240, 16
        %v7429 = vrot.slane %v7427, 5
        %v7430 = vsel %vm4146, %v7425, %v7429
        %v7431 = vshrl.u32 %v7240, 16
        %v7433 = vrot.slane %v7431, 4
        %v7434 = vor.u32 %v7433, %v7429
        %v7435 = vrot.slane %v7434, 4
        %v7437 = vshll.u32 %v7241, 16
        %v7439 = vrot.slane %v7437, 5
        %v7440 = vsel %vm4146, %v7435, %v7439
        %v7441 = vshrl.u32 %v7241, 16
        %v7443 = vrot.slane %v7441, 4
        %v7444 = vor.u32 %v7443, %v7439
        %v7445 = vrot.slane %v7444, 4
        %v7447 = vshll.u32 %v7242, 16
        %v7449 = vrot.slane %v7447, 5
        %v7450 = vsel %vm4146, %v7445, %v7449
        %v7451 = vshrl.u32 %v7242, 16
        %v7453 = vrot.slane %v7451, 4
        %v7454 = vor.u32 %v7453, %v7449
        %v7455 = vrot.slane %v7454, 4
        %v7457 = vshll.u32 %v7243, 16
        %v7459 = vrot.slane %v7457, 5
        %v7460 = vsel %vm4146, %v7455, %v7459
        %v7461 = vshrl.u32 %v7243, 16
        %v7463 = vrot.slane %v7461, 4
        %v7464 = vor.u32 %v7463, %v7459
        %v7465 = vrot.slane %v7464, 4
        %v7467 = vshll.u32 %v7244, 16
        %v7469 = vrot.slane %v7467, 5
        %v7470 = vsel %vm4146, %v7465, %v7469
        %v7471 = vshrl.u32 %v7244, 16
        %v7473 = vrot.slane %v7471, 4
        %v7474 = vor.u32 %v7473, %v7469
        %v7475 = vrot.slane %v7474, 4
        %v7477 = vshll.u32 %v7245, 16
        %v7479 = vrot.slane %v7477, 5
        %v7480 = vsel %vm4146, %v7475, %v7479
        %v7481 = vshrl.u32 %v7245, 16
        %v7483 = vrot.slane %v7481, 4
        %v7484 = vor.u32 %v7483, %v7479
        %v7485 = vrot.slane %v7484, 4
        %v7487 = vshll.u32 %v7246, 16
        %v7489 = vrot.slane %v7487, 5
        %v7490 = vsel %vm4146, %v7485, %v7489
        %v7491 = vshrl.u32 %v7246, 16
        %v7493 = vrot.slane %v7491, 4
        %v7494 = vor.u32 %v7493, %v7489
        %v7495 = vrot.slane %v7494, 4
        %v7497 = vshll.u32 %v7247, 16
        %v7499 = vrot.slane %v7497, 5
        %v7500 = vsel %vm4146, %v7495, %v7499
        %v7501 = vshrl.u32 %v7247, 16
        %v7503 = vrot.slane %v7501, 4
        %v7504 = vor.u32 %v7503, %v7499
        %v7505 = vrot.slane %v7504, 4
        %v7507 = vshll.u32 %v7248, 16
        %v7509 = vrot.slane %v7507, 5
        %v7510 = vsel %vm4146, %v7505, %v7509
        %v7511 = vshrl.u32 %v7248, 16
        %v7513 = vrot.slane %v7511, 4
        %v7514 = vor.u32 %v7513, %v7509
        %v7515 = vrot.slane %v7514, 4
        %v7517 = vshll.u32 %v7249, 16
        %v7519 = vrot.slane %v7517, 5
        %v7520 = vsel %vm4146, %v7515, %v7519
        %v7521 = vshrl.u32 %v7249, 16
        %v7523 = vrot.slane %v7521, 4
        %v7524 = vor.u32 %v7523, %v7519
        %v7525 = vrot.slane %v7524, 4
        %v7527 = vshll.u32 %v7250, 16
        %v7529 = vrot.slane %v7527, 5
        %v7530 = vsel %vm4146, %v7525, %v7529
        %v7531 = vshrl.u32 %v7250, 16
        %v7533 = vrot.slane %v7531, 4
        %v7534 = vor.u32 %v7533, %v7529
        %v7535 = vrot.slane %v7534, 4
        %v7537 = vshll.u32 %v7251, 16
        %v7539 = vrot.slane %v7537, 5
        %v7540 = vsel %vm4146, %v7535, %v7539
        %v7541 = vshrl.u32 %v7251, 16
        %v7543 = vrot.slane %v7541, 4
        %v7544 = vor.u32 %v7543, %v7539
        %v7545 = vrot.slane %v7544, 4
        %v7547 = vshll.u32 %v7252, 16
        %v7549 = vrot.slane %v7547, 5
        %v7550 = vsel %vm4146, %v7545, %v7549
        %v7551 = vshrl.u32 %v7252, 16
        %v7553 = vrot.slane %v7551, 4
        %v7554 = vor.u32 %v7553, %v7549
        %v7555 = vrot.slane %v7554, 4
        %v7557 = vshll.u32 %v7253, 16
        %v7559 = vrot.slane %v7557, 5
        %v7560 = vsel %vm4146, %v7555, %v7559
        %v7561 = vshrl.u32 %v7253, 16
        %v7563 = vrot.slane %v7561, 4
        %v7564 = vor.u32 %v7563, %v7559
        %v7565 = vrot.slane %v7564, 4
        %v7567 = vshll.u32 %v7254, 16
        %v7569 = vrot.slane %v7567, 5
        %v7570 = vsel %vm4146, %v7565, %v7569
        %v7571 = vshrl.u32 %v7254, 16
        %v7573 = vrot.slane %v7571, 4
        %v7574 = vor.u32 %v7573, %v7569
        %v7575 = vrot.slane %v7574, 4
        %v7577 = vshll.u32 %v7255, 16
        %v7579 = vrot.slane %v7577, 5
        %v7580 = vsel %vm4146, %v7575, %v7579
        %v7581 = vshrl.u32 %v7255, 16
        %v7583 = vrot.slane %v7581, 4
        %v7584 = vor.u32 %v7583, %v7579
        %v7585 = vrot.slane %v7584, 4
        %v7587 = vshll.u32 %v7256, 16
        %v7589 = vrot.slane %v7587, 5
        %v7590 = vsel %vm4146, %v7585, %v7589
        %v7591 = vshrl.u32 %v7256, 16
        %v7593 = vrot.slane %v7591, 4
        %v7594 = vor.u32 %v7593, %v7589
        %v7595 = vrot.slane %v7594, 4
        %v7597 = vshll.u32 %v7257, 16
        %v7599 = vrot.slane %v7597, 5
        %v7600 = vsel %vm4146, %v7595, %v7599
        %v7601 = vshrl.u32 %v7257, 16
        %v7603 = vrot.slane %v7601, 4
        %v7604 = vor.u32 %v7603, %v7599
        %v7605 = vrot.slane %v7604, 4
        %v7607 = vshll.u32 %v7258, 16
        %v7609 = vrot.slane %v7607, 5
        %v7610 = vsel %vm4146, %v7605, %v7609
        %v7611 = vshrl.u32 %v7258, 16
        %v7613 = vrot.slane %v7611, 4
        %v7614 = vor.u32 %v7613, %v7609
        %v7615 = vrot.slane %v7614, 4
        %v7617 = vshll.u32 %v7259, 16
        %v7619 = vrot.slane %v7617, 5
        %v7620 = vsel %vm4146, %v7615, %v7619
        %v7621 = vshrl.u32 %v7259, 16
        %v7623 = vrot.slane %v7621, 4
        %v7624 = vor.u32 %v7623, %v7619
        %v7625 = vrot.slane %v7624, 4
        %v7627 = vshll.u32 %v7260, 16
        %v7629 = vrot.slane %v7627, 5
        %v7630 = vsel %vm4146, %v7625, %v7629
        %v7631 = vshrl.u32 %v7260, 16
        %v7633 = vrot.slane %v7631, 4
        %v7634 = vor.u32 %v7633, %v7629
        %v7635 = vrot.slane %v7634, 4
        %v7637 = vshll.u32 %v7261, 16
        %v7639 = vrot.slane %v7637, 5
        %v7640 = vsel %vm4146, %v7635, %v7639
        %v7641 = vshrl.u32 %v7261, 16
        %v7643 = vrot.slane %v7641, 4
        %v7644 = vor.u32 %v7643, %v7639
        %v7645 = vrot.slane %v7644, 4
        %v7647 = vshll.u32 %v7262, 16
        %v7649 = vrot.slane %v7647, 5
        %v7650 = vsel %vm4146, %v7645, %v7649
        %v7651 = vshrl.u32 %v7262, 16
        %v7653 = vrot.slane %v7651, 4
        %v7654 = vor.u32 %v7653, %v7649
        %v7655 = vrot.slane %v7654, 4
        %v7657 = vshll.u32 %v7263, 16
        %v7659 = vrot.slane %v7657, 5
        %v7660 = vsel %vm4146, %v7655, %v7659
        %v7661 = vshrl.u32 %v7263, 16
        %v7663 = vrot.slane %v7661, 4
        %v7664 = vor.u32 %v7663, %v7659
        %v7665 = vrot.slane %v7664, 4
        %v7667 = vshll.u32 %v7264, 16
        %v7669 = vrot.slane %v7667, 5
        %v7670 = vsel %vm4146, %v7665, %v7669
        %v7671 = vshrl.u32 %v7264, 16
        %v7673 = vrot.slane %v7671, 4
        %v7674 = vor.u32 %v7673, %v7669
        %v7675 = vrot.slane %v7674, 4
        %v7677 = vshll.u32 %v7265, 16
        %v7679 = vrot.slane %v7677, 5
        %v7680 = vsel %vm4146, %v7675, %v7679
        %v7681 = vshrl.u32 %v7265, 16
        %v7683 = vrot.slane %v7681, 4
        %v7684 = vor.u32 %v7683, %v7679
        %v7685 = vrot.slane %v7684, 4
        %v7687 = vshll.u32 %v7266, 16
        %v7689 = vrot.slane %v7687, 5
        %v7690 = vsel %vm4146, %v7685, %v7689
        %v7691 = vshrl.u32 %v7266, 16
        %v7693 = vrot.slane %v7691, 4
        %v7694 = vor.u32 %v7693, %v7689
        %v7695 = vrot.slane %v7694, 4
        %v7697 = vshll.u32 %v7267, 16
        %v7699 = vrot.slane %v7697, 5
        %v7700 = vsel %vm4146, %v7695, %v7699
        %v7701 = vshrl.u32 %v7267, 16
        %v7703 = vrot.slane %v7701, 4
        %v7704 = vor.u32 %v7703, %v7699
        %v7705 = vrot.slane %v7704, 4
        %v7707 = vshll.u32 %v7268, 16
        %v7709 = vrot.slane %v7707, 5
        %v7710 = vsel %vm4146, %v7705, %v7709
        %v7711 = vshrl.u32 %v7268, 16
        %v7713 = vrot.slane %v7711, 4
        %v7714 = vor.u32 %v7713, %v7709
        %v7715 = vrot.slane %v7714, 4
        %v7717 = vshll.u32 %v7269, 16
        %v7719 = vrot.slane %v7717, 5
        %v7720 = vsel %vm4146, %v7715, %v7719
        %v7721 = vshrl.u32 %v7269, 16
        %v7723 = vrot.slane %v7721, 4
        %v7724 = vor.u32 %v7723, %v7719
        %v7725 = vrot.slane %v7724, 4
        %v7727 = vshll.u32 %v7270, 16
        %v7729 = vrot.slane %v7727, 5
        %v7730 = vsel %vm4146, %v7725, %v7729
        %v7731 = vshrl.u32 %v7270, 16
        %v7733 = vrot.slane %v7731, 4
        %v7734 = vor.u32 %v7733, %v7729
        %v7735 = vrot.slane %v7734, 4
        %v7737 = vshll.u32 %v7271, 16
        %v7739 = vrot.slane %v7737, 5
        %v7740 = vsel %vm4146, %v7735, %v7739
        %v7741 = vshrl.u32 %v7271, 16
        %v7743 = vrot.slane %v7741, 4
        %v7744 = vor.u32 %v7743, %v7739
        %v7745 = vrot.slane %v7744, 4
        %v7747 = vshll.u32 %v7272, 16
        %v7749 = vrot.slane %v7747, 5
        %v7750 = vsel %vm4146, %v7745, %v7749
        %v7751 = vshrl.u32 %v7272, 16
        %v7753 = vrot.slane %v7751, 4
        %v7754 = vor.u32 %v7753, %v7749
        %v7755 = vrot.slane %v7754, 4
        %v7757 = vshll.u32 %v7273, 16
        %v7759 = vrot.slane %v7757, 5
        %v7760 = vsel %vm4146, %v7755, %v7759
        %v7761 = vshrl.u32 %v7273, 16
        %v7763 = vrot.slane %v7761, 4
        %v7764 = vor.u32 %v7763, %v7759
        %v7765 = vrot.slane %v7764, 4
        %v7767 = vshll.u32 %v7274, 16
        %v7769 = vrot.slane %v7767, 5
        %v7770 = vsel %vm4146, %v7765, %v7769
        %v7771 = vshrl.u32 %v7274, 16
        %v7773 = vrot.slane %v7771, 4
        %v7774 = vor.u32 %v7773, %v7769
        %v7775 = vrot.slane %v7774, 4
        %v7777 = vshll.u32 %v7275, 16
        %v7779 = vrot.slane %v7777, 5
        %v7780 = vsel %vm4146, %v7775, %v7779
        %v7781 = vshrl.u32 %v7275, 16
        %v7783 = vrot.slane %v7781, 4
        %v7784 = vor.u32 %v7783, %v7779
        %v7785 = vrot.slane %v7784, 4
        %v7787 = vshll.u32 %v7276, 16
        %v7789 = vrot.slane %v7787, 5
        %v7790 = vsel %vm4146, %v7785, %v7789
        %v7791 = vshrl.u32 %v7276, 16
        %v7793 = vrot.slane %v7791, 4
        %v7794 = vor.u32 %v7793, %v7789
        %v7795 = vrot.slane %v7794, 4
        %v7797 = vshll.u32 %v7277, 16
        %v7799 = vrot.slane %v7797, 5
        %v7800 = vsel %vm4146, %v7795, %v7799
        %v7801 = vshrl.u32 %v7277, 16
        %v7803 = vrot.slane %v7801, 4
        %v7804 = vor.u32 %v7803, %v7799
        %v7805 = vrot.slane %v7804, 4
        %v7807 = vshll.u32 %v7278, 16
        %v7809 = vrot.slane %v7807, 5
        %v7810 = vsel %vm4146, %v7805, %v7809
        %v7811 = vshrl.u32 %v7278, 16
        %v7813 = vrot.slane %v7811, 4
        %v7814 = vor.u32 %v7813, %v7809
        %v7815 = vrot.slane %v7814, 4
        %v7817 = vshll.u32 %v7279, 16
        %v7819 = vrot.slane %v7817, 5
        %v7820 = vsel %vm4146, %v7815, %v7819
        %v7821 = vshrl.u32 %v7279, 16
        %v7823 = vrot.slane %v7821, 4
        %v7824 = vor.u32 %v7823, %v7819
        %v7825 = vrot.slane %v7824, 4
        %v7827 = vshll.u32 %v7280, 16
        %v7829 = vrot.slane %v7827, 5
        %v7830 = vsel %vm4146, %v7825, %v7829
        %v7831 = vshrl.u32 %v7280, 16
        %v7833 = vrot.slane %v7831, 4
        %v7834 = vor.u32 %v7833, %v7829
        %v7835 = vrot.slane %v7834, 4
        %v7837 = vshll.u32 %v7281, 16
        %v7839 = vrot.slane %v7837, 5
        %v7840 = vsel %vm4146, %v7835, %v7839
        %v7841 = vshrl.u32 %v7281, 16
        %v7843 = vrot.slane %v7841, 4
        %v7844 = vor.u32 %v7843, %v7839
        %v7845 = vrot.slane %v7844, 4
        %v7847 = vshll.u32 %v7282, 16
        %v7849 = vrot.slane %v7847, 5
        %v7850 = vsel %vm4146, %v7845, %v7849
        %v7851 = vshrl.u32 %v7282, 16
        %v7853 = vrot.slane %v7851, 4
        %v7854 = vor.u32 %v7853, %v7849
        %v7855 = vrot.slane %v7854, 4
        %v7857 = vshll.u32 %v7283, 16
        %v7859 = vrot.slane %v7857, 5
        %v7860 = vsel %vm4146, %v7855, %v7859
        %v7861 = vshrl.u32 %v7283, 16
        %v7863 = vrot.slane %v7861, 4
        %v7864 = vor.u32 %v7863, %v7859
        %v7865 = vrot.slane %v7864, 4
        %v7867 = vshll.u32 %v7284, 16
        %v7869 = vrot.slane %v7867, 5
        %v7870 = vsel %vm4146, %v7865, %v7869
        %v7871 = vshrl.u32 %v7284, 16
        %v7873 = vrot.slane %v7871, 4
        %v7874 = vor.u32 %v7873, %v7869
        %v7875 = vrot.slane %v7874, 4
        %v7877 = vshll.u32 %v7285, 16
        %v7879 = vrot.slane %v7877, 5
        %v7880 = vsel %vm4146, %v7875, %v7879
        %v7881 = vshrl.u32 %v7285, 16
        %v7883 = vrot.slane %v7881, 4
        %v7884 = vor.u32 %v7883, %v7879
        %v7885 = vrot.slane %v7884, 4
        %v7887 = vshll.u32 %v7286, 16
        %v7889 = vrot.slane %v7887, 5
        %v7890 = vsel %vm4146, %v7885, %v7889
        %7891 = vrot.lane.b32.xlu0 %v7300, 64
        %v7892 = vpop.permute.xlu0 %7891
        %7893 = vrot.lane.b32.xlu0 %v7310, 64
        %v7894 = vpop.permute.xlu0 %7893
        %7895 = vrot.lane.b32.xlu0 %v7320, 64
        %v7896 = vpop.permute.xlu0 %7895
        %7897 = vrot.lane.b32.xlu0 %v7330, 64
        %v7898 = vpop.permute.xlu0 %7897
        %7899 = vrot.lane.b32.xlu0 %v7340, 64
        %v7900 = vpop.permute.xlu0 %7899
        %7901 = vrot.lane.b32.xlu0 %v7350, 64
        %v7902 = vpop.permute.xlu0 %7901
        %7903 = vrot.lane.b32.xlu0 %v7360, 64
        %v7904 = vpop.permute.xlu0 %7903
        %7905 = vrot.lane.b32.xlu0 %v7370, 64
        %v7906 = vpop.permute.xlu0 %7905
        %7907 = vrot.lane.b32.xlu0 %v7380, 64
        %v7908 = vpop.permute.xlu0 %7907
        %7909 = vrot.lane.b32.xlu0 %v7390, 64
        %v7910 = vpop.permute.xlu0 %7909
        %7911 = vrot.lane.b32.xlu0 %v7400, 64
        %v7912 = vpop.permute.xlu0 %7911
        %7913 = vrot.lane.b32.xlu0 %v7410, 64
        %v7914 = vpop.permute.xlu0 %7913
        %7915 = vrot.lane.b32.xlu0 %v7420, 64
        %v7916 = vpop.permute.xlu0 %7915
        %7917 = vrot.lane.b32.xlu0 %v7430, 64
        %v7918 = vpop.permute.xlu0 %7917
        %7919 = vrot.lane.b32.xlu0 %v7440, 64
        %v7920 = vpop.permute.xlu0 %7919
        %7921 = vrot.lane.b32.xlu0 %v7450, 64
        %v7922 = vpop.permute.xlu0 %7921
        %7923 = vrot.lane.b32.xlu0 %v7460, 64
        %v7924 = vpop.permute.xlu0 %7923
        %7925 = vrot.lane.b32.xlu0 %v7470, 64
        %v7926 = vpop.permute.xlu0 %7925
        %7927 = vrot.lane.b32.xlu0 %v7480, 64
        %v7928 = vpop.permute.xlu0 %7927
        %7929 = vrot.lane.b32.xlu0 %v7490, 64
        %v7930 = vpop.permute.xlu0 %7929
        %7931 = vrot.lane.b32.xlu0 %v7500, 64
        %v7932 = vpop.permute.xlu0 %7931
        %7933 = vrot.lane.b32.xlu0 %v7510, 64
        %v7934 = vpop.permute.xlu0 %7933
        %7935 = vrot.lane.b32.xlu0 %v7520, 64
        %v7936 = vpop.permute.xlu0 %7935
        %7937 = vrot.lane.b32.xlu0 %v7530, 64
        %v7938 = vpop.permute.xlu0 %7937
        %7939 = vrot.lane.b32.xlu0 %v7540, 64
        %v7940 = vpop.permute.xlu0 %7939
        %7941 = vrot.lane.b32.xlu0 %v7550, 64
        %v7942 = vpop.permute.xlu0 %7941
        %7943 = vrot.lane.b32.xlu0 %v7560, 64
        %v7944 = vpop.permute.xlu0 %7943
        %7945 = vrot.lane.b32.xlu0 %v7570, 64
        %v7946 = vpop.permute.xlu0 %7945
        %7947 = vrot.lane.b32.xlu0 %v7580, 64
        %v7948 = vpop.permute.xlu0 %7947
        %7949 = vrot.lane.b32.xlu0 %v7590, 64
        %v7950 = vpop.permute.xlu0 %7949
        %7951 = vrot.lane.b32.xlu0 %v7600, 64
        %v7952 = vpop.permute.xlu0 %7951
        %7953 = vrot.lane.b32.xlu0 %v7610, 64
        %v7954 = vpop.permute.xlu0 %7953
        %7955 = vrot.lane.b32.xlu0 %v7620, 64
        %v7956 = vpop.permute.xlu0 %7955
        %7957 = vrot.lane.b32.xlu0 %v7630, 64
        %v7958 = vpop.permute.xlu0 %7957
        %7959 = vrot.lane.b32.xlu0 %v7640, 64
        %v7960 = vpop.permute.xlu0 %7959
        %7961 = vrot.lane.b32.xlu0 %v7650, 64
        %v7962 = vpop.permute.xlu0 %7961
        %7963 = vrot.lane.b32.xlu0 %v7660, 64
        %v7964 = vpop.permute.xlu0 %7963
        %7965 = vrot.lane.b32.xlu0 %v7670, 64
        %v7966 = vpop.permute.xlu0 %7965
        %7967 = vrot.lane.b32.xlu0 %v7680, 64
        %v7968 = vpop.permute.xlu0 %7967
        %7969 = vrot.lane.b32.xlu0 %v7690, 64
        %v7970 = vpop.permute.xlu0 %7969
        %7971 = vrot.lane.b32.xlu0 %v7700, 64
        %v7972 = vpop.permute.xlu0 %7971
        %7973 = vrot.lane.b32.xlu0 %v7710, 64
        %v7974 = vpop.permute.xlu0 %7973
        %7975 = vrot.lane.b32.xlu0 %v7720, 64
        %v7976 = vpop.permute.xlu0 %7975
        %7977 = vrot.lane.b32.xlu0 %v7730, 64
        %v7978 = vpop.permute.xlu0 %7977
        %7979 = vrot.lane.b32.xlu0 %v7740, 64
        %v7980 = vpop.permute.xlu0 %7979
        %7981 = vrot.lane.b32.xlu0 %v7750, 64
        %v7982 = vpop.permute.xlu0 %7981
        %7983 = vrot.lane.b32.xlu0 %v7760, 64
        %v7984 = vpop.permute.xlu0 %7983
        %7985 = vrot.lane.b32.xlu0 %v7770, 64
        %v7986 = vpop.permute.xlu0 %7985
        %7987 = vrot.lane.b32.xlu0 %v7780, 64
        %v7988 = vpop.permute.xlu0 %7987
        %7989 = vrot.lane.b32.xlu0 %v7790, 64
        %v7990 = vpop.permute.xlu0 %7989
        %7991 = vrot.lane.b32.xlu0 %v7800, 64
        %v7992 = vpop.permute.xlu0 %7991
        %7993 = vrot.lane.b32.xlu0 %v7810, 64
        %v7994 = vpop.permute.xlu0 %7993
        %7995 = vrot.lane.b32.xlu0 %v7820, 64
        %v7996 = vpop.permute.xlu0 %7995
        %7997 = vrot.lane.b32.xlu0 %v7830, 64
        %v7998 = vpop.permute.xlu0 %7997
        %7999 = vrot.lane.b32.xlu0 %v7840, 64
        %v8000 = vpop.permute.xlu0 %7999
        %8001 = vrot.lane.b32.xlu0 %v7850, 64
        %v8002 = vpop.permute.xlu0 %8001
        %8003 = vrot.lane.b32.xlu0 %v7860, 64
        %v8004 = vpop.permute.xlu0 %8003
        %8005 = vrot.lane.b32.xlu0 %v7870, 64
        %v8006 = vpop.permute.xlu0 %8005
        %8007 = vrot.lane.b32.xlu0 %v7880, 64
        %v8008 = vpop.permute.xlu0 %8007
        %8009 = vrot.lane.b32.xlu0 %v7890, 64
        %v8010 = vpop.permute.xlu0 %8009
        %8071 = vst.msk [vmem:[#allocation3 + $0xc] sm:$0xf] %vm4931, %v7892
        %8072 = vst.msk [vmem:[#allocation3 + $0x20] sm:$0xf] %vm4931, %v7894
        %8073 = vst.msk [vmem:[#allocation3 + $0x34] sm:$0xf] %vm4931, %v7896
        %8074 = vst.msk [vmem:[#allocation3 + $0x48] sm:$0xf] %vm4931, %v7898
        %8075 = vst.msk [vmem:[#allocation3 + $0x5c] sm:$0xf] %vm4931, %v7900
        %8076 = vst.msk [vmem:[#allocation3 + $0x70] sm:$0xf] %vm4931, %v7902
        %8077 = vst.msk [vmem:[#allocation3 + $0x84] sm:$0xf] %vm4931, %v7904
        %8078 = vst.msk [vmem:[#allocation3 + $0x98] sm:$0xf] %vm4931, %v7906
        %8079 = vst.msk [vmem:[#allocation3 + $0xac] sm:$0xf] %vm4931, %v7908
        %8080 = vst.msk [vmem:[#allocation3 + $0xc0] sm:$0xf] %vm4931, %v7910
        %8081 = vst.msk [vmem:[#allocation3 + $0xd4] sm:$0xf] %vm4931, %v7912
        %8082 = vst.msk [vmem:[#allocation3 + $0xe8] sm:$0xf] %vm4931, %v7914
        %8083 = vst.msk [vmem:[#allocation3 + $0xfc] sm:$0xf] %vm4931, %v7916
        %8084 = vst.msk [vmem:[#allocation3 + $0x110] sm:$0xf] %vm4931, %v7918
        %8085 = vst.msk [vmem:[#allocation3 + $0x124] sm:$0xf] %vm4931, %v7920
        %8086 = vst.msk [vmem:[#allocation3 + $0x138] sm:$0xf] %vm4931, %v7922
        %8087 = vst.msk [vmem:[#allocation3 + $0x14c] sm:$0xf] %vm4931, %v7924
        %8088 = vst.msk [vmem:[#allocation3 + $0x160] sm:$0xf] %vm4931, %v7926
        %8089 = vst.msk [vmem:[#allocation3 + $0x174] sm:$0xf] %vm4931, %v7928
        %8090 = vst.msk [vmem:[#allocation3 + $0x188] sm:$0xf] %vm4931, %v7930
        %8091 = vst.msk [vmem:[#allocation3 + $0x19c] sm:$0xf] %vm4931, %v7932
        %8092 = vst.msk [vmem:[#allocation3 + $0x1b0] sm:$0xf] %vm4931, %v7934
        %8093 = vst.msk [vmem:[#allocation3 + $0x1c4] sm:$0xf] %vm4931, %v7936
        %8094 = vst.msk [vmem:[#allocation3 + $0x1d8] sm:$0xf] %vm4931, %v7938
        %8095 = vst.msk [vmem:[#allocation3 + $0x1ec] sm:$0xf] %vm4931, %v7940
        %8096 = vst.msk [vmem:[#allocation3 + $0x200] sm:$0xf] %vm4931, %v7942
        %8097 = vst.msk [vmem:[#allocation3 + $0x214] sm:$0xf] %vm4931, %v7944
        %8098 = vst.msk [vmem:[#allocation3 + $0x228] sm:$0xf] %vm4931, %v7946
        %8099 = vst.msk [vmem:[#allocation3 + $0x23c] sm:$0xf] %vm4931, %v7948
        %8100 = vst.msk [vmem:[#allocation3 + $0x250] sm:$0xf] %vm4931, %v7950
        %8101 = vst.msk [vmem:[#allocation3 + $0x264] sm:$0xf] %vm4931, %v7952
        %8102 = vst.msk [vmem:[#allocation3 + $0x278] sm:$0xf] %vm4931, %v7954
        %8103 = vst.msk [vmem:[#allocation3 + $0x28c] sm:$0xf] %vm4931, %v7956
        %8104 = vst.msk [vmem:[#allocation3 + $0x2a0] sm:$0xf] %vm4931, %v7958
        %8105 = vst.msk [vmem:[#allocation3 + $0x2b4] sm:$0xf] %vm4931, %v7960
        %8106 = vst.msk [vmem:[#allocation3 + $0x2c8] sm:$0xf] %vm4931, %v7962
        %8107 = vst.msk [vmem:[#allocation3 + $0x2dc] sm:$0xf] %vm4931, %v7964
        %8108 = vst.msk [vmem:[#allocation3 + $0x2f0] sm:$0xf] %vm4931, %v7966
        %8109 = vst.msk [vmem:[#allocation3 + $0x304] sm:$0xf] %vm4931, %v7968
        %8110 = vst.msk [vmem:[#allocation3 + $0x318] sm:$0xf] %vm4931, %v7970
        %8111 = vst.msk [vmem:[#allocation3 + $0x32c] sm:$0xf] %vm4931, %v7972
        %8112 = vst.msk [vmem:[#allocation3 + $0x340] sm:$0xf] %vm4931, %v7974
        %8113 = vst.msk [vmem:[#allocation3 + $0x354] sm:$0xf] %vm4931, %v7976
        %8114 = vst.msk [vmem:[#allocation3 + $0x368] sm:$0xf] %vm4931, %v7978
        %8115 = vst.msk [vmem:[#allocation3 + $0x37c] sm:$0xf] %vm4931, %v7980
        %8116 = vst.msk [vmem:[#allocation3 + $0x390] sm:$0xf] %vm4931, %v7982
        %8117 = vst.msk [vmem:[#allocation3 + $0x3a4] sm:$0xf] %vm4931, %v7984
        %8118 = vst.msk [vmem:[#allocation3 + $0x3b8] sm:$0xf] %vm4931, %v7986
        %8119 = vst.msk [vmem:[#allocation3 + $0x3cc] sm:$0xf] %vm4931, %v7988
        %8120 = vst.msk [vmem:[#allocation3 + $0x3e0] sm:$0xf] %vm4931, %v7990
        %8121 = vst.msk [vmem:[#allocation3 + $0x3f4] sm:$0xf] %vm4931, %v7992
        %8122 = vst.msk [vmem:[#allocation3 + $0x408] sm:$0xf] %vm4931, %v7994
        %8123 = vst.msk [vmem:[#allocation3 + $0x41c] sm:$0xf] %vm4931, %v7996
        %8124 = vst.msk [vmem:[#allocation3 + $0x430] sm:$0xf] %vm4931, %v7998
        %8125 = vst.msk [vmem:[#allocation3 + $0x444] sm:$0xf] %vm4931, %v8000
        %8126 = vst.msk [vmem:[#allocation3 + $0x458] sm:$0xf] %vm4931, %v8002
        %8127 = vst.msk [vmem:[#allocation3 + $0x46c] sm:$0xf] %vm4931, %v8004
        %8128 = vst.msk [vmem:[#allocation3 + $0x480] sm:$0xf] %vm4931, %v8006
        %8129 = vst.msk [vmem:[#allocation3 + $0x494] sm:$0xf] %vm4931, %v8008
        %8130 = vst.msk [vmem:[#allocation3 + $0x4a8] sm:$0xf] %vm4931, %v8010
        %v8131 = vld [vmem:[#allocation2 + $0x18] sm:$0xe]
        %v8132 = vld [vmem:[#allocation2 + $0x1c] sm:$0xf]
        %v8133 = vld [vmem:[#allocation2 + $0x20] sm:$0xf]
        %v8134 = vld [vmem:[#allocation2 + $0x24] sm:$0xf]
        %v8135 = vld [vmem:[#allocation2 + $0x28] sm:$0xf]
        %v8136 = vld [vmem:[#allocation2 + $0x2c] sm:$0xf]
        %v8137 = vld [vmem:[#allocation2 + $0x30] sm:$0xf]
        %v8138 = vld [vmem:[#allocation2 + $0x34] sm:$0xf]
        %v8139 = vld [vmem:[#allocation2 + $0x38] sm:$0xf]
        %v8140 = vld [vmem:[#allocation2 + $0x3c] sm:$0xf]
        %v8141 = vld [vmem:[#allocation2 + $0x40] sm:$0xf]
        %v8142 = vld [vmem:[#allocation2 + $0x44] sm:$0xf]
        %v8143 = vld [vmem:[#allocation2 + $0x48] sm:$0xf]
        %v8144 = vld [vmem:[#allocation2 + $0x4c] sm:$0xf]
        %v8145 = vld [vmem:[#allocation2 + $0x50] sm:$0xf]
        %v8146 = vld [vmem:[#allocation2 + $0x54] sm:$0xf]
        %v8147 = vld [vmem:[#allocation2 + $0x58] sm:$0xf]
        %v8148 = vld [vmem:[#allocation2 + $0x5c] sm:$0xf]
        %v8149 = vld [vmem:[#allocation2 + $0x60] sm:$0xf]
        %v8150 = vld [vmem:[#allocation2 + $0x64] sm:$0xf]
        %v8151 = vld [vmem:[#allocation2 + $0x68] sm:$0xf]
        %v8152 = vld [vmem:[#allocation2 + $0x6c] sm:$0xf]
        %v8153 = vld [vmem:[#allocation2 + $0x70] sm:$0xf]
        %v8154 = vld [vmem:[#allocation2 + $0x74] sm:$0xf]
        %v8155 = vld [vmem:[#allocation2 + $0x78] sm:$0xf]
        %v8156 = vld [vmem:[#allocation2 + $0x7c] sm:$0xf]
        %v8157 = vld [vmem:[#allocation2 + $0x80] sm:$0xf]
        %v8158 = vld [vmem:[#allocation2 + $0x84] sm:$0xf]
        %v8159 = vld [vmem:[#allocation2 + $0x88] sm:$0xf]
        %v8160 = vld [vmem:[#allocation2 + $0x8c] sm:$0xf]
        %v8161 = vld [vmem:[#allocation2 + $0x90] sm:$0xf]
        %v8162 = vld [vmem:[#allocation2 + $0x94] sm:$0xf]
        %v8163 = vld [vmem:[#allocation2 + $0x98] sm:$0xf]
        %v8164 = vld [vmem:[#allocation2 + $0x9c] sm:$0xf]
        %v8165 = vld [vmem:[#allocation2 + $0xa0] sm:$0xf]
        %v8166 = vld [vmem:[#allocation2 + $0xa4] sm:$0xf]
        %v8167 = vld [vmem:[#allocation2 + $0xa8] sm:$0xf]
        %v8168 = vld [vmem:[#allocation2 + $0xac] sm:$0xf]
        %v8169 = vld [vmem:[#allocation2 + $0xb0] sm:$0xf]
        %v8170 = vld [vmem:[#allocation2 + $0xb4] sm:$0xf]
        %v8171 = vld [vmem:[#allocation2 + $0xb8] sm:$0xf]
        %v8172 = vld [vmem:[#allocation2 + $0xbc] sm:$0xf]
        %v8173 = vld [vmem:[#allocation2 + $0xc0] sm:$0xf]
        %v8174 = vld [vmem:[#allocation2 + $0xc4] sm:$0xf]
        %v8175 = vld [vmem:[#allocation2 + $0xc8] sm:$0xf]
        %v8176 = vld [vmem:[#allocation2 + $0xcc] sm:$0xf]
        %v8177 = vld [vmem:[#allocation2 + $0xd0] sm:$0xf]
        %v8178 = vld [vmem:[#allocation2 + $0xd4] sm:$0xf]
        %v8179 = vld [vmem:[#allocation2 + $0xd8] sm:$0xf]
        %v8180 = vld [vmem:[#allocation2 + $0xdc] sm:$0xf]
        %v8181 = vld [vmem:[#allocation2 + $0xe0] sm:$0xf]
        %v8182 = vld [vmem:[#allocation2 + $0xe4] sm:$0xf]
        %v8183 = vld [vmem:[#allocation2 + $0xe8] sm:$0xf]
        %v8184 = vld [vmem:[#allocation2 + $0xec] sm:$0xf]
        %v8185 = vld [vmem:[#allocation2 + $0xf0] sm:$0xf]
        %v8186 = vld [vmem:[#allocation2 + $0xf4] sm:$0xf]
        %v8187 = vld [vmem:[#allocation2 + $0xf8] sm:$0xf]
        %v8188 = vld [vmem:[#allocation2 + $0xfc] sm:$0xf]
        %v8189 = vld [vmem:[#allocation2 + $0x100] sm:$0xf]
        %v8190 = vld [vmem:[#allocation2 + $0x104] sm:$0xf]
        %v8191 = vld [vmem:[#allocation2 + $0x108] sm:$0x1]
        %v8253 = vrot.slane %v8131, 5
        %v8254 = vrot.slane %v8253, 4
        %v8255 = vrot.slane %v8132, 5
        %v8256 = vsel %vm5116, %v8254, %v8255
        %v8257 = vrot.slane %v8255, 4
        %v8258 = vrot.slane %v8133, 5
        %v8259 = vsel %vm5116, %v8257, %v8258
        %v8260 = vrot.slane %v8258, 4
        %v8261 = vrot.slane %v8134, 5
        %v8262 = vsel %vm5116, %v8260, %v8261
        %v8263 = vrot.slane %v8261, 4
        %v8264 = vrot.slane %v8135, 5
        %v8265 = vsel %vm5116, %v8263, %v8264
        %v8266 = vrot.slane %v8264, 4
        %v8267 = vrot.slane %v8136, 5
        %v8268 = vsel %vm5116, %v8266, %v8267
        %v8269 = vrot.slane %v8267, 4
        %v8270 = vrot.slane %v8137, 5
        %v8271 = vsel %vm5116, %v8269, %v8270
        %v8272 = vrot.slane %v8270, 4
        %v8273 = vrot.slane %v8138, 5
        %v8274 = vsel %vm5116, %v8272, %v8273
        %v8275 = vrot.slane %v8273, 4
        %v8276 = vrot.slane %v8139, 5
        %v8277 = vsel %vm5116, %v8275, %v8276
        %v8278 = vrot.slane %v8276, 4
        %v8279 = vrot.slane %v8140, 5
        %v8280 = vsel %vm5116, %v8278, %v8279
        %v8281 = vrot.slane %v8279, 4
        %v8282 = vrot.slane %v8141, 5
        %v8283 = vsel %vm5116, %v8281, %v8282
        %v8284 = vrot.slane %v8282, 4
        %v8285 = vrot.slane %v8142, 5
        %v8286 = vsel %vm5116, %v8284, %v8285
        %v8287 = vrot.slane %v8285, 4
        %v8288 = vrot.slane %v8143, 5
        %v8289 = vsel %vm5116, %v8287, %v8288
        %v8290 = vrot.slane %v8288, 4
        %v8291 = vrot.slane %v8144, 5
        %v8292 = vsel %vm5116, %v8290, %v8291
        %v8293 = vrot.slane %v8291, 4
        %v8294 = vrot.slane %v8145, 5
        %v8295 = vsel %vm5116, %v8293, %v8294
        %v8296 = vrot.slane %v8294, 4
        %v8297 = vrot.slane %v8146, 5
        %v8298 = vsel %vm5116, %v8296, %v8297
        %v8299 = vrot.slane %v8297, 4
        %v8300 = vrot.slane %v8147, 5
        %v8301 = vsel %vm5116, %v8299, %v8300
        %v8302 = vrot.slane %v8300, 4
        %v8303 = vrot.slane %v8148, 5
        %v8304 = vsel %vm5116, %v8302, %v8303
        %v8305 = vrot.slane %v8303, 4
        %v8306 = vrot.slane %v8149, 5
        %v8307 = vsel %vm5116, %v8305, %v8306
        %v8308 = vrot.slane %v8306, 4
        %v8309 = vrot.slane %v8150, 5
        %v8310 = vsel %vm5116, %v8308, %v8309
        %v8311 = vrot.slane %v8309, 4
        %v8312 = vrot.slane %v8151, 5
        %v8313 = vsel %vm5116, %v8311, %v8312
        %v8314 = vrot.slane %v8312, 4
        %v8315 = vrot.slane %v8152, 5
        %v8316 = vsel %vm5116, %v8314, %v8315
        %v8317 = vrot.slane %v8315, 4
        %v8318 = vrot.slane %v8153, 5
        %v8319 = vsel %vm5116, %v8317, %v8318
        %v8320 = vrot.slane %v8318, 4
        %v8321 = vrot.slane %v8154, 5
        %v8322 = vsel %vm5116, %v8320, %v8321
        %v8323 = vrot.slane %v8321, 4
        %v8324 = vrot.slane %v8155, 5
        %v8325 = vsel %vm5116, %v8323, %v8324
        %v8326 = vrot.slane %v8324, 4
        %v8327 = vrot.slane %v8156, 5
        %v8328 = vsel %vm5116, %v8326, %v8327
        %v8329 = vrot.slane %v8327, 4
        %v8330 = vrot.slane %v8157, 5
        %v8331 = vsel %vm5116, %v8329, %v8330
        %v8332 = vrot.slane %v8330, 4
        %v8333 = vrot.slane %v8158, 5
        %v8334 = vsel %vm5116, %v8332, %v8333
        %v8335 = vrot.slane %v8333, 4
        %v8336 = vrot.slane %v8159, 5
        %v8337 = vsel %vm5116, %v8335, %v8336
        %v8338 = vrot.slane %v8336, 4
        %v8339 = vrot.slane %v8160, 5
        %v8340 = vsel %vm5116, %v8338, %v8339
        %v8341 = vrot.slane %v8339, 4
        %v8342 = vrot.slane %v8161, 5
        %v8343 = vsel %vm5116, %v8341, %v8342
        %v8344 = vrot.slane %v8342, 4
        %v8345 = vrot.slane %v8162, 5
        %v8346 = vsel %vm5116, %v8344, %v8345
        %v8347 = vrot.slane %v8345, 4
        %v8348 = vrot.slane %v8163, 5
        %v8349 = vsel %vm5116, %v8347, %v8348
        %v8350 = vrot.slane %v8348, 4
        %v8351 = vrot.slane %v8164, 5
        %v8352 = vsel %vm5116, %v8350, %v8351
        %v8353 = vrot.slane %v8351, 4
        %v8354 = vrot.slane %v8165, 5
        %v8355 = vsel %vm5116, %v8353, %v8354
        %v8356 = vrot.slane %v8354, 4
        %v8357 = vrot.slane %v8166, 5
        %v8358 = vsel %vm5116, %v8356, %v8357
        %v8359 = vrot.slane %v8357, 4
        %v8360 = vrot.slane %v8167, 5
        %v8361 = vsel %vm5116, %v8359, %v8360
        %v8362 = vrot.slane %v8360, 4
        %v8363 = vrot.slane %v8168, 5
        %v8364 = vsel %vm5116, %v8362, %v8363
        %v8365 = vrot.slane %v8363, 4
        %v8366 = vrot.slane %v8169, 5
        %v8367 = vsel %vm5116, %v8365, %v8366
        %v8368 = vrot.slane %v8366, 4
        %v8369 = vrot.slane %v8170, 5
        %v8370 = vsel %vm5116, %v8368, %v8369
        %v8371 = vrot.slane %v8369, 4
        %v8372 = vrot.slane %v8171, 5
        %v8373 = vsel %vm5116, %v8371, %v8372
        %v8374 = vrot.slane %v8372, 4
        %v8375 = vrot.slane %v8172, 5
        %v8376 = vsel %vm5116, %v8374, %v8375
        %v8377 = vrot.slane %v8375, 4
        %v8378 = vrot.slane %v8173, 5
        %v8379 = vsel %vm5116, %v8377, %v8378
        %v8380 = vrot.slane %v8378, 4
        %v8381 = vrot.slane %v8174, 5
        %v8382 = vsel %vm5116, %v8380, %v8381
        %v8383 = vrot.slane %v8381, 4
        %v8384 = vrot.slane %v8175, 5
        %v8385 = vsel %vm5116, %v8383, %v8384
        %v8386 = vrot.slane %v8384, 4
        %v8387 = vrot.slane %v8176, 5
        %v8388 = vsel %vm5116, %v8386, %v8387
        %v8389 = vrot.slane %v8387, 4
        %v8390 = vrot.slane %v8177, 5
        %v8391 = vsel %vm5116, %v8389, %v8390
        %v8392 = vrot.slane %v8390, 4
        %v8393 = vrot.slane %v8178, 5
        %v8394 = vsel %vm5116, %v8392, %v8393
        %v8395 = vrot.slane %v8393, 4
        %v8396 = vrot.slane %v8179, 5
        %v8397 = vsel %vm5116, %v8395, %v8396
        %v8398 = vrot.slane %v8396, 4
        %v8399 = vrot.slane %v8180, 5
        %v8400 = vsel %vm5116, %v8398, %v8399
        %v8401 = vrot.slane %v8399, 4
        %v8402 = vrot.slane %v8181, 5
        %v8403 = vsel %vm5116, %v8401, %v8402
        %v8404 = vrot.slane %v8402, 4
        %v8405 = vrot.slane %v8182, 5
        %v8406 = vsel %vm5116, %v8404, %v8405
        %v8407 = vrot.slane %v8405, 4
        %v8408 = vrot.slane %v8183, 5
        %v8409 = vsel %vm5116, %v8407, %v8408
        %v8410 = vrot.slane %v8408, 4
        %v8411 = vrot.slane %v8184, 5
        %v8412 = vsel %vm5116, %v8410, %v8411
        %v8413 = vrot.slane %v8411, 4
        %v8414 = vrot.slane %v8185, 5
        %v8415 = vsel %vm5116, %v8413, %v8414
        %v8416 = vrot.slane %v8414, 4
        %v8417 = vrot.slane %v8186, 5
        %v8418 = vsel %vm5116, %v8416, %v8417
        %v8419 = vrot.slane %v8417, 4
        %v8420 = vrot.slane %v8187, 5
        %v8421 = vsel %vm5116, %v8419, %v8420
        %v8422 = vrot.slane %v8420, 4
        %v8423 = vrot.slane %v8188, 5
        %v8424 = vsel %vm5116, %v8422, %v8423
        %v8425 = vrot.slane %v8423, 4
        %v8426 = vrot.slane %v8189, 5
        %v8427 = vsel %vm5116, %v8425, %v8426
        %v8428 = vrot.slane %v8426, 4
        %v8429 = vrot.slane %v8190, 5
        %v8430 = vsel %vm5116, %v8428, %v8429
        %v8431 = vrot.slane %v8429, 4
        %v8432 = vrot.slane %v8191, 5
        %v8433 = vsel %vm5116, %v8431, %v8432
        %8494 = vst.msk [vmem:[#allocation3 + $0x10] sm:$0xf] %vm281, %v8256
        %8495 = vst.msk [vmem:[#allocation3 + $0x24] sm:$0xf] %vm281, %v8259
        %8496 = vst.msk [vmem:[#allocation3 + $0x38] sm:$0xf] %vm281, %v8262
        %8497 = vst.msk [vmem:[#allocation3 + $0x4c] sm:$0xf] %vm281, %v8265
        %8498 = vst.msk [vmem:[#allocation3 + $0x60] sm:$0xf] %vm281, %v8268
        %8499 = vst.msk [vmem:[#allocation3 + $0x74] sm:$0xf] %vm281, %v8271
        %8500 = vst.msk [vmem:[#allocation3 + $0x88] sm:$0xf] %vm281, %v8274
        %8501 = vst.msk [vmem:[#allocation3 + $0x9c] sm:$0xf] %vm281, %v8277
        %8502 = vst.msk [vmem:[#allocation3 + $0xb0] sm:$0xf] %vm281, %v8280
        %8503 = vst.msk [vmem:[#allocation3 + $0xc4] sm:$0xf] %vm281, %v8283
        %8504 = vst.msk [vmem:[#allocation3 + $0xd8] sm:$0xf] %vm281, %v8286
        %8505 = vst.msk [vmem:[#allocation3 + $0xec] sm:$0xf] %vm281, %v8289
        %8506 = vst.msk [vmem:[#allocation3 + $0x100] sm:$0xf] %vm281, %v8292
        %8507 = vst.msk [vmem:[#allocation3 + $0x114] sm:$0xf] %vm281, %v8295
        %8508 = vst.msk [vmem:[#allocation3 + $0x128] sm:$0xf] %vm281, %v8298
        %8509 = vst.msk [vmem:[#allocation3 + $0x13c] sm:$0xf] %vm281, %v8301
        %8510 = vst.msk [vmem:[#allocation3 + $0x150] sm:$0xf] %vm281, %v8304
        %8511 = vst.msk [vmem:[#allocation3 + $0x164] sm:$0xf] %vm281, %v8307
        %8512 = vst.msk [vmem:[#allocation3 + $0x178] sm:$0xf] %vm281, %v8310
        %8513 = vst.msk [vmem:[#allocation3 + $0x18c] sm:$0xf] %vm281, %v8313
        %8514 = vst.msk [vmem:[#allocation3 + $0x1a0] sm:$0xf] %vm281, %v8316
        %8515 = vst.msk [vmem:[#allocation3 + $0x1b4] sm:$0xf] %vm281, %v8319
        %8516 = vst.msk [vmem:[#allocation3 + $0x1c8] sm:$0xf] %vm281, %v8322
        %8517 = vst.msk [vmem:[#allocation3 + $0x1dc] sm:$0xf] %vm281, %v8325
        %8518 = vst.msk [vmem:[#allocation3 + $0x1f0] sm:$0xf] %vm281, %v8328
        %8519 = vst.msk [vmem:[#allocation3 + $0x204] sm:$0xf] %vm281, %v8331
        %8520 = vst.msk [vmem:[#allocation3 + $0x218] sm:$0xf] %vm281, %v8334
        %8521 = vst.msk [vmem:[#allocation3 + $0x22c] sm:$0xf] %vm281, %v8337
        %8522 = vst.msk [vmem:[#allocation3 + $0x240] sm:$0xf] %vm281, %v8340
        %8523 = vst.msk [vmem:[#allocation3 + $0x254] sm:$0xf] %vm281, %v8343
        %8524 = vst.msk [vmem:[#allocation3 + $0x268] sm:$0xf] %vm281, %v8346
        %8525 = vst.msk [vmem:[#allocation3 + $0x27c] sm:$0xf] %vm281, %v8349
        %8526 = vst.msk [vmem:[#allocation3 + $0x290] sm:$0xf] %vm281, %v8352
        %8527 = vst.msk [vmem:[#allocation3 + $0x2a4] sm:$0xf] %vm281, %v8355
        %8528 = vst.msk [vmem:[#allocation3 + $0x2b8] sm:$0xf] %vm281, %v8358
        %8529 = vst.msk [vmem:[#allocation3 + $0x2cc] sm:$0xf] %vm281, %v8361
        %8530 = vst.msk [vmem:[#allocation3 + $0x2e0] sm:$0xf] %vm281, %v8364
        %8531 = vst.msk [vmem:[#allocation3 + $0x2f4] sm:$0xf] %vm281, %v8367
        %8532 = vst.msk [vmem:[#allocation3 + $0x308] sm:$0xf] %vm281, %v8370
        %8533 = vst.msk [vmem:[#allocation3 + $0x31c] sm:$0xf] %vm281, %v8373
        %8534 = vst.msk [vmem:[#allocation3 + $0x330] sm:$0xf] %vm281, %v8376
        %8535 = vst.msk [vmem:[#allocation3 + $0x344] sm:$0xf] %vm281, %v8379
        %8536 = vst.msk [vmem:[#allocation3 + $0x358] sm:$0xf] %vm281, %v8382
        %8537 = vst.msk [vmem:[#allocation3 + $0x36c] sm:$0xf] %vm281, %v8385
        %8538 = vst.msk [vmem:[#allocation3 + $0x380] sm:$0xf] %vm281, %v8388
        %8539 = vst.msk [vmem:[#allocation3 + $0x394] sm:$0xf] %vm281, %v8391
        %8540 = vst.msk [vmem:[#allocation3 + $0x3a8] sm:$0xf] %vm281, %v8394
        %8541 = vst.msk [vmem:[#allocation3 + $0x3bc] sm:$0xf] %vm281, %v8397
        %8542 = vst.msk [vmem:[#allocation3 + $0x3d0] sm:$0xf] %vm281, %v8400
        %8543 = vst.msk [vmem:[#allocation3 + $0x3e4] sm:$0xf] %vm281, %v8403
        %8544 = vst.msk [vmem:[#allocation3 + $0x3f8] sm:$0xf] %vm281, %v8406
        %8545 = vst.msk [vmem:[#allocation3 + $0x40c] sm:$0xf] %vm281, %v8409
        %8546 = vst.msk [vmem:[#allocation3 + $0x420] sm:$0xf] %vm281, %v8412
        %8547 = vst.msk [vmem:[#allocation3 + $0x434] sm:$0xf] %vm281, %v8415
        %8548 = vst.msk [vmem:[#allocation3 + $0x448] sm:$0xf] %vm281, %v8418
        %8549 = vst.msk [vmem:[#allocation3 + $0x45c] sm:$0xf] %vm281, %v8421
        %8550 = vst.msk [vmem:[#allocation3 + $0x470] sm:$0xf] %vm281, %v8424
        %8551 = vst.msk [vmem:[#allocation3 + $0x484] sm:$0xf] %vm281, %v8427
        %8552 = vst.msk [vmem:[#allocation3 + $0x498] sm:$0xf] %vm281, %v8430
        %8553 = vst.msk [vmem:[#allocation3 + $0x4ac] sm:$0xf] %vm281, %v8433
        %v8554 = vld [vmem:[#allocation3] sm:$0xff]
        %v8555 = vld [vmem:[#allocation3 + $0x8] sm:$0xff]
        %v8556 = vld [vmem:[#allocation3 + $0x10] sm:$0xf]
        %v8557 = vld [vmem:[#allocation3 + $0x14] sm:$0xff]
        %v8558 = vld [vmem:[#allocation3 + $0x1c] sm:$0xff]
        %v8559 = vld [vmem:[#allocation3 + $0x24] sm:$0xf]
        %v8560 = vld [vmem:[#allocation3 + $0x28] sm:$0xff]
        %v8561 = vld [vmem:[#allocation3 + $0x30] sm:$0xff]
        %v8562 = vld [vmem:[#allocation3 + $0x38] sm:$0xf]
        %v8563 = vld [vmem:[#allocation3 + $0x3c] sm:$0xff]
        %v8564 = vld [vmem:[#allocation3 + $0x44] sm:$0xff]
        %v8565 = vld [vmem:[#allocation3 + $0x4c] sm:$0xf]
        %v8566 = vld [vmem:[#allocation3 + $0x50] sm:$0xff]
        %v8567 = vld [vmem:[#allocation3 + $0x58] sm:$0xff]
        %v8568 = vld [vmem:[#allocation3 + $0x60] sm:$0xf]
        %v8569 = vld [vmem:[#allocation3 + $0x64] sm:$0xff]
        %v8570 = vld [vmem:[#allocation3 + $0x6c] sm:$0xff]
        %v8571 = vld [vmem:[#allocation3 + $0x74] sm:$0xf]
        %v8572 = vld [vmem:[#allocation3 + $0x78] sm:$0xff]
        %v8573 = vld [vmem:[#allocation3 + $0x80] sm:$0xff]
        %v8574 = vld [vmem:[#allocation3 + $0x88] sm:$0xf]
        %v8575 = vld [vmem:[#allocation3 + $0x8c] sm:$0xff]
        %v8576 = vld [vmem:[#allocation3 + $0x94] sm:$0xff]
        %v8577 = vld [vmem:[#allocation3 + $0x9c] sm:$0xf]
        %v8578 = vld [vmem:[#allocation3 + $0xa0] sm:$0xff]
        %v8579 = vld [vmem:[#allocation3 + $0xa8] sm:$0xff]
        %v8580 = vld [vmem:[#allocation3 + $0xb0] sm:$0xf]
        %v8581 = vld [vmem:[#allocation3 + $0xb4] sm:$0xff]
        %v8582 = vld [vmem:[#allocation3 + $0xbc] sm:$0xff]
        %v8583 = vld [vmem:[#allocation3 + $0xc4] sm:$0xf]
        %v8584 = vld [vmem:[#allocation3 + $0xc8] sm:$0xff]
        %v8585 = vld [vmem:[#allocation3 + $0xd0] sm:$0xff]
        %v8586 = vld [vmem:[#allocation3 + $0xd8] sm:$0xf]
        %v8587 = vld [vmem:[#allocation3 + $0xdc] sm:$0xff]
        %v8588 = vld [vmem:[#allocation3 + $0xe4] sm:$0xff]
        %v8589 = vld [vmem:[#allocation3 + $0xec] sm:$0xf]
        %v8590 = vld [vmem:[#allocation3 + $0xf0] sm:$0xff]
        %v8591 = vld [vmem:[#allocation3 + $0xf8] sm:$0xff]
        %v8592 = vld [vmem:[#allocation3 + $0x100] sm:$0xf]
        %v8593 = vld [vmem:[#allocation3 + $0x104] sm:$0xff]
        %v8594 = vld [vmem:[#allocation3 + $0x10c] sm:$0xff]
        %v8595 = vld [vmem:[#allocation3 + $0x114] sm:$0xf]
        %v8596 = vld [vmem:[#allocation3 + $0x118] sm:$0xff]
        %v8597 = vld [vmem:[#allocation3 + $0x120] sm:$0xff]
        %v8598 = vld [vmem:[#allocation3 + $0x128] sm:$0xf]
        %v8599 = vld [vmem:[#allocation3 + $0x12c] sm:$0xff]
        %v8600 = vld [vmem:[#allocation3 + $0x134] sm:$0xff]
        %v8601 = vld [vmem:[#allocation3 + $0x13c] sm:$0xf]
        %v8602 = vld [vmem:[#allocation3 + $0x140] sm:$0xff]
        %v8603 = vld [vmem:[#allocation3 + $0x148] sm:$0xff]
        %v8604 = vld [vmem:[#allocation3 + $0x150] sm:$0xf]
        %v8605 = vld [vmem:[#allocation3 + $0x154] sm:$0xff]
        %v8606 = vld [vmem:[#allocation3 + $0x15c] sm:$0xff]
        %v8607 = vld [vmem:[#allocation3 + $0x164] sm:$0xf]
        %v8608 = vld [vmem:[#allocation3 + $0x168] sm:$0xff]
        %v8609 = vld [vmem:[#allocation3 + $0x170] sm:$0xff]
        %v8610 = vld [vmem:[#allocation3 + $0x178] sm:$0xf]
        %v8611 = vld [vmem:[#allocation3 + $0x17c] sm:$0xff]
        %v8612 = vld [vmem:[#allocation3 + $0x184] sm:$0xff]
        %v8613 = vld [vmem:[#allocation3 + $0x18c] sm:$0xf]
        %v8614 = vld [vmem:[#allocation3 + $0x190] sm:$0xff]
        %v8615 = vld [vmem:[#allocation3 + $0x198] sm:$0xff]
        %v8616 = vld [vmem:[#allocation3 + $0x1a0] sm:$0xf]
        %v8617 = vld [vmem:[#allocation3 + $0x1a4] sm:$0xff]
        %v8618 = vld [vmem:[#allocation3 + $0x1ac] sm:$0xff]
        %v8619 = vld [vmem:[#allocation3 + $0x1b4] sm:$0xf]
        %v8620 = vld [vmem:[#allocation3 + $0x1b8] sm:$0xff]
        %v8621 = vld [vmem:[#allocation3 + $0x1c0] sm:$0xff]
        %v8622 = vld [vmem:[#allocation3 + $0x1c8] sm:$0xf]
        %v8623 = vld [vmem:[#allocation3 + $0x1cc] sm:$0xff]
        %v8624 = vld [vmem:[#allocation3 + $0x1d4] sm:$0xff]
        %v8625 = vld [vmem:[#allocation3 + $0x1dc] sm:$0xf]
        %v8626 = vld [vmem:[#allocation3 + $0x1e0] sm:$0xff]
        %v8627 = vld [vmem:[#allocation3 + $0x1e8] sm:$0xff]
        %v8628 = vld [vmem:[#allocation3 + $0x1f0] sm:$0xf]
        %v8629 = vld [vmem:[#allocation3 + $0x1f4] sm:$0xff]
        %v8630 = vld [vmem:[#allocation3 + $0x1fc] sm:$0xff]
        %v8631 = vld [vmem:[#allocation3 + $0x204] sm:$0xf]
        %v8632 = vld [vmem:[#allocation3 + $0x208] sm:$0xff]
        %v8633 = vld [vmem:[#allocation3 + $0x210] sm:$0xff]
        %v8634 = vld [vmem:[#allocation3 + $0x218] sm:$0xf]
        %v8635 = vld [vmem:[#allocation3 + $0x21c] sm:$0xff]
        %v8636 = vld [vmem:[#allocation3 + $0x224] sm:$0xff]
        %v8637 = vld [vmem:[#allocation3 + $0x22c] sm:$0xf]
        %v8638 = vld [vmem:[#allocation3 + $0x230] sm:$0xff]
        %v8639 = vld [vmem:[#allocation3 + $0x238] sm:$0xff]
        %v8640 = vld [vmem:[#allocation3 + $0x240] sm:$0xf]
        %v8641 = vld [vmem:[#allocation3 + $0x244] sm:$0xff]
        %v8642 = vld [vmem:[#allocation3 + $0x24c] sm:$0xff]
        %v8643 = vld [vmem:[#allocation3 + $0x254] sm:$0xf]
        %v8644 = vld [vmem:[#allocation3 + $0x258] sm:$0xff]
        %v8645 = vld [vmem:[#allocation3 + $0x260] sm:$0xff]
        %v8646 = vld [vmem:[#allocation3 + $0x268] sm:$0xf]
        %v8647 = vld [vmem:[#allocation3 + $0x26c] sm:$0xff]
        %v8648 = vld [vmem:[#allocation3 + $0x274] sm:$0xff]
        %v8649 = vld [vmem:[#allocation3 + $0x27c] sm:$0xf]
        %v8650 = vld [vmem:[#allocation3 + $0x280] sm:$0xff]
        %v8651 = vld [vmem:[#allocation3 + $0x288] sm:$0xff]
        %v8652 = vld [vmem:[#allocation3 + $0x290] sm:$0xf]
        %v8653 = vld [vmem:[#allocation3 + $0x294] sm:$0xff]
        %v8654 = vld [vmem:[#allocation3 + $0x29c] sm:$0xff]
        %v8655 = vld [vmem:[#allocation3 + $0x2a4] sm:$0xf]
        %v8656 = vld [vmem:[#allocation3 + $0x2a8] sm:$0xff]
        %v8657 = vld [vmem:[#allocation3 + $0x2b0] sm:$0xff]
        %v8658 = vld [vmem:[#allocation3 + $0x2b8] sm:$0xf]
        %v8659 = vld [vmem:[#allocation3 + $0x2bc] sm:$0xff]
        %v8660 = vld [vmem:[#allocation3 + $0x2c4] sm:$0xff]
        %v8661 = vld [vmem:[#allocation3 + $0x2cc] sm:$0xf]
        %v8662 = vld [vmem:[#allocation3 + $0x2d0] sm:$0xff]
        %v8663 = vld [vmem:[#allocation3 + $0x2d8] sm:$0xff]
        %v8664 = vld [vmem:[#allocation3 + $0x2e0] sm:$0xf]
        %v8665 = vld [vmem:[#allocation3 + $0x2e4] sm:$0xff]
        %v8666 = vld [vmem:[#allocation3 + $0x2ec] sm:$0xff]
        %v8667 = vld [vmem:[#allocation3 + $0x2f4] sm:$0xf]
        %v8668 = vld [vmem:[#allocation3 + $0x2f8] sm:$0xff]
        %v8669 = vld [vmem:[#allocation3 + $0x300] sm:$0xff]
        %v8670 = vld [vmem:[#allocation3 + $0x308] sm:$0xf]
        %v8671 = vld [vmem:[#allocation3 + $0x30c] sm:$0xff]
        %v8672 = vld [vmem:[#allocation3 + $0x314] sm:$0xff]
        %v8673 = vld [vmem:[#allocation3 + $0x31c] sm:$0xf]
        %v8674 = vld [vmem:[#allocation3 + $0x320] sm:$0xff]
        %v8675 = vld [vmem:[#allocation3 + $0x328] sm:$0xff]
        %v8676 = vld [vmem:[#allocation3 + $0x330] sm:$0xf]
        %v8677 = vld [vmem:[#allocation3 + $0x334] sm:$0xff]
        %v8678 = vld [vmem:[#allocation3 + $0x33c] sm:$0xff]
        %v8679 = vld [vmem:[#allocation3 + $0x344] sm:$0xf]
        %v8680 = vld [vmem:[#allocation3 + $0x348] sm:$0xff]
        %v8681 = vld [vmem:[#allocation3 + $0x350] sm:$0xff]
        %v8682 = vld [vmem:[#allocation3 + $0x358] sm:$0xf]
        %v8683 = vld [vmem:[#allocation3 + $0x35c] sm:$0xff]
        %v8684 = vld [vmem:[#allocation3 + $0x364] sm:$0xff]
        %v8685 = vld [vmem:[#allocation3 + $0x36c] sm:$0xf]
        %v8686 = vld [vmem:[#allocation3 + $0x370] sm:$0xff]
        %v8687 = vld [vmem:[#allocation3 + $0x378] sm:$0xff]
        %v8688 = vld [vmem:[#allocation3 + $0x380] sm:$0xf]
        %v8689 = vld [vmem:[#allocation3 + $0x384] sm:$0xff]
        %v8690 = vld [vmem:[#allocation3 + $0x38c] sm:$0xff]
        %v8691 = vld [vmem:[#allocation3 + $0x394] sm:$0xf]
        %v8692 = vld [vmem:[#allocation3 + $0x398] sm:$0xff]
        %v8693 = vld [vmem:[#allocation3 + $0x3a0] sm:$0xff]
        %v8694 = vld [vmem:[#allocation3 + $0x3a8] sm:$0xf]
        %v8695 = vld [vmem:[#allocation3 + $0x3ac] sm:$0xff]
        %v8696 = vld [vmem:[#allocation3 + $0x3b4] sm:$0xff]
        %v8697 = vld [vmem:[#allocation3 + $0x3bc] sm:$0xf]
        %v8698 = vld [vmem:[#allocation3 + $0x3c0] sm:$0xff]
        %v8699 = vld [vmem:[#allocation3 + $0x3c8] sm:$0xff]
        %v8700 = vld [vmem:[#allocation3 + $0x3d0] sm:$0xf]
        %v8701 = vld [vmem:[#allocation3 + $0x3d4] sm:$0xff]
        %v8702 = vld [vmem:[#allocation3 + $0x3dc] sm:$0xff]
        %v8703 = vld [vmem:[#allocation3 + $0x3e4] sm:$0xf]
        %v8704 = vld [vmem:[#allocation3 + $0x3e8] sm:$0xff]
        %v8705 = vld [vmem:[#allocation3 + $0x3f0] sm:$0xff]
        %v8706 = vld [vmem:[#allocation3 + $0x3f8] sm:$0xf]
        %v8707 = vld [vmem:[#allocation3 + $0x3fc] sm:$0xff]
        %v8708 = vld [vmem:[#allocation3 + $0x404] sm:$0xff]
        %v8709 = vld [vmem:[#allocation3 + $0x40c] sm:$0xf]
        %v8710 = vld [vmem:[#allocation3 + $0x410] sm:$0xff]
        %v8711 = vld [vmem:[#allocation3 + $0x418] sm:$0xff]
        %v8712 = vld [vmem:[#allocation3 + $0x420] sm:$0xf]
        %v8713 = vld [vmem:[#allocation3 + $0x424] sm:$0xff]
        %v8714 = vld [vmem:[#allocation3 + $0x42c] sm:$0xff]
        %v8715 = vld [vmem:[#allocation3 + $0x434] sm:$0xf]
        %v8716 = vld [vmem:[#allocation3 + $0x438] sm:$0xff]
        %v8717 = vld [vmem:[#allocation3 + $0x440] sm:$0xff]
        %v8718 = vld [vmem:[#allocation3 + $0x448] sm:$0xf]
        %v8719 = vld [vmem:[#allocation3 + $0x44c] sm:$0xff]
        %v8720 = vld [vmem:[#allocation3 + $0x454] sm:$0xff]
        %v8721 = vld [vmem:[#allocation3 + $0x45c] sm:$0xf]
        %v8722 = vld [vmem:[#allocation3 + $0x460] sm:$0xff]
        %v8723 = vld [vmem:[#allocation3 + $0x468] sm:$0xff]
        %v8724 = vld [vmem:[#allocation3 + $0x470] sm:$0xf]
        %v8725 = vld [vmem:[#allocation3 + $0x474] sm:$0xff]
        %v8726 = vld [vmem:[#allocation3 + $0x47c] sm:$0xff]
        %v8727 = vld [vmem:[#allocation3 + $0x484] sm:$0xf]
        %v8728 = vld [vmem:[#allocation3 + $0x488] sm:$0xff]
        %v8729 = vld [vmem:[#allocation3 + $0x490] sm:$0xff]
        %v8730 = vld [vmem:[#allocation3 + $0x498] sm:$0xf]
        %v8731 = vld [vmem:[#allocation3 + $0x49c] sm:$0xff]
        %v8732 = vld [vmem:[#allocation3 + $0x4a4] sm:$0xff]
        %v8733 = vld [vmem:[#allocation3 + $0x4ac] sm:$0xf]
        %v8734 = vld [vmem:[%s3] sm:$0xf]
        %v8735 = vld [vmem:[%s3 + $0x4] sm:$0xf]
        %v8736 = vld [vmem:[%s3 + $0x8] sm:$0xf]
        %v8737 = vld [vmem:[%s3 + $0xc] sm:$0xf]
        %v8738 = vld [vmem:[%s3 + $0x10] sm:$0xf]
        %v8739 = vld [vmem:[%s3 + $0x14] sm:$0xf]
        %v8740 = vld [vmem:[%s3 + $0x18] sm:$0xf]
        %v8741 = vld [vmem:[%s3 + $0x1c] sm:$0xf]
        %v8742 = vld [vmem:[%s3 + $0x20] sm:$0xf]
        %v8743 = vld [vmem:[%s3 + $0x24] sm:$0xf]
        %v8744 = vld [vmem:[%s3 + $0x28] sm:$0xf]
        %v8745 = vld [vmem:[%s3 + $0x2c] sm:$0xf]
        %v8746 = vld [vmem:[%s3 + $0x30] sm:$0xf]
        %v8747 = vld [vmem:[%s3 + $0x34] sm:$0xf]
        %v8748 = vld [vmem:[%s3 + $0x38] sm:$0xf]
        %v8749 = vld [vmem:[%s3 + $0x3c] sm:$0xf]
        %v8750 = vld [vmem:[%s3 + $0x40] sm:$0xf]
        %v8751 = vld [vmem:[%s3 + $0x44] sm:$0xf]
        %v8752 = vld [vmem:[%s3 + $0x48] sm:$0xf]
        %v8753 = vld [vmem:[%s3 + $0x4c] sm:$0xf]
        %v8754 = vld [vmem:[%s3 + $0x50] sm:$0xf]
        %v8755 = vld [vmem:[%s3 + $0x54] sm:$0xf]
        %v8756 = vld [vmem:[%s3 + $0x58] sm:$0xf]
        %v8757 = vld [vmem:[%s3 + $0x5c] sm:$0xf]
        %v8758 = vld [vmem:[%s3 + $0x60] sm:$0xf]
        %v8759 = vld [vmem:[%s3 + $0x64] sm:$0xf]
        %v8760 = vld [vmem:[%s3 + $0x68] sm:$0xf]
        %v8761 = vld [vmem:[%s3 + $0x6c] sm:$0xf]
        %v8762 = vld [vmem:[%s3 + $0x70] sm:$0xf]
        %v8763 = vld [vmem:[%s3 + $0x74] sm:$0xf]
        %v8764 = vld [vmem:[%s3 + $0x78] sm:$0xf]
        %v8765 = vld [vmem:[%s3 + $0x7c] sm:$0xf]
        %v8766 = vld [vmem:[%s3 + $0x80] sm:$0xf]
        %v8767 = vld [vmem:[%s3 + $0x84] sm:$0xf]
        %v8768 = vld [vmem:[%s3 + $0x88] sm:$0xf]
        %v8769 = vld [vmem:[%s3 + $0x8c] sm:$0xf]
        %v8770 = vld [vmem:[%s3 + $0x90] sm:$0xf]
        %v8771 = vld [vmem:[%s3 + $0x94] sm:$0xf]
        %v8772 = vld [vmem:[%s3 + $0x98] sm:$0xf]
        %v8773 = vld [vmem:[%s3 + $0x9c] sm:$0xf]
        %v8774 = vld [vmem:[%s3 + $0xa0] sm:$0xf]
        %v8775 = vld [vmem:[%s3 + $0xa4] sm:$0xf]
        %v8776 = vld [vmem:[%s3 + $0xa8] sm:$0xf]
        %v8777 = vld [vmem:[%s3 + $0xac] sm:$0xf]
        %v8778 = vld [vmem:[%s3 + $0xb0] sm:$0xf]
        %v8779 = vld [vmem:[%s3 + $0xb4] sm:$0xf]
        %v8780 = vld [vmem:[%s3 + $0xb8] sm:$0xf]
        %v8781 = vld [vmem:[%s3 + $0xbc] sm:$0xf]
        %v8782 = vld [vmem:[%s3 + $0xc0] sm:$0xf]
        %v8783 = vld [vmem:[%s3 + $0xc4] sm:$0xf]
        %v8784 = vld [vmem:[%s3 + $0xc8] sm:$0xf]
        %v8785 = vld [vmem:[%s3 + $0xcc] sm:$0xf]
        %v8786 = vld [vmem:[%s3 + $0xd0] sm:$0xf]
        %v8787 = vld [vmem:[%s3 + $0xd4] sm:$0xf]
        %v8788 = vld [vmem:[%s3 + $0xd8] sm:$0xf]
        %v8789 = vld [vmem:[%s3 + $0xdc] sm:$0xf]
        %v8790 = vld [vmem:[%s3 + $0xe0] sm:$0xf]
        %v8791 = vld [vmem:[%s3 + $0xe4] sm:$0xf]
        %v8792 = vld [vmem:[%s3 + $0xe8] sm:$0xf]
        %v8793 = vld [vmem:[%s3 + $0xec] sm:$0xf]
        %v8794 = vld [vmem:[%s3 + $0xf0] sm:$0xf]
        %v8795 = vld [vmem:[%s3 + $0xf4] sm:$0xf]
        %v8796 = vld [vmem:[%s3 + $0xf8] sm:$0xf]
        %v8797 = vld [vmem:[%s3 + $0xfc] sm:$0xf]
        %v8798 = vld [vmem:[%s3 + $0x100] sm:$0xf]
        %v8799 = vld [vmem:[%s3 + $0x104] sm:$0xf]
        %v8800 = vld [vmem:[%s3 + $0x108] sm:$0xf]
        %v8801 = vld [vmem:[%s3 + $0x10c] sm:$0xf]
        %v8802 = vld [vmem:[%s3 + $0x110] sm:$0xf]
        %v8803 = vld [vmem:[%s3 + $0x114] sm:$0xf]
        %v8804 = vld [vmem:[%s3 + $0x118] sm:$0xf]
        %v8805 = vld [vmem:[%s3 + $0x11c] sm:$0xf]
        %v8986 = vunpack.c.l.b16 %v8554
        %v8987 = vunpack.c.h.b16 %v8554
        %v8988 = vunpack.c.l.b16 %v8555
        %v8989 = vunpack.c.h.b16 %v8555
        %v8990 = vunpack.c.l.b16 %v8556
        %v8991 = vunpack.c.l.b16 %v8557
        %v8992 = vunpack.c.h.b16 %v8557
        %v8993 = vunpack.c.l.b16 %v8558
        %v8994 = vunpack.c.h.b16 %v8558
        %v8995 = vunpack.c.l.b16 %v8559
        %v8996 = vunpack.c.l.b16 %v8560
        %v8997 = vunpack.c.h.b16 %v8560
        %v8998 = vunpack.c.l.b16 %v8561
        %v8999 = vunpack.c.h.b16 %v8561
        %v9000 = vunpack.c.l.b16 %v8562
        %v9001 = vunpack.c.l.b16 %v8563
        %v9002 = vunpack.c.h.b16 %v8563
        %v9003 = vunpack.c.l.b16 %v8564
        %v9004 = vunpack.c.h.b16 %v8564
        %v9005 = vunpack.c.l.b16 %v8565
        %v9006 = vunpack.c.l.b16 %v8566
        %v9007 = vunpack.c.h.b16 %v8566
        %v9008 = vunpack.c.l.b16 %v8567
        %v9009 = vunpack.c.h.b16 %v8567
        %v9010 = vunpack.c.l.b16 %v8568
        %v9011 = vunpack.c.l.b16 %v8569
        %v9012 = vunpack.c.h.b16 %v8569
        %v9013 = vunpack.c.l.b16 %v8570
        %v9014 = vunpack.c.h.b16 %v8570
        %v9015 = vunpack.c.l.b16 %v8571
        %v9016 = vunpack.c.l.b16 %v8572
        %v9017 = vunpack.c.h.b16 %v8572
        %v9018 = vunpack.c.l.b16 %v8573
        %v9019 = vunpack.c.h.b16 %v8573
        %v9020 = vunpack.c.l.b16 %v8574
        %v9021 = vunpack.c.l.b16 %v8575
        %v9022 = vunpack.c.h.b16 %v8575
        %v9023 = vunpack.c.l.b16 %v8576
        %v9024 = vunpack.c.h.b16 %v8576
        %v9025 = vunpack.c.l.b16 %v8577
        %v9026 = vunpack.c.l.b16 %v8578
        %v9027 = vunpack.c.h.b16 %v8578
        %v9028 = vunpack.c.l.b16 %v8579
        %v9029 = vunpack.c.h.b16 %v8579
        %v9030 = vunpack.c.l.b16 %v8580
        %v9031 = vunpack.c.l.b16 %v8581
        %v9032 = vunpack.c.h.b16 %v8581
        %v9033 = vunpack.c.l.b16 %v8582
        %v9034 = vunpack.c.h.b16 %v8582
        %v9035 = vunpack.c.l.b16 %v8583
        %v9036 = vunpack.c.l.b16 %v8584
        %v9037 = vunpack.c.h.b16 %v8584
        %v9038 = vunpack.c.l.b16 %v8585
        %v9039 = vunpack.c.h.b16 %v8585
        %v9040 = vunpack.c.l.b16 %v8586
        %v9041 = vunpack.c.l.b16 %v8587
        %v9042 = vunpack.c.h.b16 %v8587
        %v9043 = vunpack.c.l.b16 %v8588
        %v9044 = vunpack.c.h.b16 %v8588
        %v9045 = vunpack.c.l.b16 %v8589
        %v9046 = vunpack.c.l.b16 %v8590
        %v9047 = vunpack.c.h.b16 %v8590
        %v9048 = vunpack.c.l.b16 %v8591
        %v9049 = vunpack.c.h.b16 %v8591
        %v9050 = vunpack.c.l.b16 %v8592
        %v9051 = vunpack.c.l.b16 %v8593
        %v9052 = vunpack.c.h.b16 %v8593
        %v9053 = vunpack.c.l.b16 %v8594
        %v9054 = vunpack.c.h.b16 %v8594
        %v9055 = vunpack.c.l.b16 %v8595
        %v9056 = vunpack.c.l.b16 %v8596
        %v9057 = vunpack.c.h.b16 %v8596
        %v9058 = vunpack.c.l.b16 %v8597
        %v9059 = vunpack.c.h.b16 %v8597
        %v9060 = vunpack.c.l.b16 %v8598
        %v9061 = vunpack.c.l.b16 %v8599
        %v9062 = vunpack.c.h.b16 %v8599
        %v9063 = vunpack.c.l.b16 %v8600
        %v9064 = vunpack.c.h.b16 %v8600
        %v9065 = vunpack.c.l.b16 %v8601
        %v9066 = vunpack.c.l.b16 %v8602
        %v9067 = vunpack.c.h.b16 %v8602
        %v9068 = vunpack.c.l.b16 %v8603
        %v9069 = vunpack.c.h.b16 %v8603
        %v9070 = vunpack.c.l.b16 %v8604
        %v9071 = vunpack.c.l.b16 %v8605
        %v9072 = vunpack.c.h.b16 %v8605
        %v9073 = vunpack.c.l.b16 %v8606
        %v9074 = vunpack.c.h.b16 %v8606
        %v9075 = vunpack.c.l.b16 %v8607
        %v9076 = vunpack.c.l.b16 %v8608
        %v9077 = vunpack.c.h.b16 %v8608
        %v9078 = vunpack.c.l.b16 %v8609
        %v9079 = vunpack.c.h.b16 %v8609
        %v9080 = vunpack.c.l.b16 %v8610
        %v9081 = vunpack.c.l.b16 %v8611
        %v9082 = vunpack.c.h.b16 %v8611
        %v9083 = vunpack.c.l.b16 %v8612
        %v9084 = vunpack.c.h.b16 %v8612
        %v9085 = vunpack.c.l.b16 %v8613
        %v9086 = vunpack.c.l.b16 %v8614
        %v9087 = vunpack.c.h.b16 %v8614
        %v9088 = vunpack.c.l.b16 %v8615
        %v9089 = vunpack.c.h.b16 %v8615
        %v9090 = vunpack.c.l.b16 %v8616
        %v9091 = vunpack.c.l.b16 %v8617
        %v9092 = vunpack.c.h.b16 %v8617
        %v9093 = vunpack.c.l.b16 %v8618
        %v9094 = vunpack.c.h.b16 %v8618
        %v9095 = vunpack.c.l.b16 %v8619
        %v9096 = vunpack.c.l.b16 %v8620
        %v9097 = vunpack.c.h.b16 %v8620
        %v9098 = vunpack.c.l.b16 %v8621
        %v9099 = vunpack.c.h.b16 %v8621
        %v9100 = vunpack.c.l.b16 %v8622
        %v9101 = vunpack.c.l.b16 %v8623
        %v9102 = vunpack.c.h.b16 %v8623
        %v9103 = vunpack.c.l.b16 %v8624
        %v9104 = vunpack.c.h.b16 %v8624
        %v9105 = vunpack.c.l.b16 %v8625
        %v9106 = vunpack.c.l.b16 %v8626
        %v9107 = vunpack.c.h.b16 %v8626
        %v9108 = vunpack.c.l.b16 %v8627
        %v9109 = vunpack.c.h.b16 %v8627
        %v9110 = vunpack.c.l.b16 %v8628
        %v9111 = vunpack.c.l.b16 %v8629
        %v9112 = vunpack.c.h.b16 %v8629
        %v9113 = vunpack.c.l.b16 %v8630
        %v9114 = vunpack.c.h.b16 %v8630
        %v9115 = vunpack.c.l.b16 %v8631
        %v9116 = vunpack.c.l.b16 %v8632
        %v9117 = vunpack.c.h.b16 %v8632
        %v9118 = vunpack.c.l.b16 %v8633
        %v9119 = vunpack.c.h.b16 %v8633
        %v9120 = vunpack.c.l.b16 %v8634
        %v9121 = vunpack.c.l.b16 %v8635
        %v9122 = vunpack.c.h.b16 %v8635
        %v9123 = vunpack.c.l.b16 %v8636
        %v9124 = vunpack.c.h.b16 %v8636
        %v9125 = vunpack.c.l.b16 %v8637
        %v9126 = vunpack.c.l.b16 %v8638
        %v9127 = vunpack.c.h.b16 %v8638
        %v9128 = vunpack.c.l.b16 %v8639
        %v9129 = vunpack.c.h.b16 %v8639
        %v9130 = vunpack.c.l.b16 %v8640
        %v9131 = vunpack.c.l.b16 %v8641
        %v9132 = vunpack.c.h.b16 %v8641
        %v9133 = vunpack.c.l.b16 %v8642
        %v9134 = vunpack.c.h.b16 %v8642
        %v9135 = vunpack.c.l.b16 %v8643
        %v9136 = vunpack.c.l.b16 %v8644
        %v9137 = vunpack.c.h.b16 %v8644
        %v9138 = vunpack.c.l.b16 %v8645
        %v9139 = vunpack.c.h.b16 %v8645
        %v9140 = vunpack.c.l.b16 %v8646
        %v9141 = vunpack.c.l.b16 %v8647
        %v9142 = vunpack.c.h.b16 %v8647
        %v9143 = vunpack.c.l.b16 %v8648
        %v9144 = vunpack.c.h.b16 %v8648
        %v9145 = vunpack.c.l.b16 %v8649
        %v9146 = vunpack.c.l.b16 %v8650
        %v9147 = vunpack.c.h.b16 %v8650
        %v9148 = vunpack.c.l.b16 %v8651
        %v9149 = vunpack.c.h.b16 %v8651
        %v9150 = vunpack.c.l.b16 %v8652
        %v9151 = vunpack.c.l.b16 %v8653
        %v9152 = vunpack.c.h.b16 %v8653
        %v9153 = vunpack.c.l.b16 %v8654
        %v9154 = vunpack.c.h.b16 %v8654
        %v9155 = vunpack.c.l.b16 %v8655
        %v9156 = vunpack.c.l.b16 %v8656
        %v9157 = vunpack.c.h.b16 %v8656
        %v9158 = vunpack.c.l.b16 %v8657
        %v9159 = vunpack.c.h.b16 %v8657
        %v9160 = vunpack.c.l.b16 %v8658
        %v9161 = vunpack.c.l.b16 %v8659
        %v9162 = vunpack.c.h.b16 %v8659
        %v9163 = vunpack.c.l.b16 %v8660
        %v9164 = vunpack.c.h.b16 %v8660
        %v9165 = vunpack.c.l.b16 %v8661
        %v9166 = vunpack.c.l.b16 %v8662
        %v9167 = vunpack.c.h.b16 %v8662
        %v9168 = vunpack.c.l.b16 %v8663
        %v9169 = vunpack.c.h.b16 %v8663
        %v9170 = vunpack.c.l.b16 %v8664
        %v9171 = vunpack.c.l.b16 %v8665
        %v9172 = vunpack.c.h.b16 %v8665
        %v9173 = vunpack.c.l.b16 %v8666
        %v9174 = vunpack.c.h.b16 %v8666
        %v9175 = vunpack.c.l.b16 %v8667
        %v9176 = vunpack.c.l.b16 %v8668
        %v9177 = vunpack.c.h.b16 %v8668
        %v9178 = vunpack.c.l.b16 %v8669
        %v9179 = vunpack.c.h.b16 %v8669
        %v9180 = vunpack.c.l.b16 %v8670
        %v9181 = vunpack.c.l.b16 %v8671
        %v9182 = vunpack.c.h.b16 %v8671
        %v9183 = vunpack.c.l.b16 %v8672
        %v9184 = vunpack.c.h.b16 %v8672
        %v9185 = vunpack.c.l.b16 %v8673
        %v9186 = vunpack.c.l.b16 %v8674
        %v9187 = vunpack.c.h.b16 %v8674
        %v9188 = vunpack.c.l.b16 %v8675
        %v9189 = vunpack.c.h.b16 %v8675
        %v9190 = vunpack.c.l.b16 %v8676
        %v9191 = vunpack.c.l.b16 %v8677
        %v9192 = vunpack.c.h.b16 %v8677
        %v9193 = vunpack.c.l.b16 %v8678
        %v9194 = vunpack.c.h.b16 %v8678
        %v9195 = vunpack.c.l.b16 %v8679
        %v9196 = vunpack.c.l.b16 %v8680
        %v9197 = vunpack.c.h.b16 %v8680
        %v9198 = vunpack.c.l.b16 %v8681
        %v9199 = vunpack.c.h.b16 %v8681
        %v9200 = vunpack.c.l.b16 %v8682
        %v9201 = vunpack.c.l.b16 %v8683
        %v9202 = vunpack.c.h.b16 %v8683
        %v9203 = vunpack.c.l.b16 %v8684
        %v9204 = vunpack.c.h.b16 %v8684
        %v9205 = vunpack.c.l.b16 %v8685
        %v9206 = vunpack.c.l.b16 %v8686
        %v9207 = vunpack.c.h.b16 %v8686
        %v9208 = vunpack.c.l.b16 %v8687
        %v9209 = vunpack.c.h.b16 %v8687
        %v9210 = vunpack.c.l.b16 %v8688
        %v9211 = vunpack.c.l.b16 %v8689
        %v9212 = vunpack.c.h.b16 %v8689
        %v9213 = vunpack.c.l.b16 %v8690
        %v9214 = vunpack.c.h.b16 %v8690
        %v9215 = vunpack.c.l.b16 %v8691
        %v9216 = vunpack.c.l.b16 %v8692
        %v9217 = vunpack.c.h.b16 %v8692
        %v9218 = vunpack.c.l.b16 %v8693
        %v9219 = vunpack.c.h.b16 %v8693
        %v9220 = vunpack.c.l.b16 %v8694
        %v9221 = vunpack.c.l.b16 %v8695
        %v9222 = vunpack.c.h.b16 %v8695
        %v9223 = vunpack.c.l.b16 %v8696
        %v9224 = vunpack.c.h.b16 %v8696
        %v9225 = vunpack.c.l.b16 %v8697
        %v9226 = vunpack.c.l.b16 %v8698
        %v9227 = vunpack.c.h.b16 %v8698
        %v9228 = vunpack.c.l.b16 %v8699
        %v9229 = vunpack.c.h.b16 %v8699
        %v9230 = vunpack.c.l.b16 %v8700
        %v9231 = vunpack.c.l.b16 %v8701
        %v9232 = vunpack.c.h.b16 %v8701
        %v9233 = vunpack.c.l.b16 %v8702
        %v9234 = vunpack.c.h.b16 %v8702
        %v9235 = vunpack.c.l.b16 %v8703
        %v9236 = vunpack.c.l.b16 %v8704
        %v9237 = vunpack.c.h.b16 %v8704
        %v9238 = vunpack.c.l.b16 %v8705
        %v9239 = vunpack.c.h.b16 %v8705
        %v9240 = vunpack.c.l.b16 %v8706
        %v9241 = vunpack.c.l.b16 %v8707
        %v9242 = vunpack.c.h.b16 %v8707
        %v9243 = vunpack.c.l.b16 %v8708
        %v9244 = vunpack.c.h.b16 %v8708
        %v9245 = vunpack.c.l.b16 %v8709
        %v9246 = vunpack.c.l.b16 %v8710
        %v9247 = vunpack.c.h.b16 %v8710
        %v9248 = vunpack.c.l.b16 %v8711
        %v9249 = vunpack.c.h.b16 %v8711
        %v9250 = vunpack.c.l.b16 %v8712
        %v9251 = vunpack.c.l.b16 %v8713
        %v9252 = vunpack.c.h.b16 %v8713
        %v9253 = vunpack.c.l.b16 %v8714
        %v9254 = vunpack.c.h.b16 %v8714
        %v9255 = vunpack.c.l.b16 %v8715
        %v9256 = vunpack.c.l.b16 %v8716
        %v9257 = vunpack.c.h.b16 %v8716
        %v9258 = vunpack.c.l.b16 %v8717
        %v9259 = vunpack.c.h.b16 %v8717
        %v9260 = vunpack.c.l.b16 %v8718
        %v9261 = vunpack.c.l.b16 %v8719
        %v9262 = vunpack.c.h.b16 %v8719
        %v9263 = vunpack.c.l.b16 %v8720
        %v9264 = vunpack.c.h.b16 %v8720
        %v9265 = vunpack.c.l.b16 %v8721
        %v9266 = vunpack.c.l.b16 %v8722
        %v9267 = vunpack.c.h.b16 %v8722
        %v9268 = vunpack.c.l.b16 %v8723
        %v9269 = vunpack.c.h.b16 %v8723
        %v9270 = vunpack.c.l.b16 %v8724
        %v9271 = vunpack.c.l.b16 %v8725
        %v9272 = vunpack.c.h.b16 %v8725
        %v9273 = vunpack.c.l.b16 %v8726
        %v9274 = vunpack.c.h.b16 %v8726
        %v9275 = vunpack.c.l.b16 %v8727
        %v9276 = vunpack.c.l.b16 %v8728
        %v9277 = vunpack.c.h.b16 %v8728
        %v9278 = vunpack.c.l.b16 %v8729
        %v9279 = vunpack.c.h.b16 %v8729
        %v9280 = vunpack.c.l.b16 %v8730
        %v9281 = vunpack.c.l.b16 %v8731
        %v9282 = vunpack.c.h.b16 %v8731
        %v9283 = vunpack.c.l.b16 %v8732
        %v9284 = vunpack.c.h.b16 %v8732
        %v9285 = vunpack.c.l.b16 %v8733
        %v9286 = vpack.c.b16 %v8991, %v8986
        %v9287 = vpack.c.b16 %v8992, %v8987
        %v9288 = vpack.c.b16 %v8993, %v8988
        %v9289 = vpack.c.b16 %v8994, %v8989
        %v9290 = vpack.c.b16 %v8995, %v8990
        %v9291 = vpack.c.b16 %v9001, %v8996
        %v9292 = vpack.c.b16 %v9002, %v8997
        %v9293 = vpack.c.b16 %v9003, %v8998
        %v9294 = vpack.c.b16 %v9004, %v8999
        %v9295 = vpack.c.b16 %v9005, %v9000
        %v9296 = vpack.c.b16 %v9011, %v9006
        %v9297 = vpack.c.b16 %v9012, %v9007
        %v9298 = vpack.c.b16 %v9013, %v9008
        %v9299 = vpack.c.b16 %v9014, %v9009
        %v9300 = vpack.c.b16 %v9015, %v9010
        %v9301 = vpack.c.b16 %v9021, %v9016
        %v9302 = vpack.c.b16 %v9022, %v9017
        %v9303 = vpack.c.b16 %v9023, %v9018
        %v9304 = vpack.c.b16 %v9024, %v9019
        %v9305 = vpack.c.b16 %v9025, %v9020
        %v9306 = vpack.c.b16 %v9031, %v9026
        %v9307 = vpack.c.b16 %v9032, %v9027
        %v9308 = vpack.c.b16 %v9033, %v9028
        %v9309 = vpack.c.b16 %v9034, %v9029
        %v9310 = vpack.c.b16 %v9035, %v9030
        %v9311 = vpack.c.b16 %v9041, %v9036
        %v9312 = vpack.c.b16 %v9042, %v9037
        %v9313 = vpack.c.b16 %v9043, %v9038
        %v9314 = vpack.c.b16 %v9044, %v9039
        %v9315 = vpack.c.b16 %v9045, %v9040
        %v9316 = vpack.c.b16 %v9051, %v9046
        %v9317 = vpack.c.b16 %v9052, %v9047
        %v9318 = vpack.c.b16 %v9053, %v9048
        %v9319 = vpack.c.b16 %v9054, %v9049
        %v9320 = vpack.c.b16 %v9055, %v9050
        %v9321 = vpack.c.b16 %v9061, %v9056
        %v9322 = vpack.c.b16 %v9062, %v9057
        %v9323 = vpack.c.b16 %v9063, %v9058
        %v9324 = vpack.c.b16 %v9064, %v9059
        %v9325 = vpack.c.b16 %v9065, %v9060
        %v9326 = vpack.c.b16 %v9071, %v9066
        %v9327 = vpack.c.b16 %v9072, %v9067
        %v9328 = vpack.c.b16 %v9073, %v9068
        %v9329 = vpack.c.b16 %v9074, %v9069
        %v9330 = vpack.c.b16 %v9075, %v9070
        %v9331 = vpack.c.b16 %v9081, %v9076
        %v9332 = vpack.c.b16 %v9082, %v9077
        %v9333 = vpack.c.b16 %v9083, %v9078
        %v9334 = vpack.c.b16 %v9084, %v9079
        %v9335 = vpack.c.b16 %v9085, %v9080
        %v9336 = vpack.c.b16 %v9091, %v9086
        %v9337 = vpack.c.b16 %v9092, %v9087
        %v9338 = vpack.c.b16 %v9093, %v9088
        %v9339 = vpack.c.b16 %v9094, %v9089
        %v9340 = vpack.c.b16 %v9095, %v9090
        %v9341 = vpack.c.b16 %v9101, %v9096
        %v9342 = vpack.c.b16 %v9102, %v9097
        %v9343 = vpack.c.b16 %v9103, %v9098
        %v9344 = vpack.c.b16 %v9104, %v9099
        %v9345 = vpack.c.b16 %v9105, %v9100
        %v9346 = vpack.c.b16 %v9111, %v9106
        %v9347 = vpack.c.b16 %v9112, %v9107
        %v9348 = vpack.c.b16 %v9113, %v9108
        %v9349 = vpack.c.b16 %v9114, %v9109
        %v9350 = vpack.c.b16 %v9115, %v9110
        %v9351 = vpack.c.b16 %v9121, %v9116
        %v9352 = vpack.c.b16 %v9122, %v9117
        %v9353 = vpack.c.b16 %v9123, %v9118
        %v9354 = vpack.c.b16 %v9124, %v9119
        %v9355 = vpack.c.b16 %v9125, %v9120
        %v9356 = vpack.c.b16 %v9131, %v9126
        %v9357 = vpack.c.b16 %v9132, %v9127
        %v9358 = vpack.c.b16 %v9133, %v9128
        %v9359 = vpack.c.b16 %v9134, %v9129
        %v9360 = vpack.c.b16 %v9135, %v9130
        %v9361 = vpack.c.b16 %v9141, %v9136
        %v9362 = vpack.c.b16 %v9142, %v9137
        %v9363 = vpack.c.b16 %v9143, %v9138
        %v9364 = vpack.c.b16 %v9144, %v9139
        %v9365 = vpack.c.b16 %v9145, %v9140
        %v9366 = vpack.c.b16 %v9151, %v9146
        %v9367 = vpack.c.b16 %v9152, %v9147
        %v9368 = vpack.c.b16 %v9153, %v9148
        %v9369 = vpack.c.b16 %v9154, %v9149
        %v9370 = vpack.c.b16 %v9155, %v9150
        %v9371 = vpack.c.b16 %v9161, %v9156
        %v9372 = vpack.c.b16 %v9162, %v9157
        %v9373 = vpack.c.b16 %v9163, %v9158
        %v9374 = vpack.c.b16 %v9164, %v9159
        %v9375 = vpack.c.b16 %v9165, %v9160
        %v9376 = vpack.c.b16 %v9171, %v9166
        %v9377 = vpack.c.b16 %v9172, %v9167
        %v9378 = vpack.c.b16 %v9173, %v9168
        %v9379 = vpack.c.b16 %v9174, %v9169
        %v9380 = vpack.c.b16 %v9175, %v9170
        %v9381 = vpack.c.b16 %v9181, %v9176
        %v9382 = vpack.c.b16 %v9182, %v9177
        %v9383 = vpack.c.b16 %v9183, %v9178
        %v9384 = vpack.c.b16 %v9184, %v9179
        %v9385 = vpack.c.b16 %v9185, %v9180
        %v9386 = vpack.c.b16 %v9191, %v9186
        %v9387 = vpack.c.b16 %v9192, %v9187
        %v9388 = vpack.c.b16 %v9193, %v9188
        %v9389 = vpack.c.b16 %v9194, %v9189
        %v9390 = vpack.c.b16 %v9195, %v9190
        %v9391 = vpack.c.b16 %v9201, %v9196
        %v9392 = vpack.c.b16 %v9202, %v9197
        %v9393 = vpack.c.b16 %v9203, %v9198
        %v9394 = vpack.c.b16 %v9204, %v9199
        %v9395 = vpack.c.b16 %v9205, %v9200
        %v9396 = vpack.c.b16 %v9211, %v9206
        %v9397 = vpack.c.b16 %v9212, %v9207
        %v9398 = vpack.c.b16 %v9213, %v9208
        %v9399 = vpack.c.b16 %v9214, %v9209
        %v9400 = vpack.c.b16 %v9215, %v9210
        %v9401 = vpack.c.b16 %v9221, %v9216
        %v9402 = vpack.c.b16 %v9222, %v9217
        %v9403 = vpack.c.b16 %v9223, %v9218
        %v9404 = vpack.c.b16 %v9224, %v9219
        %v9405 = vpack.c.b16 %v9225, %v9220
        %v9406 = vpack.c.b16 %v9231, %v9226
        %v9407 = vpack.c.b16 %v9232, %v9227
        %v9408 = vpack.c.b16 %v9233, %v9228
        %v9409 = vpack.c.b16 %v9234, %v9229
        %v9410 = vpack.c.b16 %v9235, %v9230
        %v9411 = vpack.c.b16 %v9241, %v9236
        %v9412 = vpack.c.b16 %v9242, %v9237
        %v9413 = vpack.c.b16 %v9243, %v9238
        %v9414 = vpack.c.b16 %v9244, %v9239
        %v9415 = vpack.c.b16 %v9245, %v9240
        %v9416 = vpack.c.b16 %v9251, %v9246
        %v9417 = vpack.c.b16 %v9252, %v9247
        %v9418 = vpack.c.b16 %v9253, %v9248
        %v9419 = vpack.c.b16 %v9254, %v9249
        %v9420 = vpack.c.b16 %v9255, %v9250
        %v9421 = vpack.c.b16 %v9261, %v9256
        %v9422 = vpack.c.b16 %v9262, %v9257
        %v9423 = vpack.c.b16 %v9263, %v9258
        %v9424 = vpack.c.b16 %v9264, %v9259
        %v9425 = vpack.c.b16 %v9265, %v9260
        %v9426 = vpack.c.b16 %v9271, %v9266
        %v9427 = vpack.c.b16 %v9272, %v9267
        %v9428 = vpack.c.b16 %v9273, %v9268
        %v9429 = vpack.c.b16 %v9274, %v9269
        %v9430 = vpack.c.b16 %v9275, %v9270
        %v9431 = vpack.c.b16 %v9281, %v9276
        %v9432 = vpack.c.b16 %v9282, %v9277
        %v9433 = vpack.c.b16 %v9283, %v9278
        %v9434 = vpack.c.b16 %v9284, %v9279
        %v9435 = vpack.c.b16 %v9285, %v9280
        %v9628 = vunpack.c.l.b16 %v8734
        %v9629 = vunpack.c.l.b16 %v8735
        %v9630 = vunpack.c.l.b16 %v8736
        %v9631 = vunpack.c.l.b16 %v8737
        %v9632 = vunpack.c.l.b16 %v8738
        %v9633 = vunpack.c.l.b16 %v8739
        %v9634 = vunpack.c.l.b16 %v8740
        %v9635 = vunpack.c.l.b16 %v8741
        %v9636 = vunpack.c.l.b16 %v8742
        %v9637 = vunpack.c.l.b16 %v8743
        %v9638 = vunpack.c.l.b16 %v8744
        %v9639 = vunpack.c.l.b16 %v8745
        %v9640 = vunpack.c.l.b16 %v8746
        %v9641 = vunpack.c.l.b16 %v8747
        %v9642 = vunpack.c.l.b16 %v8748
        %v9643 = vunpack.c.l.b16 %v8749
        %v9644 = vunpack.c.l.b16 %v8750
        %v9645 = vunpack.c.l.b16 %v8751
        %v9646 = vunpack.c.l.b16 %v8752
        %v9647 = vunpack.c.l.b16 %v8753
        %v9648 = vunpack.c.l.b16 %v8754
        %v9649 = vunpack.c.l.b16 %v8755
        %v9650 = vunpack.c.l.b16 %v8756
        %v9651 = vunpack.c.l.b16 %v8757
        %v9652 = vunpack.c.l.b16 %v8758
        %v9653 = vunpack.c.l.b16 %v8759
        %v9654 = vunpack.c.l.b16 %v8760
        %v9655 = vunpack.c.l.b16 %v8761
        %v9656 = vunpack.c.l.b16 %v8762
        %v9657 = vunpack.c.l.b16 %v8763
        %v9658 = vunpack.c.l.b16 %v8764
        %v9659 = vunpack.c.l.b16 %v8765
        %v9660 = vunpack.c.l.b16 %v8766
        %v9661 = vunpack.c.l.b16 %v8767
        %v9662 = vunpack.c.l.b16 %v8768
        %v9663 = vunpack.c.l.b16 %v8769
        %v9664 = vunpack.c.l.b16 %v8770
        %v9665 = vunpack.c.l.b16 %v8771
        %v9666 = vunpack.c.l.b16 %v8772
        %v9667 = vunpack.c.l.b16 %v8773
        %v9668 = vunpack.c.l.b16 %v8774
        %v9669 = vunpack.c.l.b16 %v8775
        %v9670 = vunpack.c.l.b16 %v8776
        %v9671 = vunpack.c.l.b16 %v8777
        %v9672 = vunpack.c.l.b16 %v8778
        %v9673 = vunpack.c.l.b16 %v8779
        %v9674 = vunpack.c.l.b16 %v8780
        %v9675 = vunpack.c.l.b16 %v8781
        %v9676 = vunpack.c.l.b16 %v8782
        %v9677 = vunpack.c.l.b16 %v8783
        %v9678 = vunpack.c.l.b16 %v8784
        %v9679 = vunpack.c.l.b16 %v8785
        %v9680 = vunpack.c.l.b16 %v8786
        %v9681 = vunpack.c.l.b16 %v8787
        %v9682 = vunpack.c.l.b16 %v8788
        %v9683 = vunpack.c.l.b16 %v8789
        %v9684 = vunpack.c.l.b16 %v8790
        %v9685 = vunpack.c.l.b16 %v8791
        %v9686 = vunpack.c.l.b16 %v8792
        %v9687 = vunpack.c.l.b16 %v8793
        %v9688 = vunpack.c.l.b16 %v8794
        %v9689 = vunpack.c.l.b16 %v8795
        %v9690 = vunpack.c.l.b16 %v8796
        %v9691 = vunpack.c.l.b16 %v8797
        %v9692 = vunpack.c.l.b16 %v8798
        %v9693 = vunpack.c.l.b16 %v8799
        %v9694 = vunpack.c.l.b16 %v8800
        %v9695 = vunpack.c.l.b16 %v8801
        %v9696 = vunpack.c.l.b16 %v8802
        %v9697 = vunpack.c.l.b16 %v8803
        %v9698 = vunpack.c.l.b16 %v8804
        %v9699 = vunpack.c.l.b16 %v8805
        %v9700 = vpack.c.b16 %v9629, %v9628
        %v9701 = vpack.c.b16 %v9631, %v9630
        %v9702 = vpack.c.b16 %v9633, %v9632
        %v9703 = vpack.c.b16 %v9635, %v9634
        %v9704 = vpack.c.b16 %v9637, %v9636
        %v9705 = vpack.c.b16 %v9639, %v9638
        %v9706 = vpack.c.b16 %v9641, %v9640
        %v9707 = vpack.c.b16 %v9643, %v9642
        %v9708 = vpack.c.b16 %v9645, %v9644
        %v9709 = vpack.c.b16 %v9647, %v9646
        %v9710 = vpack.c.b16 %v9649, %v9648
        %v9711 = vpack.c.b16 %v9651, %v9650
        %v9712 = vpack.c.b16 %v9653, %v9652
        %v9713 = vpack.c.b16 %v9655, %v9654
        %v9714 = vpack.c.b16 %v9657, %v9656
        %v9715 = vpack.c.b16 %v9659, %v9658
        %v9716 = vpack.c.b16 %v9661, %v9660
        %v9717 = vpack.c.b16 %v9663, %v9662
        %v9718 = vpack.c.b16 %v9665, %v9664
        %v9719 = vpack.c.b16 %v9667, %v9666
        %v9720 = vpack.c.b16 %v9669, %v9668
        %v9721 = vpack.c.b16 %v9671, %v9670
        %v9722 = vpack.c.b16 %v9673, %v9672
        %v9723 = vpack.c.b16 %v9675, %v9674
        %v9724 = vpack.c.b16 %v9677, %v9676
        %v9725 = vpack.c.b16 %v9679, %v9678
        %v9726 = vpack.c.b16 %v9681, %v9680
        %v9727 = vpack.c.b16 %v9683, %v9682
        %v9728 = vpack.c.b16 %v9685, %v9684
        %v9729 = vpack.c.b16 %v9687, %v9686
        %v9730 = vpack.c.b16 %v9689, %v9688
        %v9731 = vpack.c.b16 %v9691, %v9690
        %v9732 = vpack.c.b16 %v9693, %v9692
        %v9733 = vpack.c.b16 %v9695, %v9694
        %v9734 = vpack.c.b16 %v9697, %v9696
        %v9735 = vpack.c.b16 %v9699, %v9698
        %vm9772 = vcmask 523264
        %v9774 = vsel %vm9772, %v9290, 0
        %v9777 = vsel %vm9772, %v9295, 0
        %v9780 = vsel %vm9772, %v9300, 0
        %v9783 = vsel %vm9772, %v9305, 0
        %v9786 = vsel %vm9772, %v9310, 0
        %v9789 = vsel %vm9772, %v9315, 0
        %v9792 = vsel %vm9772, %v9320, 0
        %v9795 = vsel %vm9772, %v9325, 0
        %v9798 = vsel %vm9772, %v9330, 0
        %v9801 = vsel %vm9772, %v9335, 0
        %v9804 = vsel %vm9772, %v9340, 0
        %v9807 = vsel %vm9772, %v9345, 0
        %v9810 = vsel %vm9772, %v9350, 0
        %v9813 = vsel %vm9772, %v9355, 0
        %v9816 = vsel %vm9772, %v9360, 0
        %v9819 = vsel %vm9772, %v9365, 0
        %v9822 = vsel %vm9772, %v9370, 0
        %v9825 = vsel %vm9772, %v9375, 0
        %v9828 = vsel %vm9772, %v9380, 0
        %v9831 = vsel %vm9772, %v9385, 0
        %v9834 = vsel %vm9772, %v9390, 0
        %v9837 = vsel %vm9772, %v9395, 0
        %v9840 = vsel %vm9772, %v9400, 0
        %v9843 = vsel %vm9772, %v9405, 0
        %v9846 = vsel %vm9772, %v9410, 0
        %v9849 = vsel %vm9772, %v9415, 0
        %v9852 = vsel %vm9772, %v9420, 0
        %v9855 = vsel %vm9772, %v9425, 0
        %v9858 = vsel %vm9772, %v9430, 0
        %v9861 = vsel %vm9772, %v9435, 0
        %9863 = vmatprep.subr.bf16.mxu0 0
        %9864 = vmatpush1.bf16.msra.mxu0 %v9707
        %9865 = vmatprep.subr.bf16.mxu0 0
        %9866 = vmatpush1.bf16.msra.mxu0 %v9706
        %9867 = vmatprep.subr.bf16.mxu0 0
        %9868 = vmatpush1.bf16.msra.mxu0 %v9705
        %9869 = vmatprep.subr.bf16.mxu0 0
        %9870 = vmatpush1.bf16.msra.mxu0 %v9704
        %9871 = vmatprep.subr.bf16.mxu0 0
        %9872 = vmatpush1.bf16.msra.mxu0 %v9703
        %9873 = vmatprep.subr.bf16.mxu0 0
        %9874 = vmatpush1.bf16.msra.mxu0 %v9702
        %9875 = vmatprep.subr.bf16.mxu0 0
        %9876 = vmatpush1.bf16.msra.mxu0 %v9701
        %9877 = vmatprep.subr.bf16.mxu0 0
        %9878 = vmatpush1.bf16.msra.mxu0 %v9700
        %9879 = vmatprep.subr.bf16.mxu0 0
        %9880 = vmatpush2.bf16.msra.mxu0 %v9715
        %9881 = vmatprep.subr.bf16.mxu0 0
        %9882 = vmatpush2.bf16.msra.mxu0 %v9714
        %9883 = vmatprep.subr.bf16.mxu0 0
        %9884 = vmatpush2.bf16.msra.mxu0 %v9713
        %9885 = vmatprep.subr.bf16.mxu0 0
        %9886 = vmatpush2.bf16.msra.mxu0 %v9712
        %9887 = vmatprep.subr.bf16.mxu0 0
        %9888 = vmatpush2.bf16.msra.mxu0 %v9711
        %9889 = vmatprep.subr.bf16.mxu0 0
        %9890 = vmatpush2.bf16.msra.mxu0 %v9710
        %9891 = vmatprep.subr.bf16.mxu0 0
        %9892 = vmatpush2.bf16.msra.mxu0 %v9709
        %9893 = vmatprep.subr.bf16.mxu0 0
        %9894 = vmatpush2.bf16.msra.mxu0 %v9708
        %9895 = vmatprep.mubr.bf16.mxu0 %v9287
        %9896 = vmatmul.mubr.bf16.gmra.mxu0 %v9286
        %v9897 = vpop.f32.mrf.mxu0
        %v9898 = vadd.f32 0.0, %v9897
        %v9899 = vpop.f32.mrf.mxu0
        %v9900 = vpop.f32.mrf.mxu0
        %v9901 = vadd.f32 0.0, %v9900
        %v9902 = vpop.f32.mrf.mxu0
        %9903 = vmatprep.mubr.bf16.mxu0 %v9292
        %9904 = vmatmul.mubr.bf16.gmra.mxu0 %v9291
        %v9905 = vpop.f32.mrf.mxu0
        %v9906 = vadd.f32 0.0, %v9905
        %v9907 = vpop.f32.mrf.mxu0
        %v9908 = vpop.f32.mrf.mxu0
        %v9909 = vadd.f32 0.0, %v9908
        %v9910 = vpop.f32.mrf.mxu0
        %9911 = vmatprep.mubr.bf16.mxu0 %v9297
        %9912 = vmatmul.mubr.bf16.gmra.mxu0 %v9296
        %v9913 = vpop.f32.mrf.mxu0
        %v9914 = vadd.f32 0.0, %v9913
        %v9915 = vpop.f32.mrf.mxu0
        %v9916 = vpop.f32.mrf.mxu0
        %v9917 = vadd.f32 0.0, %v9916
        %v9918 = vpop.f32.mrf.mxu0
        %9919 = vmatprep.mubr.bf16.mxu0 %v9302
        %9920 = vmatmul.mubr.bf16.gmra.mxu0 %v9301
        %v9921 = vpop.f32.mrf.mxu0
        %v9922 = vadd.f32 0.0, %v9921
        %v9923 = vpop.f32.mrf.mxu0
        %v9924 = vpop.f32.mrf.mxu0
        %v9925 = vadd.f32 0.0, %v9924
        %v9926 = vpop.f32.mrf.mxu0
        %9927 = vmatprep.mubr.bf16.mxu0 %v9307
        %9928 = vmatmul.mubr.bf16.gmra.mxu0 %v9306
        %v9929 = vpop.f32.mrf.mxu0
        %v9930 = vadd.f32 0.0, %v9929
        %v9931 = vpop.f32.mrf.mxu0
        %v9932 = vpop.f32.mrf.mxu0
        %v9933 = vadd.f32 0.0, %v9932
        %v9934 = vpop.f32.mrf.mxu0
        %9935 = vmatprep.mubr.bf16.mxu0 %v9312
        %9936 = vmatmul.mubr.bf16.gmra.mxu0 %v9311
        %v9937 = vpop.f32.mrf.mxu0
        %v9938 = vadd.f32 0.0, %v9937
        %v9939 = vpop.f32.mrf.mxu0
        %v9940 = vpop.f32.mrf.mxu0
        %v9941 = vadd.f32 0.0, %v9940
        %v9942 = vpop.f32.mrf.mxu0
        %9943 = vmatprep.mubr.bf16.mxu0 %v9317
        %9944 = vmatmul.mubr.bf16.gmra.mxu0 %v9316
        %v9945 = vpop.f32.mrf.mxu0
        %v9946 = vadd.f32 0.0, %v9945
        %v9947 = vpop.f32.mrf.mxu0
        %v9948 = vpop.f32.mrf.mxu0
        %v9949 = vadd.f32 0.0, %v9948
        %v9950 = vpop.f32.mrf.mxu0
        %9951 = vmatprep.mubr.bf16.mxu0 %v9322
        %9952 = vmatmul.mubr.bf16.gmra.mxu0 %v9321
        %v9953 = vpop.f32.mrf.mxu0
        %v9954 = vadd.f32 0.0, %v9953
        %v9955 = vpop.f32.mrf.mxu0
        %v9956 = vpop.f32.mrf.mxu0
        %v9957 = vadd.f32 0.0, %v9956
        %v9958 = vpop.f32.mrf.mxu0
        %9959 = vmatprep.mubr.bf16.mxu0 %v9327
        %9960 = vmatmul.mubr.bf16.gmra.mxu0 %v9326
        %v9961 = vpop.f32.mrf.mxu0
        %v9962 = vadd.f32 0.0, %v9961
        %v9963 = vpop.f32.mrf.mxu0
        %v9964 = vpop.f32.mrf.mxu0
        %v9965 = vadd.f32 0.0, %v9964
        %v9966 = vpop.f32.mrf.mxu0
        %9967 = vmatprep.mubr.bf16.mxu0 %v9332
        %9968 = vmatmul.mubr.bf16.gmra.mxu0 %v9331
        %v9969 = vpop.f32.mrf.mxu0
        %v9970 = vadd.f32 0.0, %v9969
        %v9971 = vpop.f32.mrf.mxu0
        %v9972 = vpop.f32.mrf.mxu0
        %v9973 = vadd.f32 0.0, %v9972
        %v9974 = vpop.f32.mrf.mxu0
        %9975 = vmatprep.mubr.bf16.mxu0 %v9337
        %9976 = vmatmul.mubr.bf16.gmra.mxu0 %v9336
        %v9977 = vpop.f32.mrf.mxu0
        %v9978 = vadd.f32 0.0, %v9977
        %v9979 = vpop.f32.mrf.mxu0
        %v9980 = vpop.f32.mrf.mxu0
        %v9981 = vadd.f32 0.0, %v9980
        %v9982 = vpop.f32.mrf.mxu0
        %9983 = vmatprep.mubr.bf16.mxu0 %v9342
        %9984 = vmatmul.mubr.bf16.gmra.mxu0 %v9341
        %v9985 = vpop.f32.mrf.mxu0
        %v9986 = vadd.f32 0.0, %v9985
        %v9987 = vpop.f32.mrf.mxu0
        %v9988 = vpop.f32.mrf.mxu0
        %v9989 = vadd.f32 0.0, %v9988
        %v9990 = vpop.f32.mrf.mxu0
        %9991 = vmatprep.mubr.bf16.mxu0 %v9347
        %9992 = vmatmul.mubr.bf16.gmra.mxu0 %v9346
        %v9993 = vpop.f32.mrf.mxu0
        %v9994 = vadd.f32 0.0, %v9993
        %v9995 = vpop.f32.mrf.mxu0
        %v9996 = vpop.f32.mrf.mxu0
        %v9997 = vadd.f32 0.0, %v9996
        %v9998 = vpop.f32.mrf.mxu0
        %9999 = vmatprep.mubr.bf16.mxu0 %v9352
        %10000 = vmatmul.mubr.bf16.gmra.mxu0 %v9351
        %v10001 = vpop.f32.mrf.mxu0
        %v10002 = vadd.f32 0.0, %v10001
        %v10003 = vpop.f32.mrf.mxu0
        %v10004 = vpop.f32.mrf.mxu0
        %v10005 = vadd.f32 0.0, %v10004
        %v10006 = vpop.f32.mrf.mxu0
        %10007 = vmatprep.mubr.bf16.mxu0 %v9357
        %10008 = vmatmul.mubr.bf16.gmra.mxu0 %v9356
        %v10009 = vpop.f32.mrf.mxu0
        %v10010 = vadd.f32 0.0, %v10009
        %v10011 = vpop.f32.mrf.mxu0
        %v10012 = vpop.f32.mrf.mxu0
        %v10013 = vadd.f32 0.0, %v10012
        %v10014 = vpop.f32.mrf.mxu0
        %10015 = vmatprep.mubr.bf16.mxu0 %v9362
        %10016 = vmatmul.mubr.bf16.gmra.mxu0 %v9361
        %v10017 = vpop.f32.mrf.mxu0
        %v10018 = vadd.f32 0.0, %v10017
        %v10019 = vpop.f32.mrf.mxu0
        %v10020 = vpop.f32.mrf.mxu0
        %v10021 = vadd.f32 0.0, %v10020
        %v10022 = vpop.f32.mrf.mxu0
        %10023 = vmatprep.mubr.bf16.mxu0 %v9367
        %10024 = vmatmul.mubr.bf16.gmra.mxu0 %v9366
        %v10025 = vpop.f32.mrf.mxu0
        %v10026 = vadd.f32 0.0, %v10025
        %v10027 = vpop.f32.mrf.mxu0
        %v10028 = vpop.f32.mrf.mxu0
        %v10029 = vadd.f32 0.0, %v10028
        %v10030 = vpop.f32.mrf.mxu0
        %10031 = vmatprep.mubr.bf16.mxu0 %v9372
        %10032 = vmatmul.mubr.bf16.gmra.mxu0 %v9371
        %v10033 = vpop.f32.mrf.mxu0
        %v10034 = vadd.f32 0.0, %v10033
        %v10035 = vpop.f32.mrf.mxu0
        %v10036 = vpop.f32.mrf.mxu0
        %v10037 = vadd.f32 0.0, %v10036
        %v10038 = vpop.f32.mrf.mxu0
        %10039 = vmatprep.mubr.bf16.mxu0 %v9377
        %10040 = vmatmul.mubr.bf16.gmra.mxu0 %v9376
        %v10041 = vpop.f32.mrf.mxu0
        %v10042 = vadd.f32 0.0, %v10041
        %v10043 = vpop.f32.mrf.mxu0
        %v10044 = vpop.f32.mrf.mxu0
        %v10045 = vadd.f32 0.0, %v10044
        %v10046 = vpop.f32.mrf.mxu0
        %10047 = vmatprep.mubr.bf16.mxu0 %v9382
        %10048 = vmatmul.mubr.bf16.gmra.mxu0 %v9381
        %v10049 = vpop.f32.mrf.mxu0
        %v10050 = vadd.f32 0.0, %v10049
        %v10051 = vpop.f32.mrf.mxu0
        %v10052 = vpop.f32.mrf.mxu0
        %v10053 = vadd.f32 0.0, %v10052
        %v10054 = vpop.f32.mrf.mxu0
        %10055 = vmatprep.mubr.bf16.mxu0 %v9387
        %10056 = vmatmul.mubr.bf16.gmra.mxu0 %v9386
        %v10057 = vpop.f32.mrf.mxu0
        %v10058 = vadd.f32 0.0, %v10057
        %v10059 = vpop.f32.mrf.mxu0
        %v10060 = vpop.f32.mrf.mxu0
        %v10061 = vadd.f32 0.0, %v10060
        %v10062 = vpop.f32.mrf.mxu0
        %10063 = vmatprep.mubr.bf16.mxu0 %v9392
        %10064 = vmatmul.mubr.bf16.gmra.mxu0 %v9391
        %v10065 = vpop.f32.mrf.mxu0
        %v10066 = vadd.f32 0.0, %v10065
        %v10067 = vpop.f32.mrf.mxu0
        %v10068 = vpop.f32.mrf.mxu0
        %v10069 = vadd.f32 0.0, %v10068
        %v10070 = vpop.f32.mrf.mxu0
        %10071 = vmatprep.mubr.bf16.mxu0 %v9397
        %10072 = vmatmul.mubr.bf16.gmra.mxu0 %v9396
        %v10073 = vpop.f32.mrf.mxu0
        %v10074 = vadd.f32 0.0, %v10073
        %v10075 = vpop.f32.mrf.mxu0
        %v10076 = vpop.f32.mrf.mxu0
        %v10077 = vadd.f32 0.0, %v10076
        %v10078 = vpop.f32.mrf.mxu0
        %10079 = vmatprep.mubr.bf16.mxu0 %v9402
        %10080 = vmatmul.mubr.bf16.gmra.mxu0 %v9401
        %v10081 = vpop.f32.mrf.mxu0
        %v10082 = vadd.f32 0.0, %v10081
        %v10083 = vpop.f32.mrf.mxu0
        %v10084 = vpop.f32.mrf.mxu0
        %v10085 = vadd.f32 0.0, %v10084
        %v10086 = vpop.f32.mrf.mxu0
        %10087 = vmatprep.mubr.bf16.mxu0 %v9407
        %10088 = vmatmul.mubr.bf16.gmra.mxu0 %v9406
        %v10089 = vpop.f32.mrf.mxu0
        %v10090 = vadd.f32 0.0, %v10089
        %v10091 = vpop.f32.mrf.mxu0
        %v10092 = vpop.f32.mrf.mxu0
        %v10093 = vadd.f32 0.0, %v10092
        %v10094 = vpop.f32.mrf.mxu0
        %10095 = vmatprep.mubr.bf16.mxu0 %v9412
        %10096 = vmatmul.mubr.bf16.gmra.mxu0 %v9411
        %v10097 = vpop.f32.mrf.mxu0
        %v10098 = vadd.f32 0.0, %v10097
        %v10099 = vpop.f32.mrf.mxu0
        %v10100 = vpop.f32.mrf.mxu0
        %v10101 = vadd.f32 0.0, %v10100
        %v10102 = vpop.f32.mrf.mxu0
        %10103 = vmatprep.mubr.bf16.mxu0 %v9417
        %10104 = vmatmul.mubr.bf16.gmra.mxu0 %v9416
        %v10105 = vpop.f32.mrf.mxu0
        %v10106 = vadd.f32 0.0, %v10105
        %v10107 = vpop.f32.mrf.mxu0
        %v10108 = vpop.f32.mrf.mxu0
        %v10109 = vadd.f32 0.0, %v10108
        %v10110 = vpop.f32.mrf.mxu0
        %10111 = vmatprep.mubr.bf16.mxu0 %v9422
        %10112 = vmatmul.mubr.bf16.gmra.mxu0 %v9421
        %v10113 = vpop.f32.mrf.mxu0
        %v10114 = vadd.f32 0.0, %v10113
        %v10115 = vpop.f32.mrf.mxu0
        %v10116 = vpop.f32.mrf.mxu0
        %v10117 = vadd.f32 0.0, %v10116
        %v10118 = vpop.f32.mrf.mxu0
        %10119 = vmatprep.mubr.bf16.mxu0 %v9427
        %10120 = vmatmul.mubr.bf16.gmra.mxu0 %v9426
        %v10121 = vpop.f32.mrf.mxu0
        %v10122 = vadd.f32 0.0, %v10121
        %v10123 = vpop.f32.mrf.mxu0
        %v10124 = vpop.f32.mrf.mxu0
        %v10125 = vadd.f32 0.0, %v10124
        %v10126 = vpop.f32.mrf.mxu0
        %10127 = vmatprep.mubr.bf16.mxu0 %v9432
        %10128 = vmatmul.mubr.bf16.gmra.mxu0 %v9431
        %v10129 = vpop.f32.mrf.mxu0
        %v10130 = vadd.f32 0.0, %v10129
        %v10131 = vpop.f32.mrf.mxu0
        %v10132 = vpop.f32.mrf.mxu0
        %v10133 = vadd.f32 0.0, %v10132
        %v10134 = vpop.f32.mrf.mxu0
        %10135 = vdwg.mxu0
        %10136 = vmatprep.subr.bf16.mxu0 0
        %10137 = vmatpush1.bf16.msra.mxu0 %v9723
        %10138 = vmatprep.subr.bf16.mxu0 0
        %10139 = vmatpush1.bf16.msra.mxu0 %v9722
        %10140 = vmatprep.subr.bf16.mxu0 0
        %10141 = vmatpush1.bf16.msra.mxu0 %v9721
        %10142 = vmatprep.subr.bf16.mxu0 0
        %10143 = vmatpush1.bf16.msra.mxu0 %v9720
        %10144 = vmatprep.subr.bf16.mxu0 0
        %10145 = vmatpush1.bf16.msra.mxu0 %v9719
        %10146 = vmatprep.subr.bf16.mxu0 0
        %10147 = vmatpush1.bf16.msra.mxu0 %v9718
        %10148 = vmatprep.subr.bf16.mxu0 0
        %10149 = vmatpush1.bf16.msra.mxu0 %v9717
        %10150 = vmatprep.subr.bf16.mxu0 0
        %10151 = vmatpush1.bf16.msra.mxu0 %v9716
        %10152 = vmatprep.subr.bf16.mxu0 0
        %10153 = vmatpush2.bf16.msra.mxu0 %v9731
        %10154 = vmatprep.subr.bf16.mxu0 0
        %10155 = vmatpush2.bf16.msra.mxu0 %v9730
        %10156 = vmatprep.subr.bf16.mxu0 0
        %10157 = vmatpush2.bf16.msra.mxu0 %v9729
        %10158 = vmatprep.subr.bf16.mxu0 0
        %10159 = vmatpush2.bf16.msra.mxu0 %v9728
        %10160 = vmatprep.subr.bf16.mxu0 0
        %10161 = vmatpush2.bf16.msra.mxu0 %v9727
        %10162 = vmatprep.subr.bf16.mxu0 0
        %10163 = vmatpush2.bf16.msra.mxu0 %v9726
        %10164 = vmatprep.subr.bf16.mxu0 0
        %10165 = vmatpush2.bf16.msra.mxu0 %v9725
        %10166 = vmatprep.subr.bf16.mxu0 0
        %10167 = vmatpush2.bf16.msra.mxu0 %v9724
        %10168 = vmatprep.mubr.bf16.mxu0 %v9289
        %10169 = vmatmul.mubr.bf16.gmra.mxu0 %v9288
        %v10170 = vpop.f32.mrf.mxu0
        %v10171 = vadd.f32 %v9898, %v10170
        %v10172 = vpop.f32.mrf.mxu0
        %v10173 = vpop.f32.mrf.mxu0
        %v10174 = vadd.f32 %v9901, %v10173
        %v10175 = vpop.f32.mrf.mxu0
        %10176 = vmatprep.mubr.bf16.mxu0 %v9294
        %10177 = vmatmul.mubr.bf16.gmra.mxu0 %v9293
        %v10178 = vpop.f32.mrf.mxu0
        %v10179 = vadd.f32 %v9906, %v10178
        %v10180 = vpop.f32.mrf.mxu0
        %v10181 = vpop.f32.mrf.mxu0
        %v10182 = vadd.f32 %v9909, %v10181
        %v10183 = vpop.f32.mrf.mxu0
        %10184 = vmatprep.mubr.bf16.mxu0 %v9299
        %10185 = vmatmul.mubr.bf16.gmra.mxu0 %v9298
        %v10186 = vpop.f32.mrf.mxu0
        %v10187 = vadd.f32 %v9914, %v10186
        %v10188 = vpop.f32.mrf.mxu0
        %v10189 = vpop.f32.mrf.mxu0
        %v10190 = vadd.f32 %v9917, %v10189
        %v10191 = vpop.f32.mrf.mxu0
        %10192 = vmatprep.mubr.bf16.mxu0 %v9304
        %10193 = vmatmul.mubr.bf16.gmra.mxu0 %v9303
        %v10194 = vpop.f32.mrf.mxu0
        %v10195 = vadd.f32 %v9922, %v10194
        %v10196 = vpop.f32.mrf.mxu0
        %v10197 = vpop.f32.mrf.mxu0
        %v10198 = vadd.f32 %v9925, %v10197
        %v10199 = vpop.f32.mrf.mxu0
        %10200 = vmatprep.mubr.bf16.mxu0 %v9309
        %10201 = vmatmul.mubr.bf16.gmra.mxu0 %v9308
        %v10202 = vpop.f32.mrf.mxu0
        %v10203 = vadd.f32 %v9930, %v10202
        %v10204 = vpop.f32.mrf.mxu0
        %v10205 = vpop.f32.mrf.mxu0
        %v10206 = vadd.f32 %v9933, %v10205
        %v10207 = vpop.f32.mrf.mxu0
        %10208 = vmatprep.mubr.bf16.mxu0 %v9314
        %10209 = vmatmul.mubr.bf16.gmra.mxu0 %v9313
        %v10210 = vpop.f32.mrf.mxu0
        %v10211 = vadd.f32 %v9938, %v10210
        %v10212 = vpop.f32.mrf.mxu0
        %v10213 = vpop.f32.mrf.mxu0
        %v10214 = vadd.f32 %v9941, %v10213
        %v10215 = vpop.f32.mrf.mxu0
        %10216 = vmatprep.mubr.bf16.mxu0 %v9319
        %10217 = vmatmul.mubr.bf16.gmra.mxu0 %v9318
        %v10218 = vpop.f32.mrf.mxu0
        %v10219 = vadd.f32 %v9946, %v10218
        %v10220 = vpop.f32.mrf.mxu0
        %v10221 = vpop.f32.mrf.mxu0
        %v10222 = vadd.f32 %v9949, %v10221
        %v10223 = vpop.f32.mrf.mxu0
        %10224 = vmatprep.mubr.bf16.mxu0 %v9324
        %10225 = vmatmul.mubr.bf16.gmra.mxu0 %v9323
        %v10226 = vpop.f32.mrf.mxu0
        %v10227 = vadd.f32 %v9954, %v10226
        %v10228 = vpop.f32.mrf.mxu0
        %v10229 = vpop.f32.mrf.mxu0
        %v10230 = vadd.f32 %v9957, %v10229
        %v10231 = vpop.f32.mrf.mxu0
        %10232 = vmatprep.mubr.bf16.mxu0 %v9329
        %10233 = vmatmul.mubr.bf16.gmra.mxu0 %v9328
        %v10234 = vpop.f32.mrf.mxu0
        %v10235 = vadd.f32 %v9962, %v10234
        %v10236 = vpop.f32.mrf.mxu0
        %v10237 = vpop.f32.mrf.mxu0
        %v10238 = vadd.f32 %v9965, %v10237
        %v10239 = vpop.f32.mrf.mxu0
        %10240 = vmatprep.mubr.bf16.mxu0 %v9334
        %10241 = vmatmul.mubr.bf16.gmra.mxu0 %v9333
        %v10242 = vpop.f32.mrf.mxu0
        %v10243 = vadd.f32 %v9970, %v10242
        %v10244 = vpop.f32.mrf.mxu0
        %v10245 = vpop.f32.mrf.mxu0
        %v10246 = vadd.f32 %v9973, %v10245
        %v10247 = vpop.f32.mrf.mxu0
        %10248 = vmatprep.mubr.bf16.mxu0 %v9339
        %10249 = vmatmul.mubr.bf16.gmra.mxu0 %v9338
        %v10250 = vpop.f32.mrf.mxu0
        %v10251 = vadd.f32 %v9978, %v10250
        %v10252 = vpop.f32.mrf.mxu0
        %v10253 = vpop.f32.mrf.mxu0
        %v10254 = vadd.f32 %v9981, %v10253
        %v10255 = vpop.f32.mrf.mxu0
        %10256 = vmatprep.mubr.bf16.mxu0 %v9344
        %10257 = vmatmul.mubr.bf16.gmra.mxu0 %v9343
        %v10258 = vpop.f32.mrf.mxu0
        %v10259 = vadd.f32 %v9986, %v10258
        %v10260 = vpop.f32.mrf.mxu0
        %v10261 = vpop.f32.mrf.mxu0
        %v10262 = vadd.f32 %v9989, %v10261
        %v10263 = vpop.f32.mrf.mxu0
        %10264 = vmatprep.mubr.bf16.mxu0 %v9349
        %10265 = vmatmul.mubr.bf16.gmra.mxu0 %v9348
        %v10266 = vpop.f32.mrf.mxu0
        %v10267 = vadd.f32 %v9994, %v10266
        %v10268 = vpop.f32.mrf.mxu0
        %v10269 = vpop.f32.mrf.mxu0
        %v10270 = vadd.f32 %v9997, %v10269
        %v10271 = vpop.f32.mrf.mxu0
        %10272 = vmatprep.mubr.bf16.mxu0 %v9354
        %10273 = vmatmul.mubr.bf16.gmra.mxu0 %v9353
        %v10274 = vpop.f32.mrf.mxu0
        %v10275 = vadd.f32 %v10002, %v10274
        %v10276 = vpop.f32.mrf.mxu0
        %v10277 = vpop.f32.mrf.mxu0
        %v10278 = vadd.f32 %v10005, %v10277
        %v10279 = vpop.f32.mrf.mxu0
        %10280 = vmatprep.mubr.bf16.mxu0 %v9359
        %10281 = vmatmul.mubr.bf16.gmra.mxu0 %v9358
        %v10282 = vpop.f32.mrf.mxu0
        %v10283 = vadd.f32 %v10010, %v10282
        %v10284 = vpop.f32.mrf.mxu0
        %v10285 = vpop.f32.mrf.mxu0
        %v10286 = vadd.f32 %v10013, %v10285
        %v10287 = vpop.f32.mrf.mxu0
        %10288 = vmatprep.mubr.bf16.mxu0 %v9364
        %10289 = vmatmul.mubr.bf16.gmra.mxu0 %v9363
        %v10290 = vpop.f32.mrf.mxu0
        %v10291 = vadd.f32 %v10018, %v10290
        %v10292 = vpop.f32.mrf.mxu0
        %v10293 = vpop.f32.mrf.mxu0
        %v10294 = vadd.f32 %v10021, %v10293
        %v10295 = vpop.f32.mrf.mxu0
        %10296 = vmatprep.mubr.bf16.mxu0 %v9369
        %10297 = vmatmul.mubr.bf16.gmra.mxu0 %v9368
        %v10298 = vpop.f32.mrf.mxu0
        %v10299 = vadd.f32 %v10026, %v10298
        %v10300 = vpop.f32.mrf.mxu0
        %v10301 = vpop.f32.mrf.mxu0
        %v10302 = vadd.f32 %v10029, %v10301
        %v10303 = vpop.f32.mrf.mxu0
        %10304 = vmatprep.mubr.bf16.mxu0 %v9374
        %10305 = vmatmul.mubr.bf16.gmra.mxu0 %v9373
        %v10306 = vpop.f32.mrf.mxu0
        %v10307 = vadd.f32 %v10034, %v10306
        %v10308 = vpop.f32.mrf.mxu0
        %v10309 = vpop.f32.mrf.mxu0
        %v10310 = vadd.f32 %v10037, %v10309
        %v10311 = vpop.f32.mrf.mxu0
        %10312 = vmatprep.mubr.bf16.mxu0 %v9379
        %10313 = vmatmul.mubr.bf16.gmra.mxu0 %v9378
        %v10314 = vpop.f32.mrf.mxu0
        %v10315 = vadd.f32 %v10042, %v10314
        %v10316 = vpop.f32.mrf.mxu0
        %v10317 = vpop.f32.mrf.mxu0
        %v10318 = vadd.f32 %v10045, %v10317
        %v10319 = vpop.f32.mrf.mxu0
        %10320 = vmatprep.mubr.bf16.mxu0 %v9384
        %10321 = vmatmul.mubr.bf16.gmra.mxu0 %v9383
        %v10322 = vpop.f32.mrf.mxu0
        %v10323 = vadd.f32 %v10050, %v10322
        %v10324 = vpop.f32.mrf.mxu0
        %v10325 = vpop.f32.mrf.mxu0
        %v10326 = vadd.f32 %v10053, %v10325
        %v10327 = vpop.f32.mrf.mxu0
        %10328 = vmatprep.mubr.bf16.mxu0 %v9389
        %10329 = vmatmul.mubr.bf16.gmra.mxu0 %v9388
        %v10330 = vpop.f32.mrf.mxu0
        %v10331 = vadd.f32 %v10058, %v10330
        %v10332 = vpop.f32.mrf.mxu0
        %v10333 = vpop.f32.mrf.mxu0
        %v10334 = vadd.f32 %v10061, %v10333
        %v10335 = vpop.f32.mrf.mxu0
        %10336 = vmatprep.mubr.bf16.mxu0 %v9394
        %10337 = vmatmul.mubr.bf16.gmra.mxu0 %v9393
        %v10338 = vpop.f32.mrf.mxu0
        %v10339 = vadd.f32 %v10066, %v10338
        %v10340 = vpop.f32.mrf.mxu0
        %v10341 = vpop.f32.mrf.mxu0
        %v10342 = vadd.f32 %v10069, %v10341
        %v10343 = vpop.f32.mrf.mxu0
        %10344 = vmatprep.mubr.bf16.mxu0 %v9399
        %10345 = vmatmul.mubr.bf16.gmra.mxu0 %v9398
        %v10346 = vpop.f32.mrf.mxu0
        %v10347 = vadd.f32 %v10074, %v10346
        %v10348 = vpop.f32.mrf.mxu0
        %v10349 = vpop.f32.mrf.mxu0
        %v10350 = vadd.f32 %v10077, %v10349
        %v10351 = vpop.f32.mrf.mxu0
        %10352 = vmatprep.mubr.bf16.mxu0 %v9404
        %10353 = vmatmul.mubr.bf16.gmra.mxu0 %v9403
        %v10354 = vpop.f32.mrf.mxu0
        %v10355 = vadd.f32 %v10082, %v10354
        %v10356 = vpop.f32.mrf.mxu0
        %v10357 = vpop.f32.mrf.mxu0
        %v10358 = vadd.f32 %v10085, %v10357
        %v10359 = vpop.f32.mrf.mxu0
        %10360 = vmatprep.mubr.bf16.mxu0 %v9409
        %10361 = vmatmul.mubr.bf16.gmra.mxu0 %v9408
        %v10362 = vpop.f32.mrf.mxu0
        %v10363 = vadd.f32 %v10090, %v10362
        %v10364 = vpop.f32.mrf.mxu0
        %v10365 = vpop.f32.mrf.mxu0
        %v10366 = vadd.f32 %v10093, %v10365
        %v10367 = vpop.f32.mrf.mxu0
        %10368 = vmatprep.mubr.bf16.mxu0 %v9414
        %10369 = vmatmul.mubr.bf16.gmra.mxu0 %v9413
        %v10370 = vpop.f32.mrf.mxu0
        %v10371 = vadd.f32 %v10098, %v10370
        %v10372 = vpop.f32.mrf.mxu0
        %v10373 = vpop.f32.mrf.mxu0
        %v10374 = vadd.f32 %v10101, %v10373
        %v10375 = vpop.f32.mrf.mxu0
        %10376 = vmatprep.mubr.bf16.mxu0 %v9419
        %10377 = vmatmul.mubr.bf16.gmra.mxu0 %v9418
        %v10378 = vpop.f32.mrf.mxu0
        %v10379 = vadd.f32 %v10106, %v10378
        %v10380 = vpop.f32.mrf.mxu0
        %v10381 = vpop.f32.mrf.mxu0
        %v10382 = vadd.f32 %v10109, %v10381
        %v10383 = vpop.f32.mrf.mxu0
        %10384 = vmatprep.mubr.bf16.mxu0 %v9424
        %10385 = vmatmul.mubr.bf16.gmra.mxu0 %v9423
        %v10386 = vpop.f32.mrf.mxu0
        %v10387 = vadd.f32 %v10114, %v10386
        %v10388 = vpop.f32.mrf.mxu0
        %v10389 = vpop.f32.mrf.mxu0
        %v10390 = vadd.f32 %v10117, %v10389
        %v10391 = vpop.f32.mrf.mxu0
        %10392 = vmatprep.mubr.bf16.mxu0 %v9429
        %10393 = vmatmul.mubr.bf16.gmra.mxu0 %v9428
        %v10394 = vpop.f32.mrf.mxu0
        %v10395 = vadd.f32 %v10122, %v10394
        %v10396 = vpop.f32.mrf.mxu0
        %v10397 = vpop.f32.mrf.mxu0
        %v10398 = vadd.f32 %v10125, %v10397
        %v10399 = vpop.f32.mrf.mxu0
        %10400 = vmatprep.mubr.bf16.mxu0 %v9434
        %10401 = vmatmul.mubr.bf16.gmra.mxu0 %v9433
        %v10402 = vpop.f32.mrf.mxu0
        %v10403 = vadd.f32 %v10130, %v10402
        %v10404 = vpop.f32.mrf.mxu0
        %v10405 = vpop.f32.mrf.mxu0
        %v10406 = vadd.f32 %v10133, %v10405
        %v10407 = vpop.f32.mrf.mxu0
        %10408 = vdwg.mxu0
        %10409 = vmatprep.subr.bf16.mxu0 0
        %10410 = vmatpush1.bf16.msra.mxu0 0
        %10411 = vmatprep.subr.bf16.mxu0 0
        %10412 = vmatpush1.bf16.msra.mxu0 0
        %10413 = vmatprep.subr.bf16.mxu0 0
        %10414 = vmatpush1.bf16.msra.mxu0 0
        %10415 = vmatprep.subr.bf16.mxu0 0
        %10416 = vmatpush1.bf16.msra.mxu0 0
        %10417 = vmatprep.subr.bf16.mxu0 0
        %10418 = vmatpush1.bf16.msra.mxu0 %v9735
        %10419 = vmatprep.subr.bf16.mxu0 0
        %10420 = vmatpush1.bf16.msra.mxu0 %v9734
        %10421 = vmatprep.subr.bf16.mxu0 0
        %10422 = vmatpush1.bf16.msra.mxu0 %v9733
        %10423 = vmatprep.subr.bf16.mxu0 0
        %10424 = vmatpush1.bf16.msra.mxu0 %v9732
        %10425 = vmatprep.subr.bf16.mxu0 0
        %10426 = vmatpush2.bf16.msra.mxu0 0
        %10427 = vmatprep.subr.bf16.mxu0 0
        %10428 = vmatpush2.bf16.msra.mxu0 0
        %10429 = vmatprep.subr.bf16.mxu0 0
        %10430 = vmatpush2.bf16.msra.mxu0 0
        %10431 = vmatprep.subr.bf16.mxu0 0
        %10432 = vmatpush2.bf16.msra.mxu0 0
        %10433 = vmatprep.subr.bf16.mxu0 0
        %10434 = vmatpush2.bf16.msra.mxu0 0
        %10435 = vmatprep.subr.bf16.mxu0 0
        %10436 = vmatpush2.bf16.msra.mxu0 0
        %10437 = vmatprep.subr.bf16.mxu0 0
        %10438 = vmatpush2.bf16.msra.mxu0 0
        %10439 = vmatprep.subr.bf16.mxu0 0
        %10440 = vmatpush2.bf16.msra.mxu0 0
        %10441 = vmatprep.mubr.bf16.mxu0 0
        %10442 = vmatmul.mubr.bf16.gmra.mxu0 %v9774
        %v10443 = vpop.f32.mrf.mxu0
        %v10444 = vadd.f32 %v10171, %v10443
        %v10445 = vpop.f32.mrf.mxu0
        %v10446 = vpop.f32.mrf.mxu0
        %v10447 = vadd.f32 %v10174, %v10446
        %v10448 = vpop.f32.mrf.mxu0
        %10449 = vmatprep.mubr.bf16.mxu0 0
        %10450 = vmatmul.mubr.bf16.gmra.mxu0 %v9777
        %v10451 = vpop.f32.mrf.mxu0
        %v10452 = vadd.f32 %v10179, %v10451
        %v10453 = vpop.f32.mrf.mxu0
        %v10454 = vpop.f32.mrf.mxu0
        %v10455 = vadd.f32 %v10182, %v10454
        %v10456 = vpop.f32.mrf.mxu0
        %10457 = vmatprep.mubr.bf16.mxu0 0
        %10458 = vmatmul.mubr.bf16.gmra.mxu0 %v9780
        %v10459 = vpop.f32.mrf.mxu0
        %v10460 = vadd.f32 %v10187, %v10459
        %v10461 = vpop.f32.mrf.mxu0
        %v10462 = vpop.f32.mrf.mxu0
        %v10463 = vadd.f32 %v10190, %v10462
        %v10464 = vpop.f32.mrf.mxu0
        %10465 = vmatprep.mubr.bf16.mxu0 0
        %10466 = vmatmul.mubr.bf16.gmra.mxu0 %v9783
        %v10467 = vpop.f32.mrf.mxu0
        %v10468 = vadd.f32 %v10195, %v10467
        %v10469 = vpop.f32.mrf.mxu0
        %v10470 = vpop.f32.mrf.mxu0
        %v10471 = vadd.f32 %v10198, %v10470
        %v10472 = vpop.f32.mrf.mxu0
        %10473 = vmatprep.mubr.bf16.mxu0 0
        %10474 = vmatmul.mubr.bf16.gmra.mxu0 %v9786
        %v10475 = vpop.f32.mrf.mxu0
        %v10476 = vadd.f32 %v10203, %v10475
        %v10477 = vpop.f32.mrf.mxu0
        %v10478 = vpop.f32.mrf.mxu0
        %v10479 = vadd.f32 %v10206, %v10478
        %v10480 = vpop.f32.mrf.mxu0
        %10481 = vmatprep.mubr.bf16.mxu0 0
        %10482 = vmatmul.mubr.bf16.gmra.mxu0 %v9789
        %v10483 = vpop.f32.mrf.mxu0
        %v10484 = vadd.f32 %v10211, %v10483
        %v10485 = vpop.f32.mrf.mxu0
        %v10486 = vpop.f32.mrf.mxu0
        %v10487 = vadd.f32 %v10214, %v10486
        %v10488 = vpop.f32.mrf.mxu0
        %10489 = vmatprep.mubr.bf16.mxu0 0
        %10490 = vmatmul.mubr.bf16.gmra.mxu0 %v9792
        %v10491 = vpop.f32.mrf.mxu0
        %v10492 = vadd.f32 %v10219, %v10491
        %v10493 = vpop.f32.mrf.mxu0
        %v10494 = vpop.f32.mrf.mxu0
        %v10495 = vadd.f32 %v10222, %v10494
        %v10496 = vpop.f32.mrf.mxu0
        %10497 = vmatprep.mubr.bf16.mxu0 0
        %10498 = vmatmul.mubr.bf16.gmra.mxu0 %v9795
        %v10499 = vpop.f32.mrf.mxu0
        %v10500 = vadd.f32 %v10227, %v10499
        %v10501 = vpop.f32.mrf.mxu0
        %v10502 = vpop.f32.mrf.mxu0
        %v10503 = vadd.f32 %v10230, %v10502
        %v10504 = vpop.f32.mrf.mxu0
        %10505 = vmatprep.mubr.bf16.mxu0 0
        %10506 = vmatmul.mubr.bf16.gmra.mxu0 %v9798
        %v10507 = vpop.f32.mrf.mxu0
        %v10508 = vadd.f32 %v10235, %v10507
        %v10509 = vpop.f32.mrf.mxu0
        %v10510 = vpop.f32.mrf.mxu0
        %v10511 = vadd.f32 %v10238, %v10510
        %v10512 = vpop.f32.mrf.mxu0
        %10513 = vmatprep.mubr.bf16.mxu0 0
        %10514 = vmatmul.mubr.bf16.gmra.mxu0 %v9801
        %v10515 = vpop.f32.mrf.mxu0
        %v10516 = vadd.f32 %v10243, %v10515
        %v10517 = vpop.f32.mrf.mxu0
        %v10518 = vpop.f32.mrf.mxu0
        %v10519 = vadd.f32 %v10246, %v10518
        %v10520 = vpop.f32.mrf.mxu0
        %10521 = vmatprep.mubr.bf16.mxu0 0
        %10522 = vmatmul.mubr.bf16.gmra.mxu0 %v9804
        %v10523 = vpop.f32.mrf.mxu0
        %v10524 = vadd.f32 %v10251, %v10523
        %v10525 = vpop.f32.mrf.mxu0
        %v10526 = vpop.f32.mrf.mxu0
        %v10527 = vadd.f32 %v10254, %v10526
        %v10528 = vpop.f32.mrf.mxu0
        %10529 = vmatprep.mubr.bf16.mxu0 0
        %10530 = vmatmul.mubr.bf16.gmra.mxu0 %v9807
        %v10531 = vpop.f32.mrf.mxu0
        %v10532 = vadd.f32 %v10259, %v10531
        %v10533 = vpop.f32.mrf.mxu0
        %v10534 = vpop.f32.mrf.mxu0
        %v10535 = vadd.f32 %v10262, %v10534
        %v10536 = vpop.f32.mrf.mxu0
        %10537 = vmatprep.mubr.bf16.mxu0 0
        %10538 = vmatmul.mubr.bf16.gmra.mxu0 %v9810
        %v10539 = vpop.f32.mrf.mxu0
        %v10540 = vadd.f32 %v10267, %v10539
        %v10541 = vpop.f32.mrf.mxu0
        %v10542 = vpop.f32.mrf.mxu0
        %v10543 = vadd.f32 %v10270, %v10542
        %v10544 = vpop.f32.mrf.mxu0
        %10545 = vmatprep.mubr.bf16.mxu0 0
        %10546 = vmatmul.mubr.bf16.gmra.mxu0 %v9813
        %v10547 = vpop.f32.mrf.mxu0
        %v10548 = vadd.f32 %v10275, %v10547
        %v10549 = vpop.f32.mrf.mxu0
        %v10550 = vpop.f32.mrf.mxu0
        %v10551 = vadd.f32 %v10278, %v10550
        %v10552 = vpop.f32.mrf.mxu0
        %10553 = vmatprep.mubr.bf16.mxu0 0
        %10554 = vmatmul.mubr.bf16.gmra.mxu0 %v9816
        %v10555 = vpop.f32.mrf.mxu0
        %v10556 = vadd.f32 %v10283, %v10555
        %v10557 = vpop.f32.mrf.mxu0
        %v10558 = vpop.f32.mrf.mxu0
        %v10559 = vadd.f32 %v10286, %v10558
        %v10560 = vpop.f32.mrf.mxu0
        %10561 = vmatprep.mubr.bf16.mxu0 0
        %10562 = vmatmul.mubr.bf16.gmra.mxu0 %v9819
        %v10563 = vpop.f32.mrf.mxu0
        %v10564 = vadd.f32 %v10291, %v10563
        %v10565 = vpop.f32.mrf.mxu0
        %v10566 = vpop.f32.mrf.mxu0
        %v10567 = vadd.f32 %v10294, %v10566
        %v10568 = vpop.f32.mrf.mxu0
        %10569 = vmatprep.mubr.bf16.mxu0 0
        %10570 = vmatmul.mubr.bf16.gmra.mxu0 %v9822
        %v10571 = vpop.f32.mrf.mxu0
        %v10572 = vadd.f32 %v10299, %v10571
        %v10573 = vpop.f32.mrf.mxu0
        %v10574 = vpop.f32.mrf.mxu0
        %v10575 = vadd.f32 %v10302, %v10574
        %v10576 = vpop.f32.mrf.mxu0
        %10577 = vmatprep.mubr.bf16.mxu0 0
        %10578 = vmatmul.mubr.bf16.gmra.mxu0 %v9825
        %v10579 = vpop.f32.mrf.mxu0
        %v10580 = vadd.f32 %v10307, %v10579
        %v10581 = vpop.f32.mrf.mxu0
        %v10582 = vpop.f32.mrf.mxu0
        %v10583 = vadd.f32 %v10310, %v10582
        %v10584 = vpop.f32.mrf.mxu0
        %10585 = vmatprep.mubr.bf16.mxu0 0
        %10586 = vmatmul.mubr.bf16.gmra.mxu0 %v9828
        %v10587 = vpop.f32.mrf.mxu0
        %v10588 = vadd.f32 %v10315, %v10587
        %v10589 = vpop.f32.mrf.mxu0
        %v10590 = vpop.f32.mrf.mxu0
        %v10591 = vadd.f32 %v10318, %v10590
        %v10592 = vpop.f32.mrf.mxu0
        %10593 = vmatprep.mubr.bf16.mxu0 0
        %10594 = vmatmul.mubr.bf16.gmra.mxu0 %v9831
        %v10595 = vpop.f32.mrf.mxu0
        %v10596 = vadd.f32 %v10323, %v10595
        %v10597 = vpop.f32.mrf.mxu0
        %v10598 = vpop.f32.mrf.mxu0
        %v10599 = vadd.f32 %v10326, %v10598
        %v10600 = vpop.f32.mrf.mxu0
        %10601 = vmatprep.mubr.bf16.mxu0 0
        %10602 = vmatmul.mubr.bf16.gmra.mxu0 %v9834
        %v10603 = vpop.f32.mrf.mxu0
        %v10604 = vadd.f32 %v10331, %v10603
        %v10605 = vpop.f32.mrf.mxu0
        %v10606 = vpop.f32.mrf.mxu0
        %v10607 = vadd.f32 %v10334, %v10606
        %v10608 = vpop.f32.mrf.mxu0
        %10609 = vmatprep.mubr.bf16.mxu0 0
        %10610 = vmatmul.mubr.bf16.gmra.mxu0 %v9837
        %v10611 = vpop.f32.mrf.mxu0
        %v10612 = vadd.f32 %v10339, %v10611
        %v10613 = vpop.f32.mrf.mxu0
        %v10614 = vpop.f32.mrf.mxu0
        %v10615 = vadd.f32 %v10342, %v10614
        %v10616 = vpop.f32.mrf.mxu0
        %10617 = vmatprep.mubr.bf16.mxu0 0
        %10618 = vmatmul.mubr.bf16.gmra.mxu0 %v9840
        %v10619 = vpop.f32.mrf.mxu0
        %v10620 = vadd.f32 %v10347, %v10619
        %v10621 = vpop.f32.mrf.mxu0
        %v10622 = vpop.f32.mrf.mxu0
        %v10623 = vadd.f32 %v10350, %v10622
        %v10624 = vpop.f32.mrf.mxu0
        %10625 = vmatprep.mubr.bf16.mxu0 0
        %10626 = vmatmul.mubr.bf16.gmra.mxu0 %v9843
        %v10627 = vpop.f32.mrf.mxu0
        %v10628 = vadd.f32 %v10355, %v10627
        %v10629 = vpop.f32.mrf.mxu0
        %v10630 = vpop.f32.mrf.mxu0
        %v10631 = vadd.f32 %v10358, %v10630
        %v10632 = vpop.f32.mrf.mxu0
        %10633 = vmatprep.mubr.bf16.mxu0 0
        %10634 = vmatmul.mubr.bf16.gmra.mxu0 %v9846
        %v10635 = vpop.f32.mrf.mxu0
        %v10636 = vadd.f32 %v10363, %v10635
        %v10637 = vpop.f32.mrf.mxu0
        %v10638 = vpop.f32.mrf.mxu0
        %v10639 = vadd.f32 %v10366, %v10638
        %v10640 = vpop.f32.mrf.mxu0
        %10641 = vmatprep.mubr.bf16.mxu0 0
        %10642 = vmatmul.mubr.bf16.gmra.mxu0 %v9849
        %v10643 = vpop.f32.mrf.mxu0
        %v10644 = vadd.f32 %v10371, %v10643
        %v10645 = vpop.f32.mrf.mxu0
        %v10646 = vpop.f32.mrf.mxu0
        %v10647 = vadd.f32 %v10374, %v10646
        %v10648 = vpop.f32.mrf.mxu0
        %10649 = vmatprep.mubr.bf16.mxu0 0
        %10650 = vmatmul.mubr.bf16.gmra.mxu0 %v9852
        %v10651 = vpop.f32.mrf.mxu0
        %v10652 = vadd.f32 %v10379, %v10651
        %v10653 = vpop.f32.mrf.mxu0
        %v10654 = vpop.f32.mrf.mxu0
        %v10655 = vadd.f32 %v10382, %v10654
        %v10656 = vpop.f32.mrf.mxu0
        %10657 = vmatprep.mubr.bf16.mxu0 0
        %10658 = vmatmul.mubr.bf16.gmra.mxu0 %v9855
        %v10659 = vpop.f32.mrf.mxu0
        %v10660 = vadd.f32 %v10387, %v10659
        %v10661 = vpop.f32.mrf.mxu0
        %v10662 = vpop.f32.mrf.mxu0
        %v10663 = vadd.f32 %v10390, %v10662
        %v10664 = vpop.f32.mrf.mxu0
        %10665 = vmatprep.mubr.bf16.mxu0 0
        %10666 = vmatmul.mubr.bf16.gmra.mxu0 %v9858
        %v10667 = vpop.f32.mrf.mxu0
        %v10668 = vadd.f32 %v10395, %v10667
        %v10669 = vpop.f32.mrf.mxu0
        %v10670 = vpop.f32.mrf.mxu0
        %v10671 = vadd.f32 %v10398, %v10670
        %v10672 = vpop.f32.mrf.mxu0
        %10673 = vmatprep.mubr.bf16.mxu0 0
        %10674 = vmatmul.mubr.bf16.gmra.mxu0 %v9861
        %v10675 = vpop.f32.mrf.mxu0
        %v10676 = vadd.f32 %v10403, %v10675
        %v10677 = vpop.f32.mrf.mxu0
        %v10678 = vpop.f32.mrf.mxu0
        %v10679 = vadd.f32 %v10406, %v10678
        %v10680 = vpop.f32.mrf.mxu0
        %10681 = vdwg.mxu0
        %10682 = vst [vmem:[#allocation4] sm:$0xff] %v10444
        %10683 = vst [vmem:[#allocation4 + $0x8] sm:$0xff] %v10447
        %10684 = vst [vmem:[#allocation4 + $0x10] sm:$0xff] %v10452
        %10685 = vst [vmem:[#allocation4 + $0x18] sm:$0xff] %v10455
        %10686 = vst [vmem:[#allocation4 + $0x20] sm:$0xff] %v10460
        %10687 = vst [vmem:[#allocation4 + $0x28] sm:$0xff] %v10463
        %10688 = vst [vmem:[#allocation4 + $0x30] sm:$0xff] %v10468
        %10689 = vst [vmem:[#allocation4 + $0x38] sm:$0xff] %v10471
        %10690 = vst [vmem:[#allocation4 + $0x40] sm:$0xff] %v10476
        %10691 = vst [vmem:[#allocation4 + $0x48] sm:$0xff] %v10479
        %10692 = vst [vmem:[#allocation4 + $0x50] sm:$0xff] %v10484
        %10693 = vst [vmem:[#allocation4 + $0x58] sm:$0xff] %v10487
        %10694 = vst [vmem:[#allocation4 + $0x60] sm:$0xff] %v10492
        %10695 = vst [vmem:[#allocation4 + $0x68] sm:$0xff] %v10495
        %10696 = vst [vmem:[#allocation4 + $0x70] sm:$0xff] %v10500
        %10697 = vst [vmem:[#allocation4 + $0x78] sm:$0xff] %v10503
        %10698 = vst [vmem:[#allocation4 + $0x80] sm:$0xff] %v10508
        %10699 = vst [vmem:[#allocation4 + $0x88] sm:$0xff] %v10511
        %10700 = vst [vmem:[#allocation4 + $0x90] sm:$0xff] %v10516
        %10701 = vst [vmem:[#allocation4 + $0x98] sm:$0xff] %v10519
        %10702 = vst [vmem:[#allocation4 + $0xa0] sm:$0xff] %v10524
        %10703 = vst [vmem:[#allocation4 + $0xa8] sm:$0xff] %v10527
        %10704 = vst [vmem:[#allocation4 + $0xb0] sm:$0xff] %v10532
        %10705 = vst [vmem:[#allocation4 + $0xb8] sm:$0xff] %v10535
        %10706 = vst [vmem:[#allocation4 + $0xc0] sm:$0xff] %v10540
        %10707 = vst [vmem:[#allocation4 + $0xc8] sm:$0xff] %v10543
        %10708 = vst [vmem:[#allocation4 + $0xd0] sm:$0xff] %v10548
        %10709 = vst [vmem:[#allocation4 + $0xd8] sm:$0xff] %v10551
        %10710 = vst [vmem:[#allocation4 + $0xe0] sm:$0xff] %v10556
        %10711 = vst [vmem:[#allocation4 + $0xe8] sm:$0xff] %v10559
        %10712 = vst [vmem:[#allocation4 + $0xf0] sm:$0xff] %v10564
        %10713 = vst [vmem:[#allocation4 + $0xf8] sm:$0xff] %v10567
        %10714 = vst [vmem:[#allocation4 + $0x100] sm:$0xff] %v10572
        %10715 = vst [vmem:[#allocation4 + $0x108] sm:$0xff] %v10575
        %10716 = vst [vmem:[#allocation4 + $0x110] sm:$0xff] %v10580
        %10717 = vst [vmem:[#allocation4 + $0x118] sm:$0xff] %v10583
        %10718 = vst [vmem:[#allocation4 + $0x120] sm:$0xff] %v10588
        %10719 = vst [vmem:[#allocation4 + $0x128] sm:$0xff] %v10591
        %10720 = vst [vmem:[#allocation4 + $0x130] sm:$0xff] %v10596
        %10721 = vst [vmem:[#allocation4 + $0x138] sm:$0xff] %v10599
        %10722 = vst [vmem:[#allocation4 + $0x140] sm:$0xff] %v10604
        %10723 = vst [vmem:[#allocation4 + $0x148] sm:$0xff] %v10607
        %10724 = vst [vmem:[#allocation4 + $0x150] sm:$0xff] %v10612
        %10725 = vst [vmem:[#allocation4 + $0x158] sm:$0xff] %v10615
        %10726 = vst [vmem:[#allocation4 + $0x160] sm:$0xff] %v10620
        %10727 = vst [vmem:[#allocation4 + $0x168] sm:$0xff] %v10623
        %10728 = vst [vmem:[#allocation4 + $0x170] sm:$0xff] %v10628
        %10729 = vst [vmem:[#allocation4 + $0x178] sm:$0xff] %v10631
        %10730 = vst [vmem:[#allocation4 + $0x180] sm:$0xff] %v10636
        %10731 = vst [vmem:[#allocation4 + $0x188] sm:$0xff] %v10639
        %10732 = vst [vmem:[#allocation4 + $0x190] sm:$0xff] %v10644
        %10733 = vst [vmem:[#allocation4 + $0x198] sm:$0xff] %v10647
        %10734 = vst [vmem:[#allocation4 + $0x1a0] sm:$0xff] %v10652
        %10735 = vst [vmem:[#allocation4 + $0x1a8] sm:$0xff] %v10655
        %10736 = vst [vmem:[#allocation4 + $0x1b0] sm:$0xff] %v10660
        %10737 = vst [vmem:[#allocation4 + $0x1b8] sm:$0xff] %v10663
        %10738 = vst [vmem:[#allocation4 + $0x1c0] sm:$0xff] %v10668
        %10739 = vst [vmem:[#allocation4 + $0x1c8] sm:$0xff] %v10671
        %10740 = vst [vmem:[#allocation4 + $0x1d0] sm:$0xff] %v10676
        %10741 = vst [vmem:[#allocation4 + $0x1d8] sm:$0xff] %v10679
        %v10742 = vld [vmem:[#allocation4] ss:$2 sm:$0xff]
        %s10743 = scalar_lea.vmem [#allocation4], 16
        %v10744 = vld [vmem:[%s10743] ss:$2 sm:$0xff]
        %s10745 = scalar_lea.vmem [#allocation4], 32
        %v10746 = vld [vmem:[%s10745] ss:$2 sm:$0xff]
        %s10747 = scalar_lea.vmem [#allocation4], 48
        %v10748 = vld [vmem:[%s10747] ss:$2 sm:$0xff]
        %s10749 = scalar_lea.vmem [#allocation4], 64
        %v10750 = vld [vmem:[%s10749] ss:$2 sm:$0xff]
        %s10751 = scalar_lea.vmem [#allocation4], 80
        %v10752 = vld [vmem:[%s10751] ss:$2 sm:$0xff]
        %s10753 = scalar_lea.vmem [#allocation4], 96
        %v10754 = vld [vmem:[%s10753] ss:$2 sm:$0xff]
        %s10755 = scalar_lea.vmem [#allocation4], 112
        %v10756 = vld [vmem:[%s10755] ss:$2 sm:$0xff]
        %s10757 = scalar_lea.vmem [#allocation4], 128
        %v10758 = vld [vmem:[%s10757] ss:$2 sm:$0xff]
        %s10759 = scalar_lea.vmem [#allocation4], 144
        %v10760 = vld [vmem:[%s10759] ss:$2 sm:$0xff]
        %s10761 = scalar_lea.vmem [#allocation4], 160
        %v10762 = vld [vmem:[%s10761] ss:$2 sm:$0xff]
        %s10763 = scalar_lea.vmem [#allocation4], 176
        %v10764 = vld [vmem:[%s10763] ss:$2 sm:$0xff]
        %s10765 = scalar_lea.vmem [#allocation4], 192
        %v10766 = vld [vmem:[%s10765] ss:$2 sm:$0xff]
        %s10767 = scalar_lea.vmem [#allocation4], 208
        %v10768 = vld [vmem:[%s10767] ss:$2 sm:$0xff]
        %s10769 = scalar_lea.vmem [#allocation4], 224
        %v10770 = vld [vmem:[%s10769] ss:$2 sm:$0xff]
        %s10771 = scalar_lea.vmem [#allocation4], 240
        %v10772 = vld [vmem:[%s10771] ss:$2 sm:$0xff]
        %s10773 = scalar_lea.vmem [#allocation4], 256
        %v10774 = vld [vmem:[%s10773] ss:$2 sm:$0xff]
        %s10775 = scalar_lea.vmem [#allocation4], 272
        %v10776 = vld [vmem:[%s10775] ss:$2 sm:$0xff]
        %s10777 = scalar_lea.vmem [#allocation4], 288
        %v10778 = vld [vmem:[%s10777] ss:$2 sm:$0xff]
        %s10779 = scalar_lea.vmem [#allocation4], 304
        %v10780 = vld [vmem:[%s10779] ss:$2 sm:$0xff]
        %s10781 = scalar_lea.vmem [#allocation4], 320
        %v10782 = vld [vmem:[%s10781] ss:$2 sm:$0xff]
        %s10783 = scalar_lea.vmem [#allocation4], 336
        %v10784 = vld [vmem:[%s10783] ss:$2 sm:$0xff]
        %s10785 = scalar_lea.vmem [#allocation4], 352
        %v10786 = vld [vmem:[%s10785] ss:$2 sm:$0xff]
        %s10787 = scalar_lea.vmem [#allocation4], 368
        %v10788 = vld [vmem:[%s10787] ss:$2 sm:$0xff]
        %s10789 = scalar_lea.vmem [#allocation4], 384
        %v10790 = vld [vmem:[%s10789] ss:$2 sm:$0xff]
        %s10791 = scalar_lea.vmem [#allocation4], 400
        %v10792 = vld [vmem:[%s10791] ss:$2 sm:$0xff]
        %s10793 = scalar_lea.vmem [#allocation4], 416
        %v10794 = vld [vmem:[%s10793] ss:$2 sm:$0xff]
        %s10795 = scalar_lea.vmem [#allocation4], 432
        %v10796 = vld [vmem:[%s10795] ss:$2 sm:$0xff]
        %s10797 = scalar_lea.vmem [#allocation4], 448
        %v10798 = vld [vmem:[%s10797] ss:$2 sm:$0xff]
        %s10799 = scalar_lea.vmem [#allocation4], 464
        %v10800 = vld [vmem:[%s10799] ss:$2 sm:$0xff]
        %s10801 = scalar_lea.vmem [#allocation4], 1
        %v10802 = vld [vmem:[%s10801] ss:$2 sm:$0xff]
        %s10803 = scalar_lea.vmem [#allocation4], 17
        %v10804 = vld [vmem:[%s10803] ss:$2 sm:$0xff]
        %s10805 = scalar_lea.vmem [#allocation4], 33
        %v10806 = vld [vmem:[%s10805] ss:$2 sm:$0xff]
        %s10807 = scalar_lea.vmem [#allocation4], 49
        %v10808 = vld [vmem:[%s10807] ss:$2 sm:$0xff]
        %s10809 = scalar_lea.vmem [#allocation4], 65
        %v10810 = vld [vmem:[%s10809] ss:$2 sm:$0xff]
        %s10811 = scalar_lea.vmem [#allocation4], 81
        %v10812 = vld [vmem:[%s10811] ss:$2 sm:$0xff]
        %s10813 = scalar_lea.vmem [#allocation4], 97
        %v10814 = vld [vmem:[%s10813] ss:$2 sm:$0xff]
        %s10815 = scalar_lea.vmem [#allocation4], 113
        %v10816 = vld [vmem:[%s10815] ss:$2 sm:$0xff]
        %s10817 = scalar_lea.vmem [#allocation4], 129
        %v10818 = vld [vmem:[%s10817] ss:$2 sm:$0xff]
        %s10819 = scalar_lea.vmem [#allocation4], 145
        %v10820 = vld [vmem:[%s10819] ss:$2 sm:$0xff]
        %s10821 = scalar_lea.vmem [#allocation4], 161
        %v10822 = vld [vmem:[%s10821] ss:$2 sm:$0xff]
        %s10823 = scalar_lea.vmem [#allocation4], 177
        %v10824 = vld [vmem:[%s10823] ss:$2 sm:$0xff]
        %s10825 = scalar_lea.vmem [#allocation4], 193
        %v10826 = vld [vmem:[%s10825] ss:$2 sm:$0xff]
        %s10827 = scalar_lea.vmem [#allocation4], 209
        %v10828 = vld [vmem:[%s10827] ss:$2 sm:$0xff]
        %s10829 = scalar_lea.vmem [#allocation4], 225
        %v10830 = vld [vmem:[%s10829] ss:$2 sm:$0xff]
        %s10831 = scalar_lea.vmem [#allocation4], 241
        %v10832 = vld [vmem:[%s10831] ss:$2 sm:$0xff]
        %s10833 = scalar_lea.vmem [#allocation4], 257
        %v10834 = vld [vmem:[%s10833] ss:$2 sm:$0xff]
        %s10835 = scalar_lea.vmem [#allocation4], 273
        %v10836 = vld [vmem:[%s10835] ss:$2 sm:$0xff]
        %s10837 = scalar_lea.vmem [#allocation4], 289
        %v10838 = vld [vmem:[%s10837] ss:$2 sm:$0xff]
        %s10839 = scalar_lea.vmem [#allocation4], 305
        %v10840 = vld [vmem:[%s10839] ss:$2 sm:$0xff]
        %s10841 = scalar_lea.vmem [#allocation4], 321
        %v10842 = vld [vmem:[%s10841] ss:$2 sm:$0xff]
        %s10843 = scalar_lea.vmem [#allocation4], 337
        %v10844 = vld [vmem:[%s10843] ss:$2 sm:$0xff]
        %s10845 = scalar_lea.vmem [#allocation4], 353
        %v10846 = vld [vmem:[%s10845] ss:$2 sm:$0xff]
        %s10847 = scalar_lea.vmem [#allocation4], 369
        %v10848 = vld [vmem:[%s10847] ss:$2 sm:$0xff]
        %s10849 = scalar_lea.vmem [#allocation4], 385
        %v10850 = vld [vmem:[%s10849] ss:$2 sm:$0xff]
        %s10851 = scalar_lea.vmem [#allocation4], 401
        %v10852 = vld [vmem:[%s10851] ss:$2 sm:$0xff]
        %s10853 = scalar_lea.vmem [#allocation4], 417
        %v10854 = vld [vmem:[%s10853] ss:$2 sm:$0xff]
        %s10855 = scalar_lea.vmem [#allocation4], 433
        %v10856 = vld [vmem:[%s10855] ss:$2 sm:$0xff]
        %s10857 = scalar_lea.vmem [#allocation4], 449
        %v10858 = vld [vmem:[%s10857] ss:$2 sm:$0xff]
        %s10859 = scalar_lea.vmem [#allocation4], 465
        %v10860 = vld [vmem:[%s10859] ss:$2 sm:$0xff]
        %v10861 = vmax.f32 %v10742, %v10802
        %v10862 = vmax.f32 %v10744, %v10804
        %v10863 = vmax.f32 %v10746, %v10806
        %v10864 = vmax.f32 %v10748, %v10808
        %v10865 = vmax.f32 %v10750, %v10810
        %v10866 = vmax.f32 %v10752, %v10812
        %v10867 = vmax.f32 %v10754, %v10814
        %v10868 = vmax.f32 %v10756, %v10816
        %v10869 = vmax.f32 %v10758, %v10818
        %v10870 = vmax.f32 %v10760, %v10820
        %v10871 = vmax.f32 %v10762, %v10822
        %v10872 = vmax.f32 %v10764, %v10824
        %v10873 = vmax.f32 %v10766, %v10826
        %v10874 = vmax.f32 %v10768, %v10828
        %v10875 = vmax.f32 %v10770, %v10830
        %v10876 = vmax.f32 %v10772, %v10832
        %v10877 = vmax.f32 %v10774, %v10834
        %v10878 = vmax.f32 %v10776, %v10836
        %v10879 = vmax.f32 %v10778, %v10838
        %v10880 = vmax.f32 %v10780, %v10840
        %v10881 = vmax.f32 %v10782, %v10842
        %v10882 = vmax.f32 %v10784, %v10844
        %v10883 = vmax.f32 %v10786, %v10846
        %v10884 = vmax.f32 %v10788, %v10848
        %v10885 = vmax.f32 %v10790, %v10850
        %v10886 = vmax.f32 %v10792, %v10852
        %v10887 = vmax.f32 %v10794, %v10854
        %v10888 = vmax.f32 %v10796, %v10856
        %v10889 = vmax.f32 %v10798, %v10858
        %v10890 = vmax.f32 %v10800, %v10860
        %vm10911 = vcmask 1043456
        %v10912 = vrot.slane %v10862, 4
        %v10913 = vrot.slane %v10863, 4
        %v10914 = vsel %vm10911, %v10912, %v10913
        %v10915 = vrot.slane %v10865, 4
        %v10916 = vrot.slane %v10866, 4
        %v10917 = vsel %vm10911, %v10915, %v10916
        %v10918 = vrot.slane %v10868, 4
        %v10919 = vrot.slane %v10869, 4
        %v10920 = vsel %vm10911, %v10918, %v10919
        %v10921 = vrot.slane %v10871, 4
        %v10922 = vrot.slane %v10872, 4
        %v10923 = vsel %vm10911, %v10921, %v10922
        %v10924 = vrot.slane %v10874, 4
        %v10925 = vrot.slane %v10875, 4
        %v10926 = vsel %vm10911, %v10924, %v10925
        %v10927 = vrot.slane %v10877, 4
        %v10928 = vrot.slane %v10878, 4
        %v10929 = vsel %vm10911, %v10927, %v10928
        %v10930 = vrot.slane %v10880, 4
        %v10931 = vrot.slane %v10881, 4
        %v10932 = vsel %vm10911, %v10930, %v10931
        %v10933 = vrot.slane %v10883, 4
        %v10934 = vrot.slane %v10884, 4
        %v10935 = vsel %vm10911, %v10933, %v10934
        %v10936 = vrot.slane %v10886, 4
        %v10937 = vrot.slane %v10887, 4
        %v10938 = vsel %vm10911, %v10936, %v10937
        %v10939 = vrot.slane %v10889, 4
        %v10940 = vrot.slane %v10890, 4
        %v10941 = vsel %vm10911, %v10939, %v10940
        %v10962 = vmax.f32 %v10861, %v10914
        %v10963 = vmax.f32 %v10862, %v10913
        %v10964 = vmax.f32 %v10864, %v10917
        %v10965 = vmax.f32 %v10865, %v10916
        %v10966 = vmax.f32 %v10867, %v10920
        %v10967 = vmax.f32 %v10868, %v10919
        %v10968 = vmax.f32 %v10870, %v10923
        %v10969 = vmax.f32 %v10871, %v10922
        %v10970 = vmax.f32 %v10873, %v10926
        %v10971 = vmax.f32 %v10874, %v10925
        %v10972 = vmax.f32 %v10876, %v10929
        %v10973 = vmax.f32 %v10877, %v10928
        %v10974 = vmax.f32 %v10879, %v10932
        %v10975 = vmax.f32 %v10880, %v10931
        %v10976 = vmax.f32 %v10882, %v10935
        %v10977 = vmax.f32 %v10883, %v10934
        %v10978 = vmax.f32 %v10885, %v10938
        %v10979 = vmax.f32 %v10886, %v10937
        %v10980 = vmax.f32 %v10888, %v10941
        %v10981 = vmax.f32 %v10889, %v10940
        %v10982 = vld [vmem:[%s4] sm:$0x1]
        %v10984 = vlaneseq
        %v10985 = vshrl.u32 %v10984, 7
        %v10986 = vsub.s32 0, %v10985
        %v10987 = vrot.slane %v10982, %v10986
        %v10989 = vadd.f32 %v10962, %v10987
        %v10990 = vadd.f32 %v10963, %v10987
        %v10991 = vadd.f32 %v10964, %v10987
        %v10992 = vadd.f32 %v10965, %v10987
        %v10993 = vadd.f32 %v10966, %v10987
        %v10994 = vadd.f32 %v10967, %v10987
        %v10995 = vadd.f32 %v10968, %v10987
        %v10996 = vadd.f32 %v10969, %v10987
        %v10997 = vadd.f32 %v10970, %v10987
        %v10998 = vadd.f32 %v10971, %v10987
        %v10999 = vadd.f32 %v10972, %v10987
        %v11000 = vadd.f32 %v10973, %v10987
        %v11001 = vadd.f32 %v10974, %v10987
        %v11002 = vadd.f32 %v10975, %v10987
        %v11003 = vadd.f32 %v10976, %v10987
        %v11004 = vadd.f32 %v10977, %v10987
        %v11005 = vadd.f32 %v10978, %v10987
        %v11006 = vadd.f32 %v10979, %v10987
        %v11007 = vadd.f32 %v10980, %v10987
        %v11008 = vadd.f32 %v10981, %v10987
        %v11009 = vmax.f32 %v10989, 0.0
        %v11010 = vmax.f32 %v10990, 0.0
        %v11011 = vmax.f32 %v10991, 0.0
        %v11012 = vmax.f32 %v10992, 0.0
        %v11013 = vmax.f32 %v10993, 0.0
        %v11014 = vmax.f32 %v10994, 0.0
        %v11015 = vmax.f32 %v10995, 0.0
        %v11016 = vmax.f32 %v10996, 0.0
        %v11017 = vmax.f32 %v10997, 0.0
        %v11018 = vmax.f32 %v10998, 0.0
        %v11019 = vmax.f32 %v10999, 0.0
        %v11020 = vmax.f32 %v11000, 0.0
        %v11021 = vmax.f32 %v11001, 0.0
        %v11022 = vmax.f32 %v11002, 0.0
        %v11023 = vmax.f32 %v11003, 0.0
        %v11024 = vmax.f32 %v11004, 0.0
        %v11025 = vmax.f32 %v11005, 0.0
        %v11026 = vmax.f32 %v11006, 0.0
        %v11027 = vmax.f32 %v11007, 0.0
        %v11028 = vmax.f32 %v11008, 0.0
        %v11029 = vpack.c.bf16 %v11010, %v11009
        %v11030 = vpack.c.bf16 %v11012, %v11011
        %v11031 = vpack.c.bf16 %v11014, %v11013
        %v11032 = vpack.c.bf16 %v11016, %v11015
        %v11033 = vpack.c.bf16 %v11018, %v11017
        %v11034 = vpack.c.bf16 %v11020, %v11019
        %v11035 = vpack.c.bf16 %v11022, %v11021
        %v11036 = vpack.c.bf16 %v11024, %v11023
        %v11037 = vpack.c.bf16 %v11026, %v11025
        %v11038 = vpack.c.bf16 %v11028, %v11027
        %11039 = vst [vmem:[#allocation5] sm:$0xf] %v11029
        %11040 = vst [vmem:[#allocation5 + $0x24] sm:$0xf] %v11030
        %11041 = vst [vmem:[#allocation5 + $0x48] sm:$0xf] %v11031
        %11042 = vst [vmem:[#allocation5 + $0x6c] sm:$0xf] %v11032
        %11043 = vst [vmem:[#allocation5 + $0x90] sm:$0xf] %v11033
        %11044 = vst [vmem:[#allocation5 + $0xb4] sm:$0xf] %v11034
        %11045 = vst [vmem:[#allocation5 + $0xd8] sm:$0xf] %v11035
        %11046 = vst [vmem:[#allocation5 + $0xfc] sm:$0xf] %v11036
        %v11055 = vunpack.c.l.b16 %v11029
        %v11056 = vunpack.c.h.b16 %v11029
        %v11057 = vunpack.c.l.b16 %v11030
        %v11058 = vunpack.c.h.b16 %v11030
        %v11059 = vunpack.c.l.b16 %v11031
        %v11060 = vunpack.c.h.b16 %v11031
        %v11061 = vunpack.c.l.b16 %v11032
        %v11062 = vunpack.c.h.b16 %v11032
        %v11063 = vunpack.c.l.b16 %v11033
        %v11064 = vunpack.c.h.b16 %v11033
        %v11065 = vunpack.c.l.b16 %v11034
        %v11066 = vunpack.c.h.b16 %v11034
        %v11067 = vunpack.c.l.b16 %v11035
        %v11068 = vunpack.c.h.b16 %v11035
        %v11069 = vunpack.c.l.b16 %v11036
        %v11070 = vunpack.c.h.b16 %v11036
        %v11071 = vpack.c.b16 %v11055, %v11055
        %v11072 = vpack.c.b16 %v11056, %v11056
        %v11073 = vpack.c.b16 %v11057, %v11057
        %v11074 = vpack.c.b16 %v11058, %v11058
        %v11075 = vpack.c.b16 %v11059, %v11059
        %v11076 = vpack.c.b16 %v11060, %v11060
        %v11077 = vpack.c.b16 %v11061, %v11061
        %v11078 = vpack.c.b16 %v11062, %v11062
        %v11079 = vpack.c.b16 %v11063, %v11063
        %v11080 = vpack.c.b16 %v11064, %v11064
        %v11081 = vpack.c.b16 %v11065, %v11065
        %v11082 = vpack.c.b16 %v11066, %v11066
        %v11083 = vpack.c.b16 %v11067, %v11067
        %v11084 = vpack.c.b16 %v11068, %v11068
        %v11085 = vpack.c.b16 %v11069, %v11069
        %v11086 = vpack.c.b16 %v11070, %v11070
        %v11088 = vshrl.u32 %v11071, 16
        %v11090 = vrot.slane %v11088, 4
        %v11091 = vshll.u32 %v11071, 16
        %v11093 = vrot.slane %v11091, 5
        %v11094 = vor.u32 %v11090, %v11093
        %v11095 = vrot.slane %v11094, 4
        %v11097 = vshll.u32 %v11072, 16
        %v11099 = vrot.slane %v11097, 5
        %v11100 = vsel %vm4146, %v11095, %v11099
        %v11102 = vshrl.u32 %v11073, 16
        %v11104 = vrot.slane %v11102, 4
        %v11105 = vshll.u32 %v11073, 16
        %v11107 = vrot.slane %v11105, 5
        %v11108 = vor.u32 %v11104, %v11107
        %v11109 = vrot.slane %v11108, 4
        %v11111 = vshll.u32 %v11074, 16
        %v11113 = vrot.slane %v11111, 5
        %v11114 = vsel %vm4146, %v11109, %v11113
        %v11116 = vshrl.u32 %v11075, 16
        %v11118 = vrot.slane %v11116, 4
        %v11119 = vshll.u32 %v11075, 16
        %v11121 = vrot.slane %v11119, 5
        %v11122 = vor.u32 %v11118, %v11121
        %v11123 = vrot.slane %v11122, 4
        %v11125 = vshll.u32 %v11076, 16
        %v11127 = vrot.slane %v11125, 5
        %v11128 = vsel %vm4146, %v11123, %v11127
        %v11130 = vshrl.u32 %v11077, 16
        %v11132 = vrot.slane %v11130, 4
        %v11133 = vshll.u32 %v11077, 16
        %v11135 = vrot.slane %v11133, 5
        %v11136 = vor.u32 %v11132, %v11135
        %v11137 = vrot.slane %v11136, 4
        %v11139 = vshll.u32 %v11078, 16
        %v11141 = vrot.slane %v11139, 5
        %v11142 = vsel %vm4146, %v11137, %v11141
        %v11144 = vshrl.u32 %v11079, 16
        %v11146 = vrot.slane %v11144, 4
        %v11147 = vshll.u32 %v11079, 16
        %v11149 = vrot.slane %v11147, 5
        %v11150 = vor.u32 %v11146, %v11149
        %v11151 = vrot.slane %v11150, 4
        %v11153 = vshll.u32 %v11080, 16
        %v11155 = vrot.slane %v11153, 5
        %v11156 = vsel %vm4146, %v11151, %v11155
        %v11158 = vshrl.u32 %v11081, 16
        %v11160 = vrot.slane %v11158, 4
        %v11161 = vshll.u32 %v11081, 16
        %v11163 = vrot.slane %v11161, 5
        %v11164 = vor.u32 %v11160, %v11163
        %v11165 = vrot.slane %v11164, 4
        %v11167 = vshll.u32 %v11082, 16
        %v11169 = vrot.slane %v11167, 5
        %v11170 = vsel %vm4146, %v11165, %v11169
        %v11172 = vshrl.u32 %v11083, 16
        %v11174 = vrot.slane %v11172, 4
        %v11175 = vshll.u32 %v11083, 16
        %v11177 = vrot.slane %v11175, 5
        %v11178 = vor.u32 %v11174, %v11177
        %v11179 = vrot.slane %v11178, 4
        %v11181 = vshll.u32 %v11084, 16
        %v11183 = vrot.slane %v11181, 5
        %v11184 = vsel %vm4146, %v11179, %v11183
        %v11186 = vshrl.u32 %v11085, 16
        %v11188 = vrot.slane %v11186, 4
        %v11189 = vshll.u32 %v11085, 16
        %v11191 = vrot.slane %v11189, 5
        %v11192 = vor.u32 %v11188, %v11191
        %v11193 = vrot.slane %v11192, 4
        %v11195 = vshll.u32 %v11086, 16
        %v11197 = vrot.slane %v11195, 5
        %v11198 = vsel %vm4146, %v11193, %v11197
        %11207 = vst [vmem:[#allocation5 + $0x4] sm:$0xf] %v11100
        %11208 = vst [vmem:[#allocation5 + $0x28] sm:$0xf] %v11114
        %11209 = vst [vmem:[#allocation5 + $0x4c] sm:$0xf] %v11128
        %11210 = vst [vmem:[#allocation5 + $0x70] sm:$0xf] %v11142
        %11211 = vst [vmem:[#allocation5 + $0x94] sm:$0xf] %v11156
        %11212 = vst [vmem:[#allocation5 + $0xb8] sm:$0xf] %v11170
        %11213 = vst [vmem:[#allocation5 + $0xdc] sm:$0xf] %v11184
        %11214 = vst [vmem:[#allocation5 + $0x100] sm:$0xf] %v11198
        %v11215 = vrot.slane %v11071, 5
        %v11216 = vrot.slane %v11215, 4
        %v11217 = vrot.slane %v11072, 5
        %v11218 = vsel %vm5116, %v11216, %v11217
        %v11219 = vrot.slane %v11073, 5
        %v11220 = vrot.slane %v11219, 4
        %v11221 = vrot.slane %v11074, 5
        %v11222 = vsel %vm5116, %v11220, %v11221
        %v11223 = vrot.slane %v11075, 5
        %v11224 = vrot.slane %v11223, 4
        %v11225 = vrot.slane %v11076, 5
        %v11226 = vsel %vm5116, %v11224, %v11225
        %v11227 = vrot.slane %v11077, 5
        %v11228 = vrot.slane %v11227, 4
        %v11229 = vrot.slane %v11078, 5
        %v11230 = vsel %vm5116, %v11228, %v11229
        %v11231 = vrot.slane %v11079, 5
        %v11232 = vrot.slane %v11231, 4
        %v11233 = vrot.slane %v11080, 5
        %v11234 = vsel %vm5116, %v11232, %v11233
        %v11235 = vrot.slane %v11081, 5
        %v11236 = vrot.slane %v11235, 4
        %v11237 = vrot.slane %v11082, 5
        %v11238 = vsel %vm5116, %v11236, %v11237
        %v11239 = vrot.slane %v11083, 5
        %v11240 = vrot.slane %v11239, 4
        %v11241 = vrot.slane %v11084, 5
        %v11242 = vsel %vm5116, %v11240, %v11241
        %v11243 = vrot.slane %v11085, 5
        %v11244 = vrot.slane %v11243, 4
        %v11245 = vrot.slane %v11086, 5
        %v11246 = vsel %vm5116, %v11244, %v11245
        %11255 = vst [vmem:[#allocation5 + $0x8] sm:$0xf] %v11218
        %11256 = vst [vmem:[#allocation5 + $0x2c] sm:$0xf] %v11222
        %11257 = vst [vmem:[#allocation5 + $0x50] sm:$0xf] %v11226
        %11258 = vst [vmem:[#allocation5 + $0x74] sm:$0xf] %v11230
        %11259 = vst [vmem:[#allocation5 + $0x98] sm:$0xf] %v11234
        %11260 = vst [vmem:[#allocation5 + $0xbc] sm:$0xf] %v11238
        %11261 = vst [vmem:[#allocation5 + $0xe0] sm:$0xf] %v11242
        %11262 = vst [vmem:[#allocation5 + $0x104] sm:$0xf] %v11246
        %11263 = vst [vmem:[#allocation5 + $0xc] sm:$0xf] %v11030
        %11264 = vst [vmem:[#allocation5 + $0x30] sm:$0xf] %v11031
        %11265 = vst [vmem:[#allocation5 + $0x54] sm:$0xf] %v11032
        %11266 = vst [vmem:[#allocation5 + $0x78] sm:$0xf] %v11033
        %11267 = vst [vmem:[#allocation5 + $0x9c] sm:$0xf] %v11034
        %11268 = vst [vmem:[#allocation5 + $0xc0] sm:$0xf] %v11035
        %11269 = vst [vmem:[#allocation5 + $0xe4] sm:$0xf] %v11036
        %11270 = vst [vmem:[#allocation5 + $0x108] sm:$0xf] %v11037
        %v11272 = vunpack.c.l.b16 %v11037
        %v11273 = vunpack.c.h.b16 %v11037
        %v11274 = vpack.c.b16 %v11272, %v11272
        %v11275 = vpack.c.b16 %v11273, %v11273
        %v11277 = vshrl.u32 %v11274, 16
        %v11279 = vrot.slane %v11277, 4
        %v11280 = vshll.u32 %v11274, 16
        %v11282 = vrot.slane %v11280, 5
        %v11283 = vor.u32 %v11279, %v11282
        %v11284 = vrot.slane %v11283, 4
        %v11286 = vshll.u32 %v11275, 16
        %v11288 = vrot.slane %v11286, 5
        %v11289 = vsel %vm4146, %v11284, %v11288
        %11291 = vst [vmem:[#allocation5 + $0x10] sm:$0xf] %v11114
        %11292 = vst [vmem:[#allocation5 + $0x34] sm:$0xf] %v11128
        %11293 = vst [vmem:[#allocation5 + $0x58] sm:$0xf] %v11142
        %11294 = vst [vmem:[#allocation5 + $0x7c] sm:$0xf] %v11156
        %11295 = vst [vmem:[#allocation5 + $0xa0] sm:$0xf] %v11170
        %11296 = vst [vmem:[#allocation5 + $0xc4] sm:$0xf] %v11184
        %11297 = vst [vmem:[#allocation5 + $0xe8] sm:$0xf] %v11198
        %11298 = vst [vmem:[#allocation5 + $0x10c] sm:$0xf] %v11289
        %v11299 = vrot.slane %v11274, 5
        %v11300 = vrot.slane %v11299, 4
        %v11301 = vrot.slane %v11275, 5
        %v11302 = vsel %vm5116, %v11300, %v11301
        %11304 = vst [vmem:[#allocation5 + $0x14] sm:$0xf] %v11222
        %11305 = vst [vmem:[#allocation5 + $0x38] sm:$0xf] %v11226
        %11306 = vst [vmem:[#allocation5 + $0x5c] sm:$0xf] %v11230
        %11307 = vst [vmem:[#allocation5 + $0x80] sm:$0xf] %v11234
        %11308 = vst [vmem:[#allocation5 + $0xa4] sm:$0xf] %v11238
        %11309 = vst [vmem:[#allocation5 + $0xc8] sm:$0xf] %v11242
        %11310 = vst [vmem:[#allocation5 + $0xec] sm:$0xf] %v11246
        %11311 = vst [vmem:[#allocation5 + $0x110] sm:$0xf] %v11302
        %11312 = vst [vmem:[#allocation5 + $0x18] sm:$0xf] %v11031
        %11313 = vst [vmem:[#allocation5 + $0x3c] sm:$0xf] %v11032
        %11314 = vst [vmem:[#allocation5 + $0x60] sm:$0xf] %v11033
        %11315 = vst [vmem:[#allocation5 + $0x84] sm:$0xf] %v11034
        %11316 = vst [vmem:[#allocation5 + $0xa8] sm:$0xf] %v11035
        %11317 = vst [vmem:[#allocation5 + $0xcc] sm:$0xf] %v11036
        %11318 = vst [vmem:[#allocation5 + $0xf0] sm:$0xf] %v11037
        %11319 = vst [vmem:[#allocation5 + $0x114] sm:$0xf] %v11038
        %v11321 = vunpack.c.l.b16 %v11038
        %v11322 = vunpack.c.h.b16 %v11038
        %v11323 = vpack.c.b16 %v11321, %v11321
        %v11324 = vpack.c.b16 %v11322, %v11322
        %v11326 = vshrl.u32 %v11323, 16
        %v11328 = vrot.slane %v11326, 4
        %v11329 = vshll.u32 %v11323, 16
        %v11331 = vrot.slane %v11329, 5
        %v11332 = vor.u32 %v11328, %v11331
        %v11333 = vrot.slane %v11332, 4
        %v11335 = vshll.u32 %v11324, 16
        %v11337 = vrot.slane %v11335, 5
        %v11338 = vsel %vm4146, %v11333, %v11337
        %11340 = vst [vmem:[#allocation5 + $0x1c] sm:$0xf] %v11128
        %11341 = vst [vmem:[#allocation5 + $0x40] sm:$0xf] %v11142
        %11342 = vst [vmem:[#allocation5 + $0x64] sm:$0xf] %v11156
        %11343 = vst [vmem:[#allocation5 + $0x88] sm:$0xf] %v11170
        %11344 = vst [vmem:[#allocation5 + $0xac] sm:$0xf] %v11184
        %11345 = vst [vmem:[#allocation5 + $0xd0] sm:$0xf] %v11198
        %11346 = vst [vmem:[#allocation5 + $0xf4] sm:$0xf] %v11289
        %11347 = vst [vmem:[#allocation5 + $0x118] sm:$0xf] %v11338
        %v11348 = vrot.slane %v11323, 5
        %v11349 = vrot.slane %v11348, 4
        %v11350 = vrot.slane %v11324, 5
        %v11351 = vsel %vm5116, %v11349, %v11350
        %11353 = vst [vmem:[#allocation5 + $0x20] sm:$0xf] %v11226
        %11354 = vst [vmem:[#allocation5 + $0x44] sm:$0xf] %v11230
        %11355 = vst [vmem:[#allocation5 + $0x68] sm:$0xf] %v11234
        %11356 = vst [vmem:[#allocation5 + $0x8c] sm:$0xf] %v11238
        %11357 = vst [vmem:[#allocation5 + $0xb0] sm:$0xf] %v11242
        %11358 = vst [vmem:[#allocation5 + $0xd4] sm:$0xf] %v11246
        %11359 = vst [vmem:[#allocation5 + $0xf8] sm:$0xf] %v11302
        %11360 = vst [vmem:[#allocation5 + $0x11c] sm:$0xf] %v11351
        %v11361 = vld [vmem:[#allocation5] sm:$0xff]
        %v11362 = vld [vmem:[#allocation5 + $0x8] sm:$0xff]
        %v11363 = vld [vmem:[#allocation5 + $0x10] sm:$0xff]
        %v11364 = vld [vmem:[#allocation5 + $0x18] sm:$0xff]
        %v11365 = vld [vmem:[#allocation5 + $0x20] sm:$0xf]
        %v11366 = vld [vmem:[#allocation5 + $0x24] sm:$0xff]
        %v11367 = vld [vmem:[#allocation5 + $0x2c] sm:$0xff]
        %v11368 = vld [vmem:[#allocation5 + $0x34] sm:$0xff]
        %v11369 = vld [vmem:[#allocation5 + $0x3c] sm:$0xff]
        %v11370 = vld [vmem:[#allocation5 + $0x44] sm:$0xf]
        %v11371 = vld [vmem:[#allocation5 + $0x48] sm:$0xff]
        %v11372 = vld [vmem:[#allocation5 + $0x50] sm:$0xff]
        %v11373 = vld [vmem:[#allocation5 + $0x58] sm:$0xff]
        %v11374 = vld [vmem:[#allocation5 + $0x60] sm:$0xff]
        %v11375 = vld [vmem:[#allocation5 + $0x68] sm:$0xf]
        %v11376 = vld [vmem:[#allocation5 + $0x6c] sm:$0xff]
        %v11377 = vld [vmem:[#allocation5 + $0x74] sm:$0xff]
        %v11378 = vld [vmem:[#allocation5 + $0x7c] sm:$0xff]
        %v11379 = vld [vmem:[#allocation5 + $0x84] sm:$0xff]
        %v11380 = vld [vmem:[#allocation5 + $0x8c] sm:$0xf]
        %v11381 = vld [vmem:[#allocation5 + $0x90] sm:$0xff]
        %v11382 = vld [vmem:[#allocation5 + $0x98] sm:$0xff]
        %v11383 = vld [vmem:[#allocation5 + $0xa0] sm:$0xff]
        %v11384 = vld [vmem:[#allocation5 + $0xa8] sm:$0xff]
        %v11385 = vld [vmem:[#allocation5 + $0xb0] sm:$0xf]
        %v11386 = vld [vmem:[#allocation5 + $0xb4] sm:$0xff]
        %v11387 = vld [vmem:[#allocation5 + $0xbc] sm:$0xff]
        %v11388 = vld [vmem:[#allocation5 + $0xc4] sm:$0xff]
        %v11389 = vld [vmem:[#allocation5 + $0xcc] sm:$0xff]
        %v11390 = vld [vmem:[#allocation5 + $0xd4] sm:$0xf]
        %v11391 = vld [vmem:[#allocation5 + $0xd8] sm:$0xff]
        %v11392 = vld [vmem:[#allocation5 + $0xe0] sm:$0xff]
        %v11393 = vld [vmem:[#allocation5 + $0xe8] sm:$0xff]
        %v11394 = vld [vmem:[#allocation5 + $0xf0] sm:$0xff]
        %v11395 = vld [vmem:[#allocation5 + $0xf8] sm:$0xf]
        %v11396 = vld [vmem:[#allocation5 + $0xfc] sm:$0xff]
        %v11397 = vld [vmem:[#allocation5 + $0x104] sm:$0xff]
        %v11398 = vld [vmem:[#allocation5 + $0x10c] sm:$0xff]
        %v11399 = vld [vmem:[#allocation5 + $0x114] sm:$0xff]
        %v11400 = vld [vmem:[#allocation5 + $0x11c] sm:$0xf]
        %v11401 = vld [vmem:[%s5] sm:$0xff]
        %v11402 = vld [vmem:[%s5 + $0x8] sm:$0xff]
        %v11403 = vld [vmem:[%s5 + $0x10] sm:$0xff]
        %v11404 = vld [vmem:[%s5 + $0x18] sm:$0xff]
        %v11405 = vld [vmem:[%s5 + $0x20] sm:$0xff]
        %v11406 = vld [vmem:[%s5 + $0x28] sm:$0xff]
        %v11407 = vld [vmem:[%s5 + $0x30] sm:$0xff]
        %v11408 = vld [vmem:[%s5 + $0x38] sm:$0xff]
        %v11409 = vld [vmem:[%s5 + $0x40] sm:$0xff]
        %v11410 = vld [vmem:[%s5 + $0x48] sm:$0xff]
        %v11411 = vld [vmem:[%s5 + $0x50] sm:$0xff]
        %v11412 = vld [vmem:[%s5 + $0x58] sm:$0xff]
        %v11413 = vld [vmem:[%s5 + $0x60] sm:$0xff]
        %v11414 = vld [vmem:[%s5 + $0x68] sm:$0xff]
        %v11415 = vld [vmem:[%s5 + $0x70] sm:$0xff]
        %v11416 = vld [vmem:[%s5 + $0x78] sm:$0xff]
        %v11417 = vld [vmem:[%s5 + $0x80] sm:$0xff]
        %v11418 = vld [vmem:[%s5 + $0x88] sm:$0xff]
        %v11419 = vld [vmem:[%s5 + $0x90] sm:$0xff]
        %v11420 = vld [vmem:[%s5 + $0x98] sm:$0xff]
        %v11421 = vld [vmem:[%s5 + $0xa0] sm:$0xff]
        %v11422 = vld [vmem:[%s5 + $0xa8] sm:$0xff]
        %v11423 = vld [vmem:[%s5 + $0xb0] sm:$0xff]
        %v11424 = vld [vmem:[%s5 + $0xb8] sm:$0xff]
        %v11425 = vld [vmem:[%s5 + $0xc0] sm:$0xff]
        %v11426 = vld [vmem:[%s5 + $0xc8] sm:$0xff]
        %v11427 = vld [vmem:[%s5 + $0xd0] sm:$0xff]
        %v11428 = vld [vmem:[%s5 + $0xd8] sm:$0xff]
        %v11429 = vld [vmem:[%s5 + $0xe0] sm:$0xff]
        %v11430 = vld [vmem:[%s5 + $0xe8] sm:$0xff]
        %v11431 = vld [vmem:[%s5 + $0xf0] sm:$0xff]
        %v11432 = vld [vmem:[%s5 + $0xf8] sm:$0xff]
        %v11433 = vld [vmem:[%s5 + $0x100] sm:$0xff]
        %v11434 = vld [vmem:[%s5 + $0x108] sm:$0xff]
        %v11435 = vld [vmem:[%s5 + $0x110] sm:$0xff]
        %v11436 = vld [vmem:[%s5 + $0x118] sm:$0xff]
        %v11437 = vld [vmem:[%s5 + $0x120] sm:$0xff]
        %v11438 = vld [vmem:[%s5 + $0x128] sm:$0xff]
        %v11439 = vld [vmem:[%s5 + $0x130] sm:$0xff]
        %v11440 = vld [vmem:[%s5 + $0x138] sm:$0xff]
        %v11441 = vld [vmem:[%s5 + $0x140] sm:$0xff]
        %v11442 = vld [vmem:[%s5 + $0x148] sm:$0xff]
        %v11443 = vld [vmem:[%s5 + $0x150] sm:$0xff]
        %v11444 = vld [vmem:[%s5 + $0x158] sm:$0xff]
        %v11445 = vld [vmem:[%s5 + $0x160] sm:$0xff]
        %v11446 = vld [vmem:[%s5 + $0x168] sm:$0xff]
        %v11447 = vld [vmem:[%s5 + $0x170] sm:$0xff]
        %v11448 = vld [vmem:[%s5 + $0x178] sm:$0xff]
        %v11449 = vld [vmem:[%s5 + $0x180] sm:$0xff]
        %v11450 = vld [vmem:[%s5 + $0x188] sm:$0xff]
        %v11451 = vld [vmem:[%s5 + $0x190] sm:$0xff]
        %v11452 = vld [vmem:[%s5 + $0x198] sm:$0xff]
        %v11453 = vld [vmem:[%s5 + $0x1a0] sm:$0xff]
        %v11454 = vld [vmem:[%s5 + $0x1a8] sm:$0xff]
        %v11455 = vld [vmem:[%s5 + $0x1b0] sm:$0xff]
        %v11456 = vld [vmem:[%s5 + $0x1b8] sm:$0xff]
        %v11457 = vld [vmem:[%s5 + $0x1c0] sm:$0xff]
        %v11458 = vld [vmem:[%s5 + $0x1c8] sm:$0xff]
        %v11459 = vld [vmem:[%s5 + $0x1d0] sm:$0xff]
        %v11460 = vld [vmem:[%s5 + $0x1d8] sm:$0xff]
        %v11461 = vld [vmem:[%s5 + $0x1e0] sm:$0xff]
        %v11462 = vld [vmem:[%s5 + $0x1e8] sm:$0xff]
        %v11463 = vld [vmem:[%s5 + $0x1f0] sm:$0xff]
        %v11464 = vld [vmem:[%s5 + $0x1f8] sm:$0xff]
        %v11465 = vld [vmem:[%s5 + $0x200] sm:$0xff]
        %v11466 = vld [vmem:[%s5 + $0x208] sm:$0xff]
        %v11467 = vld [vmem:[%s5 + $0x210] sm:$0xff]
        %v11468 = vld [vmem:[%s5 + $0x218] sm:$0xff]
        %v11469 = vld [vmem:[%s5 + $0x220] sm:$0xff]
        %v11470 = vld [vmem:[%s5 + $0x228] sm:$0xff]
        %v11471 = vld [vmem:[%s5 + $0x230] sm:$0xff]
        %v11472 = vld [vmem:[%s5 + $0x238] sm:$0xff]
        %v11473 = vld [vmem:[%s5 + $0x240] sm:$0xff]
        %v11474 = vld [vmem:[%s5 + $0x248] sm:$0xff]
        %v11475 = vld [vmem:[%s5 + $0x250] sm:$0xff]
        %v11476 = vld [vmem:[%s5 + $0x258] sm:$0xff]
        %v11477 = vld [vmem:[%s5 + $0x260] sm:$0xff]
        %v11478 = vld [vmem:[%s5 + $0x268] sm:$0xff]
        %v11479 = vld [vmem:[%s5 + $0x270] sm:$0xff]
        %v11480 = vld [vmem:[%s5 + $0x278] sm:$0xff]
        %v11481 = vld [vmem:[%s5 + $0x280] sm:$0xff]
        %v11482 = vld [vmem:[%s5 + $0x288] sm:$0xff]
        %v11483 = vld [vmem:[%s5 + $0x290] sm:$0xff]
        %v11484 = vld [vmem:[%s5 + $0x298] sm:$0xff]
        %v11485 = vld [vmem:[%s5 + $0x2a0] sm:$0xff]
        %v11486 = vld [vmem:[%s5 + $0x2a8] sm:$0xff]
        %v11487 = vld [vmem:[%s5 + $0x2b0] sm:$0xff]
        %v11488 = vld [vmem:[%s5 + $0x2b8] sm:$0xff]
        %v11489 = vld [vmem:[%s5 + $0x2c0] sm:$0xff]
        %v11490 = vld [vmem:[%s5 + $0x2c8] sm:$0xff]
        %v11491 = vld [vmem:[%s5 + $0x2d0] sm:$0xff]
        %v11492 = vld [vmem:[%s5 + $0x2d8] sm:$0xff]
        %v11493 = vld [vmem:[%s5 + $0x2e0] sm:$0xff]
        %v11494 = vld [vmem:[%s5 + $0x2e8] sm:$0xff]
        %v11495 = vld [vmem:[%s5 + $0x2f0] sm:$0xff]
        %v11496 = vld [vmem:[%s5 + $0x2f8] sm:$0xff]
        %v11497 = vld [vmem:[%s5 + $0x300] sm:$0xff]
        %v11498 = vld [vmem:[%s5 + $0x308] sm:$0xff]
        %v11499 = vld [vmem:[%s5 + $0x310] sm:$0xff]
        %v11500 = vld [vmem:[%s5 + $0x318] sm:$0xff]
        %v11501 = vld [vmem:[%s5 + $0x320] sm:$0xff]
        %v11502 = vld [vmem:[%s5 + $0x328] sm:$0xff]
        %v11503 = vld [vmem:[%s5 + $0x330] sm:$0xff]
        %v11504 = vld [vmem:[%s5 + $0x338] sm:$0xff]
        %v11505 = vld [vmem:[%s5 + $0x340] sm:$0xff]
        %v11506 = vld [vmem:[%s5 + $0x348] sm:$0xff]
        %v11507 = vld [vmem:[%s5 + $0x350] sm:$0xff]
        %v11508 = vld [vmem:[%s5 + $0x358] sm:$0xff]
        %v11509 = vld [vmem:[%s5 + $0x360] sm:$0xff]
        %v11510 = vld [vmem:[%s5 + $0x368] sm:$0xff]
        %v11511 = vld [vmem:[%s5 + $0x370] sm:$0xff]
        %v11512 = vld [vmem:[%s5 + $0x378] sm:$0xff]
        %v11513 = vld [vmem:[%s5 + $0x380] sm:$0xff]
        %v11514 = vld [vmem:[%s5 + $0x388] sm:$0xff]
        %v11515 = vld [vmem:[%s5 + $0x390] sm:$0xff]
        %v11516 = vld [vmem:[%s5 + $0x398] sm:$0xff]
        %v11517 = vld [vmem:[%s5 + $0x3a0] sm:$0xff]
        %v11518 = vld [vmem:[%s5 + $0x3a8] sm:$0xff]
        %v11519 = vld [vmem:[%s5 + $0x3b0] sm:$0xff]
        %v11520 = vld [vmem:[%s5 + $0x3b8] sm:$0xff]
        %v11521 = vld [vmem:[%s5 + $0x3c0] sm:$0xff]
        %v11522 = vld [vmem:[%s5 + $0x3c8] sm:$0xff]
        %v11523 = vld [vmem:[%s5 + $0x3d0] sm:$0xff]
        %v11524 = vld [vmem:[%s5 + $0x3d8] sm:$0xff]
        %v11525 = vld [vmem:[%s5 + $0x3e0] sm:$0xff]
        %v11526 = vld [vmem:[%s5 + $0x3e8] sm:$0xff]
        %v11527 = vld [vmem:[%s5 + $0x3f0] sm:$0xff]
        %v11528 = vld [vmem:[%s5 + $0x3f8] sm:$0xff]
        %v11529 = vld [vmem:[%s5 + $0x400] sm:$0xff]
        %v11530 = vld [vmem:[%s5 + $0x408] sm:$0xff]
        %v11531 = vld [vmem:[%s5 + $0x410] sm:$0xff]
        %v11532 = vld [vmem:[%s5 + $0x418] sm:$0xff]
        %v11533 = vld [vmem:[%s5 + $0x420] sm:$0xff]
        %v11534 = vld [vmem:[%s5 + $0x428] sm:$0xff]
        %v11535 = vld [vmem:[%s5 + $0x430] sm:$0xff]
        %v11536 = vld [vmem:[%s5 + $0x438] sm:$0xff]
        %v11537 = vld [vmem:[%s5 + $0x440] sm:$0xff]
        %v11538 = vld [vmem:[%s5 + $0x448] sm:$0xff]
        %v11539 = vld [vmem:[%s5 + $0x450] sm:$0xff]
        %v11540 = vld [vmem:[%s5 + $0x458] sm:$0xff]
        %v11541 = vld [vmem:[%s5 + $0x460] sm:$0xff]
        %v11542 = vld [vmem:[%s5 + $0x468] sm:$0xff]
        %v11543 = vld [vmem:[%s5 + $0x470] sm:$0xff]
        %v11544 = vld [vmem:[%s5 + $0x478] sm:$0xff]
        %v11545 = vld [vmem:[%s6] sm:$0x3]
        %v11547 = vlaneseq
        %v11548 = vshrl.u32 %v11547, 7
        %v11549 = vsub.s32 0, %v11548
        %v11550 = vrot.slane %v11545, %v11549
        %v11551 = vlaneseq
        %v11552 = vshrl.u32 %v11551, 7
        %v11553 = vsub.s32 1, %v11552
        %v11554 = vrot.slane %v11545, %v11553
        %v11597 = vunpack.c.l.b16 %v11361
        %v11598 = vunpack.c.h.b16 %v11361
        %v11599 = vunpack.c.l.b16 %v11362
        %v11600 = vunpack.c.h.b16 %v11362
        %v11601 = vunpack.c.l.b16 %v11363
        %v11602 = vunpack.c.h.b16 %v11363
        %v11603 = vunpack.c.l.b16 %v11364
        %v11604 = vunpack.c.h.b16 %v11364
        %v11605 = vunpack.c.l.b16 %v11365
        %v11606 = vunpack.c.l.b16 %v11366
        %v11607 = vunpack.c.h.b16 %v11366
        %v11608 = vunpack.c.l.b16 %v11367
        %v11609 = vunpack.c.h.b16 %v11367
        %v11610 = vunpack.c.l.b16 %v11368
        %v11611 = vunpack.c.h.b16 %v11368
        %v11612 = vunpack.c.l.b16 %v11369
        %v11613 = vunpack.c.h.b16 %v11369
        %v11614 = vunpack.c.l.b16 %v11370
        %v11615 = vunpack.c.l.b16 %v11371
        %v11616 = vunpack.c.h.b16 %v11371
        %v11617 = vunpack.c.l.b16 %v11372
        %v11618 = vunpack.c.h.b16 %v11372
        %v11619 = vunpack.c.l.b16 %v11373
        %v11620 = vunpack.c.h.b16 %v11373
        %v11621 = vunpack.c.l.b16 %v11374
        %v11622 = vunpack.c.h.b16 %v11374
        %v11623 = vunpack.c.l.b16 %v11375
        %v11624 = vunpack.c.l.b16 %v11376
        %v11625 = vunpack.c.h.b16 %v11376
        %v11626 = vunpack.c.l.b16 %v11377
        %v11627 = vunpack.c.h.b16 %v11377
        %v11628 = vunpack.c.l.b16 %v11378
        %v11629 = vunpack.c.h.b16 %v11378
        %v11630 = vunpack.c.l.b16 %v11379
        %v11631 = vunpack.c.h.b16 %v11379
        %v11632 = vunpack.c.l.b16 %v11380
        %v11633 = vunpack.c.l.b16 %v11381
        %v11634 = vunpack.c.h.b16 %v11381
        %v11635 = vunpack.c.l.b16 %v11382
        %v11636 = vunpack.c.h.b16 %v11382
        %v11637 = vunpack.c.l.b16 %v11383
        %v11638 = vunpack.c.h.b16 %v11383
        %v11639 = vunpack.c.l.b16 %v11384
        %v11640 = vunpack.c.h.b16 %v11384
        %v11641 = vunpack.c.l.b16 %v11385
        %v11642 = vunpack.c.l.b16 %v11386
        %v11643 = vunpack.c.h.b16 %v11386
        %v11644 = vunpack.c.l.b16 %v11387
        %v11645 = vunpack.c.h.b16 %v11387
        %v11646 = vunpack.c.l.b16 %v11388
        %v11647 = vunpack.c.h.b16 %v11388
        %v11648 = vunpack.c.l.b16 %v11389
        %v11649 = vunpack.c.h.b16 %v11389
        %v11650 = vunpack.c.l.b16 %v11390
        %v11651 = vunpack.c.l.b16 %v11391
        %v11652 = vunpack.c.h.b16 %v11391
        %v11653 = vunpack.c.l.b16 %v11392
        %v11654 = vunpack.c.h.b16 %v11392
        %v11655 = vunpack.c.l.b16 %v11393
        %v11656 = vunpack.c.h.b16 %v11393
        %v11657 = vunpack.c.l.b16 %v11394
        %v11658 = vunpack.c.h.b16 %v11394
        %v11659 = vunpack.c.l.b16 %v11395
        %v11660 = vunpack.c.l.b16 %v11396
        %v11661 = vunpack.c.h.b16 %v11396
        %v11662 = vunpack.c.l.b16 %v11397
        %v11663 = vunpack.c.h.b16 %v11397
        %v11664 = vunpack.c.l.b16 %v11398
        %v11665 = vunpack.c.h.b16 %v11398
        %v11666 = vunpack.c.l.b16 %v11399
        %v11667 = vunpack.c.h.b16 %v11399
        %v11668 = vunpack.c.l.b16 %v11400
        %v11669 = vpack.c.b16 %v11606, %v11597
        %v11670 = vpack.c.b16 %v11607, %v11598
        %v11671 = vpack.c.b16 %v11608, %v11599
        %v11672 = vpack.c.b16 %v11609, %v11600
        %v11673 = vpack.c.b16 %v11610, %v11601
        %v11674 = vpack.c.b16 %v11611, %v11602
        %v11675 = vpack.c.b16 %v11612, %v11603
        %v11676 = vpack.c.b16 %v11613, %v11604
        %v11677 = vpack.c.b16 %v11614, %v11605
        %v11678 = vpack.c.b16 %v11624, %v11615
        %v11679 = vpack.c.b16 %v11625, %v11616
        %v11680 = vpack.c.b16 %v11626, %v11617
        %v11681 = vpack.c.b16 %v11627, %v11618
        %v11682 = vpack.c.b16 %v11628, %v11619
        %v11683 = vpack.c.b16 %v11629, %v11620
        %v11684 = vpack.c.b16 %v11630, %v11621
        %v11685 = vpack.c.b16 %v11631, %v11622
        %v11686 = vpack.c.b16 %v11632, %v11623
        %v11687 = vpack.c.b16 %v11642, %v11633
        %v11688 = vpack.c.b16 %v11643, %v11634
        %v11689 = vpack.c.b16 %v11644, %v11635
        %v11690 = vpack.c.b16 %v11645, %v11636
        %v11691 = vpack.c.b16 %v11646, %v11637
        %v11692 = vpack.c.b16 %v11647, %v11638
        %v11693 = vpack.c.b16 %v11648, %v11639
        %v11694 = vpack.c.b16 %v11649, %v11640
        %v11695 = vpack.c.b16 %v11650, %v11641
        %v11696 = vpack.c.b16 %v11660, %v11651
        %v11697 = vpack.c.b16 %v11661, %v11652
        %v11698 = vpack.c.b16 %v11662, %v11653
        %v11699 = vpack.c.b16 %v11663, %v11654
        %v11700 = vpack.c.b16 %v11664, %v11655
        %v11701 = vpack.c.b16 %v11665, %v11656
        %v11702 = vpack.c.b16 %v11666, %v11657
        %v11703 = vpack.c.b16 %v11667, %v11658
        %v11704 = vpack.c.b16 %v11668, %v11659
        %v11885 = vunpack.c.l.b16 %v11401
        %v11886 = vunpack.c.h.b16 %v11401
        %v11887 = vunpack.c.l.b16 %v11402
        %v11888 = vunpack.c.h.b16 %v11402
        %v11889 = vunpack.c.l.b16 %v11403
        %v11890 = vunpack.c.h.b16 %v11403
        %v11891 = vunpack.c.l.b16 %v11404
        %v11892 = vunpack.c.h.b16 %v11404
        %v11893 = vunpack.c.l.b16 %v11405
        %v11894 = vunpack.c.h.b16 %v11405
        %v11895 = vunpack.c.l.b16 %v11406
        %v11896 = vunpack.c.h.b16 %v11406
        %v11897 = vunpack.c.l.b16 %v11407
        %v11898 = vunpack.c.h.b16 %v11407
        %v11899 = vunpack.c.l.b16 %v11408
        %v11900 = vunpack.c.h.b16 %v11408
        %v11901 = vunpack.c.l.b16 %v11409
        %v11902 = vunpack.c.h.b16 %v11409
        %v11903 = vunpack.c.l.b16 %v11410
        %v11904 = vunpack.c.h.b16 %v11410
        %v11905 = vunpack.c.l.b16 %v11411
        %v11906 = vunpack.c.h.b16 %v11411
        %v11907 = vunpack.c.l.b16 %v11412
        %v11908 = vunpack.c.h.b16 %v11412
        %v11909 = vunpack.c.l.b16 %v11413
        %v11910 = vunpack.c.h.b16 %v11413
        %v11911 = vunpack.c.l.b16 %v11414
        %v11912 = vunpack.c.h.b16 %v11414
        %v11913 = vunpack.c.l.b16 %v11415
        %v11914 = vunpack.c.h.b16 %v11415
        %v11915 = vunpack.c.l.b16 %v11416
        %v11916 = vunpack.c.h.b16 %v11416
        %v11917 = vunpack.c.l.b16 %v11417
        %v11918 = vunpack.c.h.b16 %v11417
        %v11919 = vunpack.c.l.b16 %v11418
        %v11920 = vunpack.c.h.b16 %v11418
        %v11921 = vunpack.c.l.b16 %v11419
        %v11922 = vunpack.c.h.b16 %v11419
        %v11923 = vunpack.c.l.b16 %v11420
        %v11924 = vunpack.c.h.b16 %v11420
        %v11925 = vunpack.c.l.b16 %v11421
        %v11926 = vunpack.c.h.b16 %v11421
        %v11927 = vunpack.c.l.b16 %v11422
        %v11928 = vunpack.c.h.b16 %v11422
        %v11929 = vunpack.c.l.b16 %v11423
        %v11930 = vunpack.c.h.b16 %v11423
        %v11931 = vunpack.c.l.b16 %v11424
        %v11932 = vunpack.c.h.b16 %v11424
        %v11933 = vunpack.c.l.b16 %v11425
        %v11934 = vunpack.c.h.b16 %v11425
        %v11935 = vunpack.c.l.b16 %v11426
        %v11936 = vunpack.c.h.b16 %v11426
        %v11937 = vunpack.c.l.b16 %v11427
        %v11938 = vunpack.c.h.b16 %v11427
        %v11939 = vunpack.c.l.b16 %v11428
        %v11940 = vunpack.c.h.b16 %v11428
        %v11941 = vunpack.c.l.b16 %v11429
        %v11942 = vunpack.c.h.b16 %v11429
        %v11943 = vunpack.c.l.b16 %v11430
        %v11944 = vunpack.c.h.b16 %v11430
        %v11945 = vunpack.c.l.b16 %v11431
        %v11946 = vunpack.c.h.b16 %v11431
        %v11947 = vunpack.c.l.b16 %v11432
        %v11948 = vunpack.c.h.b16 %v11432
        %v11949 = vunpack.c.l.b16 %v11433
        %v11950 = vunpack.c.h.b16 %v11433
        %v11951 = vunpack.c.l.b16 %v11434
        %v11952 = vunpack.c.h.b16 %v11434
        %v11953 = vunpack.c.l.b16 %v11435
        %v11954 = vunpack.c.h.b16 %v11435
        %v11955 = vunpack.c.l.b16 %v11436
        %v11956 = vunpack.c.h.b16 %v11436
        %v11957 = vunpack.c.l.b16 %v11437
        %v11958 = vunpack.c.h.b16 %v11437
        %v11959 = vunpack.c.l.b16 %v11438
        %v11960 = vunpack.c.h.b16 %v11438
        %v11961 = vunpack.c.l.b16 %v11439
        %v11962 = vunpack.c.h.b16 %v11439
        %v11963 = vunpack.c.l.b16 %v11440
        %v11964 = vunpack.c.h.b16 %v11440
        %v11965 = vunpack.c.l.b16 %v11441
        %v11966 = vunpack.c.h.b16 %v11441
        %v11967 = vunpack.c.l.b16 %v11442
        %v11968 = vunpack.c.h.b16 %v11442
        %v11969 = vunpack.c.l.b16 %v11443
        %v11970 = vunpack.c.h.b16 %v11443
        %v11971 = vunpack.c.l.b16 %v11444
        %v11972 = vunpack.c.h.b16 %v11444
        %v11973 = vunpack.c.l.b16 %v11445
        %v11974 = vunpack.c.h.b16 %v11445
        %v11975 = vunpack.c.l.b16 %v11446
        %v11976 = vunpack.c.h.b16 %v11446
        %v11977 = vunpack.c.l.b16 %v11447
        %v11978 = vunpack.c.h.b16 %v11447
        %v11979 = vunpack.c.l.b16 %v11448
        %v11980 = vunpack.c.h.b16 %v11448
        %v11981 = vunpack.c.l.b16 %v11449
        %v11982 = vunpack.c.h.b16 %v11449
        %v11983 = vunpack.c.l.b16 %v11450
        %v11984 = vunpack.c.h.b16 %v11450
        %v11985 = vunpack.c.l.b16 %v11451
        %v11986 = vunpack.c.h.b16 %v11451
        %v11987 = vunpack.c.l.b16 %v11452
        %v11988 = vunpack.c.h.b16 %v11452
        %v11989 = vunpack.c.l.b16 %v11453
        %v11990 = vunpack.c.h.b16 %v11453
        %v11991 = vunpack.c.l.b16 %v11454
        %v11992 = vunpack.c.h.b16 %v11454
        %v11993 = vunpack.c.l.b16 %v11455
        %v11994 = vunpack.c.h.b16 %v11455
        %v11995 = vunpack.c.l.b16 %v11456
        %v11996 = vunpack.c.h.b16 %v11456
        %v11997 = vunpack.c.l.b16 %v11457
        %v11998 = vunpack.c.h.b16 %v11457
        %v11999 = vunpack.c.l.b16 %v11458
        %v12000 = vunpack.c.h.b16 %v11458
        %v12001 = vunpack.c.l.b16 %v11459
        %v12002 = vunpack.c.h.b16 %v11459
        %v12003 = vunpack.c.l.b16 %v11460
        %v12004 = vunpack.c.h.b16 %v11460
        %v12005 = vunpack.c.l.b16 %v11461
        %v12006 = vunpack.c.h.b16 %v11461
        %v12007 = vunpack.c.l.b16 %v11462
        %v12008 = vunpack.c.h.b16 %v11462
        %v12009 = vunpack.c.l.b16 %v11463
        %v12010 = vunpack.c.h.b16 %v11463
        %v12011 = vunpack.c.l.b16 %v11464
        %v12012 = vunpack.c.h.b16 %v11464
        %v12013 = vunpack.c.l.b16 %v11465
        %v12014 = vunpack.c.h.b16 %v11465
        %v12015 = vunpack.c.l.b16 %v11466
        %v12016 = vunpack.c.h.b16 %v11466
        %v12017 = vunpack.c.l.b16 %v11467
        %v12018 = vunpack.c.h.b16 %v11467
        %v12019 = vunpack.c.l.b16 %v11468
        %v12020 = vunpack.c.h.b16 %v11468
        %v12021 = vunpack.c.l.b16 %v11469
        %v12022 = vunpack.c.h.b16 %v11469
        %v12023 = vunpack.c.l.b16 %v11470
        %v12024 = vunpack.c.h.b16 %v11470
        %v12025 = vunpack.c.l.b16 %v11471
        %v12026 = vunpack.c.h.b16 %v11471
        %v12027 = vunpack.c.l.b16 %v11472
        %v12028 = vunpack.c.h.b16 %v11472
        %v12029 = vunpack.c.l.b16 %v11473
        %v12030 = vunpack.c.h.b16 %v11473
        %v12031 = vunpack.c.l.b16 %v11474
        %v12032 = vunpack.c.h.b16 %v11474
        %v12033 = vunpack.c.l.b16 %v11475
        %v12034 = vunpack.c.h.b16 %v11475
        %v12035 = vunpack.c.l.b16 %v11476
        %v12036 = vunpack.c.h.b16 %v11476
        %v12037 = vunpack.c.l.b16 %v11477
        %v12038 = vunpack.c.h.b16 %v11477
        %v12039 = vunpack.c.l.b16 %v11478
        %v12040 = vunpack.c.h.b16 %v11478
        %v12041 = vunpack.c.l.b16 %v11479
        %v12042 = vunpack.c.h.b16 %v11479
        %v12043 = vunpack.c.l.b16 %v11480
        %v12044 = vunpack.c.h.b16 %v11480
        %v12045 = vunpack.c.l.b16 %v11481
        %v12046 = vunpack.c.h.b16 %v11481
        %v12047 = vunpack.c.l.b16 %v11482
        %v12048 = vunpack.c.h.b16 %v11482
        %v12049 = vunpack.c.l.b16 %v11483
        %v12050 = vunpack.c.h.b16 %v11483
        %v12051 = vunpack.c.l.b16 %v11484
        %v12052 = vunpack.c.h.b16 %v11484
        %v12053 = vunpack.c.l.b16 %v11485
        %v12054 = vunpack.c.h.b16 %v11485
        %v12055 = vunpack.c.l.b16 %v11486
        %v12056 = vunpack.c.h.b16 %v11486
        %v12057 = vunpack.c.l.b16 %v11487
        %v12058 = vunpack.c.h.b16 %v11487
        %v12059 = vunpack.c.l.b16 %v11488
        %v12060 = vunpack.c.h.b16 %v11488
        %v12061 = vunpack.c.l.b16 %v11489
        %v12062 = vunpack.c.h.b16 %v11489
        %v12063 = vunpack.c.l.b16 %v11490
        %v12064 = vunpack.c.h.b16 %v11490
        %v12065 = vunpack.c.l.b16 %v11491
        %v12066 = vunpack.c.h.b16 %v11491
        %v12067 = vunpack.c.l.b16 %v11492
        %v12068 = vunpack.c.h.b16 %v11492
        %v12069 = vunpack.c.l.b16 %v11493
        %v12070 = vunpack.c.h.b16 %v11493
        %v12071 = vunpack.c.l.b16 %v11494
        %v12072 = vunpack.c.h.b16 %v11494
        %v12073 = vunpack.c.l.b16 %v11495
        %v12074 = vunpack.c.h.b16 %v11495
        %v12075 = vunpack.c.l.b16 %v11496
        %v12076 = vunpack.c.h.b16 %v11496
        %v12077 = vunpack.c.l.b16 %v11497
        %v12078 = vunpack.c.h.b16 %v11497
        %v12079 = vunpack.c.l.b16 %v11498
        %v12080 = vunpack.c.h.b16 %v11498
        %v12081 = vunpack.c.l.b16 %v11499
        %v12082 = vunpack.c.h.b16 %v11499
        %v12083 = vunpack.c.l.b16 %v11500
        %v12084 = vunpack.c.h.b16 %v11500
        %v12085 = vunpack.c.l.b16 %v11501
        %v12086 = vunpack.c.h.b16 %v11501
        %v12087 = vunpack.c.l.b16 %v11502
        %v12088 = vunpack.c.h.b16 %v11502
        %v12089 = vunpack.c.l.b16 %v11503
        %v12090 = vunpack.c.h.b16 %v11503
        %v12091 = vunpack.c.l.b16 %v11504
        %v12092 = vunpack.c.h.b16 %v11504
        %v12093 = vunpack.c.l.b16 %v11505
        %v12094 = vunpack.c.h.b16 %v11505
        %v12095 = vunpack.c.l.b16 %v11506
        %v12096 = vunpack.c.h.b16 %v11506
        %v12097 = vunpack.c.l.b16 %v11507
        %v12098 = vunpack.c.h.b16 %v11507
        %v12099 = vunpack.c.l.b16 %v11508
        %v12100 = vunpack.c.h.b16 %v11508
        %v12101 = vunpack.c.l.b16 %v11509
        %v12102 = vunpack.c.h.b16 %v11509
        %v12103 = vunpack.c.l.b16 %v11510
        %v12104 = vunpack.c.h.b16 %v11510
        %v12105 = vunpack.c.l.b16 %v11511
        %v12106 = vunpack.c.h.b16 %v11511
        %v12107 = vunpack.c.l.b16 %v11512
        %v12108 = vunpack.c.h.b16 %v11512
        %v12109 = vunpack.c.l.b16 %v11513
        %v12110 = vunpack.c.h.b16 %v11513
        %v12111 = vunpack.c.l.b16 %v11514
        %v12112 = vunpack.c.h.b16 %v11514
        %v12113 = vunpack.c.l.b16 %v11515
        %v12114 = vunpack.c.h.b16 %v11515
        %v12115 = vunpack.c.l.b16 %v11516
        %v12116 = vunpack.c.h.b16 %v11516
        %v12117 = vunpack.c.l.b16 %v11517
        %v12118 = vunpack.c.h.b16 %v11517
        %v12119 = vunpack.c.l.b16 %v11518
        %v12120 = vunpack.c.h.b16 %v11518
        %v12121 = vunpack.c.l.b16 %v11519
        %v12122 = vunpack.c.h.b16 %v11519
        %v12123 = vunpack.c.l.b16 %v11520
        %v12124 = vunpack.c.h.b16 %v11520
        %v12125 = vunpack.c.l.b16 %v11521
        %v12126 = vunpack.c.h.b16 %v11521
        %v12127 = vunpack.c.l.b16 %v11522
        %v12128 = vunpack.c.h.b16 %v11522
        %v12129 = vunpack.c.l.b16 %v11523
        %v12130 = vunpack.c.h.b16 %v11523
        %v12131 = vunpack.c.l.b16 %v11524
        %v12132 = vunpack.c.h.b16 %v11524
        %v12133 = vunpack.c.l.b16 %v11525
        %v12134 = vunpack.c.h.b16 %v11525
        %v12135 = vunpack.c.l.b16 %v11526
        %v12136 = vunpack.c.h.b16 %v11526
        %v12137 = vunpack.c.l.b16 %v11527
        %v12138 = vunpack.c.h.b16 %v11527
        %v12139 = vunpack.c.l.b16 %v11528
        %v12140 = vunpack.c.h.b16 %v11528
        %v12141 = vunpack.c.l.b16 %v11529
        %v12142 = vunpack.c.h.b16 %v11529
        %v12143 = vunpack.c.l.b16 %v11530
        %v12144 = vunpack.c.h.b16 %v11530
        %v12145 = vunpack.c.l.b16 %v11531
        %v12146 = vunpack.c.h.b16 %v11531
        %v12147 = vunpack.c.l.b16 %v11532
        %v12148 = vunpack.c.h.b16 %v11532
        %v12149 = vunpack.c.l.b16 %v11533
        %v12150 = vunpack.c.h.b16 %v11533
        %v12151 = vunpack.c.l.b16 %v11534
        %v12152 = vunpack.c.h.b16 %v11534
        %v12153 = vunpack.c.l.b16 %v11535
        %v12154 = vunpack.c.h.b16 %v11535
        %v12155 = vunpack.c.l.b16 %v11536
        %v12156 = vunpack.c.h.b16 %v11536
        %v12157 = vunpack.c.l.b16 %v11537
        %v12158 = vunpack.c.h.b16 %v11537
        %v12159 = vunpack.c.l.b16 %v11538
        %v12160 = vunpack.c.h.b16 %v11538
        %v12161 = vunpack.c.l.b16 %v11539
        %v12162 = vunpack.c.h.b16 %v11539
        %v12163 = vunpack.c.l.b16 %v11540
        %v12164 = vunpack.c.h.b16 %v11540
        %v12165 = vunpack.c.l.b16 %v11541
        %v12166 = vunpack.c.h.b16 %v11541
        %v12167 = vunpack.c.l.b16 %v11542
        %v12168 = vunpack.c.h.b16 %v11542
        %v12169 = vunpack.c.l.b16 %v11543
        %v12170 = vunpack.c.h.b16 %v11543
        %v12171 = vunpack.c.l.b16 %v11544
        %v12172 = vunpack.c.h.b16 %v11544
        %v12173 = vpack.c.b16 %v11887, %v11885
        %v12174 = vpack.c.b16 %v11888, %v11886
        %v12175 = vpack.c.b16 %v11891, %v11889
        %v12176 = vpack.c.b16 %v11892, %v11890
        %v12177 = vpack.c.b16 %v11895, %v11893
        %v12178 = vpack.c.b16 %v11896, %v11894
        %v12179 = vpack.c.b16 %v11899, %v11897
        %v12180 = vpack.c.b16 %v11900, %v11898
        %v12181 = vpack.c.b16 %v11903, %v11901
        %v12182 = vpack.c.b16 %v11904, %v11902
        %v12183 = vpack.c.b16 %v11907, %v11905
        %v12184 = vpack.c.b16 %v11908, %v11906
        %v12185 = vpack.c.b16 %v11911, %v11909
        %v12186 = vpack.c.b16 %v11912, %v11910
        %v12187 = vpack.c.b16 %v11915, %v11913
        %v12188 = vpack.c.b16 %v11916, %v11914
        %v12189 = vpack.c.b16 %v11919, %v11917
        %v12190 = vpack.c.b16 %v11920, %v11918
        %v12191 = vpack.c.b16 %v11923, %v11921
        %v12192 = vpack.c.b16 %v11924, %v11922
        %v12193 = vpack.c.b16 %v11927, %v11925
        %v12194 = vpack.c.b16 %v11928, %v11926
        %v12195 = vpack.c.b16 %v11931, %v11929
        %v12196 = vpack.c.b16 %v11932, %v11930
        %v12197 = vpack.c.b16 %v11935, %v11933
        %v12198 = vpack.c.b16 %v11936, %v11934
        %v12199 = vpack.c.b16 %v11939, %v11937
        %v12200 = vpack.c.b16 %v11940, %v11938
        %v12201 = vpack.c.b16 %v11943, %v11941
        %v12202 = vpack.c.b16 %v11944, %v11942
        %v12203 = vpack.c.b16 %v11947, %v11945
        %v12204 = vpack.c.b16 %v11948, %v11946
        %v12205 = vpack.c.b16 %v11951, %v11949
        %v12206 = vpack.c.b16 %v11952, %v11950
        %v12207 = vpack.c.b16 %v11955, %v11953
        %v12208 = vpack.c.b16 %v11956, %v11954
        %v12209 = vpack.c.b16 %v11959, %v11957
        %v12210 = vpack.c.b16 %v11960, %v11958
        %v12211 = vpack.c.b16 %v11963, %v11961
        %v12212 = vpack.c.b16 %v11964, %v11962
        %v12213 = vpack.c.b16 %v11967, %v11965
        %v12214 = vpack.c.b16 %v11968, %v11966
        %v12215 = vpack.c.b16 %v11971, %v11969
        %v12216 = vpack.c.b16 %v11972, %v11970
        %v12217 = vpack.c.b16 %v11975, %v11973
        %v12218 = vpack.c.b16 %v11976, %v11974
        %v12219 = vpack.c.b16 %v11979, %v11977
        %v12220 = vpack.c.b16 %v11980, %v11978
        %v12221 = vpack.c.b16 %v11983, %v11981
        %v12222 = vpack.c.b16 %v11984, %v11982
        %v12223 = vpack.c.b16 %v11987, %v11985
        %v12224 = vpack.c.b16 %v11988, %v11986
        %v12225 = vpack.c.b16 %v11991, %v11989
        %v12226 = vpack.c.b16 %v11992, %v11990
        %v12227 = vpack.c.b16 %v11995, %v11993
        %v12228 = vpack.c.b16 %v11996, %v11994
        %v12229 = vpack.c.b16 %v11999, %v11997
        %v12230 = vpack.c.b16 %v12000, %v11998
        %v12231 = vpack.c.b16 %v12003, %v12001
        %v12232 = vpack.c.b16 %v12004, %v12002
        %v12233 = vpack.c.b16 %v12007, %v12005
        %v12234 = vpack.c.b16 %v12008, %v12006
        %v12235 = vpack.c.b16 %v12011, %v12009
        %v12236 = vpack.c.b16 %v12012, %v12010
        %v12237 = vpack.c.b16 %v12015, %v12013
        %v12238 = vpack.c.b16 %v12016, %v12014
        %v12239 = vpack.c.b16 %v12019, %v12017
        %v12240 = vpack.c.b16 %v12020, %v12018
        %v12241 = vpack.c.b16 %v12023, %v12021
        %v12242 = vpack.c.b16 %v12024, %v12022
        %v12243 = vpack.c.b16 %v12027, %v12025
        %v12244 = vpack.c.b16 %v12028, %v12026
        %v12245 = vpack.c.b16 %v12031, %v12029
        %v12246 = vpack.c.b16 %v12032, %v12030
        %v12247 = vpack.c.b16 %v12035, %v12033
        %v12248 = vpack.c.b16 %v12036, %v12034
        %v12249 = vpack.c.b16 %v12039, %v12037
        %v12250 = vpack.c.b16 %v12040, %v12038
        %v12251 = vpack.c.b16 %v12043, %v12041
        %v12252 = vpack.c.b16 %v12044, %v12042
        %v12253 = vpack.c.b16 %v12047, %v12045
        %v12254 = vpack.c.b16 %v12048, %v12046
        %v12255 = vpack.c.b16 %v12051, %v12049
        %v12256 = vpack.c.b16 %v12052, %v12050
        %v12257 = vpack.c.b16 %v12055, %v12053
        %v12258 = vpack.c.b16 %v12056, %v12054
        %v12259 = vpack.c.b16 %v12059, %v12057
        %v12260 = vpack.c.b16 %v12060, %v12058
        %v12261 = vpack.c.b16 %v12063, %v12061
        %v12262 = vpack.c.b16 %v12064, %v12062
        %v12263 = vpack.c.b16 %v12067, %v12065
        %v12264 = vpack.c.b16 %v12068, %v12066
        %v12265 = vpack.c.b16 %v12071, %v12069
        %v12266 = vpack.c.b16 %v12072, %v12070
        %v12267 = vpack.c.b16 %v12075, %v12073
        %v12268 = vpack.c.b16 %v12076, %v12074
        %v12269 = vpack.c.b16 %v12079, %v12077
        %v12270 = vpack.c.b16 %v12080, %v12078
        %v12271 = vpack.c.b16 %v12083, %v12081
        %v12272 = vpack.c.b16 %v12084, %v12082
        %v12273 = vpack.c.b16 %v12087, %v12085
        %v12274 = vpack.c.b16 %v12088, %v12086
        %v12275 = vpack.c.b16 %v12091, %v12089
        %v12276 = vpack.c.b16 %v12092, %v12090
        %v12277 = vpack.c.b16 %v12095, %v12093
        %v12278 = vpack.c.b16 %v12096, %v12094
        %v12279 = vpack.c.b16 %v12099, %v12097
        %v12280 = vpack.c.b16 %v12100, %v12098
        %v12281 = vpack.c.b16 %v12103, %v12101
        %v12282 = vpack.c.b16 %v12104, %v12102
        %v12283 = vpack.c.b16 %v12107, %v12105
        %v12284 = vpack.c.b16 %v12108, %v12106
        %v12285 = vpack.c.b16 %v12111, %v12109
        %v12286 = vpack.c.b16 %v12112, %v12110
        %v12287 = vpack.c.b16 %v12115, %v12113
        %v12288 = vpack.c.b16 %v12116, %v12114
        %v12289 = vpack.c.b16 %v12119, %v12117
        %v12290 = vpack.c.b16 %v12120, %v12118
        %v12291 = vpack.c.b16 %v12123, %v12121
        %v12292 = vpack.c.b16 %v12124, %v12122
        %v12293 = vpack.c.b16 %v12127, %v12125
        %v12294 = vpack.c.b16 %v12128, %v12126
        %v12295 = vpack.c.b16 %v12131, %v12129
        %v12296 = vpack.c.b16 %v12132, %v12130
        %v12297 = vpack.c.b16 %v12135, %v12133
        %v12298 = vpack.c.b16 %v12136, %v12134
        %v12299 = vpack.c.b16 %v12139, %v12137
        %v12300 = vpack.c.b16 %v12140, %v12138
        %v12301 = vpack.c.b16 %v12143, %v12141
        %v12302 = vpack.c.b16 %v12144, %v12142
        %v12303 = vpack.c.b16 %v12147, %v12145
        %v12304 = vpack.c.b16 %v12148, %v12146
        %v12305 = vpack.c.b16 %v12151, %v12149
        %v12306 = vpack.c.b16 %v12152, %v12150
        %v12307 = vpack.c.b16 %v12155, %v12153
        %v12308 = vpack.c.b16 %v12156, %v12154
        %v12309 = vpack.c.b16 %v12159, %v12157
        %v12310 = vpack.c.b16 %v12160, %v12158
        %v12311 = vpack.c.b16 %v12163, %v12161
        %v12312 = vpack.c.b16 %v12164, %v12162
        %v12313 = vpack.c.b16 %v12167, %v12165
        %v12314 = vpack.c.b16 %v12168, %v12166
        %v12315 = vpack.c.b16 %v12171, %v12169
        %v12316 = vpack.c.b16 %v12172, %v12170
        %12461 = vmatprep.subr.bf16.mxu0 %v12188
        %12462 = vmatpush1.bf16.msra.mxu0 %v12187
        %12463 = vmatprep.subr.bf16.mxu0 %v12186
        %12464 = vmatpush1.bf16.msra.mxu0 %v12185
        %12465 = vmatprep.subr.bf16.mxu0 %v12184
        %12466 = vmatpush1.bf16.msra.mxu0 %v12183
        %12467 = vmatprep.subr.bf16.mxu0 %v12182
        %12468 = vmatpush1.bf16.msra.mxu0 %v12181
        %12469 = vmatprep.subr.bf16.mxu0 %v12180
        %12470 = vmatpush1.bf16.msra.mxu0 %v12179
        %12471 = vmatprep.subr.bf16.mxu0 %v12178
        %12472 = vmatpush1.bf16.msra.mxu0 %v12177
        %12473 = vmatprep.subr.bf16.mxu0 %v12176
        %12474 = vmatpush1.bf16.msra.mxu0 %v12175
        %12475 = vmatprep.subr.bf16.mxu0 %v12174
        %12476 = vmatpush1.bf16.msra.mxu0 %v12173
        %12477 = vmatprep.subr.bf16.mxu0 %v12204
        %12478 = vmatpush2.bf16.msra.mxu0 %v12203
        %12479 = vmatprep.subr.bf16.mxu0 %v12202
        %12480 = vmatpush2.bf16.msra.mxu0 %v12201
        %12481 = vmatprep.subr.bf16.mxu0 %v12200
        %12482 = vmatpush2.bf16.msra.mxu0 %v12199
        %12483 = vmatprep.subr.bf16.mxu0 %v12198
        %12484 = vmatpush2.bf16.msra.mxu0 %v12197
        %12485 = vmatprep.subr.bf16.mxu0 %v12196
        %12486 = vmatpush2.bf16.msra.mxu0 %v12195
        %12487 = vmatprep.subr.bf16.mxu0 %v12194
        %12488 = vmatpush2.bf16.msra.mxu0 %v12193
        %12489 = vmatprep.subr.bf16.mxu0 %v12192
        %12490 = vmatpush2.bf16.msra.mxu0 %v12191
        %12491 = vmatprep.subr.bf16.mxu0 %v12190
        %12492 = vmatpush2.bf16.msra.mxu0 %v12189
        %12493 = vmatprep.mubr.bf16.mxu0 %v11670
        %12494 = vmatmul.mubr.bf16.gmra.mxu0 %v11669
        %v12495 = vpop.f32.mrf.mxu0
        %v12496 = vadd.f32 %v11550, %v12495
        %v12497 = vpop.f32.mrf.mxu0
        %v12498 = vadd.f32 %v11554, %v12497
        %v12499 = vpop.f32.mrf.mxu0
        %v12500 = vadd.f32 %v11550, %v12499
        %v12501 = vpop.f32.mrf.mxu0
        %v12502 = vadd.f32 %v11554, %v12501
        %12503 = vmatprep.mubr.bf16.mxu0 %v11679
        %12504 = vmatmul.mubr.bf16.gmra.mxu0 %v11678
        %v12505 = vpop.f32.mrf.mxu0
        %v12506 = vadd.f32 %v11550, %v12505
        %v12507 = vpop.f32.mrf.mxu0
        %v12508 = vadd.f32 %v11554, %v12507
        %v12509 = vpop.f32.mrf.mxu0
        %v12510 = vadd.f32 %v11550, %v12509
        %v12511 = vpop.f32.mrf.mxu0
        %v12512 = vadd.f32 %v11554, %v12511
        %12513 = vmatprep.mubr.bf16.mxu0 %v11688
        %12514 = vmatmul.mubr.bf16.gmra.mxu0 %v11687
        %v12515 = vpop.f32.mrf.mxu0
        %v12516 = vadd.f32 %v11550, %v12515
        %v12517 = vpop.f32.mrf.mxu0
        %v12518 = vadd.f32 %v11554, %v12517
        %v12519 = vpop.f32.mrf.mxu0
        %v12520 = vadd.f32 %v11550, %v12519
        %v12521 = vpop.f32.mrf.mxu0
        %v12522 = vadd.f32 %v11554, %v12521
        %12523 = vmatprep.mubr.bf16.mxu0 %v11697
        %12524 = vmatmul.mubr.bf16.gmra.mxu0 %v11696
        %v12525 = vpop.f32.mrf.mxu0
        %v12526 = vadd.f32 %v11550, %v12525
        %v12527 = vpop.f32.mrf.mxu0
        %v12528 = vadd.f32 %v11554, %v12527
        %v12529 = vpop.f32.mrf.mxu0
        %v12530 = vadd.f32 %v11550, %v12529
        %v12531 = vpop.f32.mrf.mxu0
        %v12532 = vadd.f32 %v11554, %v12531
        %12533 = vdwg.mxu0
        %12534 = vmatprep.subr.bf16.mxu0 %v12220
        %12535 = vmatpush1.bf16.msra.mxu0 %v12219
        %12536 = vmatprep.subr.bf16.mxu0 %v12218
        %12537 = vmatpush1.bf16.msra.mxu0 %v12217
        %12538 = vmatprep.subr.bf16.mxu0 %v12216
        %12539 = vmatpush1.bf16.msra.mxu0 %v12215
        %12540 = vmatprep.subr.bf16.mxu0 %v12214
        %12541 = vmatpush1.bf16.msra.mxu0 %v12213
        %12542 = vmatprep.subr.bf16.mxu0 %v12212
        %12543 = vmatpush1.bf16.msra.mxu0 %v12211
        %12544 = vmatprep.subr.bf16.mxu0 %v12210
        %12545 = vmatpush1.bf16.msra.mxu0 %v12209
        %12546 = vmatprep.subr.bf16.mxu0 %v12208
        %12547 = vmatpush1.bf16.msra.mxu0 %v12207
        %12548 = vmatprep.subr.bf16.mxu0 %v12206
        %12549 = vmatpush1.bf16.msra.mxu0 %v12205
        %12550 = vmatprep.subr.bf16.mxu0 %v12236
        %12551 = vmatpush2.bf16.msra.mxu0 %v12235
        %12552 = vmatprep.subr.bf16.mxu0 %v12234
        %12553 = vmatpush2.bf16.msra.mxu0 %v12233
        %12554 = vmatprep.subr.bf16.mxu0 %v12232
        %12555 = vmatpush2.bf16.msra.mxu0 %v12231
        %12556 = vmatprep.subr.bf16.mxu0 %v12230
        %12557 = vmatpush2.bf16.msra.mxu0 %v12229
        %12558 = vmatprep.subr.bf16.mxu0 %v12228
        %12559 = vmatpush2.bf16.msra.mxu0 %v12227
        %12560 = vmatprep.subr.bf16.mxu0 %v12226
        %12561 = vmatpush2.bf16.msra.mxu0 %v12225
        %12562 = vmatprep.subr.bf16.mxu0 %v12224
        %12563 = vmatpush2.bf16.msra.mxu0 %v12223
        %12564 = vmatprep.subr.bf16.mxu0 %v12222
        %12565 = vmatpush2.bf16.msra.mxu0 %v12221
        %12566 = vmatprep.mubr.bf16.mxu0 %v11672
        %12567 = vmatmul.mubr.bf16.gmra.mxu0 %v11671
        %v12568 = vpop.f32.mrf.mxu0
        %v12569 = vadd.f32 %v12496, %v12568
        %v12570 = vpop.f32.mrf.mxu0
        %v12571 = vadd.f32 %v12498, %v12570
        %v12572 = vpop.f32.mrf.mxu0
        %v12573 = vadd.f32 %v12500, %v12572
        %v12574 = vpop.f32.mrf.mxu0
        %v12575 = vadd.f32 %v12502, %v12574
        %12576 = vmatprep.mubr.bf16.mxu0 %v11681
        %12577 = vmatmul.mubr.bf16.gmra.mxu0 %v11680
        %v12578 = vpop.f32.mrf.mxu0
        %v12579 = vadd.f32 %v12506, %v12578
        %v12580 = vpop.f32.mrf.mxu0
        %v12581 = vadd.f32 %v12508, %v12580
        %v12582 = vpop.f32.mrf.mxu0
        %v12583 = vadd.f32 %v12510, %v12582
        %v12584 = vpop.f32.mrf.mxu0
        %v12585 = vadd.f32 %v12512, %v12584
        %12586 = vmatprep.mubr.bf16.mxu0 %v11690
        %12587 = vmatmul.mubr.bf16.gmra.mxu0 %v11689
        %v12588 = vpop.f32.mrf.mxu0
        %v12589 = vadd.f32 %v12516, %v12588
        %v12590 = vpop.f32.mrf.mxu0
        %v12591 = vadd.f32 %v12518, %v12590
        %v12592 = vpop.f32.mrf.mxu0
        %v12593 = vadd.f32 %v12520, %v12592
        %v12594 = vpop.f32.mrf.mxu0
        %v12595 = vadd.f32 %v12522, %v12594
        %12596 = vmatprep.mubr.bf16.mxu0 %v11699
        %12597 = vmatmul.mubr.bf16.gmra.mxu0 %v11698
        %v12598 = vpop.f32.mrf.mxu0
        %v12599 = vadd.f32 %v12526, %v12598
        %v12600 = vpop.f32.mrf.mxu0
        %v12601 = vadd.f32 %v12528, %v12600
        %v12602 = vpop.f32.mrf.mxu0
        %v12603 = vadd.f32 %v12530, %v12602
        %v12604 = vpop.f32.mrf.mxu0
        %v12605 = vadd.f32 %v12532, %v12604
        %12606 = vdwg.mxu0
        %12607 = vmatprep.subr.bf16.mxu0 %v12252
        %12608 = vmatpush1.bf16.msra.mxu0 %v12251
        %12609 = vmatprep.subr.bf16.mxu0 %v12250
        %12610 = vmatpush1.bf16.msra.mxu0 %v12249
        %12611 = vmatprep.subr.bf16.mxu0 %v12248
        %12612 = vmatpush1.bf16.msra.mxu0 %v12247
        %12613 = vmatprep.subr.bf16.mxu0 %v12246
        %12614 = vmatpush1.bf16.msra.mxu0 %v12245
        %12615 = vmatprep.subr.bf16.mxu0 %v12244
        %12616 = vmatpush1.bf16.msra.mxu0 %v12243
        %12617 = vmatprep.subr.bf16.mxu0 %v12242
        %12618 = vmatpush1.bf16.msra.mxu0 %v12241
        %12619 = vmatprep.subr.bf16.mxu0 %v12240
        %12620 = vmatpush1.bf16.msra.mxu0 %v12239
        %12621 = vmatprep.subr.bf16.mxu0 %v12238
        %12622 = vmatpush1.bf16.msra.mxu0 %v12237
        %12623 = vmatprep.subr.bf16.mxu0 %v12268
        %12624 = vmatpush2.bf16.msra.mxu0 %v12267
        %12625 = vmatprep.subr.bf16.mxu0 %v12266
        %12626 = vmatpush2.bf16.msra.mxu0 %v12265
        %12627 = vmatprep.subr.bf16.mxu0 %v12264
        %12628 = vmatpush2.bf16.msra.mxu0 %v12263
        %12629 = vmatprep.subr.bf16.mxu0 %v12262
        %12630 = vmatpush2.bf16.msra.mxu0 %v12261
        %12631 = vmatprep.subr.bf16.mxu0 %v12260
        %12632 = vmatpush2.bf16.msra.mxu0 %v12259
        %12633 = vmatprep.subr.bf16.mxu0 %v12258
        %12634 = vmatpush2.bf16.msra.mxu0 %v12257
        %12635 = vmatprep.subr.bf16.mxu0 %v12256
        %12636 = vmatpush2.bf16.msra.mxu0 %v12255
        %12637 = vmatprep.subr.bf16.mxu0 %v12254
        %12638 = vmatpush2.bf16.msra.mxu0 %v12253
        %12639 = vmatprep.mubr.bf16.mxu0 %v11674
        %12640 = vmatmul.mubr.bf16.gmra.mxu0 %v11673
        %v12641 = vpop.f32.mrf.mxu0
        %v12642 = vadd.f32 %v12569, %v12641
        %v12643 = vpop.f32.mrf.mxu0
        %v12644 = vadd.f32 %v12571, %v12643
        %v12645 = vpop.f32.mrf.mxu0
        %v12646 = vadd.f32 %v12573, %v12645
        %v12647 = vpop.f32.mrf.mxu0
        %v12648 = vadd.f32 %v12575, %v12647
        %12649 = vmatprep.mubr.bf16.mxu0 %v11683
        %12650 = vmatmul.mubr.bf16.gmra.mxu0 %v11682
        %v12651 = vpop.f32.mrf.mxu0
        %v12652 = vadd.f32 %v12579, %v12651
        %v12653 = vpop.f32.mrf.mxu0
        %v12654 = vadd.f32 %v12581, %v12653
        %v12655 = vpop.f32.mrf.mxu0
        %v12656 = vadd.f32 %v12583, %v12655
        %v12657 = vpop.f32.mrf.mxu0
        %v12658 = vadd.f32 %v12585, %v12657
        %12659 = vmatprep.mubr.bf16.mxu0 %v11692
        %12660 = vmatmul.mubr.bf16.gmra.mxu0 %v11691
        %v12661 = vpop.f32.mrf.mxu0
        %v12662 = vadd.f32 %v12589, %v12661
        %v12663 = vpop.f32.mrf.mxu0
        %v12664 = vadd.f32 %v12591, %v12663
        %v12665 = vpop.f32.mrf.mxu0
        %v12666 = vadd.f32 %v12593, %v12665
        %v12667 = vpop.f32.mrf.mxu0
        %v12668 = vadd.f32 %v12595, %v12667
        %12669 = vmatprep.mubr.bf16.mxu0 %v11701
        %12670 = vmatmul.mubr.bf16.gmra.mxu0 %v11700
        %v12671 = vpop.f32.mrf.mxu0
        %v12672 = vadd.f32 %v12599, %v12671
        %v12673 = vpop.f32.mrf.mxu0
        %v12674 = vadd.f32 %v12601, %v12673
        %v12675 = vpop.f32.mrf.mxu0
        %v12676 = vadd.f32 %v12603, %v12675
        %v12677 = vpop.f32.mrf.mxu0
        %v12678 = vadd.f32 %v12605, %v12677
        %12679 = vdwg.mxu0
        %12680 = vmatprep.subr.bf16.mxu0 %v12284
        %12681 = vmatpush1.bf16.msra.mxu0 %v12283
        %12682 = vmatprep.subr.bf16.mxu0 %v12282
        %12683 = vmatpush1.bf16.msra.mxu0 %v12281
        %12684 = vmatprep.subr.bf16.mxu0 %v12280
        %12685 = vmatpush1.bf16.msra.mxu0 %v12279
        %12686 = vmatprep.subr.bf16.mxu0 %v12278
        %12687 = vmatpush1.bf16.msra.mxu0 %v12277
        %12688 = vmatprep.subr.bf16.mxu0 %v12276
        %12689 = vmatpush1.bf16.msra.mxu0 %v12275
        %12690 = vmatprep.subr.bf16.mxu0 %v12274
        %12691 = vmatpush1.bf16.msra.mxu0 %v12273
        %12692 = vmatprep.subr.bf16.mxu0 %v12272
        %12693 = vmatpush1.bf16.msra.mxu0 %v12271
        %12694 = vmatprep.subr.bf16.mxu0 %v12270
        %12695 = vmatpush1.bf16.msra.mxu0 %v12269
        %12696 = vmatprep.subr.bf16.mxu0 %v12300
        %12697 = vmatpush2.bf16.msra.mxu0 %v12299
        %12698 = vmatprep.subr.bf16.mxu0 %v12298
        %12699 = vmatpush2.bf16.msra.mxu0 %v12297
        %12700 = vmatprep.subr.bf16.mxu0 %v12296
        %12701 = vmatpush2.bf16.msra.mxu0 %v12295
        %12702 = vmatprep.subr.bf16.mxu0 %v12294
        %12703 = vmatpush2.bf16.msra.mxu0 %v12293
        %12704 = vmatprep.subr.bf16.mxu0 %v12292
        %12705 = vmatpush2.bf16.msra.mxu0 %v12291
        %12706 = vmatprep.subr.bf16.mxu0 %v12290
        %12707 = vmatpush2.bf16.msra.mxu0 %v12289
        %12708 = vmatprep.subr.bf16.mxu0 %v12288
        %12709 = vmatpush2.bf16.msra.mxu0 %v12287
        %12710 = vmatprep.subr.bf16.mxu0 %v12286
        %12711 = vmatpush2.bf16.msra.mxu0 %v12285
        %12712 = vmatprep.mubr.bf16.mxu0 %v11676
        %12713 = vmatmul.mubr.bf16.gmra.mxu0 %v11675
        %v12714 = vpop.f32.mrf.mxu0
        %v12715 = vadd.f32 %v12642, %v12714
        %v12716 = vpop.f32.mrf.mxu0
        %v12717 = vadd.f32 %v12644, %v12716
        %v12718 = vpop.f32.mrf.mxu0
        %v12719 = vadd.f32 %v12646, %v12718
        %v12720 = vpop.f32.mrf.mxu0
        %v12721 = vadd.f32 %v12648, %v12720
        %12722 = vmatprep.mubr.bf16.mxu0 %v11685
        %12723 = vmatmul.mubr.bf16.gmra.mxu0 %v11684
        %v12724 = vpop.f32.mrf.mxu0
        %v12725 = vadd.f32 %v12652, %v12724
        %v12726 = vpop.f32.mrf.mxu0
        %v12727 = vadd.f32 %v12654, %v12726
        %v12728 = vpop.f32.mrf.mxu0
        %v12729 = vadd.f32 %v12656, %v12728
        %v12730 = vpop.f32.mrf.mxu0
        %v12731 = vadd.f32 %v12658, %v12730
        %12732 = vmatprep.mubr.bf16.mxu0 %v11694
        %12733 = vmatmul.mubr.bf16.gmra.mxu0 %v11693
        %v12734 = vpop.f32.mrf.mxu0
        %v12735 = vadd.f32 %v12662, %v12734
        %v12736 = vpop.f32.mrf.mxu0
        %v12737 = vadd.f32 %v12664, %v12736
        %v12738 = vpop.f32.mrf.mxu0
        %v12739 = vadd.f32 %v12666, %v12738
        %v12740 = vpop.f32.mrf.mxu0
        %v12741 = vadd.f32 %v12668, %v12740
        %12742 = vmatprep.mubr.bf16.mxu0 %v11703
        %12743 = vmatmul.mubr.bf16.gmra.mxu0 %v11702
        %v12744 = vpop.f32.mrf.mxu0
        %v12745 = vadd.f32 %v12672, %v12744
        %v12746 = vpop.f32.mrf.mxu0
        %v12747 = vadd.f32 %v12674, %v12746
        %v12748 = vpop.f32.mrf.mxu0
        %v12749 = vadd.f32 %v12676, %v12748
        %v12750 = vpop.f32.mrf.mxu0
        %v12751 = vadd.f32 %v12678, %v12750
        %12752 = vdwg.mxu0
        %12753 = vmatprep.subr.bf16.mxu0 %v12316
        %12754 = vmatpush1.bf16.msra.mxu0 %v12315
        %12755 = vmatprep.subr.bf16.mxu0 %v12314
        %12756 = vmatpush1.bf16.msra.mxu0 %v12313
        %12757 = vmatprep.subr.bf16.mxu0 %v12312
        %12758 = vmatpush1.bf16.msra.mxu0 %v12311
        %12759 = vmatprep.subr.bf16.mxu0 %v12310
        %12760 = vmatpush1.bf16.msra.mxu0 %v12309
        %12761 = vmatprep.subr.bf16.mxu0 %v12308
        %12762 = vmatpush1.bf16.msra.mxu0 %v12307
        %12763 = vmatprep.subr.bf16.mxu0 %v12306
        %12764 = vmatpush1.bf16.msra.mxu0 %v12305
        %12765 = vmatprep.subr.bf16.mxu0 %v12304
        %12766 = vmatpush1.bf16.msra.mxu0 %v12303
        %12767 = vmatprep.subr.bf16.mxu0 %v12302
        %12768 = vmatpush1.bf16.msra.mxu0 %v12301
        %12769 = vmatprep.subr.bf16.mxu0 0
        %12770 = vmatpush2.bf16.msra.mxu0 0
        %12771 = vmatprep.subr.bf16.mxu0 0
        %12772 = vmatpush2.bf16.msra.mxu0 0
        %12773 = vmatprep.subr.bf16.mxu0 0
        %12774 = vmatpush2.bf16.msra.mxu0 0
        %12775 = vmatprep.subr.bf16.mxu0 0
        %12776 = vmatpush2.bf16.msra.mxu0 0
        %12777 = vmatprep.subr.bf16.mxu0 0
        %12778 = vmatpush2.bf16.msra.mxu0 0
        %12779 = vmatprep.subr.bf16.mxu0 0
        %12780 = vmatpush2.bf16.msra.mxu0 0
        %12781 = vmatprep.subr.bf16.mxu0 0
        %12782 = vmatpush2.bf16.msra.mxu0 0
        %12783 = vmatprep.subr.bf16.mxu0 0
        %12784 = vmatpush2.bf16.msra.mxu0 0
        %12785 = vmatprep.mubr.bf16.mxu0 0
        %12786 = vmatmul.mubr.bf16.gmra.mxu0 %v11677
        %v12787 = vpop.f32.mrf.mxu0
        %v12788 = vadd.f32 %v12715, %v12787
        %v12789 = vpop.f32.mrf.mxu0
        %v12790 = vadd.f32 %v12717, %v12789
        %v12791 = vpop.f32.mrf.mxu0
        %v12792 = vadd.f32 %v12719, %v12791
        %v12793 = vpop.f32.mrf.mxu0
        %v12794 = vadd.f32 %v12721, %v12793
        %12795 = vmatprep.mubr.bf16.mxu0 0
        %12796 = vmatmul.mubr.bf16.gmra.mxu0 %v11686
        %v12797 = vpop.f32.mrf.mxu0
        %v12798 = vadd.f32 %v12725, %v12797
        %v12799 = vpop.f32.mrf.mxu0
        %v12800 = vadd.f32 %v12727, %v12799
        %v12801 = vpop.f32.mrf.mxu0
        %v12802 = vadd.f32 %v12729, %v12801
        %v12803 = vpop.f32.mrf.mxu0
        %v12804 = vadd.f32 %v12731, %v12803
        %12805 = vmatprep.mubr.bf16.mxu0 0
        %12806 = vmatmul.mubr.bf16.gmra.mxu0 %v11695
        %v12807 = vpop.f32.mrf.mxu0
        %v12808 = vadd.f32 %v12735, %v12807
        %v12809 = vpop.f32.mrf.mxu0
        %v12810 = vadd.f32 %v12737, %v12809
        %v12811 = vpop.f32.mrf.mxu0
        %v12812 = vadd.f32 %v12739, %v12811
        %v12813 = vpop.f32.mrf.mxu0
        %v12814 = vadd.f32 %v12741, %v12813
        %12815 = vmatprep.mubr.bf16.mxu0 0
        %12816 = vmatmul.mubr.bf16.gmra.mxu0 %v11704
        %v12817 = vpop.f32.mrf.mxu0
        %v12818 = vadd.f32 %v12745, %v12817
        %v12819 = vpop.f32.mrf.mxu0
        %v12820 = vadd.f32 %v12747, %v12819
        %v12821 = vpop.f32.mrf.mxu0
        %v12822 = vadd.f32 %v12749, %v12821
        %v12823 = vpop.f32.mrf.mxu0
        %v12824 = vadd.f32 %v12751, %v12823
        %12825 = vdwg.mxu0
        %v12826 = vmax.f32 %v12788, 0.0
        %v12827 = vmax.f32 %v12790, 0.0
        %v12828 = vmax.f32 %v12792, 0.0
        %v12829 = vmax.f32 %v12794, 0.0
        %v12830 = vmax.f32 %v12798, 0.0
        %v12831 = vmax.f32 %v12800, 0.0
        %v12832 = vmax.f32 %v12802, 0.0
        %v12833 = vmax.f32 %v12804, 0.0
        %v12834 = vmax.f32 %v12808, 0.0
        %v12835 = vmax.f32 %v12810, 0.0
        %v12836 = vmax.f32 %v12812, 0.0
        %v12837 = vmax.f32 %v12814, 0.0
        %v12838 = vmax.f32 %v12818, 0.0
        %v12839 = vmax.f32 %v12820, 0.0
        %v12840 = vmax.f32 %v12822, 0.0
        %v12841 = vmax.f32 %v12824, 0.0
        %12842 = vst [vmem:[%s271] sm:$0xff] %v12826
        %12843 = vst [vmem:[%s271 + $0x8] sm:$0xff] %v12827
        %12844 = vst [vmem:[%s271 + $0x10] sm:$0xff] %v12828
        %12845 = vst [vmem:[%s271 + $0x18] sm:$0xff] %v12829
        %12846 = vst [vmem:[%s271 + $0x20] sm:$0xff] %v12830
        %12847 = vst [vmem:[%s271 + $0x28] sm:$0xff] %v12831
        %12848 = vst [vmem:[%s271 + $0x30] sm:$0xff] %v12832
        %12849 = vst [vmem:[%s271 + $0x38] sm:$0xff] %v12833
        %12850 = vst [vmem:[%s271 + $0x40] sm:$0xff] %v12834
        %12851 = vst [vmem:[%s271 + $0x48] sm:$0xff] %v12835
        %12852 = vst [vmem:[%s271 + $0x50] sm:$0xff] %v12836
        %12853 = vst [vmem:[%s271 + $0x58] sm:$0xff] %v12837
        %12854 = vst [vmem:[%s271 + $0x60] sm:$0xff] %v12838
        %12855 = vst [vmem:[%s271 + $0x68] sm:$0xff] %v12839
        %12856 = vst [vmem:[%s271 + $0x70] sm:$0xff] %v12840
        %12857 = vst [vmem:[%s271 + $0x78] sm:$0xff] %v12841
        %s12858 = sand.u32 %s181, 1
        %s12859 = scalar_lea.sflag [#allocation7], %s12858
        %s12860 = sand.u32 %s181, 1
        %s12861 = smul.addr %s12860, 128
        %s12862 = scalar_lea.vmem [#allocation6], %s12861
        // Predicated region
        $region49: #{inhand_conv_forward.1} parent=47 // pred_check
          %p12863 = pneg %p191
        $region50: #{inhand_conv_forward.1} parent=47 // pred_check_branch
          %12865 = sbr.rel (%p12863) target = $region52
        $region51: #{inhand_conv_forward.1} parent=47 // pred_region
          %s12866 = smul.u32 8, %s21
          %s12868 = ssub.s32 2048, 2048
          %12869 = vsyncadd %s12859, %s12868
          %s12870 = smul.addr %s12866, 2
          %s12871 = smul.addr %s12870, 128
          %s12872 = scalar_lea.hbm %s7, %s12871
          %s12873 = sshll.u32 %s12862, 4
          %s12874 = int_to_ptr.vmem [resolvable:$true] %s12873
          %12879 = dma.vmem_to_hbm [thread:$0]  %s12874, 2048, %s12872, %s12859, 256, 256, 16
        $region52: #{inhand_conv_forward.1} parent=47 // pred_fallthru
          _
      $region48: #{inhand_conv_forward.1} parent=5 // pred_fallthru
        _
      %p12880 = scmp.le.s32.totalorder 2, %s16
      // Predicated region
      $region53: #{inhand_conv_forward.1} parent=5 // pred_check
        %p12881 = pneg %p12880
      $region54: #{inhand_conv_forward.1} parent=5 // pred_check_branch
        %12883 = sbr.rel (%p12881) target = $region56
      $region55: #{inhand_conv_forward.1} parent=5 // pred_region
        %s12884 = ssub.s32 %s16, 2
        // Predicated region
        $region57: #{inhand_conv_forward.1} parent=55 // pred_check
          %p12885 = pneg %p197
        $region58: #{inhand_conv_forward.1} parent=55 // pred_check_branch
          %12887 = sbr.rel (%p12885) target = $region60
        $region59: #{inhand_conv_forward.1} parent=55 // pred_region
          %s12888 = sand.u32 %s182, 1
          %s12889 = scalar_lea.sflag [#allocation7], %s12888
          %s12890 = sand.u32 %s182, 1
          %s12891 = smul.addr %s12890, 128
          %s12892 = scalar_lea.vmem [#allocation6], %s12891
          %12893 = dma.done %s12889, 2048
        $region60: #{inhand_conv_forward.1} parent=55 // pred_fallthru
          _
      $region56: #{inhand_conv_forward.1} parent=5 // pred_fallthru
        _
    $region6: #{inhand_conv_forward.1} parent=1 // loop_footer
      %s20 = sadd.s32 1, %s16
    $region7: #{inhand_conv_forward.1} parent=1 // loop_footer_branch
      %15 = sbr.rel target = $region3
    $region8: #{inhand_conv_forward.1} parent=1 // loop_exit
      _
    %12894 = vsyncpa [#allocation7], 1
    %s12895 = scalar_lea.sflag [#allocation7], 1
    %12896 = vsyncpa %s12895, 1

</llo_original>
